<compile_context>
chip_gen: v6e
topology: v6e:2x2x1
jax: 0.10.0
libtpu: 0.0.40
codegen_flags: <defaults>
</compile_context>

<pallas_src>
import functools

import jax
import jax.numpy as jnp
from jax.experimental import pallas as pl
from jax.experimental.pallas import tpu as pltpu

_VMEM_LIMIT = 32 * 1024 * 1024  # explicit scoped-VMEM limit, safe on v5e/v6e/v7x


# ----------------------------------------------------------------------------
# Kernel 1: fused (M,K)@(K,N) matmul + per-channel affine (folded BN) + optional SiLU
# ----------------------------------------------------------------------------
def _matmul_affine_act_kernel(x_ref, w_ref, scale_ref, bias_ref, o_ref, *, act):
    y = jnp.dot(x_ref[...].astype(jnp.bfloat16), w_ref[...],
                preferred_element_type=jnp.float32)
    y = y * scale_ref[...] + bias_ref[...]
    if act:  # SiLU
        y = y * jax.nn.sigmoid(y)
    o_ref[...] = y.astype(o_ref.dtype)


def _pick_bm(m):
    for bm in (256, 512, 128, 64, 32, 16, 8):
        if m % bm == 0:
            return bm
    return m


def matmul_affine_act(x, w_bf16, scale, bias, act=True):
    """x: (M, K) f32, w_bf16: (K, N) bf16, scale/bias: (N,) f32 -> (M, N) f32."""
    M, K = x.shape
    K2, N = w_bf16.shape
    assert K == K2
    bm = _pick_bm(M)
    scale = scale.reshape(1, N).astype(jnp.float32)
    bias = bias.reshape(1, N).astype(jnp.float32)
    return pl.pallas_call(
        functools.partial(_matmul_affine_act_kernel, act=act),
        out_shape=jax.ShapeDtypeStruct((M, N), jnp.float32),
        grid=(M // bm,),
        in_specs=[
            pl.BlockSpec((bm, K), lambda i: (i, 0)),
            pl.BlockSpec((K, N), lambda i: (0, 0)),
            pl.BlockSpec((1, N), lambda i: (0, 0)),
            pl.BlockSpec((1, N), lambda i: (0, 0)),
        ],
        out_specs=pl.BlockSpec((bm, N), lambda i: (i, 0)),
        compiler_params=pltpu.CompilerParams(
            dimension_semantics=("parallel",), vmem_limit_bytes=_VMEM_LIMIT),
    )(x, w_bf16, scale, bias)


# ----------------------------------------------------------------------------
# Kernel 2: 3x3 conv (stride 1, pad 1) + affine + SiLU as a 9-tap shifted-matmul
# accumulation over the padded, flattened NHWC image (no im2col in HBM).
# ----------------------------------------------------------------------------
def _conv3x3_affine_silu_kernel(x_ref, w_ref, scale_ref, bias_ref, o_ref, *, Wp):
    # x_ref: (1, Mpad, Cin) padded+flattened image; w_ref: (9, Cin, Cout) bf16
    # o_ref: (1, Lout, Cout) with Lout = H*Wp (cols >= W per row are cropped by caller)
    _, lout, cout = o_ref.shape
    acc = jnp.zeros((lout, cout), jnp.float32)
    for kh in range(3):
        for kw in range(3):
            tap = kh * 3 + kw
            start = kh * Wp + kw                      # static flat shift for this tap
            xs = x_ref[0, pl.ds(start, lout), :]      # shifted rows of the padded image
            acc = acc + jnp.dot(xs.astype(jnp.bfloat16), w_ref[tap],
                                preferred_element_type=jnp.float32)
    y = acc * scale_ref[...] + bias_ref[...]
    y = y * jax.nn.sigmoid(y)                         # SiLU
    o_ref[0] = y.astype(o_ref.dtype)


def conv3x3_affine_silu(x_flat, w9_bf16, scale, bias, n, h, w):
    """3x3/s1/p1 conv + folded-BN affine + SiLU on flattened NHWC activations.

    x_flat: (n*h*w, Cin) f32; w9_bf16: (9, Cin, Cout) bf16, tap t = kh*3+kw holds the
    (Cin, Cout) matrix of torch weight[:, :, kh, kw]^T.  Returns (n*h*w, Cout) f32.
    """
    cin = x_flat.shape[1]
    cout = w9_bf16.shape[-1]
    hp, wp = h + 2, w + 2
    lout = h * wp                                # h rows of wp cols; cols >= w are garbage
    mpad = ((hp * wp + 2 + 7) // 8) * 8          # taps read up to (lout-1) + 2*wp + 2
    xp = jnp.pad(x_flat.reshape(n, h, w, cin), ((0, 0), (1, 1), (1, 1), (0, 0)))
    xp = xp.reshape(n, hp * wp, cin)
    xp = jnp.pad(xp, ((0, 0), (0, mpad - hp * wp), (0, 0)))
    scale = scale.reshape(1, cout).astype(jnp.float32)
    bias = bias.reshape(1, cout).astype(jnp.float32)
    out = pl.pallas_call(
        functools.partial(_conv3x3_affine_silu_kernel, Wp=wp),
        out_shape=jax.ShapeDtypeStruct((n, lout, cout), jnp.float32),
        grid=(n,),
        in_specs=[
            pl.BlockSpec((1, mpad, cin), lambda i: (i, 0, 0)),
            pl.BlockSpec((9, cin, cout), lambda i: (0, 0, 0)),
            pl.BlockSpec((1, cout), lambda i: (0, 0)),
            pl.BlockSpec((1, cout), lambda i: (0, 0)),
        ],
        out_specs=pl.BlockSpec((1, lout, cout), lambda i: (i, 0, 0)),
        compiler_params=pltpu.CompilerParams(
            dimension_semantics=("parallel",), vmem_limit_bytes=_VMEM_LIMIT),
    )(xp, w9_bf16, scale, bias)
    out = out.reshape(n, h, wp, cout)[:, :, :w, :]   # crop the padding columns
    return out.reshape(n * h * w, cout)


# ----------------------------------------------------------------------------
# Kernel 3: whole MHSA path fused — q/k/v projections (+bias), per-head softmax
# attention, head merge — one grid step per image, NHWC layout in and out.
# ----------------------------------------------------------------------------
def _mhsa_fused_kernel(x_ref, w_ref, b_ref, o_ref, *, heads):
    L, C = o_ref.shape
    d = C // heads
    xb = x_ref[...].astype(jnp.bfloat16)
    q = jnp.dot(xb, w_ref[0], preferred_element_type=jnp.float32) + b_ref[0]
    k = jnp.dot(xb, w_ref[1], preferred_element_type=jnp.float32) + b_ref[1]
    v = jnp.dot(xb, w_ref[2], preferred_element_type=jnp.float32) + b_ref[2]
    col = jax.lax.broadcasted_iota(jnp.int32, (1, C), 1)
    out = jnp.zeros((L, C), jnp.float32)
    for hd in range(heads):
        msk = ((col >= hd * d) & (col < (hd + 1) * d)).astype(jnp.float32)
        # energy[i, j] = sum_{c in head hd} q[i, c] * k[j, c]   (no 1/sqrt(d), as in reference)
        e = jax.lax.dot_general(q, k * msk, (((1,), (1,)), ((), ())),
                                preferred_element_type=jnp.float32)        # (L, L)
        m = jnp.max(e, axis=-1, keepdims=True)
        p = jnp.exp(e - m)
        inv = pl.reciprocal(jnp.sum(p, axis=-1, keepdims=True), approx=True)
        attn = p * inv
        # attn @ (v masked to head hd) only contributes to this head's output channels.
        out = out + jnp.dot(attn, v * msk, preferred_element_type=jnp.float32)
    o_ref[...] = out.astype(o_ref.dtype)


def mhsa_fused(x_flat, w_qkv_bf16, b_qkv, n, heads):
    """x_flat: (n*L, C) f32; w_qkv_bf16: (3, C, C) bf16 stacked (q,k,v) weights (Cin, Cout);
    b_qkv: (3, 1, C) f32 biases.  Returns (n*L, C) f32 (same NHWC-flat layout)."""
    m, c = x_flat.shape
    l = m // n
    return pl.pallas_call(
        functools.partial(_mhsa_fused_kernel, heads=heads),
        out_shape=jax.ShapeDtypeStruct((m, c), jnp.float32),
        grid=(n,),
        in_specs=[
            pl.BlockSpec((l, c), lambda i: (i, 0)),
            pl.BlockSpec((3, c, c), lambda i: (0, 0, 0)),
            pl.BlockSpec((3, 1, c), lambda i: (0, 0, 0)),
        ],
        out_specs=pl.BlockSpec((l, c), lambda i: (i, 0)),
        compiler_params=pltpu.CompilerParams(
            dimension_semantics=("parallel",), vmem_limit_bytes=_VMEM_LIMIT),
    )(x_flat, w_qkv_bf16, b_qkv)


# ----------------------------------------------------------------------------
# Module-level glue (NHWC-flat throughout; permutes only at entry/exit)
# ----------------------------------------------------------------------------
def bottleneck_mhsa_forward(x_flat, p, n, h, w, heads):
    """MHSA_Bottleneck_ with shortcut=False: 3x3 Conv -> 3x3 Conv -> MHSA."""
    y = conv3x3_affine_silu(x_flat, p["cv1_w9"], p["cv1_scale"], p["cv1_bias"], n, h, w)
    y = conv3x3_affine_silu(y, p["cv2_w9"], p["cv2_scale"], p["cv2_bias"], n, h, w)
    return mhsa_fused(y, p["mhsa_w"], p["mhsa_b"], n, heads)


def c2f_mhsa_forward(x_nchw, params, c, heads=4):
    """C2f_MHSA forward.  x: NCHW -> NCHW."""
    n, c1, h, w = x_nchw.shape
    x_flat = x_nchw.transpose(0, 2, 3, 1).reshape(n * h * w, c1)      # entry permute only
    y = matmul_affine_act(x_flat, params["cv1_wT"], params["cv1_scale"],
                          params["cv1_bias"], act=True)               # (M, 2c)
    y0, y1 = y[:, :c], y[:, c:]
    y2 = bottleneck_mhsa_forward(y1, params["m0"], n, h, w, heads)
    ycat = jnp.concatenate([y0, y1, y2], axis=-1)                     # (M, 3c)
    out = matmul_affine_act(ycat, params["cv2_wT"], params["cv2_scale"],
                            params["cv2_bias"], act=True)             # (M, c2)
    c2 = out.shape[-1]
    return out.reshape(n, h, w, c2).transpose(0, 3, 1, 2)             # exit permute only


# ----------------------------------------------------------------------------
# Deterministic synthetic parameters (eval-mode BN folded into scale/bias, eps=1e-5),
# pre-laid-out for the kernels (transposed / stacked, matmul weights in bf16).
# ----------------------------------------------------------------------------
def init_params(key, c1, c2, n=1, e=0.5):
    c = int(c2 * e)
    keys = iter(jax.random.split(key, 64))
    nxt = lambda: next(keys)
    conv_w = lambda shape: 0.1 * jax.random.normal(nxt(), shape, jnp.float32)

    def bn(cn):
        gamma = jax.random.uniform(nxt(), (cn,), jnp.float32, 0.5, 1.5)
        beta = 0.1 * jax.random.normal(nxt(), (cn,), jnp.float32)
        mean = 0.1 * jax.random.normal(nxt(), (cn,), jnp.float32)
        var = jax.random.uniform(nxt(), (cn,), jnp.float32, 0.5, 1.5)
        scale = gamma / jnp.sqrt(var + 1e-5)
        return scale, beta - mean * scale

    params = {}
    w = conv_w((2 * c, c1))                               # torch 1x1 weight (Cout, Cin)
    params["cv1_wT"] = w.T.astype(jnp.bfloat16)
    params["cv1_scale"], params["cv1_bias"] = bn(2 * c)
    w = conv_w((c2, (2 + n) * c))
    params["cv2_wT"] = w.T.astype(jnp.bfloat16)
    params["cv2_scale"], params["cv2_bias"] = bn(c2)

    m = {}
    for name in ("cv1", "cv2"):                           # torch 3x3 weight (Cout, Cin, 3, 3)
        w = conv_w((c, c, 3, 3))
        m[name + "_w9"] = w.transpose(2, 3, 1, 0).reshape(9, c, c).astype(jnp.bfloat16)
        m[name + "_scale"], m[name + "_bias"] = bn(c)
    wq, wk, wv = (conv_w((c, c)) for _ in range(3))       # MHSA 1x1 convs (with bias)
    bq, bk, bv = (0.1 * jax.random.normal(nxt(), (c,), jnp.float32) for _ in range(3))
    m["mhsa_w"] = jnp.stack([wq.T, wk.T, wv.T]).astype(jnp.bfloat16)   # (3, Cin, Cout)
    m["mhsa_b"] = jnp.stack([bq, bk, bv]).reshape(3, 1, c).astype(jnp.float32)
    params["m0"] = m
    return params, c


if __name__ == "__main__":
    key = jax.random.PRNGKey(0)
    kx, kp = jax.random.split(key)

    # C2f_MHSA(c1=8, c2=16, n=1, shortcut=False, e=0.5); input NCHW (2, 8, 16, 16)
    c1, c2 = 8, 16
    n, h, w = 2, 16, 16
    x = jax.random.normal(kx, (n, c1, h, w), jnp.float32)
    params, c = init_params(kp, c1=c1, c2=c2, n=1, e=0.5)

    fwd = jax.jit(functools.partial(c2f_mhsa_forward, c=c, heads=4))
    out = jax.block_until_ready(fwd(x, params))
    assert out.shape == (n, c2, h, w), out.shape
    assert bool(jnp.all(jnp.isfinite(out)))
    print("KERNEL_OK")
</pallas_src>

<mosaic_0001>
module attributes {stable_mosaic.version = 11 : i64} {
  func.func @_matmul_affine_act_kernel(%arg0: i32, %arg1: memref<256x8xf32, #tpu.memory_space<vmem>>, %arg2: memref<8x16xbf16, #tpu.memory_space<vmem>>, %arg3: memref<1x16xf32, #tpu.memory_space<vmem>>, %arg4: memref<1x16xf32, #tpu.memory_space<vmem>>, %arg5: memref<256x16xf32, #tpu.memory_space<vmem>>) attributes {dimension_semantics = [#tpu.dimension_semantics<parallel>], iteration_bounds = array<i64: 2>, scalar_prefetch = 0 : i64, scratch_operands = 0 : i64, tpu.core_type = #tpu.core_type<tc>, window_params = [{transform_indices = @transform_0, window_bounds = array<i64: 256, 8>}, {pipeline_mode = #tpu.pipeline_mode<synchronous>, transform_indices = @transform_1, window_bounds = array<i64: 8, 16>}, {pipeline_mode = #tpu.pipeline_mode<synchronous>, transform_indices = @transform_2, window_bounds = array<i64: 1, 16>}, {pipeline_mode = #tpu.pipeline_mode<synchronous>, transform_indices = @transform_3, window_bounds = array<i64: 1, 16>}, {transform_indices = @transform_4, window_bounds = array<i64: 256, 16>}]} {
    %c0 = arith.constant 0 : index
    %c0_0 = arith.constant 0 : index
    %0 = vector.load %arg1[%c0, %c0_0] : memref<256x8xf32, #tpu.memory_space<vmem>>, vector<256x8xf32>
    %1 = arith.truncf %0 : vector<256x8xf32> to vector<256x8xbf16>
    %c0_1 = arith.constant 0 : index
    %c0_2 = arith.constant 0 : index
    %2 = vector.load %arg2[%c0_1, %c0_2] : memref<8x16xbf16, #tpu.memory_space<vmem>>, vector<8x16xbf16>
    %cst = arith.constant dense<0.000000e+00> : vector<256x16xf32>
    %3 = tpu.matmul %1, %2, %cst {dimension_numbers = #tpu.dot_dimension_numbers<[1], [0], [0], [1], [0, 0, 1, 1], [], []>} : vector<256x8xbf16>, vector<8x16xbf16>, vector<256x16xf32> -> vector<256x16xf32>
    %c0_3 = arith.constant 0 : index
    %c0_4 = arith.constant 0 : index
    %4 = vector.load %arg3[%c0_3, %c0_4] : memref<1x16xf32, #tpu.memory_space<vmem>>, vector<1x16xf32>
    %5 = vector.broadcast %4 : vector<1x16xf32> to vector<256x16xf32>
    %6 = arith.mulf %3, %5 : vector<256x16xf32>
    %c0_5 = arith.constant 0 : index
    %c0_6 = arith.constant 0 : index
    %7 = vector.load %arg4[%c0_5, %c0_6] : memref<1x16xf32, #tpu.memory_space<vmem>>, vector<1x16xf32>
    %8 = vector.broadcast %7 : vector<1x16xf32> to vector<256x16xf32>
    %9 = arith.addf %6, %8 : vector<256x16xf32>
    %10 = arith.negf %9 : vector<256x16xf32>
    %11 = math.exp %10 : vector<256x16xf32>
    %cst_7 = arith.constant 1.000000e+00 : f32
    %12 = vector.broadcast %cst_7 : f32 to vector<256x16xf32>
    %13 = arith.addf %12, %11 : vector<256x16xf32>
    %14 = arith.divf %12, %13 : vector<256x16xf32>
    %15 = arith.mulf %9, %14 : vector<256x16xf32>
    %c0_8 = arith.constant 0 : index
    %c0_9 = arith.constant 0 : index
    %16 = vector.load %arg5[%c0_8, %c0_9] : memref<256x16xf32, #tpu.memory_space<vmem>>, vector<256x16xf32>
    tpu.vector_store %arg5[%c0_8, %c0_9], %15 {strides = array<i32>} : memref<256x16xf32, #tpu.memory_space<vmem>>, vector<256x16xf32>,
    return
  }
  func.func @transform_0(%arg0: i32) -> (i32, i32) {
    %c0_i32 = arith.constant 0 : i32
    %c0_i32_0 = arith.constant 0 : i32
    return %arg0, %c0_i32 : i32, i32
  }
  func.func @transform_1(%arg0: i32) -> (i32, i32) {
    %c0_i32 = arith.constant 0 : i32
    %c0_i32_0 = arith.constant 0 : i32
    %c0_i32_1 = arith.constant 0 : i32
    return %c0_i32, %c0_i32_0 : i32, i32
  }
  func.func @transform_2(%arg0: i32) -> (i32, i32) {
    %c0_i32 = arith.constant 0 : i32
    %c0_i32_0 = arith.constant 0 : i32
    %c0_i32_1 = arith.constant 0 : i32
    return %c0_i32, %c0_i32_0 : i32, i32
  }
  func.func @transform_3(%arg0: i32) -> (i32, i32) {
    %c0_i32 = arith.constant 0 : i32
    %c0_i32_0 = arith.constant 0 : i32
    %c0_i32_1 = arith.constant 0 : i32
    return %c0_i32, %c0_i32_0 : i32, i32
  }
  func.func @transform_4(%arg0: i32) -> (i32, i32) {
    %c0_i32 = arith.constant 0 : i32
    %c0_i32_0 = arith.constant 0 : i32
    return %arg0, %c0_i32 : i32, i32
  }
}

module attributes {stable_mosaic.version = 11 : i64} {
  func.func @_conv3x3_affine_silu_kernel(%arg0: i32, %arg1: memref<1x328x8xf32, #tpu.memory_space<vmem>>, %arg2: memref<9x8x8xbf16, #tpu.memory_space<vmem>>, %arg3: memref<1x8xf32, #tpu.memory_space<vmem>>, %arg4: memref<1x8xf32, #tpu.memory_space<vmem>>, %arg5: memref<1x288x8xf32, #tpu.memory_space<vmem>>) attributes {dimension_semantics = [#tpu.dimension_semantics<parallel>], iteration_bounds = array<i64: 2>, scalar_prefetch = 0 : i64, scratch_operands = 0 : i64, tpu.core_type = #tpu.core_type<tc>, window_params = [{transform_indices = @transform_0, window_bounds = array<i64: 1, 328, 8>}, {pipeline_mode = #tpu.pipeline_mode<synchronous>, transform_indices = @transform_1, window_bounds = array<i64: 9, 8, 8>}, {pipeline_mode = #tpu.pipeline_mode<synchronous>, transform_indices = @transform_2, window_bounds = array<i64: 1, 8>}, {pipeline_mode = #tpu.pipeline_mode<synchronous>, transform_indices = @transform_3, window_bounds = array<i64: 1, 8>}, {transform_indices = @transform_4, window_bounds = array<i64: 1, 288, 8>}]} {
    %cst = arith.constant 0.000000e+00 : f32
    %0 = vector.broadcast %cst : f32 to vector<288x8xf32>
    %c0 = arith.constant 0 : index
    %c0_0 = arith.constant 0 : index
    %c0_1 = arith.constant 0 : index
    %1 = vector.load %arg1[%c0, %c0_0, %c0_1] : memref<1x328x8xf32, #tpu.memory_space<vmem>>, vector<1x288x8xf32>
    %2 = vector.shape_cast %1 : vector<1x288x8xf32> to vector<288x8xf32>
    %3 = arith.truncf %2 : vector<288x8xf32> to vector<288x8xbf16>
    %c0_2 = arith.constant 0 : index
    %c0_3 = arith.constant 0 : index
    %c0_4 = arith.constant 0 : index
    %4 = vector.load %arg2[%c0_2, %c0_3, %c0_4] : memref<9x8x8xbf16, #tpu.memory_space<vmem>>, vector<1x8x8xbf16>
    %5 = vector.shape_cast %4 : vector<1x8x8xbf16> to vector<8x8xbf16>
    %cst_5 = arith.constant dense<0.000000e+00> : vector<288x8xf32>
    %6 = tpu.matmul %3, %5, %cst_5 {dimension_numbers = #tpu.dot_dimension_numbers<[1], [0], [0], [1], [0, 0, 1, 1], [], []>} : vector<288x8xbf16>, vector<8x8xbf16>, vector<288x8xf32> -> vector<288x8xf32>
    %7 = arith.addf %0, %6 : vector<288x8xf32>
    %c0_6 = arith.constant 0 : index
    %c1 = arith.constant 1 : index
    %c0_7 = arith.constant 0 : index
    %8 = vector.load %arg1[%c0_6, %c1, %c0_7] : memref<1x328x8xf32, #tpu.memory_space<vmem>>, vector<1x288x8xf32>
    %9 = vector.shape_cast %8 : vector<1x288x8xf32> to vector<288x8xf32>
    %10 = arith.truncf %9 : vector<288x8xf32> to vector<288x8xbf16>
    %c1_8 = arith.constant 1 : index
    %c0_9 = arith.constant 0 : index
    %c0_10 = arith.constant 0 : index
    %11 = vector.load %arg2[%c1_8, %c0_9, %c0_10] : memref<9x8x8xbf16, #tpu.memory_space<vmem>>, vector<1x8x8xbf16>
    %12 = vector.shape_cast %11 : vector<1x8x8xbf16> to vector<8x8xbf16>
    %cst_11 = arith.constant dense<0.000000e+00> : vector<288x8xf32>
    %13 = tpu.matmul %10, %12, %cst_11 {dimension_numbers = #tpu.dot_dimension_numbers<[1], [0], [0], [1], [0, 0, 1, 1], [], []>} : vector<288x8xbf16>, vector<8x8xbf16>, vector<288x8xf32> -> vector<288x8xf32>
    %14 = arith.addf %7, %13 : vector<288x8xf32>
    %c0_12 = arith.constant 0 : index
    %c2 = arith.constant 2 : index
    %c0_13 = arith.constant 0 : index
    %15 = vector.load %arg1[%c0_12, %c2, %c0_13] : memref<1x328x8xf32, #tpu.memory_space<vmem>>, vector<1x288x8xf32>
    %16 = vector.shape_cast %15 : vector<1x288x8xf32> to vector<288x8xf32>
    %17 = arith.truncf %16 : vector<288x8xf32> to vector<288x8xbf16>
    %c2_14 = arith.constant 2 : index
    %c0_15 = arith.constant 0 : index
    %c0_16 = arith.constant 0 : index
    %18 = vector.load %arg2[%c2_14, %c0_15, %c0_16] : memref<9x8x8xbf16, #tpu.memory_space<vmem>>, vector<1x8x8xbf16>
    %19 = vector.shape_cast %18 : vector<1x8x8xbf16> to vector<8x8xbf16>
    %cst_17 = arith.constant dense<0.000000e+00> : vector<288x8xf32>
    %20 = tpu.matmul %17, %19, %cst_17 {dimension_numbers = #tpu.dot_dimension_numbers<[1], [0], [0], [1], [0, 0, 1, 1], [], []>} : vector<288x8xbf16>, vector<8x8xbf16>, vector<288x8xf32> -> vector<288x8xf32>
    %21 = arith.addf %14, %20 : vector<288x8xf32>
    %c0_18 = arith.constant 0 : index
    %c18 = arith.constant 18 : index
    %c0_19 = arith.constant 0 : index
    %22 = vector.load %arg1[%c0_18, %c18, %c0_19] : memref<1x328x8xf32, #tpu.memory_space<vmem>>, vector<1x288x8xf32>
    %23 = vector.shape_cast %22 : vector<1x288x8xf32> to vector<288x8xf32>
    %24 = arith.truncf %23 : vector<288x8xf32> to vector<288x8xbf16>
    %c3 = arith.constant 3 : index
    %c0_20 = arith.constant 0 : index
    %c0_21 = arith.constant 0 : index
    %25 = vector.load %arg2[%c3, %c0_20, %c0_21] : memref<9x8x8xbf16, #tpu.memory_space<vmem>>, vector<1x8x8xbf16>
    %26 = vector.shape_cast %25 : vector<1x8x8xbf16> to vector<8x8xbf16>
    %cst_22 = arith.constant dense<0.000000e+00> : vector<288x8xf32>
    %27 = tpu.matmul %24, %26, %cst_22 {dimension_numbers = #tpu.dot_dimension_numbers<[1], [0], [0], [1], [0, 0, 1, 1], [], []>} : vector<288x8xbf16>, vector<8x8xbf16>, vector<288x8xf32> -> vector<288x8xf32>
    %28 = arith.addf %21, %27 : vector<288x8xf32>
    %c0_23 = arith.constant 0 : index
    %c19 = arith.constant 19 : index
    %c0_24 = arith.constant 0 : index
    %29 = vector.load %arg1[%c0_23, %c19, %c0_24] : memref<1x328x8xf32, #tpu.memory_space<vmem>>, vector<1x288x8xf32>
    %30 = vector.shape_cast %29 : vector<1x288x8xf32> to vector<288x8xf32>
    %31 = arith.truncf %30 : vector<288x8xf32> to vector<288x8xbf16>
    %c4 = arith.constant 4 : index
    %c0_25 = arith.constant 0 : index
    %c0_26 = arith.constant 0 : index
    %32 = vector.load %arg2[%c4, %c0_25, %c0_26] : memref<9x8x8xbf16, #tpu.memory_space<vmem>>, vector<1x8x8xbf16>
    %33 = vector.shape_cast %32 : vector<1x8x8xbf16> to vector<8x8xbf16>
    %cst_27 = arith.constant dense<0.000000e+00> : vector<288x8xf32>
    %34 = tpu.matmul %31, %33, %cst_27 {dimension_numbers = #tpu.dot_dimension_numbers<[1], [0], [0], [1], [0, 0, 1, 1], [], []>} : vector<288x8xbf16>, vector<8x8xbf16>, vector<288x8xf32> -> vector<288x8xf32>
    %35 = arith.addf %28, %34 : vector<288x8xf32>
    %c0_28 = arith.constant 0 : index
    %c20 = arith.constant 20 : index
    %c0_29 = arith.constant 0 : index
    %36 = vector.load %arg1[%c0_28, %c20, %c0_29] : memref<1x328x8xf32, #tpu.memory_space<vmem>>, vector<1x288x8xf32>
    %37 = vector.shape_cast %36 : vector<1x288x8xf32> to vector<288x8xf32>
    %38 = arith.truncf %37 : vector<288x8xf32> to vector<288x8xbf16>
    %c5 = arith.constant 5 : index
    %c0_30 = arith.constant 0 : index
    %c0_31 = arith.constant 0 : index
    %39 = vector.load %arg2[%c5, %c0_30, %c0_31] : memref<9x8x8xbf16, #tpu.memory_space<vmem>>, vector<1x8x8xbf16>
    %40 = vector.shape_cast %39 : vector<1x8x8xbf16> to vector<8x8xbf16>
    %cst_32 = arith.constant dense<0.000000e+00> : vector<288x8xf32>
    %41 = tpu.matmul %38, %40, %cst_32 {dimension_numbers = #tpu.dot_dimension_numbers<[1], [0], [0], [1], [0, 0, 1, 1], [], []>} : vector<288x8xbf16>, vector<8x8xbf16>, vector<288x8xf32> -> vector<288x8xf32>
    %42 = arith.addf %35, %41 : vector<288x8xf32>
    %c0_33 = arith.constant 0 : index
    %c36 = arith.constant 36 : index
    %c0_34 = arith.constant 0 : index
    %43 = vector.load %arg1[%c0_33, %c36, %c0_34] : memref<1x328x8xf32, #tpu.memory_space<vmem>>, vector<1x288x8xf32>
    %44 = vector.shape_cast %43 : vector<1x288x8xf32> to vector<288x8xf32>
    %45 = arith.truncf %44 : vector<288x8xf32> to vector<288x8xbf16>
    %c6 = arith.constant 6 : index
    %c0_35 = arith.constant 0 : index
    %c0_36 = arith.constant 0 : index
    %46 = vector.load %arg2[%c6, %c0_35, %c0_36] : memref<9x8x8xbf16, #tpu.memory_space<vmem>>, vector<1x8x8xbf16>
    %47 = vector.shape_cast %46 : vector<1x8x8xbf16> to vector<8x8xbf16>
    %cst_37 = arith.constant dense<0.000000e+00> : vector<288x8xf32>
    %48 = tpu.matmul %45, %47, %cst_37 {dimension_numbers = #tpu.dot_dimension_numbers<[1], [0], [0], [1], [0, 0, 1, 1], [], []>} : vector<288x8xbf16>, vector<8x8xbf16>, vector<288x8xf32> -> vector<288x8xf32>
    %49 = arith.addf %42, %48 : vector<288x8xf32>
    %c0_38 = arith.constant 0 : index
    %c37 = arith.constant 37 : index
    %c0_39 = arith.constant 0 : index
    %50 = vector.load %arg1[%c0_38, %c37, %c0_39] : memref<1x328x8xf32, #tpu.memory_space<vmem>>, vector<1x288x8xf32>
    %51 = vector.shape_cast %50 : vector<1x288x8xf32> to vector<288x8xf32>
    %52 = arith.truncf %51 : vector<288x8xf32> to vector<288x8xbf16>
    %c7 = arith.constant 7 : index
    %c0_40 = arith.constant 0 : index
    %c0_41 = arith.constant 0 : index
    %53 = vector.load %arg2[%c7, %c0_40, %c0_41] : memref<9x8x8xbf16, #tpu.memory_space<vmem>>, vector<1x8x8xbf16>
    %54 = vector.shape_cast %53 : vector<1x8x8xbf16> to vector<8x8xbf16>
    %cst_42 = arith.constant dense<0.000000e+00> : vector<288x8xf32>
    %55 = tpu.matmul %52, %54, %cst_42 {dimension_numbers = #tpu.dot_dimension_numbers<[1], [0], [0], [1], [0, 0, 1, 1], [], []>} : vector<288x8xbf16>, vector<8x8xbf16>, vector<288x8xf32> -> vector<288x8xf32>
    %56 = arith.addf %49, %55 : vector<288x8xf32>
    %c0_43 = arith.constant 0 : index
    %c38 = arith.constant 38 : index
    %c0_44 = arith.constant 0 : index
    %57 = vector.load %arg1[%c0_43, %c38, %c0_44] : memref<1x328x8xf32, #tpu.memory_space<vmem>>, vector<1x288x8xf32>
    %58 = vector.shape_cast %57 : vector<1x288x8xf32> to vector<288x8xf32>
    %59 = arith.truncf %58 : vector<288x8xf32> to vector<288x8xbf16>
    %c8 = arith.constant 8 : index
    %c0_45 = arith.constant 0 : index
    %c0_46 = arith.constant 0 : index
    %60 = vector.load %arg2[%c8, %c0_45, %c0_46] : memref<9x8x8xbf16, #tpu.memory_space<vmem>>, vector<1x8x8xbf16>
    %61 = vector.shape_cast %60 : vector<1x8x8xbf16> to vector<8x8xbf16>
    %cst_47 = arith.constant dense<0.000000e+00> : vector<288x8xf32>
    %62 = tpu.matmul %59, %61, %cst_47 {dimension_numbers = #tpu.dot_dimension_numbers<[1], [0], [0], [1], [0, 0, 1, 1], [], []>} : vector<288x8xbf16>, vector<8x8xbf16>, vector<288x8xf32> -> vector<288x8xf32>
    %63 = arith.addf %56, %62 : vector<288x8xf32>
    %c0_48 = arith.constant 0 : index
    %c0_49 = arith.constant 0 : index
    %64 = vector.load %arg3[%c0_48, %c0_49] : memref<1x8xf32, #tpu.memory_space<vmem>>, vector<1x8xf32>
    %65 = vector.broadcast %64 : vector<1x8xf32> to vector<288x8xf32>
    %66 = arith.mulf %63, %65 : vector<288x8xf32>
    %c0_50 = arith.constant 0 : index
    %c0_51 = arith.constant 0 : index
    %67 = vector.load %arg4[%c0_50, %c0_51] : memref<1x8xf32, #tpu.memory_space<vmem>>, vector<1x8xf32>
    %68 = vector.broadcast %67 : vector<1x8xf32> to vector<288x8xf32>
    %69 = arith.addf %66, %68 : vector<288x8xf32>
    %70 = arith.negf %69 : vector<288x8xf32>
    %71 = math.exp %70 : vector<288x8xf32>
    %cst_52 = arith.constant 1.000000e+00 : f32
    %72 = vector.broadcast %cst_52 : f32 to vector<288x8xf32>
    %73 = arith.addf %72, %71 : vector<288x8xf32>
    %74 = arith.divf %72, %73 : vector<288x8xf32>
    %75 = arith.mulf %69, %74 : vector<288x8xf32>
    %c0_53 = arith.constant 0 : index
    %c0_54 = arith.constant 0 : index
    %c0_55 = arith.constant 0 : index
    %76 = vector.load %arg5[%c0_53, %c0_54, %c0_55] : memref<1x288x8xf32, #tpu.memory_space<vmem>>, vector<1x288x8xf32>
    %77 = vector.shape_cast %76 : vector<1x288x8xf32> to vector<288x8xf32>
    %78 = vector.shape_cast %75 : vector<288x8xf32> to vector<1x288x8xf32>
    tpu.vector_store %arg5[%c0_53, %c0_54, %c0_55], %78 {strides = array<i32>} : memref<1x288x8xf32, #tpu.memory_space<vmem>>, vector<1x288x8xf32>,
    return
  }
  func.func @transform_0(%arg0: i32) -> (i32, i32, i32) {
    %c0_i32 = arith.constant 0 : i32
    %c0_i32_0 = arith.constant 0 : i32
    %c0_i32_1 = arith.constant 0 : i32
    return %arg0, %c0_i32, %c0_i32_0 : i32, i32, i32
  }
  func.func @transform_1(%arg0: i32) -> (i32, i32, i32) {
    %c0_i32 = arith.constant 0 : i32
    %c0_i32_0 = arith.constant 0 : i32
    %c0_i32_1 = arith.constant 0 : i32
    %c0_i32_2 = arith.constant 0 : i32
    return %c0_i32, %c0_i32_0, %c0_i32_1 : i32, i32, i32
  }
  func.func @transform_2(%arg0: i32) -> (i32, i32) {
    %c0_i32 = arith.constant 0 : i32
    %c0_i32_0 = arith.constant 0 : i32
    %c0_i32_1 = arith.constant 0 : i32
    return %c0_i32, %c0_i32_0 : i32, i32
  }
  func.func @transform_3(%arg0: i32) -> (i32, i32) {
    %c0_i32 = arith.constant 0 : i32
    %c0_i32_0 = arith.constant 0 : i32
    %c0_i32_1 = arith.constant 0 : i32
    return %c0_i32, %c0_i32_0 : i32, i32
  }
  func.func @transform_4(%arg0: i32) -> (i32, i32, i32) {
    %c0_i32 = arith.constant 0 : i32
    %c0_i32_0 = arith.constant 0 : i32
    %c0_i32_1 = arith.constant 0 : i32
    return %arg0, %c0_i32, %c0_i32_0 : i32, i32, i32
  }
}

module attributes {stable_mosaic.version = 11 : i64} {
  func.func @_mhsa_fused_kernel(%arg0: i32, %arg1: memref<256x8xf32, #tpu.memory_space<vmem>>, %arg2: memref<3x8x8xbf16, #tpu.memory_space<vmem>>, %arg3: memref<3x1x8xf32, #tpu.memory_space<vmem>>, %arg4: memref<256x8xf32, #tpu.memory_space<vmem>>) attributes {dimension_semantics = [#tpu.dimension_semantics<parallel>], iteration_bounds = array<i64: 2>, scalar_prefetch = 0 : i64, scratch_operands = 0 : i64, tpu.core_type = #tpu.core_type<tc>, window_params = [{transform_indices = @transform_0, window_bounds = array<i64: 256, 8>}, {pipeline_mode = #tpu.pipeline_mode<synchronous>, transform_indices = @transform_1, window_bounds = array<i64: 3, 8, 8>}, {pipeline_mode = #tpu.pipeline_mode<synchronous>, transform_indices = @transform_2, window_bounds = array<i64: 3, 1, 8>}, {transform_indices = @transform_3, window_bounds = array<i64: 256, 8>}]} {
    %c0 = arith.constant 0 : index
    %c0_0 = arith.constant 0 : index
    %0 = vector.load %arg1[%c0, %c0_0] : memref<256x8xf32, #tpu.memory_space<vmem>>, vector<256x8xf32>
    %1 = arith.truncf %0 : vector<256x8xf32> to vector<256x8xbf16>
    %c0_1 = arith.constant 0 : index
    %c0_2 = arith.constant 0 : index
    %c0_3 = arith.constant 0 : index
    %2 = vector.load %arg2[%c0_1, %c0_2, %c0_3] : memref<3x8x8xbf16, #tpu.memory_space<vmem>>, vector<1x8x8xbf16>
    %3 = vector.shape_cast %2 : vector<1x8x8xbf16> to vector<8x8xbf16>
    %cst = arith.constant dense<0.000000e+00> : vector<256x8xf32>
    %4 = tpu.matmul %1, %3, %cst {dimension_numbers = #tpu.dot_dimension_numbers<[1], [0], [0], [1], [0, 0, 1, 1], [], []>} : vector<256x8xbf16>, vector<8x8xbf16>, vector<256x8xf32> -> vector<256x8xf32>
    %c0_4 = arith.constant 0 : index
    %c0_5 = arith.constant 0 : index
    %c0_6 = arith.constant 0 : index
    %5 = vector.load %arg3[%c0_4, %c0_5, %c0_6] : memref<3x1x8xf32, #tpu.memory_space<vmem>>, vector<1x1x8xf32>
    %6 = vector.shape_cast %5 : vector<1x1x8xf32> to vector<1x8xf32>
    %7 = vector.broadcast %6 : vector<1x8xf32> to vector<256x8xf32>
    %8 = arith.addf %4, %7 : vector<256x8xf32>
    %c1 = arith.constant 1 : index
    %c0_7 = arith.constant 0 : index
    %c0_8 = arith.constant 0 : index
    %9 = vector.load %arg2[%c1, %c0_7, %c0_8] : memref<3x8x8xbf16, #tpu.memory_space<vmem>>, vector<1x8x8xbf16>
    %10 = vector.shape_cast %9 : vector<1x8x8xbf16> to vector<8x8xbf16>
    %cst_9 = arith.constant dense<0.000000e+00> : vector<256x8xf32>
    %11 = tpu.matmul %1, %10, %cst_9 {dimension_numbers = #tpu.dot_dimension_numbers<[1], [0], [0], [1], [0, 0, 1, 1], [], []>} : vector<256x8xbf16>, vector<8x8xbf16>, vector<256x8xf32> -> vector<256x8xf32>
    %c1_10 = arith.constant 1 : index
    %c0_11 = arith.constant 0 : index
    %c0_12 = arith.constant 0 : index
    %12 = vector.load %arg3[%c1_10, %c0_11, %c0_12] : memref<3x1x8xf32, #tpu.memory_space<vmem>>, vector<1x1x8xf32>
    %13 = vector.shape_cast %12 : vector<1x1x8xf32> to vector<1x8xf32>
    %14 = vector.broadcast %13 : vector<1x8xf32> to vector<256x8xf32>
    %15 = arith.addf %11, %14 : vector<256x8xf32>
    %c2 = arith.constant 2 : index
    %c0_13 = arith.constant 0 : index
    %c0_14 = arith.constant 0 : index
    %16 = vector.load %arg2[%c2, %c0_13, %c0_14] : memref<3x8x8xbf16, #tpu.memory_space<vmem>>, vector<1x8x8xbf16>
    %17 = vector.shape_cast %16 : vector<1x8x8xbf16> to vector<8x8xbf16>
    %cst_15 = arith.constant dense<0.000000e+00> : vector<256x8xf32>
    %18 = tpu.matmul %1, %17, %cst_15 {dimension_numbers = #tpu.dot_dimension_numbers<[1], [0], [0], [1], [0, 0, 1, 1], [], []>} : vector<256x8xbf16>, vector<8x8xbf16>, vector<256x8xf32> -> vector<256x8xf32>
    %c2_16 = arith.constant 2 : index
    %c0_17 = arith.constant 0 : index
    %c0_18 = arith.constant 0 : index
    %19 = vector.load %arg3[%c2_16, %c0_17, %c0_18] : memref<3x1x8xf32, #tpu.memory_space<vmem>>, vector<1x1x8xf32>
    %20 = vector.shape_cast %19 : vector<1x1x8xf32> to vector<1x8xf32>
    %21 = vector.broadcast %20 : vector<1x8xf32> to vector<256x8xf32>
    %22 = arith.addf %18, %21 : vector<256x8xf32>
    %23 = tpu.iota {dimensions = array<i32: 1>} : vector<1x8xi32>
    %cst_19 = arith.constant 0.000000e+00 : f32
    %24 = vector.broadcast %cst_19 : f32 to vector<256x8xf32>
    %c0_i32 = arith.constant 0 : i32
    %25 = vector.broadcast %c0_i32 : i32 to vector<1x8xi32>
    %26 = arith.cmpi sge, %23, %25 : vector<1x8xi32>
    %c2_i32 = arith.constant 2 : i32
    %27 = vector.broadcast %c2_i32 : i32 to vector<1x8xi32>
    %28 = arith.cmpi slt, %23, %27 : vector<1x8xi32>
    %29 = arith.andi %26, %28 : vector<1x8xi1>
    %30 = arith.extui %29 : vector<1x8xi1> to vector<1x8xi32>
    %31 = arith.sitofp %30 : vector<1x8xi32> to vector<1x8xf32>
    %32 = vector.broadcast %31 : vector<1x8xf32> to vector<256x8xf32>
    %33 = arith.mulf %15, %32 : vector<256x8xf32>
    %cst_20 = arith.constant dense<0.000000e+00> : vector<256x256xf32>
    %34 = tpu.matmul %8, %33, %cst_20 {dimension_numbers = #tpu.dot_dimension_numbers<[1], [1], [0], [0], [0, 0, 1, 0], [], []>} : vector<256x8xf32>, vector<256x8xf32>, vector<256x256xf32> -> vector<256x256xf32>
    %cst_21 = arith.constant dense<0xFF800000> : vector<256xf32>
    %35 = vector.multi_reduction <maximumf>, %34, %cst_21 [1] : vector<256x256xf32> to vector<256xf32>
    %36 = vector.shape_cast %35 : vector<256xf32> to vector<256x1xf32>
    %37 = vector.broadcast %36 : vector<256x1xf32> to vector<256x256xf32>
    %38 = arith.subf %34, %37 : vector<256x256xf32>
    %39 = math.exp %38 : vector<256x256xf32>
    %cst_22 = arith.constant dense<0.000000e+00> : vector<256xf32>
    %40 = vector.multi_reduction <add>, %39, %cst_22 [1] : vector<256x256xf32> to vector<256xf32>
    %41 = vector.shape_cast %40 : vector<256xf32> to vector<256x1xf32>
    %42 = tpu.reciprocal %41 {approx = true} : vector<256x1xf32> -> vector<256x1xf32>
    %43 = vector.broadcast %42 : vector<256x1xf32> to vector<256x256xf32>
    %44 = arith.mulf %39, %43 : vector<256x256xf32>
    %45 = vector.broadcast %31 : vector<1x8xf32> to vector<256x8xf32>
    %46 = arith.mulf %22, %45 : vector<256x8xf32>
    %cst_23 = arith.constant dense<0.000000e+00> : vector<256x8xf32>
    %47 = tpu.matmul %44, %46, %cst_23 {dimension_numbers = #tpu.dot_dimension_numbers<[1], [0], [0], [1], [0, 0, 1, 1], [], []>} : vector<256x256xf32>, vector<256x8xf32>, vector<256x8xf32> -> vector<256x8xf32>
    %48 = arith.addf %24, %47 : vector<256x8xf32>
    %c2_i32_24 = arith.constant 2 : i32
    %49 = vector.broadcast %c2_i32_24 : i32 to vector<1x8xi32>
    %50 = arith.cmpi sge, %23, %49 : vector<1x8xi32>
    %c4_i32 = arith.constant 4 : i32
    %51 = vector.broadcast %c4_i32 : i32 to vector<1x8xi32>
    %52 = arith.cmpi slt, %23, %51 : vector<1x8xi32>
    %53 = arith.andi %50, %52 : vector<1x8xi1>
    %54 = arith.extui %53 : vector<1x8xi1> to vector<1x8xi32>
    %55 = arith.sitofp %54 : vector<1x8xi32> to vector<1x8xf32>
    %56 = vector.broadcast %55 : vector<1x8xf32> to vector<256x8xf32>
    %57 = arith.mulf %15, %56 : vector<256x8xf32>
    %cst_25 = arith.constant dense<0.000000e+00> : vector<256x256xf32>
    %58 = tpu.matmul %8, %57, %cst_25 {dimension_numbers = #tpu.dot_dimension_numbers<[1], [1], [0], [0], [0, 0, 1, 0], [], []>} : vector<256x8xf32>, vector<256x8xf32>, vector<256x256xf32> -> vector<256x256xf32>
    %cst_26 = arith.constant dense<0xFF800000> : vector<256xf32>
    %59 = vector.multi_reduction <maximumf>, %58, %cst_26 [1] : vector<256x256xf32> to vector<256xf32>
    %60 = vector.shape_cast %59 : vector<256xf32> to vector<256x1xf32>
    %61 = vector.broadcast %60 : vector<256x1xf32> to vector<256x256xf32>
    %62 = arith.subf %58, %61 : vector<256x256xf32>
    %63 = math.exp %62 : vector<256x256xf32>
    %cst_27 = arith.constant dense<0.000000e+00> : vector<256xf32>
    %64 = vector.multi_reduction <add>, %63, %cst_27 [1] : vector<256x256xf32> to vector<256xf32>
    %65 = vector.shape_cast %64 : vector<256xf32> to vector<256x1xf32>
    %66 = tpu.reciprocal %65 {approx = true} : vector<256x1xf32> -> vector<256x1xf32>
    %67 = vector.broadcast %66 : vector<256x1xf32> to vector<256x256xf32>
    %68 = arith.mulf %63, %67 : vector<256x256xf32>
    %69 = vector.broadcast %55 : vector<1x8xf32> to vector<256x8xf32>
    %70 = arith.mulf %22, %69 : vector<256x8xf32>
    %cst_28 = arith.constant dense<0.000000e+00> : vector<256x8xf32>
    %71 = tpu.matmul %68, %70, %cst_28 {dimension_numbers = #tpu.dot_dimension_numbers<[1], [0], [0], [1], [0, 0, 1, 1], [], []>} : vector<256x256xf32>, vector<256x8xf32>, vector<256x8xf32> -> vector<256x8xf32>
    %72 = arith.addf %48, %71 : vector<256x8xf32>
    %c4_i32_29 = arith.constant 4 : i32
    %73 = vector.broadcast %c4_i32_29 : i32 to vector<1x8xi32>
    %74 = arith.cmpi sge, %23, %73 : vector<1x8xi32>
    %c6_i32 = arith.constant 6 : i32
    %75 = vector.broadcast %c6_i32 : i32 to vector<1x8xi32>
    %76 = arith.cmpi slt, %23, %75 : vector<1x8xi32>
    %77 = arith.andi %74, %76 : vector<1x8xi1>
    %78 = arith.extui %77 : vector<1x8xi1> to vector<1x8xi32>
    %79 = arith.sitofp %78 : vector<1x8xi32> to vector<1x8xf32>
    %80 = vector.broadcast %79 : vector<1x8xf32> to vector<256x8xf32>
    %81 = arith.mulf %15, %80 : vector<256x8xf32>
    %cst_30 = arith.constant dense<0.000000e+00> : vector<256x256xf32>
    %82 = tpu.matmul %8, %81, %cst_30 {dimension_numbers = #tpu.dot_dimension_numbers<[1], [1], [0], [0], [0, 0, 1, 0], [], []>} : vector<256x8xf32>, vector<256x8xf32>, vector<256x256xf32> -> vector<256x256xf32>
    %cst_31 = arith.constant dense<0xFF800000> : vector<256xf32>
    %83 = vector.multi_reduction <maximumf>, %82, %cst_31 [1] : vector<256x256xf32> to vector<256xf32>
    %84 = vector.shape_cast %83 : vector<256xf32> to vector<256x1xf32>
    %85 = vector.broadcast %84 : vector<256x1xf32> to vector<256x256xf32>
    %86 = arith.subf %82, %85 : vector<256x256xf32>
    %87 = math.exp %86 : vector<256x256xf32>
    %cst_32 = arith.constant dense<0.000000e+00> : vector<256xf32>
    %88 = vector.multi_reduction <add>, %87, %cst_32 [1] : vector<256x256xf32> to vector<256xf32>
    %89 = vector.shape_cast %88 : vector<256xf32> to vector<256x1xf32>
    %90 = tpu.reciprocal %89 {approx = true} : vector<256x1xf32> -> vector<256x1xf32>
    %91 = vector.broadcast %90 : vector<256x1xf32> to vector<256x256xf32>
    %92 = arith.mulf %87, %91 : vector<256x256xf32>
    %93 = vector.broadcast %79 : vector<1x8xf32> to vector<256x8xf32>
    %94 = arith.mulf %22, %93 : vector<256x8xf32>
    %cst_33 = arith.constant dense<0.000000e+00> : vector<256x8xf32>
    %95 = tpu.matmul %92, %94, %cst_33 {dimension_numbers = #tpu.dot_dimension_numbers<[1], [0], [0], [1], [0, 0, 1, 1], [], []>} : vector<256x256xf32>, vector<256x8xf32>, vector<256x8xf32> -> vector<256x8xf32>
    %96 = arith.addf %72, %95 : vector<256x8xf32>
    %c6_i32_34 = arith.constant 6 : i32
    %97 = vector.broadcast %c6_i32_34 : i32 to vector<1x8xi32>
    %98 = arith.cmpi sge, %23, %97 : vector<1x8xi32>
    %c8_i32 = arith.constant 8 : i32
    %99 = vector.broadcast %c8_i32 : i32 to vector<1x8xi32>
    %100 = arith.cmpi slt, %23, %99 : vector<1x8xi32>
    %101 = arith.andi %98, %100 : vector<1x8xi1>
    %102 = arith.extui %101 : vector<1x8xi1> to vector<1x8xi32>
    %103 = arith.sitofp %102 : vector<1x8xi32> to vector<1x8xf32>
    %104 = vector.broadcast %103 : vector<1x8xf32> to vector<256x8xf32>
    %105 = arith.mulf %15, %104 : vector<256x8xf32>
    %cst_35 = arith.constant dense<0.000000e+00> : vector<256x256xf32>
    %106 = tpu.matmul %8, %105, %cst_35 {dimension_numbers = #tpu.dot_dimension_numbers<[1], [1], [0], [0], [0, 0, 1, 0], [], []>} : vector<256x8xf32>, vector<256x8xf32>, vector<256x256xf32> -> vector<256x256xf32>
    %cst_36 = arith.constant dense<0xFF800000> : vector<256xf32>
    %107 = vector.multi_reduction <maximumf>, %106, %cst_36 [1] : vector<256x256xf32> to vector<256xf32>
    %108 = vector.shape_cast %107 : vector<256xf32> to vector<256x1xf32>
    %109 = vector.broadcast %108 : vector<256x1xf32> to vector<256x256xf32>
    %110 = arith.subf %106, %109 : vector<256x256xf32>
    %111 = math.exp %110 : vector<256x256xf32>
    %cst_37 = arith.constant dense<0.000000e+00> : vector<256xf32>
    %112 = vector.multi_reduction <add>, %111, %cst_37 [1] : vector<256x256xf32> to vector<256xf32>
    %113 = vector.shape_cast %112 : vector<256xf32> to vector<256x1xf32>
    %114 = tpu.reciprocal %113 {approx = true} : vector<256x1xf32> -> vector<256x1xf32>
    %115 = vector.broadcast %114 : vector<256x1xf32> to vector<256x256xf32>
    %116 = arith.mulf %111, %115 : vector<256x256xf32>
    %117 = vector.broadcast %103 : vector<1x8xf32> to vector<256x8xf32>
    %118 = arith.mulf %22, %117 : vector<256x8xf32>
    %cst_38 = arith.constant dense<0.000000e+00> : vector<256x8xf32>
    %119 = tpu.matmul %116, %118, %cst_38 {dimension_numbers = #tpu.dot_dimension_numbers<[1], [0], [0], [1], [0, 0, 1, 1], [], []>} : vector<256x256xf32>, vector<256x8xf32>, vector<256x8xf32> -> vector<256x8xf32>
    %120 = arith.addf %96, %119 : vector<256x8xf32>
    %c0_39 = arith.constant 0 : index
    %c0_40 = arith.constant 0 : index
    %121 = vector.load %arg4[%c0_39, %c0_40] : memref<256x8xf32, #tpu.memory_space<vmem>>, vector<256x8xf32>
    tpu.vector_store %arg4[%c0_39, %c0_40], %120 {strides = array<i32>} : memref<256x8xf32, #tpu.memory_space<vmem>>, vector<256x8xf32>,
    return
  }
  func.func @transform_0(%arg0: i32) -> (i32, i32) {
    %c0_i32 = arith.constant 0 : i32
    %c0_i32_0 = arith.constant 0 : i32
    return %arg0, %c0_i32 : i32, i32
  }
  func.func @transform_1(%arg0: i32) -> (i32, i32, i32) {
    %c0_i32 = arith.constant 0 : i32
    %c0_i32_0 = arith.constant 0 : i32
    %c0_i32_1 = arith.constant 0 : i32
    %c0_i32_2 = arith.constant 0 : i32
    return %c0_i32, %c0_i32_0, %c0_i32_1 : i32, i32, i32
  }
  func.func @transform_2(%arg0: i32) -> (i32, i32, i32) {
    %c0_i32 = arith.constant 0 : i32
    %c0_i32_0 = arith.constant 0 : i32
    %c0_i32_1 = arith.constant 0 : i32
    %c0_i32_2 = arith.constant 0 : i32
    return %c0_i32, %c0_i32_0, %c0_i32_1 : i32, i32, i32
  }
  func.func @transform_3(%arg0: i32) -> (i32, i32) {
    %c0_i32 = arith.constant 0 : i32
    %c0_i32_0 = arith.constant 0 : i32
    return %arg0, %c0_i32 : i32, i32
  }
}

module attributes {stable_mosaic.version = 11 : i64} {
  func.func @_matmul_affine_act_kernel(%arg0: i32, %arg1: memref<256x24xf32, #tpu.memory_space<vmem>>, %arg2: memref<24x16xbf16, #tpu.memory_space<vmem>>, %arg3: memref<1x16xf32, #tpu.memory_space<vmem>>, %arg4: memref<1x16xf32, #tpu.memory_space<vmem>>, %arg5: memref<256x16xf32, #tpu.memory_space<vmem>>) attributes {dimension_semantics = [#tpu.dimension_semantics<parallel>], iteration_bounds = array<i64: 2>, scalar_prefetch = 0 : i64, scratch_operands = 0 : i64, tpu.core_type = #tpu.core_type<tc>, window_params = [{transform_indices = @transform_0, window_bounds = array<i64: 256, 24>}, {pipeline_mode = #tpu.pipeline_mode<synchronous>, transform_indices = @transform_1, window_bounds = array<i64: 24, 16>}, {pipeline_mode = #tpu.pipeline_mode<synchronous>, transform_indices = @transform_2, window_bounds = array<i64: 1, 16>}, {pipeline_mode = #tpu.pipeline_mode<synchronous>, transform_indices = @transform_3, window_bounds = array<i64: 1, 16>}, {transform_indices = @transform_4, window_bounds = array<i64: 256, 16>}]} {
    %c0 = arith.constant 0 : index
    %c0_0 = arith.constant 0 : index
    %0 = vector.load %arg1[%c0, %c0_0] : memref<256x24xf32, #tpu.memory_space<vmem>>, vector<256x24xf32>
    %1 = arith.truncf %0 : vector<256x24xf32> to vector<256x24xbf16>
    %c0_1 = arith.constant 0 : index
    %c0_2 = arith.constant 0 : index
    %2 = vector.load %arg2[%c0_1, %c0_2] : memref<24x16xbf16, #tpu.memory_space<vmem>>, vector<24x16xbf16>
    %cst = arith.constant dense<0.000000e+00> : vector<256x16xf32>
    %3 = tpu.matmul %1, %2, %cst {dimension_numbers = #tpu.dot_dimension_numbers<[1], [0], [0], [1], [0, 0, 1, 1], [], []>} : vector<256x24xbf16>, vector<24x16xbf16>, vector<256x16xf32> -> vector<256x16xf32>
    %c0_3 = arith.constant 0 : index
    %c0_4 = arith.constant 0 : index
    %4 = vector.load %arg3[%c0_3, %c0_4] : memref<1x16xf32, #tpu.memory_space<vmem>>, vector<1x16xf32>
    %5 = vector.broadcast %4 : vector<1x16xf32> to vector<256x16xf32>
    %6 = arith.mulf %3, %5 : vector<256x16xf32>
    %c0_5 = arith.constant 0 : index
    %c0_6 = arith.constant 0 : index
    %7 = vector.load %arg4[%c0_5, %c0_6] : memref<1x16xf32, #tpu.memory_space<vmem>>, vector<1x16xf32>
    %8 = vector.broadcast %7 : vector<1x16xf32> to vector<256x16xf32>
    %9 = arith.addf %6, %8 : vector<256x16xf32>
    %10 = arith.negf %9 : vector<256x16xf32>
    %11 = math.exp %10 : vector<256x16xf32>
    %cst_7 = arith.constant 1.000000e+00 : f32
    %12 = vector.broadcast %cst_7 : f32 to vector<256x16xf32>
    %13 = arith.addf %12, %11 : vector<256x16xf32>
    %14 = arith.divf %12, %13 : vector<256x16xf32>
    %15 = arith.mulf %9, %14 : vector<256x16xf32>
    %c0_8 = arith.constant 0 : index
    %c0_9 = arith.constant 0 : index
    %16 = vector.load %arg5[%c0_8, %c0_9] : memref<256x16xf32, #tpu.memory_space<vmem>>, vector<256x16xf32>
    tpu.vector_store %arg5[%c0_8, %c0_9], %15 {strides = array<i32>} : memref<256x16xf32, #tpu.memory_space<vmem>>, vector<256x16xf32>,
    return
  }
  func.func @transform_0(%arg0: i32) -> (i32, i32) {
    %c0_i32 = arith.constant 0 : i32
    %c0_i32_0 = arith.constant 0 : i32
    return %arg0, %c0_i32 : i32, i32
  }
  func.func @transform_1(%arg0: i32) -> (i32, i32) {
    %c0_i32 = arith.constant 0 : i32
    %c0_i32_0 = arith.constant 0 : i32
    %c0_i32_1 = arith.constant 0 : i32
    return %c0_i32, %c0_i32_0 : i32, i32
  }
  func.func @transform_2(%arg0: i32) -> (i32, i32) {
    %c0_i32 = arith.constant 0 : i32
    %c0_i32_0 = arith.constant 0 : i32
    %c0_i32_1 = arith.constant 0 : i32
    return %c0_i32, %c0_i32_0 : i32, i32
  }
  func.func @transform_3(%arg0: i32) -> (i32, i32) {
    %c0_i32 = arith.constant 0 : i32
    %c0_i32_0 = arith.constant 0 : i32
    %c0_i32_1 = arith.constant 0 : i32
    return %c0_i32, %c0_i32_0 : i32, i32
  }
  func.func @transform_4(%arg0: i32) -> (i32, i32) {
    %c0_i32 = arith.constant 0 : i32
    %c0_i32_0 = arith.constant 0 : i32
    return %arg0, %c0_i32 : i32, i32
  }
}

</mosaic_0001>

<llo_original>
// kernel: c2f_mhsa_forward.5
$region0: #{c2f_mhsa_forward.5}
  #allocation0 [shape = 'u32[]', space=smem, size = 0x4, offset = 0x4, fixed_abs, tag = 'smem constant byte address 0x4 - core index']
  #allocation1 [shape = 'u32[144,128]{1,0:T(1,128)}', space=vmem, size = 0x12000, scoped, tag = 'internal scratch']
  %s0 = inlined_call_operand.vmem [shape: f32[512,8], index: 0, kind: input, shape index: {}]
  %s1 = inlined_call_operand.vmem [shape: bf16[8,16], index: 1, kind: input, shape index: {}]
  %s2 = inlined_call_operand.vmem [shape: f32[1,16], index: 2, kind: input, shape index: {}]
  %s3 = inlined_call_operand.vmem [shape: f32[1,16], index: 3, kind: input, shape index: {}]
  %s4 = inlined_call_operand.vmem [shape: f32[512,16], index: 4, kind: output, shape index: {}]
  %s5 = sld [smem:[#allocation0]]
  $region49: #{c2f_mhsa_forward.5} parent=0
    _
  %s7 = ssub.s32 1, %s5
  %s8 = scalar_select 0, %s7, %s5
  loop: start=0, step=1, limit=4
  $region2: #{c2f_mhsa_forward.5} parent=0 // loop_pre_header
    _
  $region3: #{c2f_mhsa_forward.5} parent=0 // loop_header
    %s10 = sphi 0, %s14
    %p11 = scmp.ge.s32.totalorder %s10, 4
    %s20 = sphi 0, %s22
    %s23 = sphi 0, %s20
    %s24 = sphi 0, %s23
    %s40 = sphi 0, %s24
    %s44 = sphi 0, %s44
    %s46 = sphi 0, %s44
    %s47 = sphi 0, %s46
    %s61 = sphi 0, %s47
    %s65 = sphi 0, %s65
    %s67 = sphi 0, %s65
    %s68 = sphi 0, %s67
    %s82 = sphi 0, %s68
    %s86 = sphi 0, %s86
    %s88 = sphi 0, %s86
    %s89 = sphi 0, %s88
    %s103 = sphi 0, %s89
    %s109 = sphi 0, %s111
    %s112 = sphi 0, %s109
    %s113 = sphi 0, %s112
    %s129 = sphi 0, %s113
  $region4: #{c2f_mhsa_forward.5} parent=0 // loop_header_branch
    %13 = sbr.rel (%p11) target = $region8
  $region5: #{c2f_mhsa_forward.5} parent=0 // loop_body
    %s15 = ssub.s32 %s10, 1
    %s16 = ssub.s32 %s10, 2
    %s17 = sadd.s32 %s10, 1
    %s18 = ssub.s32 %s10, %s17
    %p19 = scmp.eq.s32.totalorder %s18, 0
    %s21 = sadd.s32 %s20, 1
    %s22 = scalar_select %p19, %s20, %s21
    %p25 = pneg %p19
    %p26 = scmp.eq.s32.totalorder %s10, 1
    %p27 = por %p25, %p26
    %p28 = scmp.ne.s32.totalorder %s20, %s23
    %p29 = scmp.eq.s32.totalorder %s10, 0
    %p30 = por %p28, %p29
    %p31 = scmp.ne.s32.totalorder %s20, %s23
    %p32 = scmp.eq.s32.totalorder %s15, 1
    %p33 = por %p31, %p32
    %p34 = scmp.ne.s32.totalorder %s23, %s24
    %p35 = scmp.eq.s32.totalorder %s15, 0
    %p36 = por %p34, %p35
    %p37 = scmp.ne.s32.totalorder %s23, %s24
    %p38 = scmp.eq.s32.totalorder %s16, 1
    %p39 = por %p37, %p38
    %p41 = scmp.ne.s32.totalorder %s24, %s40
    %p42 = scmp.eq.s32.totalorder %s16, 0
    %p43 = por %p41, %p42
    %s45 = sadd.s32 %s44, 1
    %p48 = scmp.eq.s32.totalorder %s10, 1
    %p49 = scmp.ne.s32.totalorder %s44, %s46
    %p50 = scmp.eq.s32.totalorder %s10, 0
    %p51 = por %p49, %p50
    %p52 = scmp.ne.s32.totalorder %s44, %s46
    %p53 = scmp.eq.s32.totalorder %s15, 1
    %p54 = por %p52, %p53
    %p55 = scmp.ne.s32.totalorder %s46, %s47
    %p56 = scmp.eq.s32.totalorder %s15, 0
    %p57 = por %p55, %p56
    %p58 = scmp.ne.s32.totalorder %s46, %s47
    %p59 = scmp.eq.s32.totalorder %s16, 1
    %p60 = por %p58, %p59
    %p62 = scmp.ne.s32.totalorder %s47, %s61
    %p63 = scmp.eq.s32.totalorder %s16, 0
    %p64 = por %p62, %p63
    %s66 = sadd.s32 %s65, 1
    %p69 = scmp.eq.s32.totalorder %s10, 1
    %p70 = scmp.ne.s32.totalorder %s65, %s67
    %p71 = scmp.eq.s32.totalorder %s10, 0
    %p72 = por %p70, %p71
    %p73 = scmp.ne.s32.totalorder %s65, %s67
    %p74 = scmp.eq.s32.totalorder %s15, 1
    %p75 = por %p73, %p74
    %p76 = scmp.ne.s32.totalorder %s67, %s68
    %p77 = scmp.eq.s32.totalorder %s15, 0
    %p78 = por %p76, %p77
    %p79 = scmp.ne.s32.totalorder %s67, %s68
    %p80 = scmp.eq.s32.totalorder %s16, 1
    %p81 = por %p79, %p80
    %p83 = scmp.ne.s32.totalorder %s68, %s82
    %p84 = scmp.eq.s32.totalorder %s16, 0
    %p85 = por %p83, %p84
    %s87 = sadd.s32 %s86, 1
    %p90 = scmp.eq.s32.totalorder %s10, 1
    %p91 = scmp.ne.s32.totalorder %s86, %s88
    %p92 = scmp.eq.s32.totalorder %s10, 0
    %p93 = por %p91, %p92
    %p94 = scmp.ne.s32.totalorder %s86, %s88
    %p95 = scmp.eq.s32.totalorder %s15, 1
    %p96 = por %p94, %p95
    %p97 = scmp.ne.s32.totalorder %s88, %s89
    %p98 = scmp.eq.s32.totalorder %s15, 0
    %p99 = por %p97, %p98
    %p100 = scmp.ne.s32.totalorder %s88, %s89
    %p101 = scmp.eq.s32.totalorder %s16, 1
    %p102 = por %p100, %p101
    %p104 = scmp.ne.s32.totalorder %s89, %s103
    %p105 = scmp.eq.s32.totalorder %s16, 0
    %p106 = por %p104, %p105
    %s107 = ssub.s32 %s10, %s17
    %p108 = scmp.eq.s32.totalorder %s107, 0
    %s110 = sadd.s32 %s109, 1
    %s111 = scalar_select %p108, %s109, %s110
    %p114 = pneg %p108
    %p115 = scmp.eq.s32.totalorder %s10, 1
    %p116 = por %p114, %p115
    %p117 = scmp.ne.s32.totalorder %s109, %s112
    %p118 = scmp.eq.s32.totalorder %s10, 0
    %p119 = por %p117, %p118
    %p120 = scmp.ne.s32.totalorder %s109, %s112
    %p121 = scmp.eq.s32.totalorder %s15, 1
    %p122 = por %p120, %p121
    %p123 = scmp.ne.s32.totalorder %s112, %s113
    %p124 = scmp.eq.s32.totalorder %s15, 0
    %p125 = por %p123, %p124
    %p126 = scmp.ne.s32.totalorder %s112, %s113
    %p127 = scmp.eq.s32.totalorder %s16, 1
    %p128 = por %p126, %p127
    %p130 = scmp.ne.s32.totalorder %s113, %s129
    %p131 = scmp.eq.s32.totalorder %s16, 0
    %p132 = por %p130, %p131
    %p133 = scmp.le.s32.totalorder 1, %s10
    %p134 = scmp.lt.s32.totalorder %s10, 3
    %p135 = pnand %p133, %p134
    %p136 = pneg %p135
    // Predicated region
    $region9: #{c2f_mhsa_forward.5} parent=5 // pred_check
      _
    $region10: #{c2f_mhsa_forward.5} parent=5 // pred_check_branch
      %138 = sbr.rel (%p135) target = $region12
    $region11: #{c2f_mhsa_forward.5} parent=5 // pred_region
      %s139 = ssub.s32 %s10, 1
      // Predicated region
      $region13: #{c2f_mhsa_forward.5} parent=11 // pred_check
        %p140 = pneg %p57
      $region14: #{c2f_mhsa_forward.5} parent=11 // pred_check_branch
        %142 = sbr.rel (%p140) target = $region16
      $region15: #{c2f_mhsa_forward.5} parent=11 // pred_region
        _
      $region16: #{c2f_mhsa_forward.5} parent=11 // pred_fallthru
        _
      // Predicated region
      $region17: #{c2f_mhsa_forward.5} parent=11 // pred_check
        %p143 = pneg %p78
      $region18: #{c2f_mhsa_forward.5} parent=11 // pred_check_branch
        %145 = sbr.rel (%p143) target = $region20
      $region19: #{c2f_mhsa_forward.5} parent=11 // pred_region
        _
      $region20: #{c2f_mhsa_forward.5} parent=11 // pred_fallthru
        _
      // Predicated region
      $region21: #{c2f_mhsa_forward.5} parent=11 // pred_check
        %p146 = pneg %p99
      $region22: #{c2f_mhsa_forward.5} parent=11 // pred_check_branch
        %148 = sbr.rel (%p146) target = $region24
      $region23: #{c2f_mhsa_forward.5} parent=11 // pred_region
        _
      $region24: #{c2f_mhsa_forward.5} parent=11 // pred_fallthru
        _
    $region12: #{c2f_mhsa_forward.5} parent=5 // pred_fallthru
      _
    %p149 = scmp.lt.s32.totalorder %s10, 2
    // Predicated region
    $region25: #{c2f_mhsa_forward.5} parent=5 // pred_check
      %p150 = pneg %p149
    $region26: #{c2f_mhsa_forward.5} parent=5 // pred_check_branch
      %152 = sbr.rel (%p150) target = $region28
    $region27: #{c2f_mhsa_forward.5} parent=5 // pred_region
      // Predicated region
      $region29: #{c2f_mhsa_forward.5} parent=27 // pred_check
        %p153 = pneg %p30
      $region30: #{c2f_mhsa_forward.5} parent=27 // pred_check_branch
        %155 = sbr.rel (%p153) target = $region32
      $region31: #{c2f_mhsa_forward.5} parent=27 // pred_region
        %s156 = smul.u32 32, %s10
        %p157 = scmp.lt.s32.totalorder %s156, 63
        %s158 = scalar_select %p157, %s156, 63
        %s159 = smul.addr %s158, 8
        %s160 = scalar_lea.vmem %s0, %s159
        %s161 = smul.u32 32, %s10
      $region32: #{c2f_mhsa_forward.5} parent=27 // pred_fallthru
        _
    $region28: #{c2f_mhsa_forward.5} parent=5 // pred_fallthru
      _
    %p162 = scmp.le.s32.totalorder 1, %s10
    %p163 = scmp.lt.s32.totalorder %s10, 3
    %p164 = pnand %p162, %p163
    %p165 = pneg %p164
    // Predicated region
    $region33: #{c2f_mhsa_forward.5} parent=5 // pred_check
      _
    $region34: #{c2f_mhsa_forward.5} parent=5 // pred_check_branch
      %167 = sbr.rel (%p164) target = $region36
    $region35: #{c2f_mhsa_forward.5} parent=5 // pred_region
      %s168 = ssub.s32 %s10, 1
      %s169 = smul.u32 32, %s15
      %p170 = scmp.lt.s32.totalorder %s169, 63
      %s171 = scalar_select %p170, %s169, 63
      %s172 = smul.addr %s171, 8
      %s173 = scalar_lea.vmem %s0, %s172
      %p174 = pneg %p36
      %p175 = pneg %p33
      %p176 = pneg %p57
      %p177 = pneg %p54
      %p178 = pneg %p78
      %p179 = pneg %p75
      %p180 = pneg %p99
      %p181 = pneg %p96
      %p182 = pneg %p125
      %p183 = pneg %p122
      %s184 = smul.u32 32, %s15
      %p185 = scmp.lt.s32.totalorder %s184, 63
      %s186 = scalar_select %p185, %s184, 63
      %s187 = smul.addr %s186, 8
      %s188 = scalar_lea.vmem %s4, %s187
      %s189 = smul.u32 32, %s15
      %p190 = scmp.lt.s32.totalorder %s189, 63
      %s191 = scalar_select %p190, %s189, 63
      %s192 = smul.addr %s191, 8
      %s193 = scalar_lea.vmem %s0, %s192
      %s194 = smul.u32 32, %s15
      %s195 = smul.u32 32, %s15
      %p196 = scmp.lt.s32.totalorder %s195, 63
      %s197 = scalar_select %p196, %s195, 63
      %s198 = smul.addr %s197, 8
      %s199 = scalar_lea.vmem %s4, %s198
      %s200 = smul.u32 32, %s15
      %v202 = vld [vmem:[%s193] sm:$0xff]
      %v203 = vld [vmem:[%s193 + $0x8] sm:$0xff]
      %v204 = vld [vmem:[%s193 + $0x10] sm:$0xff]
      %v205 = vld [vmem:[%s193 + $0x18] sm:$0xff]
      %v206 = vld [vmem:[%s193 + $0x20] sm:$0xff]
      %v207 = vld [vmem:[%s193 + $0x28] sm:$0xff]
      %v208 = vld [vmem:[%s193 + $0x30] sm:$0xff]
      %v209 = vld [vmem:[%s193 + $0x38] sm:$0xff]
      %v210 = vld [vmem:[%s193 + $0x40] sm:$0xff]
      %v211 = vld [vmem:[%s193 + $0x48] sm:$0xff]
      %v212 = vld [vmem:[%s193 + $0x50] sm:$0xff]
      %v213 = vld [vmem:[%s193 + $0x58] sm:$0xff]
      %v214 = vld [vmem:[%s193 + $0x60] sm:$0xff]
      %v215 = vld [vmem:[%s193 + $0x68] sm:$0xff]
      %v216 = vld [vmem:[%s193 + $0x70] sm:$0xff]
      %v217 = vld [vmem:[%s193 + $0x78] sm:$0xff]
      %v218 = vld [vmem:[%s193 + $0x80] sm:$0xff]
      %v219 = vld [vmem:[%s193 + $0x88] sm:$0xff]
      %v220 = vld [vmem:[%s193 + $0x90] sm:$0xff]
      %v221 = vld [vmem:[%s193 + $0x98] sm:$0xff]
      %v222 = vld [vmem:[%s193 + $0xa0] sm:$0xff]
      %v223 = vld [vmem:[%s193 + $0xa8] sm:$0xff]
      %v224 = vld [vmem:[%s193 + $0xb0] sm:$0xff]
      %v225 = vld [vmem:[%s193 + $0xb8] sm:$0xff]
      %v226 = vld [vmem:[%s193 + $0xc0] sm:$0xff]
      %v227 = vld [vmem:[%s193 + $0xc8] sm:$0xff]
      %v228 = vld [vmem:[%s193 + $0xd0] sm:$0xff]
      %v229 = vld [vmem:[%s193 + $0xd8] sm:$0xff]
      %v230 = vld [vmem:[%s193 + $0xe0] sm:$0xff]
      %v231 = vld [vmem:[%s193 + $0xe8] sm:$0xff]
      %v232 = vld [vmem:[%s193 + $0xf0] sm:$0xff]
      %v233 = vld [vmem:[%s193 + $0xf8] sm:$0xff]
      %v234 = vpack.c.bf16 %v203, %v202
      %v235 = vpack.c.bf16 %v205, %v204
      %v236 = vpack.c.bf16 %v207, %v206
      %v237 = vpack.c.bf16 %v209, %v208
      %v238 = vpack.c.bf16 %v211, %v210
      %v239 = vpack.c.bf16 %v213, %v212
      %v240 = vpack.c.bf16 %v215, %v214
      %v241 = vpack.c.bf16 %v217, %v216
      %v242 = vpack.c.bf16 %v219, %v218
      %v243 = vpack.c.bf16 %v221, %v220
      %v244 = vpack.c.bf16 %v223, %v222
      %v245 = vpack.c.bf16 %v225, %v224
      %v246 = vpack.c.bf16 %v227, %v226
      %v247 = vpack.c.bf16 %v229, %v228
      %v248 = vpack.c.bf16 %v231, %v230
      %v249 = vpack.c.bf16 %v233, %v232
      %v250 = vld [vmem:[%s1] sm:$0xf]
      %vm251 = vcmask 64512
      %v253 = vsel %vm251, %v234, 0
      %v256 = vsel %vm251, %v235, 0
      %v259 = vsel %vm251, %v236, 0
      %v262 = vsel %vm251, %v237, 0
      %v265 = vsel %vm251, %v238, 0
      %v268 = vsel %vm251, %v239, 0
      %v271 = vsel %vm251, %v240, 0
      %v274 = vsel %vm251, %v241, 0
      %v277 = vsel %vm251, %v242, 0
      %v280 = vsel %vm251, %v243, 0
      %v283 = vsel %vm251, %v244, 0
      %v286 = vsel %vm251, %v245, 0
      %v289 = vsel %vm251, %v246, 0
      %v292 = vsel %vm251, %v247, 0
      %v295 = vsel %vm251, %v248, 0
      %v298 = vsel %vm251, %v249, 0
      %vm300 = vcmask 1043456
      %v302 = vsel %vm300, %v250, 0
      %304 = vmatprep.subr.bf16.mxu0 0
      %305 = vmatpush1.bf16.msra.mxu0 0
      %306 = vmatprep.subr.bf16.mxu0 0
      %307 = vmatpush1.bf16.msra.mxu0 0
      %308 = vmatprep.subr.bf16.mxu0 0
      %309 = vmatpush1.bf16.msra.mxu0 0
      %310 = vmatprep.subr.bf16.mxu0 0
      %311 = vmatpush1.bf16.msra.mxu0 0
      %312 = vmatprep.subr.bf16.mxu0 0
      %313 = vmatpush1.bf16.msra.mxu0 0
      %314 = vmatprep.subr.bf16.mxu0 0
      %315 = vmatpush1.bf16.msra.mxu0 0
      %316 = vmatprep.subr.bf16.mxu0 0
      %317 = vmatpush1.bf16.msra.mxu0 0
      %318 = vmatprep.subr.bf16.mxu0 0
      %319 = vmatpush1.bf16.msra.mxu0 %v302
      %320 = vmatprep.subr.bf16.mxu0 0
      %321 = vmatpush2.bf16.msra.mxu0 0
      %322 = vmatprep.subr.bf16.mxu0 0
      %323 = vmatpush2.bf16.msra.mxu0 0
      %324 = vmatprep.subr.bf16.mxu0 0
      %325 = vmatpush2.bf16.msra.mxu0 0
      %326 = vmatprep.subr.bf16.mxu0 0
      %327 = vmatpush2.bf16.msra.mxu0 0
      %328 = vmatprep.subr.bf16.mxu0 0
      %329 = vmatpush2.bf16.msra.mxu0 0
      %330 = vmatprep.subr.bf16.mxu0 0
      %331 = vmatpush2.bf16.msra.mxu0 0
      %332 = vmatprep.subr.bf16.mxu0 0
      %333 = vmatpush2.bf16.msra.mxu0 0
      %334 = vmatprep.subr.bf16.mxu0 0
      %335 = vmatpush2.bf16.msra.mxu0 0
      %336 = vmatprep.mubr.bf16.mxu0 0
      %337 = vmatmul.mubr.bf16.gmra.mxu0 %v253
      %v338 = vpop.f32.mrf.mxu0
      %v339 = vadd.f32 0.0, %v338
      %v340 = vpop.f32.mrf.mxu0
      %v341 = vpop.f32.mrf.mxu0
      %v342 = vadd.f32 0.0, %v341
      %v343 = vpop.f32.mrf.mxu0
      %344 = vmatprep.mubr.bf16.mxu0 0
      %345 = vmatmul.mubr.bf16.gmra.mxu0 %v256
      %v346 = vpop.f32.mrf.mxu0
      %v347 = vadd.f32 0.0, %v346
      %v348 = vpop.f32.mrf.mxu0
      %v349 = vpop.f32.mrf.mxu0
      %v350 = vadd.f32 0.0, %v349
      %v351 = vpop.f32.mrf.mxu0
      %352 = vmatprep.mubr.bf16.mxu0 0
      %353 = vmatmul.mubr.bf16.gmra.mxu0 %v259
      %v354 = vpop.f32.mrf.mxu0
      %v355 = vadd.f32 0.0, %v354
      %v356 = vpop.f32.mrf.mxu0
      %v357 = vpop.f32.mrf.mxu0
      %v358 = vadd.f32 0.0, %v357
      %v359 = vpop.f32.mrf.mxu0
      %360 = vmatprep.mubr.bf16.mxu0 0
      %361 = vmatmul.mubr.bf16.gmra.mxu0 %v262
      %v362 = vpop.f32.mrf.mxu0
      %v363 = vadd.f32 0.0, %v362
      %v364 = vpop.f32.mrf.mxu0
      %v365 = vpop.f32.mrf.mxu0
      %v366 = vadd.f32 0.0, %v365
      %v367 = vpop.f32.mrf.mxu0
      %368 = vmatprep.mubr.bf16.mxu0 0
      %369 = vmatmul.mubr.bf16.gmra.mxu0 %v265
      %v370 = vpop.f32.mrf.mxu0
      %v371 = vadd.f32 0.0, %v370
      %v372 = vpop.f32.mrf.mxu0
      %v373 = vpop.f32.mrf.mxu0
      %v374 = vadd.f32 0.0, %v373
      %v375 = vpop.f32.mrf.mxu0
      %376 = vmatprep.mubr.bf16.mxu0 0
      %377 = vmatmul.mubr.bf16.gmra.mxu0 %v268
      %v378 = vpop.f32.mrf.mxu0
      %v379 = vadd.f32 0.0, %v378
      %v380 = vpop.f32.mrf.mxu0
      %v381 = vpop.f32.mrf.mxu0
      %v382 = vadd.f32 0.0, %v381
      %v383 = vpop.f32.mrf.mxu0
      %384 = vmatprep.mubr.bf16.mxu0 0
      %385 = vmatmul.mubr.bf16.gmra.mxu0 %v271
      %v386 = vpop.f32.mrf.mxu0
      %v387 = vadd.f32 0.0, %v386
      %v388 = vpop.f32.mrf.mxu0
      %v389 = vpop.f32.mrf.mxu0
      %v390 = vadd.f32 0.0, %v389
      %v391 = vpop.f32.mrf.mxu0
      %392 = vmatprep.mubr.bf16.mxu0 0
      %393 = vmatmul.mubr.bf16.gmra.mxu0 %v274
      %v394 = vpop.f32.mrf.mxu0
      %v395 = vadd.f32 0.0, %v394
      %v396 = vpop.f32.mrf.mxu0
      %v397 = vpop.f32.mrf.mxu0
      %v398 = vadd.f32 0.0, %v397
      %v399 = vpop.f32.mrf.mxu0
      %400 = vmatprep.mubr.bf16.mxu0 0
      %401 = vmatmul.mubr.bf16.gmra.mxu0 %v277
      %v402 = vpop.f32.mrf.mxu0
      %v403 = vadd.f32 0.0, %v402
      %v404 = vpop.f32.mrf.mxu0
      %v405 = vpop.f32.mrf.mxu0
      %v406 = vadd.f32 0.0, %v405
      %v407 = vpop.f32.mrf.mxu0
      %408 = vmatprep.mubr.bf16.mxu0 0
      %409 = vmatmul.mubr.bf16.gmra.mxu0 %v280
      %v410 = vpop.f32.mrf.mxu0
      %v411 = vadd.f32 0.0, %v410
      %v412 = vpop.f32.mrf.mxu0
      %v413 = vpop.f32.mrf.mxu0
      %v414 = vadd.f32 0.0, %v413
      %v415 = vpop.f32.mrf.mxu0
      %416 = vmatprep.mubr.bf16.mxu0 0
      %417 = vmatmul.mubr.bf16.gmra.mxu0 %v283
      %v418 = vpop.f32.mrf.mxu0
      %v419 = vadd.f32 0.0, %v418
      %v420 = vpop.f32.mrf.mxu0
      %v421 = vpop.f32.mrf.mxu0
      %v422 = vadd.f32 0.0, %v421
      %v423 = vpop.f32.mrf.mxu0
      %424 = vmatprep.mubr.bf16.mxu0 0
      %425 = vmatmul.mubr.bf16.gmra.mxu0 %v286
      %v426 = vpop.f32.mrf.mxu0
      %v427 = vadd.f32 0.0, %v426
      %v428 = vpop.f32.mrf.mxu0
      %v429 = vpop.f32.mrf.mxu0
      %v430 = vadd.f32 0.0, %v429
      %v431 = vpop.f32.mrf.mxu0
      %432 = vmatprep.mubr.bf16.mxu0 0
      %433 = vmatmul.mubr.bf16.gmra.mxu0 %v289
      %v434 = vpop.f32.mrf.mxu0
      %v435 = vadd.f32 0.0, %v434
      %v436 = vpop.f32.mrf.mxu0
      %v437 = vpop.f32.mrf.mxu0
      %v438 = vadd.f32 0.0, %v437
      %v439 = vpop.f32.mrf.mxu0
      %440 = vmatprep.mubr.bf16.mxu0 0
      %441 = vmatmul.mubr.bf16.gmra.mxu0 %v292
      %v442 = vpop.f32.mrf.mxu0
      %v443 = vadd.f32 0.0, %v442
      %v444 = vpop.f32.mrf.mxu0
      %v445 = vpop.f32.mrf.mxu0
      %v446 = vadd.f32 0.0, %v445
      %v447 = vpop.f32.mrf.mxu0
      %448 = vmatprep.mubr.bf16.mxu0 0
      %449 = vmatmul.mubr.bf16.gmra.mxu0 %v295
      %v450 = vpop.f32.mrf.mxu0
      %v451 = vadd.f32 0.0, %v450
      %v452 = vpop.f32.mrf.mxu0
      %v453 = vpop.f32.mrf.mxu0
      %v454 = vadd.f32 0.0, %v453
      %v455 = vpop.f32.mrf.mxu0
      %456 = vmatprep.mubr.bf16.mxu0 0
      %457 = vmatmul.mubr.bf16.gmra.mxu0 %v298
      %v458 = vpop.f32.mrf.mxu0
      %v459 = vadd.f32 0.0, %v458
      %v460 = vpop.f32.mrf.mxu0
      %v461 = vpop.f32.mrf.mxu0
      %v462 = vadd.f32 0.0, %v461
      %v463 = vpop.f32.mrf.mxu0
      %464 = vdwg.mxu0
      %v465 = vld [vmem:[%s2] sm:$0x1]
      %v467 = vlaneseq
      %v468 = vshrl.u32 %v467, 7
      %v469 = vsub.s32 0, %v468
      %v470 = vrot.slane %v465, %v469
      %v472 = vmul.f32 %v339, %v470
      %v473 = vmul.f32 %v342, %v470
      %v474 = vmul.f32 %v347, %v470
      %v475 = vmul.f32 %v350, %v470
      %v476 = vmul.f32 %v355, %v470
      %v477 = vmul.f32 %v358, %v470
      %v478 = vmul.f32 %v363, %v470
      %v479 = vmul.f32 %v366, %v470
      %v480 = vmul.f32 %v371, %v470
      %v481 = vmul.f32 %v374, %v470
      %v482 = vmul.f32 %v379, %v470
      %v483 = vmul.f32 %v382, %v470
      %v484 = vmul.f32 %v387, %v470
      %v485 = vmul.f32 %v390, %v470
      %v486 = vmul.f32 %v395, %v470
      %v487 = vmul.f32 %v398, %v470
      %v488 = vmul.f32 %v403, %v470
      %v489 = vmul.f32 %v406, %v470
      %v490 = vmul.f32 %v411, %v470
      %v491 = vmul.f32 %v414, %v470
      %v492 = vmul.f32 %v419, %v470
      %v493 = vmul.f32 %v422, %v470
      %v494 = vmul.f32 %v427, %v470
      %v495 = vmul.f32 %v430, %v470
      %v496 = vmul.f32 %v435, %v470
      %v497 = vmul.f32 %v438, %v470
      %v498 = vmul.f32 %v443, %v470
      %v499 = vmul.f32 %v446, %v470
      %v500 = vmul.f32 %v451, %v470
      %v501 = vmul.f32 %v454, %v470
      %v502 = vmul.f32 %v459, %v470
      %v503 = vmul.f32 %v462, %v470
      %v504 = vld [vmem:[%s3] sm:$0x1]
      %v506 = vlaneseq
      %v507 = vshrl.u32 %v506, 7
      %v508 = vsub.s32 0, %v507
      %v509 = vrot.slane %v504, %v508
      %v511 = vadd.f32 %v472, %v509
      %v512 = vadd.f32 %v473, %v509
      %v513 = vadd.f32 %v474, %v509
      %v514 = vadd.f32 %v475, %v509
      %v515 = vadd.f32 %v476, %v509
      %v516 = vadd.f32 %v477, %v509
      %v517 = vadd.f32 %v478, %v509
      %v518 = vadd.f32 %v479, %v509
      %v519 = vadd.f32 %v480, %v509
      %v520 = vadd.f32 %v481, %v509
      %v521 = vadd.f32 %v482, %v509
      %v522 = vadd.f32 %v483, %v509
      %v523 = vadd.f32 %v484, %v509
      %v524 = vadd.f32 %v485, %v509
      %v525 = vadd.f32 %v486, %v509
      %v526 = vadd.f32 %v487, %v509
      %v527 = vadd.f32 %v488, %v509
      %v528 = vadd.f32 %v489, %v509
      %v529 = vadd.f32 %v490, %v509
      %v530 = vadd.f32 %v491, %v509
      %v531 = vadd.f32 %v492, %v509
      %v532 = vadd.f32 %v493, %v509
      %v533 = vadd.f32 %v494, %v509
      %v534 = vadd.f32 %v495, %v509
      %v535 = vadd.f32 %v496, %v509
      %v536 = vadd.f32 %v497, %v509
      %v537 = vadd.f32 %v498, %v509
      %v538 = vadd.f32 %v499, %v509
      %v539 = vadd.f32 %v500, %v509
      %v540 = vadd.f32 %v501, %v509
      %v541 = vadd.f32 %v502, %v509
      %v542 = vadd.f32 %v503, %v509
      %v543 = vxor.u32 %v511, 2147483648
      %v544 = vxor.u32 %v512, 2147483648
      %v545 = vxor.u32 %v513, 2147483648
      %v546 = vxor.u32 %v514, 2147483648
      %v547 = vxor.u32 %v515, 2147483648
      %v548 = vxor.u32 %v516, 2147483648
      %v549 = vxor.u32 %v517, 2147483648
      %v550 = vxor.u32 %v518, 2147483648
      %v551 = vxor.u32 %v519, 2147483648
      %v552 = vxor.u32 %v520, 2147483648
      %v553 = vxor.u32 %v521, 2147483648
      %v554 = vxor.u32 %v522, 2147483648
      %v555 = vxor.u32 %v523, 2147483648
      %v556 = vxor.u32 %v524, 2147483648
      %v557 = vxor.u32 %v525, 2147483648
      %v558 = vxor.u32 %v526, 2147483648
      %v559 = vxor.u32 %v527, 2147483648
      %v560 = vxor.u32 %v528, 2147483648
      %v561 = vxor.u32 %v529, 2147483648
      %v562 = vxor.u32 %v530, 2147483648
      %v563 = vxor.u32 %v531, 2147483648
      %v564 = vxor.u32 %v532, 2147483648
      %v565 = vxor.u32 %v533, 2147483648
      %v566 = vxor.u32 %v534, 2147483648
      %v567 = vxor.u32 %v535, 2147483648
      %v568 = vxor.u32 %v536, 2147483648
      %v569 = vxor.u32 %v537, 2147483648
      %v570 = vxor.u32 %v538, 2147483648
      %v571 = vxor.u32 %v539, 2147483648
      %v572 = vxor.u32 %v540, 2147483648
      %v573 = vxor.u32 %v541, 2147483648
      %v574 = vxor.u32 %v542, 2147483648
      %v575 = vmul.f32 %v543, 1.442695
      %v576 = vpow.pop %v575
      %v577 = vmul.f32 %v544, 1.442695
      %v578 = vpow.pop %v577
      %v579 = vmul.f32 %v545, 1.442695
      %v580 = vpow.pop %v579
      %v581 = vmul.f32 %v546, 1.442695
      %v582 = vpow.pop %v581
      %v583 = vmul.f32 %v547, 1.442695
      %v584 = vpow.pop %v583
      %v585 = vmul.f32 %v548, 1.442695
      %v586 = vpow.pop %v585
      %v587 = vmul.f32 %v549, 1.442695
      %v588 = vpow.pop %v587
      %v589 = vmul.f32 %v550, 1.442695
      %v590 = vpow.pop %v589
      %v591 = vmul.f32 %v551, 1.442695
      %v592 = vpow.pop %v591
      %v593 = vmul.f32 %v552, 1.442695
      %v594 = vpow.pop %v593
      %v595 = vmul.f32 %v553, 1.442695
      %v596 = vpow.pop %v595
      %v597 = vmul.f32 %v554, 1.442695
      %v598 = vpow.pop %v597
      %v599 = vmul.f32 %v555, 1.442695
      %v600 = vpow.pop %v599
      %v601 = vmul.f32 %v556, 1.442695
      %v602 = vpow.pop %v601
      %v603 = vmul.f32 %v557, 1.442695
      %v604 = vpow.pop %v603
      %v605 = vmul.f32 %v558, 1.442695
      %v606 = vpow.pop %v605
      %v607 = vmul.f32 %v559, 1.442695
      %v608 = vpow.pop %v607
      %v609 = vmul.f32 %v560, 1.442695
      %v610 = vpow.pop %v609
      %v611 = vmul.f32 %v561, 1.442695
      %v612 = vpow.pop %v611
      %v613 = vmul.f32 %v562, 1.442695
      %v614 = vpow.pop %v613
      %v615 = vmul.f32 %v563, 1.442695
      %v616 = vpow.pop %v615
      %v617 = vmul.f32 %v564, 1.442695
      %v618 = vpow.pop %v617
      %v619 = vmul.f32 %v565, 1.442695
      %v620 = vpow.pop %v619
      %v621 = vmul.f32 %v566, 1.442695
      %v622 = vpow.pop %v621
      %v623 = vmul.f32 %v567, 1.442695
      %v624 = vpow.pop %v623
      %v625 = vmul.f32 %v568, 1.442695
      %v626 = vpow.pop %v625
      %v627 = vmul.f32 %v569, 1.442695
      %v628 = vpow.pop %v627
      %v629 = vmul.f32 %v570, 1.442695
      %v630 = vpow.pop %v629
      %v631 = vmul.f32 %v571, 1.442695
      %v632 = vpow.pop %v631
      %v633 = vmul.f32 %v572, 1.442695
      %v634 = vpow.pop %v633
      %v635 = vmul.f32 %v573, 1.442695
      %v636 = vpow.pop %v635
      %v637 = vmul.f32 %v574, 1.442695
      %v638 = vpow.pop %v637
      %v639 = vadd.f32 %v576, 1.0
      %v640 = vadd.f32 %v578, 1.0
      %v641 = vadd.f32 %v580, 1.0
      %v642 = vadd.f32 %v582, 1.0
      %v643 = vadd.f32 %v584, 1.0
      %v644 = vadd.f32 %v586, 1.0
      %v645 = vadd.f32 %v588, 1.0
      %v646 = vadd.f32 %v590, 1.0
      %v647 = vadd.f32 %v592, 1.0
      %v648 = vadd.f32 %v594, 1.0
      %v649 = vadd.f32 %v596, 1.0
      %v650 = vadd.f32 %v598, 1.0
      %v651 = vadd.f32 %v600, 1.0
      %v652 = vadd.f32 %v602, 1.0
      %v653 = vadd.f32 %v604, 1.0
      %v654 = vadd.f32 %v606, 1.0
      %v655 = vadd.f32 %v608, 1.0
      %v656 = vadd.f32 %v610, 1.0
      %v657 = vadd.f32 %v612, 1.0
      %v658 = vadd.f32 %v614, 1.0
      %v659 = vadd.f32 %v616, 1.0
      %v660 = vadd.f32 %v618, 1.0
      %v661 = vadd.f32 %v620, 1.0
      %v662 = vadd.f32 %v622, 1.0
      %v663 = vadd.f32 %v624, 1.0
      %v664 = vadd.f32 %v626, 1.0
      %v665 = vadd.f32 %v628, 1.0
      %v666 = vadd.f32 %v630, 1.0
      %v667 = vadd.f32 %v632, 1.0
      %v668 = vadd.f32 %v634, 1.0
      %v669 = vadd.f32 %v636, 1.0
      %v670 = vadd.f32 %v638, 1.0
      %v671 = vrcp.pop %v639
      %v672 = vmul.f32 1.0, %v671
      %v673 = vrcp.pop %v640
      %v674 = vmul.f32 1.0, %v673
      %v675 = vrcp.pop %v641
      %v676 = vmul.f32 1.0, %v675
      %v677 = vrcp.pop %v642
      %v678 = vmul.f32 1.0, %v677
      %v679 = vrcp.pop %v643
      %v680 = vmul.f32 1.0, %v679
      %v681 = vrcp.pop %v644
      %v682 = vmul.f32 1.0, %v681
      %v683 = vrcp.pop %v645
      %v684 = vmul.f32 1.0, %v683
      %v685 = vrcp.pop %v646
      %v686 = vmul.f32 1.0, %v685
      %v687 = vrcp.pop %v647
      %v688 = vmul.f32 1.0, %v687
      %v689 = vrcp.pop %v648
      %v690 = vmul.f32 1.0, %v689
      %v691 = vrcp.pop %v649
      %v692 = vmul.f32 1.0, %v691
      %v693 = vrcp.pop %v650
      %v694 = vmul.f32 1.0, %v693
      %v695 = vrcp.pop %v651
      %v696 = vmul.f32 1.0, %v695
      %v697 = vrcp.pop %v652
      %v698 = vmul.f32 1.0, %v697
      %v699 = vrcp.pop %v653
      %v700 = vmul.f32 1.0, %v699
      %v701 = vrcp.pop %v654
      %v702 = vmul.f32 1.0, %v701
      %v703 = vrcp.pop %v655
      %v704 = vmul.f32 1.0, %v703
      %v705 = vrcp.pop %v656
      %v706 = vmul.f32 1.0, %v705
      %v707 = vrcp.pop %v657
      %v708 = vmul.f32 1.0, %v707
      %v709 = vrcp.pop %v658
      %v710 = vmul.f32 1.0, %v709
      %v711 = vrcp.pop %v659
      %v712 = vmul.f32 1.0, %v711
      %v713 = vrcp.pop %v660
      %v714 = vmul.f32 1.0, %v713
      %v715 = vrcp.pop %v661
      %v716 = vmul.f32 1.0, %v715
      %v717 = vrcp.pop %v662
      %v718 = vmul.f32 1.0, %v717
      %v719 = vrcp.pop %v663
      %v720 = vmul.f32 1.0, %v719
      %v721 = vrcp.pop %v664
      %v722 = vmul.f32 1.0, %v721
      %v723 = vrcp.pop %v665
      %v724 = vmul.f32 1.0, %v723
      %v725 = vrcp.pop %v666
      %v726 = vmul.f32 1.0, %v725
      %v727 = vrcp.pop %v667
      %v728 = vmul.f32 1.0, %v727
      %v729 = vrcp.pop %v668
      %v730 = vmul.f32 1.0, %v729
      %v731 = vrcp.pop %v669
      %v732 = vmul.f32 1.0, %v731
      %v733 = vrcp.pop %v670
      %v734 = vmul.f32 1.0, %v733
      %v735 = vmul.f32 %v511, %v672
      %v736 = vmul.f32 %v512, %v674
      %v737 = vmul.f32 %v513, %v676
      %v738 = vmul.f32 %v514, %v678
      %v739 = vmul.f32 %v515, %v680
      %v740 = vmul.f32 %v516, %v682
      %v741 = vmul.f32 %v517, %v684
      %v742 = vmul.f32 %v518, %v686
      %v743 = vmul.f32 %v519, %v688
      %v744 = vmul.f32 %v520, %v690
      %v745 = vmul.f32 %v521, %v692
      %v746 = vmul.f32 %v522, %v694
      %v747 = vmul.f32 %v523, %v696
      %v748 = vmul.f32 %v524, %v698
      %v749 = vmul.f32 %v525, %v700
      %v750 = vmul.f32 %v526, %v702
      %v751 = vmul.f32 %v527, %v704
      %v752 = vmul.f32 %v528, %v706
      %v753 = vmul.f32 %v529, %v708
      %v754 = vmul.f32 %v530, %v710
      %v755 = vmul.f32 %v531, %v712
      %v756 = vmul.f32 %v532, %v714
      %v757 = vmul.f32 %v533, %v716
      %v758 = vmul.f32 %v534, %v718
      %v759 = vmul.f32 %v535, %v720
      %v760 = vmul.f32 %v536, %v722
      %v761 = vmul.f32 %v537, %v724
      %v762 = vmul.f32 %v538, %v726
      %v763 = vmul.f32 %v539, %v728
      %v764 = vmul.f32 %v540, %v730
      %v765 = vmul.f32 %v541, %v732
      %v766 = vmul.f32 %v542, %v734
      %vm767 = vcmask 130048
      %768 = vst.msk [vmem:[%s199] sm:$0xff] %vm767, %v735
      %769 = vst.msk [vmem:[%s199 + $0x8] sm:$0xff] %vm767, %v736
      %770 = vst.msk [vmem:[%s199 + $0x10] sm:$0xff] %vm767, %v737
      %771 = vst.msk [vmem:[%s199 + $0x18] sm:$0xff] %vm767, %v738
      %772 = vst.msk [vmem:[%s199 + $0x20] sm:$0xff] %vm767, %v739
      %773 = vst.msk [vmem:[%s199 + $0x28] sm:$0xff] %vm767, %v740
      %774 = vst.msk [vmem:[%s199 + $0x30] sm:$0xff] %vm767, %v741
      %775 = vst.msk [vmem:[%s199 + $0x38] sm:$0xff] %vm767, %v742
      %776 = vst.msk [vmem:[%s199 + $0x40] sm:$0xff] %vm767, %v743
      %777 = vst.msk [vmem:[%s199 + $0x48] sm:$0xff] %vm767, %v744
      %778 = vst.msk [vmem:[%s199 + $0x50] sm:$0xff] %vm767, %v745
      %779 = vst.msk [vmem:[%s199 + $0x58] sm:$0xff] %vm767, %v746
      %780 = vst.msk [vmem:[%s199 + $0x60] sm:$0xff] %vm767, %v747
      %781 = vst.msk [vmem:[%s199 + $0x68] sm:$0xff] %vm767, %v748
      %782 = vst.msk [vmem:[%s199 + $0x70] sm:$0xff] %vm767, %v749
      %783 = vst.msk [vmem:[%s199 + $0x78] sm:$0xff] %vm767, %v750
      %784 = vst.msk [vmem:[%s199 + $0x80] sm:$0xff] %vm767, %v751
      %785 = vst.msk [vmem:[%s199 + $0x88] sm:$0xff] %vm767, %v752
      %786 = vst.msk [vmem:[%s199 + $0x90] sm:$0xff] %vm767, %v753
      %787 = vst.msk [vmem:[%s199 + $0x98] sm:$0xff] %vm767, %v754
      %788 = vst.msk [vmem:[%s199 + $0xa0] sm:$0xff] %vm767, %v755
      %789 = vst.msk [vmem:[%s199 + $0xa8] sm:$0xff] %vm767, %v756
      %790 = vst.msk [vmem:[%s199 + $0xb0] sm:$0xff] %vm767, %v757
      %791 = vst.msk [vmem:[%s199 + $0xb8] sm:$0xff] %vm767, %v758
      %792 = vst.msk [vmem:[%s199 + $0xc0] sm:$0xff] %vm767, %v759
      %793 = vst.msk [vmem:[%s199 + $0xc8] sm:$0xff] %vm767, %v760
      %794 = vst.msk [vmem:[%s199 + $0xd0] sm:$0xff] %vm767, %v761
      %795 = vst.msk [vmem:[%s199 + $0xd8] sm:$0xff] %vm767, %v762
      %796 = vst.msk [vmem:[%s199 + $0xe0] sm:$0xff] %vm767, %v763
      %797 = vst.msk [vmem:[%s199 + $0xe8] sm:$0xff] %vm767, %v764
      %798 = vst.msk [vmem:[%s199 + $0xf0] sm:$0xff] %vm767, %v765
      %799 = vst.msk [vmem:[%s199 + $0xf8] sm:$0xff] %vm767, %v766
      %s800 = smul.u32 32, %s15
      %p801 = scmp.lt.s32.totalorder %s800, 63
      %s802 = scalar_select %p801, %s800, 63
      %s803 = smul.addr %s802, 8
      %s804 = scalar_lea.vmem %s4, %s803
      // Predicated region
      $region37: #{c2f_mhsa_forward.5} parent=35 // pred_check
        %p805 = pneg %p122
      $region38: #{c2f_mhsa_forward.5} parent=35 // pred_check_branch
        %807 = sbr.rel (%p805) target = $region40
      $region39: #{c2f_mhsa_forward.5} parent=35 // pred_region
        %s808 = smul.u32 32, %s15
      $region40: #{c2f_mhsa_forward.5} parent=35 // pred_fallthru
        _
    $region36: #{c2f_mhsa_forward.5} parent=5 // pred_fallthru
      _
    %p809 = scmp.le.s32.totalorder 2, %s10
    // Predicated region
    $region41: #{c2f_mhsa_forward.5} parent=5 // pred_check
      %p810 = pneg %p809
    $region42: #{c2f_mhsa_forward.5} parent=5 // pred_check_branch
      %812 = sbr.rel (%p810) target = $region44
    $region43: #{c2f_mhsa_forward.5} parent=5 // pred_region
      %s813 = ssub.s32 %s10, 2
      // Predicated region
      $region45: #{c2f_mhsa_forward.5} parent=43 // pred_check
        %p814 = pneg %p128
      $region46: #{c2f_mhsa_forward.5} parent=43 // pred_check_branch
        %816 = sbr.rel (%p814) target = $region48
      $region47: #{c2f_mhsa_forward.5} parent=43 // pred_region
        %s817 = smul.u32 32, %s16
        %p818 = scmp.lt.s32.totalorder %s817, 63
        %s819 = scalar_select %p818, %s817, 63
        %s820 = smul.addr %s819, 8
        %s821 = scalar_lea.vmem %s4, %s820
      $region48: #{c2f_mhsa_forward.5} parent=43 // pred_fallthru
        _
    $region44: #{c2f_mhsa_forward.5} parent=5 // pred_fallthru
      _
  $region6: #{c2f_mhsa_forward.5} parent=0 // loop_footer
    %s14 = sadd.s32 1, %s10
  $region7: #{c2f_mhsa_forward.5} parent=0 // loop_footer_branch
    %9 = sbr.rel target = $region3
  $region8: #{c2f_mhsa_forward.5} parent=0 // loop_exit
    _

// kernel: c2f_mhsa_forward.9
$region0: #{c2f_mhsa_forward.9}
  #allocation0 [shape = 'u32[]', space=smem, size = 0x4, offset = 0x4, fixed_abs, tag = 'smem constant byte address 0x4 - core index']
  #allocation1 [shape = 'u32[144,128]{1,0:T(1,128)}', space=vmem, size = 0x12000, scoped, tag = 'internal scratch']
  %s0 = inlined_call_operand.vmem [shape: f32[512,24], index: 0, kind: input, shape index: {}]
  %s1 = inlined_call_operand.vmem [shape: bf16[24,16], index: 1, kind: input, shape index: {}]
  %s2 = inlined_call_operand.vmem [shape: f32[1,16], index: 2, kind: input, shape index: {}]
  %s3 = inlined_call_operand.vmem [shape: f32[1,16], index: 3, kind: input, shape index: {}]
  %s4 = inlined_call_operand.vmem [shape: f32[512,16], index: 4, kind: output, shape index: {}]
  %s5 = sld [smem:[#allocation0]]
  $region49: #{c2f_mhsa_forward.9} parent=0
    _
  %s7 = ssub.s32 1, %s5
  %s8 = scalar_select 0, %s7, %s5
  loop: start=0, step=1, limit=4
  $region2: #{c2f_mhsa_forward.9} parent=0 // loop_pre_header
    _
  $region3: #{c2f_mhsa_forward.9} parent=0 // loop_header
    %s10 = sphi 0, %s14
    %p11 = scmp.ge.s32.totalorder %s10, 4
    %s20 = sphi 0, %s22
    %s23 = sphi 0, %s20
    %s24 = sphi 0, %s23
    %s40 = sphi 0, %s24
    %s44 = sphi 0, %s44
    %s46 = sphi 0, %s44
    %s47 = sphi 0, %s46
    %s61 = sphi 0, %s47
    %s65 = sphi 0, %s65
    %s67 = sphi 0, %s65
    %s68 = sphi 0, %s67
    %s82 = sphi 0, %s68
    %s86 = sphi 0, %s86
    %s88 = sphi 0, %s86
    %s89 = sphi 0, %s88
    %s103 = sphi 0, %s89
    %s109 = sphi 0, %s111
    %s112 = sphi 0, %s109
    %s113 = sphi 0, %s112
    %s129 = sphi 0, %s113
  $region4: #{c2f_mhsa_forward.9} parent=0 // loop_header_branch
    %13 = sbr.rel (%p11) target = $region8
  $region5: #{c2f_mhsa_forward.9} parent=0 // loop_body
    %s15 = ssub.s32 %s10, 1
    %s16 = ssub.s32 %s10, 2
    %s17 = sadd.s32 %s10, 1
    %s18 = ssub.s32 %s10, %s17
    %p19 = scmp.eq.s32.totalorder %s18, 0
    %s21 = sadd.s32 %s20, 1
    %s22 = scalar_select %p19, %s20, %s21
    %p25 = pneg %p19
    %p26 = scmp.eq.s32.totalorder %s10, 1
    %p27 = por %p25, %p26
    %p28 = scmp.ne.s32.totalorder %s20, %s23
    %p29 = scmp.eq.s32.totalorder %s10, 0
    %p30 = por %p28, %p29
    %p31 = scmp.ne.s32.totalorder %s20, %s23
    %p32 = scmp.eq.s32.totalorder %s15, 1
    %p33 = por %p31, %p32
    %p34 = scmp.ne.s32.totalorder %s23, %s24
    %p35 = scmp.eq.s32.totalorder %s15, 0
    %p36 = por %p34, %p35
    %p37 = scmp.ne.s32.totalorder %s23, %s24
    %p38 = scmp.eq.s32.totalorder %s16, 1
    %p39 = por %p37, %p38
    %p41 = scmp.ne.s32.totalorder %s24, %s40
    %p42 = scmp.eq.s32.totalorder %s16, 0
    %p43 = por %p41, %p42
    %s45 = sadd.s32 %s44, 1
    %p48 = scmp.eq.s32.totalorder %s10, 1
    %p49 = scmp.ne.s32.totalorder %s44, %s46
    %p50 = scmp.eq.s32.totalorder %s10, 0
    %p51 = por %p49, %p50
    %p52 = scmp.ne.s32.totalorder %s44, %s46
    %p53 = scmp.eq.s32.totalorder %s15, 1
    %p54 = por %p52, %p53
    %p55 = scmp.ne.s32.totalorder %s46, %s47
    %p56 = scmp.eq.s32.totalorder %s15, 0
    %p57 = por %p55, %p56
    %p58 = scmp.ne.s32.totalorder %s46, %s47
    %p59 = scmp.eq.s32.totalorder %s16, 1
    %p60 = por %p58, %p59
    %p62 = scmp.ne.s32.totalorder %s47, %s61
    %p63 = scmp.eq.s32.totalorder %s16, 0
    %p64 = por %p62, %p63
    %s66 = sadd.s32 %s65, 1
    %p69 = scmp.eq.s32.totalorder %s10, 1
    %p70 = scmp.ne.s32.totalorder %s65, %s67
    %p71 = scmp.eq.s32.totalorder %s10, 0
    %p72 = por %p70, %p71
    %p73 = scmp.ne.s32.totalorder %s65, %s67
    %p74 = scmp.eq.s32.totalorder %s15, 1
    %p75 = por %p73, %p74
    %p76 = scmp.ne.s32.totalorder %s67, %s68
    %p77 = scmp.eq.s32.totalorder %s15, 0
    %p78 = por %p76, %p77
    %p79 = scmp.ne.s32.totalorder %s67, %s68
    %p80 = scmp.eq.s32.totalorder %s16, 1
    %p81 = por %p79, %p80
    %p83 = scmp.ne.s32.totalorder %s68, %s82
    %p84 = scmp.eq.s32.totalorder %s16, 0
    %p85 = por %p83, %p84
    %s87 = sadd.s32 %s86, 1
    %p90 = scmp.eq.s32.totalorder %s10, 1
    %p91 = scmp.ne.s32.totalorder %s86, %s88
    %p92 = scmp.eq.s32.totalorder %s10, 0
    %p93 = por %p91, %p92
    %p94 = scmp.ne.s32.totalorder %s86, %s88
    %p95 = scmp.eq.s32.totalorder %s15, 1
    %p96 = por %p94, %p95
    %p97 = scmp.ne.s32.totalorder %s88, %s89
    %p98 = scmp.eq.s32.totalorder %s15, 0
    %p99 = por %p97, %p98
    %p100 = scmp.ne.s32.totalorder %s88, %s89
    %p101 = scmp.eq.s32.totalorder %s16, 1
    %p102 = por %p100, %p101
    %p104 = scmp.ne.s32.totalorder %s89, %s103
    %p105 = scmp.eq.s32.totalorder %s16, 0
    %p106 = por %p104, %p105
    %s107 = ssub.s32 %s10, %s17
    %p108 = scmp.eq.s32.totalorder %s107, 0
    %s110 = sadd.s32 %s109, 1
    %s111 = scalar_select %p108, %s109, %s110
    %p114 = pneg %p108
    %p115 = scmp.eq.s32.totalorder %s10, 1
    %p116 = por %p114, %p115
    %p117 = scmp.ne.s32.totalorder %s109, %s112
    %p118 = scmp.eq.s32.totalorder %s10, 0
    %p119 = por %p117, %p118
    %p120 = scmp.ne.s32.totalorder %s109, %s112
    %p121 = scmp.eq.s32.totalorder %s15, 1
    %p122 = por %p120, %p121
    %p123 = scmp.ne.s32.totalorder %s112, %s113
    %p124 = scmp.eq.s32.totalorder %s15, 0
    %p125 = por %p123, %p124
    %p126 = scmp.ne.s32.totalorder %s112, %s113
    %p127 = scmp.eq.s32.totalorder %s16, 1
    %p128 = por %p126, %p127
    %p130 = scmp.ne.s32.totalorder %s113, %s129
    %p131 = scmp.eq.s32.totalorder %s16, 0
    %p132 = por %p130, %p131
    %p133 = scmp.le.s32.totalorder 1, %s10
    %p134 = scmp.lt.s32.totalorder %s10, 3
    %p135 = pnand %p133, %p134
    %p136 = pneg %p135
    // Predicated region
    $region9: #{c2f_mhsa_forward.9} parent=5 // pred_check
      _
    $region10: #{c2f_mhsa_forward.9} parent=5 // pred_check_branch
      %138 = sbr.rel (%p135) target = $region12
    $region11: #{c2f_mhsa_forward.9} parent=5 // pred_region
      %s139 = ssub.s32 %s10, 1
      // Predicated region
      $region13: #{c2f_mhsa_forward.9} parent=11 // pred_check
        %p140 = pneg %p57
      $region14: #{c2f_mhsa_forward.9} parent=11 // pred_check_branch
        %142 = sbr.rel (%p140) target = $region16
      $region15: #{c2f_mhsa_forward.9} parent=11 // pred_region
        _
      $region16: #{c2f_mhsa_forward.9} parent=11 // pred_fallthru
        _
      // Predicated region
      $region17: #{c2f_mhsa_forward.9} parent=11 // pred_check
        %p143 = pneg %p78
      $region18: #{c2f_mhsa_forward.9} parent=11 // pred_check_branch
        %145 = sbr.rel (%p143) target = $region20
      $region19: #{c2f_mhsa_forward.9} parent=11 // pred_region
        _
      $region20: #{c2f_mhsa_forward.9} parent=11 // pred_fallthru
        _
      // Predicated region
      $region21: #{c2f_mhsa_forward.9} parent=11 // pred_check
        %p146 = pneg %p99
      $region22: #{c2f_mhsa_forward.9} parent=11 // pred_check_branch
        %148 = sbr.rel (%p146) target = $region24
      $region23: #{c2f_mhsa_forward.9} parent=11 // pred_region
        _
      $region24: #{c2f_mhsa_forward.9} parent=11 // pred_fallthru
        _
    $region12: #{c2f_mhsa_forward.9} parent=5 // pred_fallthru
      _
    %p149 = scmp.lt.s32.totalorder %s10, 2
    // Predicated region
    $region25: #{c2f_mhsa_forward.9} parent=5 // pred_check
      %p150 = pneg %p149
    $region26: #{c2f_mhsa_forward.9} parent=5 // pred_check_branch
      %152 = sbr.rel (%p150) target = $region28
    $region27: #{c2f_mhsa_forward.9} parent=5 // pred_region
      // Predicated region
      $region29: #{c2f_mhsa_forward.9} parent=27 // pred_check
        %p153 = pneg %p30
      $region30: #{c2f_mhsa_forward.9} parent=27 // pred_check_branch
        %155 = sbr.rel (%p153) target = $region32
      $region31: #{c2f_mhsa_forward.9} parent=27 // pred_region
        %s156 = smul.u32 32, %s10
        %p157 = scmp.lt.s32.totalorder %s156, 63
        %s158 = scalar_select %p157, %s156, 63
        %s159 = smul.addr %s158, 8
        %s160 = scalar_lea.vmem %s0, %s159
        %s161 = smul.u32 32, %s10
      $region32: #{c2f_mhsa_forward.9} parent=27 // pred_fallthru
        _
    $region28: #{c2f_mhsa_forward.9} parent=5 // pred_fallthru
      _
    %p162 = scmp.le.s32.totalorder 1, %s10
    %p163 = scmp.lt.s32.totalorder %s10, 3
    %p164 = pnand %p162, %p163
    %p165 = pneg %p164
    // Predicated region
    $region33: #{c2f_mhsa_forward.9} parent=5 // pred_check
      _
    $region34: #{c2f_mhsa_forward.9} parent=5 // pred_check_branch
      %167 = sbr.rel (%p164) target = $region36
    $region35: #{c2f_mhsa_forward.9} parent=5 // pred_region
      %s168 = ssub.s32 %s10, 1
      %s169 = smul.u32 32, %s15
      %p170 = scmp.lt.s32.totalorder %s169, 63
      %s171 = scalar_select %p170, %s169, 63
      %s172 = smul.addr %s171, 8
      %s173 = scalar_lea.vmem %s0, %s172
      %p174 = pneg %p36
      %p175 = pneg %p33
      %p176 = pneg %p57
      %p177 = pneg %p54
      %p178 = pneg %p78
      %p179 = pneg %p75
      %p180 = pneg %p99
      %p181 = pneg %p96
      %p182 = pneg %p125
      %p183 = pneg %p122
      %s184 = smul.u32 32, %s15
      %p185 = scmp.lt.s32.totalorder %s184, 63
      %s186 = scalar_select %p185, %s184, 63
      %s187 = smul.addr %s186, 8
      %s188 = scalar_lea.vmem %s4, %s187
      %s189 = smul.u32 32, %s15
      %p190 = scmp.lt.s32.totalorder %s189, 63
      %s191 = scalar_select %p190, %s189, 63
      %s192 = smul.addr %s191, 8
      %s193 = scalar_lea.vmem %s0, %s192
      %s194 = smul.u32 32, %s15
      %s195 = smul.u32 32, %s15
      %p196 = scmp.lt.s32.totalorder %s195, 63
      %s197 = scalar_select %p196, %s195, 63
      %s198 = smul.addr %s197, 8
      %s199 = scalar_lea.vmem %s4, %s198
      %s200 = smul.u32 32, %s15
      %v202 = vld [vmem:[%s193] sm:$0xff]
      %v203 = vld [vmem:[%s193 + $0x8] sm:$0xff]
      %v204 = vld [vmem:[%s193 + $0x10] sm:$0xff]
      %v205 = vld [vmem:[%s193 + $0x18] sm:$0xff]
      %v206 = vld [vmem:[%s193 + $0x20] sm:$0xff]
      %v207 = vld [vmem:[%s193 + $0x28] sm:$0xff]
      %v208 = vld [vmem:[%s193 + $0x30] sm:$0xff]
      %v209 = vld [vmem:[%s193 + $0x38] sm:$0xff]
      %v210 = vld [vmem:[%s193 + $0x40] sm:$0xff]
      %v211 = vld [vmem:[%s193 + $0x48] sm:$0xff]
      %v212 = vld [vmem:[%s193 + $0x50] sm:$0xff]
      %v213 = vld [vmem:[%s193 + $0x58] sm:$0xff]
      %v214 = vld [vmem:[%s193 + $0x60] sm:$0xff]
      %v215 = vld [vmem:[%s193 + $0x68] sm:$0xff]
      %v216 = vld [vmem:[%s193 + $0x70] sm:$0xff]
      %v217 = vld [vmem:[%s193 + $0x78] sm:$0xff]
      %v218 = vld [vmem:[%s193 + $0x80] sm:$0xff]
      %v219 = vld [vmem:[%s193 + $0x88] sm:$0xff]
      %v220 = vld [vmem:[%s193 + $0x90] sm:$0xff]
      %v221 = vld [vmem:[%s193 + $0x98] sm:$0xff]
      %v222 = vld [vmem:[%s193 + $0xa0] sm:$0xff]
      %v223 = vld [vmem:[%s193 + $0xa8] sm:$0xff]
      %v224 = vld [vmem:[%s193 + $0xb0] sm:$0xff]
      %v225 = vld [vmem:[%s193 + $0xb8] sm:$0xff]
      %v226 = vld [vmem:[%s193 + $0xc0] sm:$0xff]
      %v227 = vld [vmem:[%s193 + $0xc8] sm:$0xff]
      %v228 = vld [vmem:[%s193 + $0xd0] sm:$0xff]
      %v229 = vld [vmem:[%s193 + $0xd8] sm:$0xff]
      %v230 = vld [vmem:[%s193 + $0xe0] sm:$0xff]
      %v231 = vld [vmem:[%s193 + $0xe8] sm:$0xff]
      %v232 = vld [vmem:[%s193 + $0xf0] sm:$0xff]
      %v233 = vld [vmem:[%s193 + $0xf8] sm:$0xff]
      %v234 = vpack.c.bf16 %v203, %v202
      %v235 = vpack.c.bf16 %v205, %v204
      %v236 = vpack.c.bf16 %v207, %v206
      %v237 = vpack.c.bf16 %v209, %v208
      %v238 = vpack.c.bf16 %v211, %v210
      %v239 = vpack.c.bf16 %v213, %v212
      %v240 = vpack.c.bf16 %v215, %v214
      %v241 = vpack.c.bf16 %v217, %v216
      %v242 = vpack.c.bf16 %v219, %v218
      %v243 = vpack.c.bf16 %v221, %v220
      %v244 = vpack.c.bf16 %v223, %v222
      %v245 = vpack.c.bf16 %v225, %v224
      %v246 = vpack.c.bf16 %v227, %v226
      %v247 = vpack.c.bf16 %v229, %v228
      %v248 = vpack.c.bf16 %v231, %v230
      %v249 = vpack.c.bf16 %v233, %v232
      %v250 = vld [vmem:[%s1] sm:$0xf]
      %v251 = vld [vmem:[%s1 + $0x4] sm:$0xf]
      %v252 = vld [vmem:[%s1 + $0x8] sm:$0xf]
      %v256 = vunpack.c.l.b16 %v250
      %v257 = vunpack.c.l.b16 %v251
      %v258 = vunpack.c.l.b16 %v252
      %v259 = vpack.c.b16 %v257, %v256
      %v260 = vpack.c.b16 %v258, %v258
      %vm262 = vcmask 195584
      %v264 = vsel %vm262, %v234, 0
      %v267 = vsel %vm262, %v235, 0
      %v270 = vsel %vm262, %v236, 0
      %v273 = vsel %vm262, %v237, 0
      %v276 = vsel %vm262, %v238, 0
      %v279 = vsel %vm262, %v239, 0
      %v282 = vsel %vm262, %v240, 0
      %v285 = vsel %vm262, %v241, 0
      %v288 = vsel %vm262, %v242, 0
      %v291 = vsel %vm262, %v243, 0
      %v294 = vsel %vm262, %v244, 0
      %v297 = vsel %vm262, %v245, 0
      %v300 = vsel %vm262, %v246, 0
      %v303 = vsel %vm262, %v247, 0
      %v306 = vsel %vm262, %v248, 0
      %v309 = vsel %vm262, %v249, 0
      %vm311 = vcmask 1043456
      %v313 = vsel %vm311, %v260, 0
      %315 = vmatprep.subr.bf16.mxu0 0
      %316 = vmatpush1.bf16.msra.mxu0 0
      %317 = vmatprep.subr.bf16.mxu0 0
      %318 = vmatpush1.bf16.msra.mxu0 0
      %319 = vmatprep.subr.bf16.mxu0 0
      %320 = vmatpush1.bf16.msra.mxu0 0
      %321 = vmatprep.subr.bf16.mxu0 0
      %322 = vmatpush1.bf16.msra.mxu0 0
      %323 = vmatprep.subr.bf16.mxu0 0
      %324 = vmatpush1.bf16.msra.mxu0 0
      %325 = vmatprep.subr.bf16.mxu0 0
      %326 = vmatpush1.bf16.msra.mxu0 0
      %327 = vmatprep.subr.bf16.mxu0 0
      %328 = vmatpush1.bf16.msra.mxu0 %v313
      %329 = vmatprep.subr.bf16.mxu0 0
      %330 = vmatpush1.bf16.msra.mxu0 %v259
      %331 = vmatprep.subr.bf16.mxu0 0
      %332 = vmatpush2.bf16.msra.mxu0 0
      %333 = vmatprep.subr.bf16.mxu0 0
      %334 = vmatpush2.bf16.msra.mxu0 0
      %335 = vmatprep.subr.bf16.mxu0 0
      %336 = vmatpush2.bf16.msra.mxu0 0
      %337 = vmatprep.subr.bf16.mxu0 0
      %338 = vmatpush2.bf16.msra.mxu0 0
      %339 = vmatprep.subr.bf16.mxu0 0
      %340 = vmatpush2.bf16.msra.mxu0 0
      %341 = vmatprep.subr.bf16.mxu0 0
      %342 = vmatpush2.bf16.msra.mxu0 0
      %343 = vmatprep.subr.bf16.mxu0 0
      %344 = vmatpush2.bf16.msra.mxu0 0
      %345 = vmatprep.subr.bf16.mxu0 0
      %346 = vmatpush2.bf16.msra.mxu0 0
      %347 = vmatprep.mubr.bf16.mxu0 0
      %348 = vmatmul.mubr.bf16.gmra.mxu0 %v264
      %v349 = vpop.f32.mrf.mxu0
      %v350 = vadd.f32 0.0, %v349
      %v351 = vpop.f32.mrf.mxu0
      %v352 = vpop.f32.mrf.mxu0
      %v353 = vadd.f32 0.0, %v352
      %v354 = vpop.f32.mrf.mxu0
      %355 = vmatprep.mubr.bf16.mxu0 0
      %356 = vmatmul.mubr.bf16.gmra.mxu0 %v267
      %v357 = vpop.f32.mrf.mxu0
      %v358 = vadd.f32 0.0, %v357
      %v359 = vpop.f32.mrf.mxu0
      %v360 = vpop.f32.mrf.mxu0
      %v361 = vadd.f32 0.0, %v360
      %v362 = vpop.f32.mrf.mxu0
      %363 = vmatprep.mubr.bf16.mxu0 0
      %364 = vmatmul.mubr.bf16.gmra.mxu0 %v270
      %v365 = vpop.f32.mrf.mxu0
      %v366 = vadd.f32 0.0, %v365
      %v367 = vpop.f32.mrf.mxu0
      %v368 = vpop.f32.mrf.mxu0
      %v369 = vadd.f32 0.0, %v368
      %v370 = vpop.f32.mrf.mxu0
      %371 = vmatprep.mubr.bf16.mxu0 0
      %372 = vmatmul.mubr.bf16.gmra.mxu0 %v273
      %v373 = vpop.f32.mrf.mxu0
      %v374 = vadd.f32 0.0, %v373
      %v375 = vpop.f32.mrf.mxu0
      %v376 = vpop.f32.mrf.mxu0
      %v377 = vadd.f32 0.0, %v376
      %v378 = vpop.f32.mrf.mxu0
      %379 = vmatprep.mubr.bf16.mxu0 0
      %380 = vmatmul.mubr.bf16.gmra.mxu0 %v276
      %v381 = vpop.f32.mrf.mxu0
      %v382 = vadd.f32 0.0, %v381
      %v383 = vpop.f32.mrf.mxu0
      %v384 = vpop.f32.mrf.mxu0
      %v385 = vadd.f32 0.0, %v384
      %v386 = vpop.f32.mrf.mxu0
      %387 = vmatprep.mubr.bf16.mxu0 0
      %388 = vmatmul.mubr.bf16.gmra.mxu0 %v279
      %v389 = vpop.f32.mrf.mxu0
      %v390 = vadd.f32 0.0, %v389
      %v391 = vpop.f32.mrf.mxu0
      %v392 = vpop.f32.mrf.mxu0
      %v393 = vadd.f32 0.0, %v392
      %v394 = vpop.f32.mrf.mxu0
      %395 = vmatprep.mubr.bf16.mxu0 0
      %396 = vmatmul.mubr.bf16.gmra.mxu0 %v282
      %v397 = vpop.f32.mrf.mxu0
      %v398 = vadd.f32 0.0, %v397
      %v399 = vpop.f32.mrf.mxu0
      %v400 = vpop.f32.mrf.mxu0
      %v401 = vadd.f32 0.0, %v400
      %v402 = vpop.f32.mrf.mxu0
      %403 = vmatprep.mubr.bf16.mxu0 0
      %404 = vmatmul.mubr.bf16.gmra.mxu0 %v285
      %v405 = vpop.f32.mrf.mxu0
      %v406 = vadd.f32 0.0, %v405
      %v407 = vpop.f32.mrf.mxu0
      %v408 = vpop.f32.mrf.mxu0
      %v409 = vadd.f32 0.0, %v408
      %v410 = vpop.f32.mrf.mxu0
      %411 = vmatprep.mubr.bf16.mxu0 0
      %412 = vmatmul.mubr.bf16.gmra.mxu0 %v288
      %v413 = vpop.f32.mrf.mxu0
      %v414 = vadd.f32 0.0, %v413
      %v415 = vpop.f32.mrf.mxu0
      %v416 = vpop.f32.mrf.mxu0
      %v417 = vadd.f32 0.0, %v416
      %v418 = vpop.f32.mrf.mxu0
      %419 = vmatprep.mubr.bf16.mxu0 0
      %420 = vmatmul.mubr.bf16.gmra.mxu0 %v291
      %v421 = vpop.f32.mrf.mxu0
      %v422 = vadd.f32 0.0, %v421
      %v423 = vpop.f32.mrf.mxu0
      %v424 = vpop.f32.mrf.mxu0
      %v425 = vadd.f32 0.0, %v424
      %v426 = vpop.f32.mrf.mxu0
      %427 = vmatprep.mubr.bf16.mxu0 0
      %428 = vmatmul.mubr.bf16.gmra.mxu0 %v294
      %v429 = vpop.f32.mrf.mxu0
      %v430 = vadd.f32 0.0, %v429
      %v431 = vpop.f32.mrf.mxu0
      %v432 = vpop.f32.mrf.mxu0
      %v433 = vadd.f32 0.0, %v432
      %v434 = vpop.f32.mrf.mxu0
      %435 = vmatprep.mubr.bf16.mxu0 0
      %436 = vmatmul.mubr.bf16.gmra.mxu0 %v297
      %v437 = vpop.f32.mrf.mxu0
      %v438 = vadd.f32 0.0, %v437
      %v439 = vpop.f32.mrf.mxu0
      %v440 = vpop.f32.mrf.mxu0
      %v441 = vadd.f32 0.0, %v440
      %v442 = vpop.f32.mrf.mxu0
      %443 = vmatprep.mubr.bf16.mxu0 0
      %444 = vmatmul.mubr.bf16.gmra.mxu0 %v300
      %v445 = vpop.f32.mrf.mxu0
      %v446 = vadd.f32 0.0, %v445
      %v447 = vpop.f32.mrf.mxu0
      %v448 = vpop.f32.mrf.mxu0
      %v449 = vadd.f32 0.0, %v448
      %v450 = vpop.f32.mrf.mxu0
      %451 = vmatprep.mubr.bf16.mxu0 0
      %452 = vmatmul.mubr.bf16.gmra.mxu0 %v303
      %v453 = vpop.f32.mrf.mxu0
      %v454 = vadd.f32 0.0, %v453
      %v455 = vpop.f32.mrf.mxu0
      %v456 = vpop.f32.mrf.mxu0
      %v457 = vadd.f32 0.0, %v456
      %v458 = vpop.f32.mrf.mxu0
      %459 = vmatprep.mubr.bf16.mxu0 0
      %460 = vmatmul.mubr.bf16.gmra.mxu0 %v306
      %v461 = vpop.f32.mrf.mxu0
      %v462 = vadd.f32 0.0, %v461
      %v463 = vpop.f32.mrf.mxu0
      %v464 = vpop.f32.mrf.mxu0
      %v465 = vadd.f32 0.0, %v464
      %v466 = vpop.f32.mrf.mxu0
      %467 = vmatprep.mubr.bf16.mxu0 0
      %468 = vmatmul.mubr.bf16.gmra.mxu0 %v309
      %v469 = vpop.f32.mrf.mxu0
      %v470 = vadd.f32 0.0, %v469
      %v471 = vpop.f32.mrf.mxu0
      %v472 = vpop.f32.mrf.mxu0
      %v473 = vadd.f32 0.0, %v472
      %v474 = vpop.f32.mrf.mxu0
      %475 = vdwg.mxu0
      %v476 = vld [vmem:[%s2] sm:$0x1]
      %v478 = vlaneseq
      %v479 = vshrl.u32 %v478, 7
      %v480 = vsub.s32 0, %v479
      %v481 = vrot.slane %v476, %v480
      %v483 = vmul.f32 %v350, %v481
      %v484 = vmul.f32 %v353, %v481
      %v485 = vmul.f32 %v358, %v481
      %v486 = vmul.f32 %v361, %v481
      %v487 = vmul.f32 %v366, %v481
      %v488 = vmul.f32 %v369, %v481
      %v489 = vmul.f32 %v374, %v481
      %v490 = vmul.f32 %v377, %v481
      %v491 = vmul.f32 %v382, %v481
      %v492 = vmul.f32 %v385, %v481
      %v493 = vmul.f32 %v390, %v481
      %v494 = vmul.f32 %v393, %v481
      %v495 = vmul.f32 %v398, %v481
      %v496 = vmul.f32 %v401, %v481
      %v497 = vmul.f32 %v406, %v481
      %v498 = vmul.f32 %v409, %v481
      %v499 = vmul.f32 %v414, %v481
      %v500 = vmul.f32 %v417, %v481
      %v501 = vmul.f32 %v422, %v481
      %v502 = vmul.f32 %v425, %v481
      %v503 = vmul.f32 %v430, %v481
      %v504 = vmul.f32 %v433, %v481
      %v505 = vmul.f32 %v438, %v481
      %v506 = vmul.f32 %v441, %v481
      %v507 = vmul.f32 %v446, %v481
      %v508 = vmul.f32 %v449, %v481
      %v509 = vmul.f32 %v454, %v481
      %v510 = vmul.f32 %v457, %v481
      %v511 = vmul.f32 %v462, %v481
      %v512 = vmul.f32 %v465, %v481
      %v513 = vmul.f32 %v470, %v481
      %v514 = vmul.f32 %v473, %v481
      %v515 = vld [vmem:[%s3] sm:$0x1]
      %v517 = vlaneseq
      %v518 = vshrl.u32 %v517, 7
      %v519 = vsub.s32 0, %v518
      %v520 = vrot.slane %v515, %v519
      %v522 = vadd.f32 %v483, %v520
      %v523 = vadd.f32 %v484, %v520
      %v524 = vadd.f32 %v485, %v520
      %v525 = vadd.f32 %v486, %v520
      %v526 = vadd.f32 %v487, %v520
      %v527 = vadd.f32 %v488, %v520
      %v528 = vadd.f32 %v489, %v520
      %v529 = vadd.f32 %v490, %v520
      %v530 = vadd.f32 %v491, %v520
      %v531 = vadd.f32 %v492, %v520
      %v532 = vadd.f32 %v493, %v520
      %v533 = vadd.f32 %v494, %v520
      %v534 = vadd.f32 %v495, %v520
      %v535 = vadd.f32 %v496, %v520
      %v536 = vadd.f32 %v497, %v520
      %v537 = vadd.f32 %v498, %v520
      %v538 = vadd.f32 %v499, %v520
      %v539 = vadd.f32 %v500, %v520
      %v540 = vadd.f32 %v501, %v520
      %v541 = vadd.f32 %v502, %v520
      %v542 = vadd.f32 %v503, %v520
      %v543 = vadd.f32 %v504, %v520
      %v544 = vadd.f32 %v505, %v520
      %v545 = vadd.f32 %v506, %v520
      %v546 = vadd.f32 %v507, %v520
      %v547 = vadd.f32 %v508, %v520
      %v548 = vadd.f32 %v509, %v520
      %v549 = vadd.f32 %v510, %v520
      %v550 = vadd.f32 %v511, %v520
      %v551 = vadd.f32 %v512, %v520
      %v552 = vadd.f32 %v513, %v520
      %v553 = vadd.f32 %v514, %v520
      %v554 = vxor.u32 %v522, 2147483648
      %v555 = vxor.u32 %v523, 2147483648
      %v556 = vxor.u32 %v524, 2147483648
      %v557 = vxor.u32 %v525, 2147483648
      %v558 = vxor.u32 %v526, 2147483648
      %v559 = vxor.u32 %v527, 2147483648
      %v560 = vxor.u32 %v528, 2147483648
      %v561 = vxor.u32 %v529, 2147483648
      %v562 = vxor.u32 %v530, 2147483648
      %v563 = vxor.u32 %v531, 2147483648
      %v564 = vxor.u32 %v532, 2147483648
      %v565 = vxor.u32 %v533, 2147483648
      %v566 = vxor.u32 %v534, 2147483648
      %v567 = vxor.u32 %v535, 2147483648
      %v568 = vxor.u32 %v536, 2147483648
      %v569 = vxor.u32 %v537, 2147483648
      %v570 = vxor.u32 %v538, 2147483648
      %v571 = vxor.u32 %v539, 2147483648
      %v572 = vxor.u32 %v540, 2147483648
      %v573 = vxor.u32 %v541, 2147483648
      %v574 = vxor.u32 %v542, 2147483648
      %v575 = vxor.u32 %v543, 2147483648
      %v576 = vxor.u32 %v544, 2147483648
      %v577 = vxor.u32 %v545, 2147483648
      %v578 = vxor.u32 %v546, 2147483648
      %v579 = vxor.u32 %v547, 2147483648
      %v580 = vxor.u32 %v548, 2147483648
      %v581 = vxor.u32 %v549, 2147483648
      %v582 = vxor.u32 %v550, 2147483648
      %v583 = vxor.u32 %v551, 2147483648
      %v584 = vxor.u32 %v552, 2147483648
      %v585 = vxor.u32 %v553, 2147483648
      %v586 = vmul.f32 %v554, 1.442695
      %v587 = vpow.pop %v586
      %v588 = vmul.f32 %v555, 1.442695
      %v589 = vpow.pop %v588
      %v590 = vmul.f32 %v556, 1.442695
      %v591 = vpow.pop %v590
      %v592 = vmul.f32 %v557, 1.442695
      %v593 = vpow.pop %v592
      %v594 = vmul.f32 %v558, 1.442695
      %v595 = vpow.pop %v594
      %v596 = vmul.f32 %v559, 1.442695
      %v597 = vpow.pop %v596
      %v598 = vmul.f32 %v560, 1.442695
      %v599 = vpow.pop %v598
      %v600 = vmul.f32 %v561, 1.442695
      %v601 = vpow.pop %v600
      %v602 = vmul.f32 %v562, 1.442695
      %v603 = vpow.pop %v602
      %v604 = vmul.f32 %v563, 1.442695
      %v605 = vpow.pop %v604
      %v606 = vmul.f32 %v564, 1.442695
      %v607 = vpow.pop %v606
      %v608 = vmul.f32 %v565, 1.442695
      %v609 = vpow.pop %v608
      %v610 = vmul.f32 %v566, 1.442695
      %v611 = vpow.pop %v610
      %v612 = vmul.f32 %v567, 1.442695
      %v613 = vpow.pop %v612
      %v614 = vmul.f32 %v568, 1.442695
      %v615 = vpow.pop %v614
      %v616 = vmul.f32 %v569, 1.442695
      %v617 = vpow.pop %v616
      %v618 = vmul.f32 %v570, 1.442695
      %v619 = vpow.pop %v618
      %v620 = vmul.f32 %v571, 1.442695
      %v621 = vpow.pop %v620
      %v622 = vmul.f32 %v572, 1.442695
      %v623 = vpow.pop %v622
      %v624 = vmul.f32 %v573, 1.442695
      %v625 = vpow.pop %v624
      %v626 = vmul.f32 %v574, 1.442695
      %v627 = vpow.pop %v626
      %v628 = vmul.f32 %v575, 1.442695
      %v629 = vpow.pop %v628
      %v630 = vmul.f32 %v576, 1.442695
      %v631 = vpow.pop %v630
      %v632 = vmul.f32 %v577, 1.442695
      %v633 = vpow.pop %v632
      %v634 = vmul.f32 %v578, 1.442695
      %v635 = vpow.pop %v634
      %v636 = vmul.f32 %v579, 1.442695
      %v637 = vpow.pop %v636
      %v638 = vmul.f32 %v580, 1.442695
      %v639 = vpow.pop %v638
      %v640 = vmul.f32 %v581, 1.442695
      %v641 = vpow.pop %v640
      %v642 = vmul.f32 %v582, 1.442695
      %v643 = vpow.pop %v642
      %v644 = vmul.f32 %v583, 1.442695
      %v645 = vpow.pop %v644
      %v646 = vmul.f32 %v584, 1.442695
      %v647 = vpow.pop %v646
      %v648 = vmul.f32 %v585, 1.442695
      %v649 = vpow.pop %v648
      %v650 = vadd.f32 %v587, 1.0
      %v651 = vadd.f32 %v589, 1.0
      %v652 = vadd.f32 %v591, 1.0
      %v653 = vadd.f32 %v593, 1.0
      %v654 = vadd.f32 %v595, 1.0
      %v655 = vadd.f32 %v597, 1.0
      %v656 = vadd.f32 %v599, 1.0
      %v657 = vadd.f32 %v601, 1.0
      %v658 = vadd.f32 %v603, 1.0
      %v659 = vadd.f32 %v605, 1.0
      %v660 = vadd.f32 %v607, 1.0
      %v661 = vadd.f32 %v609, 1.0
      %v662 = vadd.f32 %v611, 1.0
      %v663 = vadd.f32 %v613, 1.0
      %v664 = vadd.f32 %v615, 1.0
      %v665 = vadd.f32 %v617, 1.0
      %v666 = vadd.f32 %v619, 1.0
      %v667 = vadd.f32 %v621, 1.0
      %v668 = vadd.f32 %v623, 1.0
      %v669 = vadd.f32 %v625, 1.0
      %v670 = vadd.f32 %v627, 1.0
      %v671 = vadd.f32 %v629, 1.0
      %v672 = vadd.f32 %v631, 1.0
      %v673 = vadd.f32 %v633, 1.0
      %v674 = vadd.f32 %v635, 1.0
      %v675 = vadd.f32 %v637, 1.0
      %v676 = vadd.f32 %v639, 1.0
      %v677 = vadd.f32 %v641, 1.0
      %v678 = vadd.f32 %v643, 1.0
      %v679 = vadd.f32 %v645, 1.0
      %v680 = vadd.f32 %v647, 1.0
      %v681 = vadd.f32 %v649, 1.0
      %v682 = vrcp.pop %v650
      %v683 = vmul.f32 1.0, %v682
      %v684 = vrcp.pop %v651
      %v685 = vmul.f32 1.0, %v684
      %v686 = vrcp.pop %v652
      %v687 = vmul.f32 1.0, %v686
      %v688 = vrcp.pop %v653
      %v689 = vmul.f32 1.0, %v688
      %v690 = vrcp.pop %v654
      %v691 = vmul.f32 1.0, %v690
      %v692 = vrcp.pop %v655
      %v693 = vmul.f32 1.0, %v692
      %v694 = vrcp.pop %v656
      %v695 = vmul.f32 1.0, %v694
      %v696 = vrcp.pop %v657
      %v697 = vmul.f32 1.0, %v696
      %v698 = vrcp.pop %v658
      %v699 = vmul.f32 1.0, %v698
      %v700 = vrcp.pop %v659
      %v701 = vmul.f32 1.0, %v700
      %v702 = vrcp.pop %v660
      %v703 = vmul.f32 1.0, %v702
      %v704 = vrcp.pop %v661
      %v705 = vmul.f32 1.0, %v704
      %v706 = vrcp.pop %v662
      %v707 = vmul.f32 1.0, %v706
      %v708 = vrcp.pop %v663
      %v709 = vmul.f32 1.0, %v708
      %v710 = vrcp.pop %v664
      %v711 = vmul.f32 1.0, %v710
      %v712 = vrcp.pop %v665
      %v713 = vmul.f32 1.0, %v712
      %v714 = vrcp.pop %v666
      %v715 = vmul.f32 1.0, %v714
      %v716 = vrcp.pop %v667
      %v717 = vmul.f32 1.0, %v716
      %v718 = vrcp.pop %v668
      %v719 = vmul.f32 1.0, %v718
      %v720 = vrcp.pop %v669
      %v721 = vmul.f32 1.0, %v720
      %v722 = vrcp.pop %v670
      %v723 = vmul.f32 1.0, %v722
      %v724 = vrcp.pop %v671
      %v725 = vmul.f32 1.0, %v724
      %v726 = vrcp.pop %v672
      %v727 = vmul.f32 1.0, %v726
      %v728 = vrcp.pop %v673
      %v729 = vmul.f32 1.0, %v728
      %v730 = vrcp.pop %v674
      %v731 = vmul.f32 1.0, %v730
      %v732 = vrcp.pop %v675
      %v733 = vmul.f32 1.0, %v732
      %v734 = vrcp.pop %v676
      %v735 = vmul.f32 1.0, %v734
      %v736 = vrcp.pop %v677
      %v737 = vmul.f32 1.0, %v736
      %v738 = vrcp.pop %v678
      %v739 = vmul.f32 1.0, %v738
      %v740 = vrcp.pop %v679
      %v741 = vmul.f32 1.0, %v740
      %v742 = vrcp.pop %v680
      %v743 = vmul.f32 1.0, %v742
      %v744 = vrcp.pop %v681
      %v745 = vmul.f32 1.0, %v744
      %v746 = vmul.f32 %v522, %v683
      %v747 = vmul.f32 %v523, %v685
      %v748 = vmul.f32 %v524, %v687
      %v749 = vmul.f32 %v525, %v689
      %v750 = vmul.f32 %v526, %v691
      %v751 = vmul.f32 %v527, %v693
      %v752 = vmul.f32 %v528, %v695
      %v753 = vmul.f32 %v529, %v697
      %v754 = vmul.f32 %v530, %v699
      %v755 = vmul.f32 %v531, %v701
      %v756 = vmul.f32 %v532, %v703
      %v757 = vmul.f32 %v533, %v705
      %v758 = vmul.f32 %v534, %v707
      %v759 = vmul.f32 %v535, %v709
      %v760 = vmul.f32 %v536, %v711
      %v761 = vmul.f32 %v537, %v713
      %v762 = vmul.f32 %v538, %v715
      %v763 = vmul.f32 %v539, %v717
      %v764 = vmul.f32 %v540, %v719
      %v765 = vmul.f32 %v541, %v721
      %v766 = vmul.f32 %v542, %v723
      %v767 = vmul.f32 %v543, %v725
      %v768 = vmul.f32 %v544, %v727
      %v769 = vmul.f32 %v545, %v729
      %v770 = vmul.f32 %v546, %v731
      %v771 = vmul.f32 %v547, %v733
      %v772 = vmul.f32 %v548, %v735
      %v773 = vmul.f32 %v549, %v737
      %v774 = vmul.f32 %v550, %v739
      %v775 = vmul.f32 %v551, %v741
      %v776 = vmul.f32 %v552, %v743
      %v777 = vmul.f32 %v553, %v745
      %vm778 = vcmask 130048
      %779 = vst.msk [vmem:[%s199] sm:$0xff] %vm778, %v746
      %780 = vst.msk [vmem:[%s199 + $0x8] sm:$0xff] %vm778, %v747
      %781 = vst.msk [vmem:[%s199 + $0x10] sm:$0xff] %vm778, %v748
      %782 = vst.msk [vmem:[%s199 + $0x18] sm:$0xff] %vm778, %v749
      %783 = vst.msk [vmem:[%s199 + $0x20] sm:$0xff] %vm778, %v750
      %784 = vst.msk [vmem:[%s199 + $0x28] sm:$0xff] %vm778, %v751
      %785 = vst.msk [vmem:[%s199 + $0x30] sm:$0xff] %vm778, %v752
      %786 = vst.msk [vmem:[%s199 + $0x38] sm:$0xff] %vm778, %v753
      %787 = vst.msk [vmem:[%s199 + $0x40] sm:$0xff] %vm778, %v754
      %788 = vst.msk [vmem:[%s199 + $0x48] sm:$0xff] %vm778, %v755
      %789 = vst.msk [vmem:[%s199 + $0x50] sm:$0xff] %vm778, %v756
      %790 = vst.msk [vmem:[%s199 + $0x58] sm:$0xff] %vm778, %v757
      %791 = vst.msk [vmem:[%s199 + $0x60] sm:$0xff] %vm778, %v758
      %792 = vst.msk [vmem:[%s199 + $0x68] sm:$0xff] %vm778, %v759
      %793 = vst.msk [vmem:[%s199 + $0x70] sm:$0xff] %vm778, %v760
      %794 = vst.msk [vmem:[%s199 + $0x78] sm:$0xff] %vm778, %v761
      %795 = vst.msk [vmem:[%s199 + $0x80] sm:$0xff] %vm778, %v762
      %796 = vst.msk [vmem:[%s199 + $0x88] sm:$0xff] %vm778, %v763
      %797 = vst.msk [vmem:[%s199 + $0x90] sm:$0xff] %vm778, %v764
      %798 = vst.msk [vmem:[%s199 + $0x98] sm:$0xff] %vm778, %v765
      %799 = vst.msk [vmem:[%s199 + $0xa0] sm:$0xff] %vm778, %v766
      %800 = vst.msk [vmem:[%s199 + $0xa8] sm:$0xff] %vm778, %v767
      %801 = vst.msk [vmem:[%s199 + $0xb0] sm:$0xff] %vm778, %v768
      %802 = vst.msk [vmem:[%s199 + $0xb8] sm:$0xff] %vm778, %v769
      %803 = vst.msk [vmem:[%s199 + $0xc0] sm:$0xff] %vm778, %v770
      %804 = vst.msk [vmem:[%s199 + $0xc8] sm:$0xff] %vm778, %v771
      %805 = vst.msk [vmem:[%s199 + $0xd0] sm:$0xff] %vm778, %v772
      %806 = vst.msk [vmem:[%s199 + $0xd8] sm:$0xff] %vm778, %v773
      %807 = vst.msk [vmem:[%s199 + $0xe0] sm:$0xff] %vm778, %v774
      %808 = vst.msk [vmem:[%s199 + $0xe8] sm:$0xff] %vm778, %v775
      %809 = vst.msk [vmem:[%s199 + $0xf0] sm:$0xff] %vm778, %v776
      %810 = vst.msk [vmem:[%s199 + $0xf8] sm:$0xff] %vm778, %v777
      %s811 = smul.u32 32, %s15
      %p812 = scmp.lt.s32.totalorder %s811, 63
      %s813 = scalar_select %p812, %s811, 63
      %s814 = smul.addr %s813, 8
      %s815 = scalar_lea.vmem %s4, %s814
      // Predicated region
      $region37: #{c2f_mhsa_forward.9} parent=35 // pred_check
        %p816 = pneg %p122
      $region38: #{c2f_mhsa_forward.9} parent=35 // pred_check_branch
        %818 = sbr.rel (%p816) target = $region40
      $region39: #{c2f_mhsa_forward.9} parent=35 // pred_region
        %s819 = smul.u32 32, %s15
      $region40: #{c2f_mhsa_forward.9} parent=35 // pred_fallthru
        _
    $region36: #{c2f_mhsa_forward.9} parent=5 // pred_fallthru
      _
    %p820 = scmp.le.s32.totalorder 2, %s10
    // Predicated region
    $region41: #{c2f_mhsa_forward.9} parent=5 // pred_check
      %p821 = pneg %p820
    $region42: #{c2f_mhsa_forward.9} parent=5 // pred_check_branch
      %823 = sbr.rel (%p821) target = $region44
    $region43: #{c2f_mhsa_forward.9} parent=5 // pred_region
      %s824 = ssub.s32 %s10, 2
      // Predicated region
      $region45: #{c2f_mhsa_forward.9} parent=43 // pred_check
        %p825 = pneg %p128
      $region46: #{c2f_mhsa_forward.9} parent=43 // pred_check_branch
        %827 = sbr.rel (%p825) target = $region48
      $region47: #{c2f_mhsa_forward.9} parent=43 // pred_region
        %s828 = smul.u32 32, %s16
        %p829 = scmp.lt.s32.totalorder %s828, 63
        %s830 = scalar_select %p829, %s828, 63
        %s831 = smul.addr %s830, 8
        %s832 = scalar_lea.vmem %s4, %s831
      $region48: #{c2f_mhsa_forward.9} parent=43 // pred_fallthru
        _
    $region44: #{c2f_mhsa_forward.9} parent=5 // pred_fallthru
      _
  $region6: #{c2f_mhsa_forward.9} parent=0 // loop_footer
    %s14 = sadd.s32 1, %s10
  $region7: #{c2f_mhsa_forward.9} parent=0 // loop_footer_branch
    %9 = sbr.rel target = $region3
  $region8: #{c2f_mhsa_forward.9} parent=0 // loop_exit
    _

// kernel: c2f_mhsa_forward.6
$region0: #{c2f_mhsa_forward.6}
  #allocation0 [shape = 'u32[]', space=smem, size = 0x4, offset = 0x4, fixed_abs, tag = 'smem constant byte address 0x4 - core index']
  #allocation1 [shape = 'u32[144,128]{1,0:T(1,128)}', space=vmem, size = 0x12000, scoped, tag = 'internal scratch']
  %s0 = inlined_call_operand.vmem [shape: f32[2,328,8], index: 0, kind: input, shape index: {}]
  %s1 = inlined_call_operand.vmem [shape: bf16[9,8,8], index: 1, kind: input, shape index: {}]
  %s2 = inlined_call_operand.vmem [shape: f32[1,8], index: 2, kind: input, shape index: {}]
  %s3 = inlined_call_operand.vmem [shape: f32[1,8], index: 3, kind: input, shape index: {}]
  %s4 = inlined_call_operand.vmem [shape: f32[2,288,8], index: 4, kind: output, shape index: {}]
  %s5 = sld [smem:[#allocation0]]
  $region49: #{c2f_mhsa_forward.6} parent=0
    _
  %s7 = ssub.s32 1, %s5
  %s8 = scalar_select 0, %s7, %s5
  loop: start=0, step=1, limit=4
  $region2: #{c2f_mhsa_forward.6} parent=0 // loop_pre_header
    _
  $region3: #{c2f_mhsa_forward.6} parent=0 // loop_header
    %s10 = sphi 0, %s14
    %p11 = scmp.ge.s32.totalorder %s10, 4
    %s20 = sphi 0, %s22
    %s23 = sphi 0, %s20
    %s24 = sphi 0, %s23
    %s40 = sphi 0, %s24
    %s44 = sphi 0, %s44
    %s46 = sphi 0, %s44
    %s47 = sphi 0, %s46
    %s61 = sphi 0, %s47
    %s65 = sphi 0, %s65
    %s67 = sphi 0, %s65
    %s68 = sphi 0, %s67
    %s82 = sphi 0, %s68
    %s86 = sphi 0, %s86
    %s88 = sphi 0, %s86
    %s89 = sphi 0, %s88
    %s103 = sphi 0, %s89
    %s109 = sphi 0, %s111
    %s112 = sphi 0, %s109
    %s113 = sphi 0, %s112
    %s129 = sphi 0, %s113
  $region4: #{c2f_mhsa_forward.6} parent=0 // loop_header_branch
    %13 = sbr.rel (%p11) target = $region8
  $region5: #{c2f_mhsa_forward.6} parent=0 // loop_body
    %s15 = ssub.s32 %s10, 1
    %s16 = ssub.s32 %s10, 2
    %s17 = sadd.s32 %s10, 1
    %s18 = ssub.s32 %s10, %s17
    %p19 = scmp.eq.s32.totalorder %s18, 0
    %s21 = sadd.s32 %s20, 1
    %s22 = scalar_select %p19, %s20, %s21
    %p25 = pneg %p19
    %p26 = scmp.eq.s32.totalorder %s10, 1
    %p27 = por %p25, %p26
    %p28 = scmp.ne.s32.totalorder %s20, %s23
    %p29 = scmp.eq.s32.totalorder %s10, 0
    %p30 = por %p28, %p29
    %p31 = scmp.ne.s32.totalorder %s20, %s23
    %p32 = scmp.eq.s32.totalorder %s15, 1
    %p33 = por %p31, %p32
    %p34 = scmp.ne.s32.totalorder %s23, %s24
    %p35 = scmp.eq.s32.totalorder %s15, 0
    %p36 = por %p34, %p35
    %p37 = scmp.ne.s32.totalorder %s23, %s24
    %p38 = scmp.eq.s32.totalorder %s16, 1
    %p39 = por %p37, %p38
    %p41 = scmp.ne.s32.totalorder %s24, %s40
    %p42 = scmp.eq.s32.totalorder %s16, 0
    %p43 = por %p41, %p42
    %s45 = sadd.s32 %s44, 1
    %p48 = scmp.eq.s32.totalorder %s10, 1
    %p49 = scmp.ne.s32.totalorder %s44, %s46
    %p50 = scmp.eq.s32.totalorder %s10, 0
    %p51 = por %p49, %p50
    %p52 = scmp.ne.s32.totalorder %s44, %s46
    %p53 = scmp.eq.s32.totalorder %s15, 1
    %p54 = por %p52, %p53
    %p55 = scmp.ne.s32.totalorder %s46, %s47
    %p56 = scmp.eq.s32.totalorder %s15, 0
    %p57 = por %p55, %p56
    %p58 = scmp.ne.s32.totalorder %s46, %s47
    %p59 = scmp.eq.s32.totalorder %s16, 1
    %p60 = por %p58, %p59
    %p62 = scmp.ne.s32.totalorder %s47, %s61
    %p63 = scmp.eq.s32.totalorder %s16, 0
    %p64 = por %p62, %p63
    %s66 = sadd.s32 %s65, 1
    %p69 = scmp.eq.s32.totalorder %s10, 1
    %p70 = scmp.ne.s32.totalorder %s65, %s67
    %p71 = scmp.eq.s32.totalorder %s10, 0
    %p72 = por %p70, %p71
    %p73 = scmp.ne.s32.totalorder %s65, %s67
    %p74 = scmp.eq.s32.totalorder %s15, 1
    %p75 = por %p73, %p74
    %p76 = scmp.ne.s32.totalorder %s67, %s68
    %p77 = scmp.eq.s32.totalorder %s15, 0
    %p78 = por %p76, %p77
    %p79 = scmp.ne.s32.totalorder %s67, %s68
    %p80 = scmp.eq.s32.totalorder %s16, 1
    %p81 = por %p79, %p80
    %p83 = scmp.ne.s32.totalorder %s68, %s82
    %p84 = scmp.eq.s32.totalorder %s16, 0
    %p85 = por %p83, %p84
    %s87 = sadd.s32 %s86, 1
    %p90 = scmp.eq.s32.totalorder %s10, 1
    %p91 = scmp.ne.s32.totalorder %s86, %s88
    %p92 = scmp.eq.s32.totalorder %s10, 0
    %p93 = por %p91, %p92
    %p94 = scmp.ne.s32.totalorder %s86, %s88
    %p95 = scmp.eq.s32.totalorder %s15, 1
    %p96 = por %p94, %p95
    %p97 = scmp.ne.s32.totalorder %s88, %s89
    %p98 = scmp.eq.s32.totalorder %s15, 0
    %p99 = por %p97, %p98
    %p100 = scmp.ne.s32.totalorder %s88, %s89
    %p101 = scmp.eq.s32.totalorder %s16, 1
    %p102 = por %p100, %p101
    %p104 = scmp.ne.s32.totalorder %s89, %s103
    %p105 = scmp.eq.s32.totalorder %s16, 0
    %p106 = por %p104, %p105
    %s107 = ssub.s32 %s10, %s17
    %p108 = scmp.eq.s32.totalorder %s107, 0
    %s110 = sadd.s32 %s109, 1
    %s111 = scalar_select %p108, %s109, %s110
    %p114 = pneg %p108
    %p115 = scmp.eq.s32.totalorder %s10, 1
    %p116 = por %p114, %p115
    %p117 = scmp.ne.s32.totalorder %s109, %s112
    %p118 = scmp.eq.s32.totalorder %s10, 0
    %p119 = por %p117, %p118
    %p120 = scmp.ne.s32.totalorder %s109, %s112
    %p121 = scmp.eq.s32.totalorder %s15, 1
    %p122 = por %p120, %p121
    %p123 = scmp.ne.s32.totalorder %s112, %s113
    %p124 = scmp.eq.s32.totalorder %s15, 0
    %p125 = por %p123, %p124
    %p126 = scmp.ne.s32.totalorder %s112, %s113
    %p127 = scmp.eq.s32.totalorder %s16, 1
    %p128 = por %p126, %p127
    %p130 = scmp.ne.s32.totalorder %s113, %s129
    %p131 = scmp.eq.s32.totalorder %s16, 0
    %p132 = por %p130, %p131
    %p133 = scmp.le.s32.totalorder 1, %s10
    %p134 = scmp.lt.s32.totalorder %s10, 3
    %p135 = pnand %p133, %p134
    %p136 = pneg %p135
    // Predicated region
    $region9: #{c2f_mhsa_forward.6} parent=5 // pred_check
      _
    $region10: #{c2f_mhsa_forward.6} parent=5 // pred_check_branch
      %138 = sbr.rel (%p135) target = $region12
    $region11: #{c2f_mhsa_forward.6} parent=5 // pred_region
      %s139 = ssub.s32 %s10, 1
      // Predicated region
      $region13: #{c2f_mhsa_forward.6} parent=11 // pred_check
        %p140 = pneg %p57
      $region14: #{c2f_mhsa_forward.6} parent=11 // pred_check_branch
        %142 = sbr.rel (%p140) target = $region16
      $region15: #{c2f_mhsa_forward.6} parent=11 // pred_region
        _
      $region16: #{c2f_mhsa_forward.6} parent=11 // pred_fallthru
        _
      // Predicated region
      $region17: #{c2f_mhsa_forward.6} parent=11 // pred_check
        %p143 = pneg %p78
      $region18: #{c2f_mhsa_forward.6} parent=11 // pred_check_branch
        %145 = sbr.rel (%p143) target = $region20
      $region19: #{c2f_mhsa_forward.6} parent=11 // pred_region
        _
      $region20: #{c2f_mhsa_forward.6} parent=11 // pred_fallthru
        _
      // Predicated region
      $region21: #{c2f_mhsa_forward.6} parent=11 // pred_check
        %p146 = pneg %p99
      $region22: #{c2f_mhsa_forward.6} parent=11 // pred_check_branch
        %148 = sbr.rel (%p146) target = $region24
      $region23: #{c2f_mhsa_forward.6} parent=11 // pred_region
        _
      $region24: #{c2f_mhsa_forward.6} parent=11 // pred_fallthru
        _
    $region12: #{c2f_mhsa_forward.6} parent=5 // pred_fallthru
      _
    %p149 = scmp.lt.s32.totalorder %s10, 2
    // Predicated region
    $region25: #{c2f_mhsa_forward.6} parent=5 // pred_check
      %p150 = pneg %p149
    $region26: #{c2f_mhsa_forward.6} parent=5 // pred_check_branch
      %152 = sbr.rel (%p150) target = $region28
    $region27: #{c2f_mhsa_forward.6} parent=5 // pred_region
      // Predicated region
      $region29: #{c2f_mhsa_forward.6} parent=27 // pred_check
        %p153 = pneg %p30
      $region30: #{c2f_mhsa_forward.6} parent=27 // pred_check_branch
        %155 = sbr.rel (%p153) target = $region32
      $region31: #{c2f_mhsa_forward.6} parent=27 // pred_region
        %p156 = scmp.lt.s32.totalorder %s10, 1
        %s157 = scalar_select %p156, %s10, 1
        %s158 = smul.addr %s157, 41
        %s159 = smul.addr %s158, 8
        %s160 = scalar_lea.vmem %s0, %s159
      $region32: #{c2f_mhsa_forward.6} parent=27 // pred_fallthru
        _
    $region28: #{c2f_mhsa_forward.6} parent=5 // pred_fallthru
      _
    %p161 = scmp.le.s32.totalorder 1, %s10
    %p162 = scmp.lt.s32.totalorder %s10, 3
    %p163 = pnand %p161, %p162
    %p164 = pneg %p163
    // Predicated region
    $region33: #{c2f_mhsa_forward.6} parent=5 // pred_check
      _
    $region34: #{c2f_mhsa_forward.6} parent=5 // pred_check_branch
      %166 = sbr.rel (%p163) target = $region36
    $region35: #{c2f_mhsa_forward.6} parent=5 // pred_region
      %s167 = ssub.s32 %s10, 1
      %p168 = scmp.lt.s32.totalorder %s15, 1
      %s169 = scalar_select %p168, %s15, 1
      %s170 = smul.addr %s169, 41
      %s171 = smul.addr %s170, 8
      %s172 = scalar_lea.vmem %s0, %s171
      %p173 = pneg %p36
      %p174 = pneg %p33
      %p175 = pneg %p57
      %p176 = pneg %p54
      %p177 = pneg %p78
      %p178 = pneg %p75
      %p179 = pneg %p99
      %p180 = pneg %p96
      %p181 = pneg %p125
      %p182 = pneg %p122
      %p183 = scmp.lt.s32.totalorder %s15, 1
      %s184 = scalar_select %p183, %s15, 1
      %s185 = smul.addr %s184, 36
      %s186 = smul.addr %s185, 8
      %s187 = scalar_lea.vmem %s4, %s186
      %p188 = scmp.lt.s32.totalorder %s15, 1
      %s189 = scalar_select %p188, %s15, 1
      %s190 = smul.addr %s189, 41
      %s191 = smul.addr %s190, 8
      %s192 = scalar_lea.vmem %s0, %s191
      %p193 = scmp.lt.s32.totalorder %s15, 1
      %s194 = scalar_select %p193, %s15, 1
      %s195 = smul.addr %s194, 36
      %s196 = smul.addr %s195, 8
      %s197 = scalar_lea.vmem %s4, %s196
      %v199 = vld [vmem:[%s192] sm:$0xff]
      %v200 = vld [vmem:[%s192 + $0x8] sm:$0xff]
      %v201 = vld [vmem:[%s192 + $0x10] sm:$0xff]
      %v202 = vld [vmem:[%s192 + $0x18] sm:$0xff]
      %v203 = vld [vmem:[%s192 + $0x20] sm:$0xff]
      %v204 = vld [vmem:[%s192 + $0x28] sm:$0xff]
      %v205 = vld [vmem:[%s192 + $0x30] sm:$0xff]
      %v206 = vld [vmem:[%s192 + $0x38] sm:$0xff]
      %v207 = vld [vmem:[%s192 + $0x40] sm:$0xff]
      %v208 = vld [vmem:[%s192 + $0x48] sm:$0xff]
      %v209 = vld [vmem:[%s192 + $0x50] sm:$0xff]
      %v210 = vld [vmem:[%s192 + $0x58] sm:$0xff]
      %v211 = vld [vmem:[%s192 + $0x60] sm:$0xff]
      %v212 = vld [vmem:[%s192 + $0x68] sm:$0xff]
      %v213 = vld [vmem:[%s192 + $0x70] sm:$0xff]
      %v214 = vld [vmem:[%s192 + $0x78] sm:$0xff]
      %v215 = vld [vmem:[%s192 + $0x80] sm:$0xff]
      %v216 = vld [vmem:[%s192 + $0x88] sm:$0xff]
      %v217 = vld [vmem:[%s192 + $0x90] sm:$0xff]
      %v218 = vld [vmem:[%s192 + $0x98] sm:$0xff]
      %v219 = vld [vmem:[%s192 + $0xa0] sm:$0xff]
      %v220 = vld [vmem:[%s192 + $0xa8] sm:$0xff]
      %v221 = vld [vmem:[%s192 + $0xb0] sm:$0xff]
      %v222 = vld [vmem:[%s192 + $0xb8] sm:$0xff]
      %v223 = vld [vmem:[%s192 + $0xc0] sm:$0xff]
      %v224 = vld [vmem:[%s192 + $0xc8] sm:$0xff]
      %v225 = vld [vmem:[%s192 + $0xd0] sm:$0xff]
      %v226 = vld [vmem:[%s192 + $0xd8] sm:$0xff]
      %v227 = vld [vmem:[%s192 + $0xe0] sm:$0xff]
      %v228 = vld [vmem:[%s192 + $0xe8] sm:$0xff]
      %v229 = vld [vmem:[%s192 + $0xf0] sm:$0xff]
      %v230 = vld [vmem:[%s192 + $0xf8] sm:$0xff]
      %v231 = vld [vmem:[%s192 + $0x100] sm:$0xff]
      %v232 = vld [vmem:[%s192 + $0x108] sm:$0xff]
      %v233 = vld [vmem:[%s192 + $0x110] sm:$0xff]
      %v234 = vld [vmem:[%s192 + $0x118] sm:$0xff]
      %v235 = vpack.c.bf16 %v200, %v199
      %v236 = vpack.c.bf16 %v202, %v201
      %v237 = vpack.c.bf16 %v204, %v203
      %v238 = vpack.c.bf16 %v206, %v205
      %v239 = vpack.c.bf16 %v208, %v207
      %v240 = vpack.c.bf16 %v210, %v209
      %v241 = vpack.c.bf16 %v212, %v211
      %v242 = vpack.c.bf16 %v214, %v213
      %v243 = vpack.c.bf16 %v216, %v215
      %v244 = vpack.c.bf16 %v218, %v217
      %v245 = vpack.c.bf16 %v220, %v219
      %v246 = vpack.c.bf16 %v222, %v221
      %v247 = vpack.c.bf16 %v224, %v223
      %v248 = vpack.c.bf16 %v226, %v225
      %v249 = vpack.c.bf16 %v228, %v227
      %v250 = vpack.c.bf16 %v230, %v229
      %v251 = vpack.c.bf16 %v232, %v231
      %v252 = vpack.c.bf16 %v234, %v233
      %v253 = vld [vmem:[%s1] sm:$0xf]
      %v254 = vld [vmem:[%s192 + $0x1] sm:$0xff]
      %v255 = vld [vmem:[%s192 + $0x9] sm:$0xff]
      %v256 = vld [vmem:[%s192 + $0x11] sm:$0xff]
      %v257 = vld [vmem:[%s192 + $0x19] sm:$0xff]
      %v258 = vld [vmem:[%s192 + $0x21] sm:$0xff]
      %v259 = vld [vmem:[%s192 + $0x29] sm:$0xff]
      %v260 = vld [vmem:[%s192 + $0x31] sm:$0xff]
      %v261 = vld [vmem:[%s192 + $0x39] sm:$0xff]
      %v262 = vld [vmem:[%s192 + $0x41] sm:$0xff]
      %v263 = vld [vmem:[%s192 + $0x49] sm:$0xff]
      %v264 = vld [vmem:[%s192 + $0x51] sm:$0xff]
      %v265 = vld [vmem:[%s192 + $0x59] sm:$0xff]
      %v266 = vld [vmem:[%s192 + $0x61] sm:$0xff]
      %v267 = vld [vmem:[%s192 + $0x69] sm:$0xff]
      %v268 = vld [vmem:[%s192 + $0x71] sm:$0xff]
      %v269 = vld [vmem:[%s192 + $0x79] sm:$0xff]
      %v270 = vld [vmem:[%s192 + $0x81] sm:$0xff]
      %v271 = vld [vmem:[%s192 + $0x89] sm:$0xff]
      %v272 = vld [vmem:[%s192 + $0x91] sm:$0xff]
      %v273 = vld [vmem:[%s192 + $0x99] sm:$0xff]
      %v274 = vld [vmem:[%s192 + $0xa1] sm:$0xff]
      %v275 = vld [vmem:[%s192 + $0xa9] sm:$0xff]
      %v276 = vld [vmem:[%s192 + $0xb1] sm:$0xff]
      %v277 = vld [vmem:[%s192 + $0xb9] sm:$0xff]
      %v278 = vld [vmem:[%s192 + $0xc1] sm:$0xff]
      %v279 = vld [vmem:[%s192 + $0xc9] sm:$0xff]
      %v280 = vld [vmem:[%s192 + $0xd1] sm:$0xff]
      %v281 = vld [vmem:[%s192 + $0xd9] sm:$0xff]
      %v282 = vld [vmem:[%s192 + $0xe1] sm:$0xff]
      %v283 = vld [vmem:[%s192 + $0xe9] sm:$0xff]
      %v284 = vld [vmem:[%s192 + $0xf1] sm:$0xff]
      %v285 = vld [vmem:[%s192 + $0xf9] sm:$0xff]
      %v286 = vld [vmem:[%s192 + $0x101] sm:$0xff]
      %v287 = vld [vmem:[%s192 + $0x109] sm:$0xff]
      %v288 = vld [vmem:[%s192 + $0x111] sm:$0xff]
      %v289 = vld [vmem:[%s192 + $0x119] sm:$0xff]
      %v290 = vpack.c.bf16 %v255, %v254
      %v291 = vpack.c.bf16 %v257, %v256
      %v292 = vpack.c.bf16 %v259, %v258
      %v293 = vpack.c.bf16 %v261, %v260
      %v294 = vpack.c.bf16 %v263, %v262
      %v295 = vpack.c.bf16 %v265, %v264
      %v296 = vpack.c.bf16 %v267, %v266
      %v297 = vpack.c.bf16 %v269, %v268
      %v298 = vpack.c.bf16 %v271, %v270
      %v299 = vpack.c.bf16 %v273, %v272
      %v300 = vpack.c.bf16 %v275, %v274
      %v301 = vpack.c.bf16 %v277, %v276
      %v302 = vpack.c.bf16 %v279, %v278
      %v303 = vpack.c.bf16 %v281, %v280
      %v304 = vpack.c.bf16 %v283, %v282
      %v305 = vpack.c.bf16 %v285, %v284
      %v306 = vpack.c.bf16 %v287, %v286
      %v307 = vpack.c.bf16 %v289, %v288
      %s308 = scalar_lea.vmem %s1, 4
      %v309 = vld [vmem:[%s308] sm:$0xf]
      %vm310 = vcmask 64512
      %v312 = vsel %vm310, %v290, 0
      %v315 = vsel %vm310, %v291, 0
      %v318 = vsel %vm310, %v292, 0
      %v321 = vsel %vm310, %v293, 0
      %v324 = vsel %vm310, %v294, 0
      %v327 = vsel %vm310, %v295, 0
      %v330 = vsel %vm310, %v296, 0
      %v333 = vsel %vm310, %v297, 0
      %v336 = vsel %vm310, %v298, 0
      %v339 = vsel %vm310, %v299, 0
      %v342 = vsel %vm310, %v300, 0
      %v345 = vsel %vm310, %v301, 0
      %v348 = vsel %vm310, %v302, 0
      %v351 = vsel %vm310, %v303, 0
      %v354 = vsel %vm310, %v304, 0
      %v357 = vsel %vm310, %v305, 0
      %v360 = vsel %vm310, %v306, 0
      %v363 = vsel %vm310, %v307, 0
      %vm365 = vcmask 1043456
      %v367 = vsel %vm365, %v309, 0
      %369 = vmatprep.subr.bf16.mxu0 0
      %370 = vmatpush1.bf16.msra.mxu0 0
      %371 = vmatprep.subr.bf16.mxu0 0
      %372 = vmatpush1.bf16.msra.mxu0 0
      %373 = vmatprep.subr.bf16.mxu0 0
      %374 = vmatpush1.bf16.msra.mxu0 0
      %375 = vmatprep.subr.bf16.mxu0 0
      %376 = vmatpush1.bf16.msra.mxu0 0
      %377 = vmatprep.subr.bf16.mxu0 0
      %378 = vmatpush1.bf16.msra.mxu0 0
      %379 = vmatprep.subr.bf16.mxu0 0
      %380 = vmatpush1.bf16.msra.mxu0 0
      %381 = vmatprep.subr.bf16.mxu0 0
      %382 = vmatpush1.bf16.msra.mxu0 0
      %383 = vmatprep.subr.bf16.mxu0 0
      %384 = vmatpush1.bf16.msra.mxu0 %v367
      %385 = vmatprep.subr.bf16.mxu0 0
      %386 = vmatpush2.bf16.msra.mxu0 0
      %387 = vmatprep.subr.bf16.mxu0 0
      %388 = vmatpush2.bf16.msra.mxu0 0
      %389 = vmatprep.subr.bf16.mxu0 0
      %390 = vmatpush2.bf16.msra.mxu0 0
      %391 = vmatprep.subr.bf16.mxu0 0
      %392 = vmatpush2.bf16.msra.mxu0 0
      %393 = vmatprep.subr.bf16.mxu0 0
      %394 = vmatpush2.bf16.msra.mxu0 0
      %395 = vmatprep.subr.bf16.mxu0 0
      %396 = vmatpush2.bf16.msra.mxu0 0
      %397 = vmatprep.subr.bf16.mxu0 0
      %398 = vmatpush2.bf16.msra.mxu0 0
      %399 = vmatprep.subr.bf16.mxu0 0
      %400 = vmatpush2.bf16.msra.mxu0 0
      %401 = vmatprep.mubr.bf16.mxu0 0
      %402 = vmatmul.mubr.bf16.gmra.mxu0 %v312
      %v403 = vpop.f32.mrf.mxu0
      %v404 = vadd.f32 0.0, %v403
      %v405 = vpop.f32.mrf.mxu0
      %v406 = vpop.f32.mrf.mxu0
      %v407 = vadd.f32 0.0, %v406
      %v408 = vpop.f32.mrf.mxu0
      %409 = vmatprep.mubr.bf16.mxu0 0
      %410 = vmatmul.mubr.bf16.gmra.mxu0 %v315
      %v411 = vpop.f32.mrf.mxu0
      %v412 = vadd.f32 0.0, %v411
      %v413 = vpop.f32.mrf.mxu0
      %v414 = vpop.f32.mrf.mxu0
      %v415 = vadd.f32 0.0, %v414
      %v416 = vpop.f32.mrf.mxu0
      %417 = vmatprep.mubr.bf16.mxu0 0
      %418 = vmatmul.mubr.bf16.gmra.mxu0 %v318
      %v419 = vpop.f32.mrf.mxu0
      %v420 = vadd.f32 0.0, %v419
      %v421 = vpop.f32.mrf.mxu0
      %v422 = vpop.f32.mrf.mxu0
      %v423 = vadd.f32 0.0, %v422
      %v424 = vpop.f32.mrf.mxu0
      %425 = vmatprep.mubr.bf16.mxu0 0
      %426 = vmatmul.mubr.bf16.gmra.mxu0 %v321
      %v427 = vpop.f32.mrf.mxu0
      %v428 = vadd.f32 0.0, %v427
      %v429 = vpop.f32.mrf.mxu0
      %v430 = vpop.f32.mrf.mxu0
      %v431 = vadd.f32 0.0, %v430
      %v432 = vpop.f32.mrf.mxu0
      %433 = vmatprep.mubr.bf16.mxu0 0
      %434 = vmatmul.mubr.bf16.gmra.mxu0 %v324
      %v435 = vpop.f32.mrf.mxu0
      %v436 = vadd.f32 0.0, %v435
      %v437 = vpop.f32.mrf.mxu0
      %v438 = vpop.f32.mrf.mxu0
      %v439 = vadd.f32 0.0, %v438
      %v440 = vpop.f32.mrf.mxu0
      %441 = vmatprep.mubr.bf16.mxu0 0
      %442 = vmatmul.mubr.bf16.gmra.mxu0 %v327
      %v443 = vpop.f32.mrf.mxu0
      %v444 = vadd.f32 0.0, %v443
      %v445 = vpop.f32.mrf.mxu0
      %v446 = vpop.f32.mrf.mxu0
      %v447 = vadd.f32 0.0, %v446
      %v448 = vpop.f32.mrf.mxu0
      %449 = vmatprep.mubr.bf16.mxu0 0
      %450 = vmatmul.mubr.bf16.gmra.mxu0 %v330
      %v451 = vpop.f32.mrf.mxu0
      %v452 = vadd.f32 0.0, %v451
      %v453 = vpop.f32.mrf.mxu0
      %v454 = vpop.f32.mrf.mxu0
      %v455 = vadd.f32 0.0, %v454
      %v456 = vpop.f32.mrf.mxu0
      %457 = vmatprep.mubr.bf16.mxu0 0
      %458 = vmatmul.mubr.bf16.gmra.mxu0 %v333
      %v459 = vpop.f32.mrf.mxu0
      %v460 = vadd.f32 0.0, %v459
      %v461 = vpop.f32.mrf.mxu0
      %v462 = vpop.f32.mrf.mxu0
      %v463 = vadd.f32 0.0, %v462
      %v464 = vpop.f32.mrf.mxu0
      %465 = vmatprep.mubr.bf16.mxu0 0
      %466 = vmatmul.mubr.bf16.gmra.mxu0 %v336
      %v467 = vpop.f32.mrf.mxu0
      %v468 = vadd.f32 0.0, %v467
      %v469 = vpop.f32.mrf.mxu0
      %v470 = vpop.f32.mrf.mxu0
      %v471 = vadd.f32 0.0, %v470
      %v472 = vpop.f32.mrf.mxu0
      %473 = vmatprep.mubr.bf16.mxu0 0
      %474 = vmatmul.mubr.bf16.gmra.mxu0 %v339
      %v475 = vpop.f32.mrf.mxu0
      %v476 = vadd.f32 0.0, %v475
      %v477 = vpop.f32.mrf.mxu0
      %v478 = vpop.f32.mrf.mxu0
      %v479 = vadd.f32 0.0, %v478
      %v480 = vpop.f32.mrf.mxu0
      %481 = vmatprep.mubr.bf16.mxu0 0
      %482 = vmatmul.mubr.bf16.gmra.mxu0 %v342
      %v483 = vpop.f32.mrf.mxu0
      %v484 = vadd.f32 0.0, %v483
      %v485 = vpop.f32.mrf.mxu0
      %v486 = vpop.f32.mrf.mxu0
      %v487 = vadd.f32 0.0, %v486
      %v488 = vpop.f32.mrf.mxu0
      %489 = vmatprep.mubr.bf16.mxu0 0
      %490 = vmatmul.mubr.bf16.gmra.mxu0 %v345
      %v491 = vpop.f32.mrf.mxu0
      %v492 = vadd.f32 0.0, %v491
      %v493 = vpop.f32.mrf.mxu0
      %v494 = vpop.f32.mrf.mxu0
      %v495 = vadd.f32 0.0, %v494
      %v496 = vpop.f32.mrf.mxu0
      %497 = vmatprep.mubr.bf16.mxu0 0
      %498 = vmatmul.mubr.bf16.gmra.mxu0 %v348
      %v499 = vpop.f32.mrf.mxu0
      %v500 = vadd.f32 0.0, %v499
      %v501 = vpop.f32.mrf.mxu0
      %v502 = vpop.f32.mrf.mxu0
      %v503 = vadd.f32 0.0, %v502
      %v504 = vpop.f32.mrf.mxu0
      %505 = vmatprep.mubr.bf16.mxu0 0
      %506 = vmatmul.mubr.bf16.gmra.mxu0 %v351
      %v507 = vpop.f32.mrf.mxu0
      %v508 = vadd.f32 0.0, %v507
      %v509 = vpop.f32.mrf.mxu0
      %v510 = vpop.f32.mrf.mxu0
      %v511 = vadd.f32 0.0, %v510
      %v512 = vpop.f32.mrf.mxu0
      %513 = vmatprep.mubr.bf16.mxu0 0
      %514 = vmatmul.mubr.bf16.gmra.mxu0 %v354
      %v515 = vpop.f32.mrf.mxu0
      %v516 = vadd.f32 0.0, %v515
      %v517 = vpop.f32.mrf.mxu0
      %v518 = vpop.f32.mrf.mxu0
      %v519 = vadd.f32 0.0, %v518
      %v520 = vpop.f32.mrf.mxu0
      %521 = vmatprep.mubr.bf16.mxu0 0
      %522 = vmatmul.mubr.bf16.gmra.mxu0 %v357
      %v523 = vpop.f32.mrf.mxu0
      %v524 = vadd.f32 0.0, %v523
      %v525 = vpop.f32.mrf.mxu0
      %v526 = vpop.f32.mrf.mxu0
      %v527 = vadd.f32 0.0, %v526
      %v528 = vpop.f32.mrf.mxu0
      %529 = vmatprep.mubr.bf16.mxu0 0
      %530 = vmatmul.mubr.bf16.gmra.mxu0 %v360
      %v531 = vpop.f32.mrf.mxu0
      %v532 = vadd.f32 0.0, %v531
      %v533 = vpop.f32.mrf.mxu0
      %v534 = vpop.f32.mrf.mxu0
      %v535 = vadd.f32 0.0, %v534
      %v536 = vpop.f32.mrf.mxu0
      %537 = vmatprep.mubr.bf16.mxu0 0
      %538 = vmatmul.mubr.bf16.gmra.mxu0 %v363
      %v539 = vpop.f32.mrf.mxu0
      %v540 = vadd.f32 0.0, %v539
      %v541 = vpop.f32.mrf.mxu0
      %v542 = vpop.f32.mrf.mxu0
      %v543 = vadd.f32 0.0, %v542
      %v544 = vpop.f32.mrf.mxu0
      %545 = vdwg.mxu0
      %v547 = vsel %vm310, %v235, 0
      %v550 = vsel %vm310, %v236, 0
      %v553 = vsel %vm310, %v237, 0
      %v556 = vsel %vm310, %v238, 0
      %v559 = vsel %vm310, %v239, 0
      %v562 = vsel %vm310, %v240, 0
      %v565 = vsel %vm310, %v241, 0
      %v568 = vsel %vm310, %v242, 0
      %v571 = vsel %vm310, %v243, 0
      %v574 = vsel %vm310, %v244, 0
      %v577 = vsel %vm310, %v245, 0
      %v580 = vsel %vm310, %v246, 0
      %v583 = vsel %vm310, %v247, 0
      %v586 = vsel %vm310, %v248, 0
      %v589 = vsel %vm310, %v249, 0
      %v592 = vsel %vm310, %v250, 0
      %v595 = vsel %vm310, %v251, 0
      %v598 = vsel %vm310, %v252, 0
      %v601 = vsel %vm365, %v253, 0
      %603 = vmatprep.subr.bf16.mxu0 0
      %604 = vmatpush1.bf16.msra.mxu0 0
      %605 = vmatprep.subr.bf16.mxu0 0
      %606 = vmatpush1.bf16.msra.mxu0 0
      %607 = vmatprep.subr.bf16.mxu0 0
      %608 = vmatpush1.bf16.msra.mxu0 0
      %609 = vmatprep.subr.bf16.mxu0 0
      %610 = vmatpush1.bf16.msra.mxu0 0
      %611 = vmatprep.subr.bf16.mxu0 0
      %612 = vmatpush1.bf16.msra.mxu0 0
      %613 = vmatprep.subr.bf16.mxu0 0
      %614 = vmatpush1.bf16.msra.mxu0 0
      %615 = vmatprep.subr.bf16.mxu0 0
      %616 = vmatpush1.bf16.msra.mxu0 0
      %617 = vmatprep.subr.bf16.mxu0 0
      %618 = vmatpush1.bf16.msra.mxu0 %v601
      %619 = vmatprep.subr.bf16.mxu0 0
      %620 = vmatpush2.bf16.msra.mxu0 0
      %621 = vmatprep.subr.bf16.mxu0 0
      %622 = vmatpush2.bf16.msra.mxu0 0
      %623 = vmatprep.subr.bf16.mxu0 0
      %624 = vmatpush2.bf16.msra.mxu0 0
      %625 = vmatprep.subr.bf16.mxu0 0
      %626 = vmatpush2.bf16.msra.mxu0 0
      %627 = vmatprep.subr.bf16.mxu0 0
      %628 = vmatpush2.bf16.msra.mxu0 0
      %629 = vmatprep.subr.bf16.mxu0 0
      %630 = vmatpush2.bf16.msra.mxu0 0
      %631 = vmatprep.subr.bf16.mxu0 0
      %632 = vmatpush2.bf16.msra.mxu0 0
      %633 = vmatprep.subr.bf16.mxu0 0
      %634 = vmatpush2.bf16.msra.mxu0 0
      %635 = vmatprep.mubr.bf16.mxu0 0
      %636 = vmatmul.mubr.bf16.gmra.mxu0 %v547
      %v637 = vpop.f32.mrf.mxu0
      %v638 = vadd.f32 %v404, %v637
      %v639 = vpop.f32.mrf.mxu0
      %v640 = vpop.f32.mrf.mxu0
      %v641 = vadd.f32 %v407, %v640
      %v642 = vpop.f32.mrf.mxu0
      %643 = vmatprep.mubr.bf16.mxu0 0
      %644 = vmatmul.mubr.bf16.gmra.mxu0 %v550
      %v645 = vpop.f32.mrf.mxu0
      %v646 = vadd.f32 %v412, %v645
      %v647 = vpop.f32.mrf.mxu0
      %v648 = vpop.f32.mrf.mxu0
      %v649 = vadd.f32 %v415, %v648
      %v650 = vpop.f32.mrf.mxu0
      %651 = vmatprep.mubr.bf16.mxu0 0
      %652 = vmatmul.mubr.bf16.gmra.mxu0 %v553
      %v653 = vpop.f32.mrf.mxu0
      %v654 = vadd.f32 %v420, %v653
      %v655 = vpop.f32.mrf.mxu0
      %v656 = vpop.f32.mrf.mxu0
      %v657 = vadd.f32 %v423, %v656
      %v658 = vpop.f32.mrf.mxu0
      %659 = vmatprep.mubr.bf16.mxu0 0
      %660 = vmatmul.mubr.bf16.gmra.mxu0 %v556
      %v661 = vpop.f32.mrf.mxu0
      %v662 = vadd.f32 %v428, %v661
      %v663 = vpop.f32.mrf.mxu0
      %v664 = vpop.f32.mrf.mxu0
      %v665 = vadd.f32 %v431, %v664
      %v666 = vpop.f32.mrf.mxu0
      %667 = vmatprep.mubr.bf16.mxu0 0
      %668 = vmatmul.mubr.bf16.gmra.mxu0 %v559
      %v669 = vpop.f32.mrf.mxu0
      %v670 = vadd.f32 %v436, %v669
      %v671 = vpop.f32.mrf.mxu0
      %v672 = vpop.f32.mrf.mxu0
      %v673 = vadd.f32 %v439, %v672
      %v674 = vpop.f32.mrf.mxu0
      %675 = vmatprep.mubr.bf16.mxu0 0
      %676 = vmatmul.mubr.bf16.gmra.mxu0 %v562
      %v677 = vpop.f32.mrf.mxu0
      %v678 = vadd.f32 %v444, %v677
      %v679 = vpop.f32.mrf.mxu0
      %v680 = vpop.f32.mrf.mxu0
      %v681 = vadd.f32 %v447, %v680
      %v682 = vpop.f32.mrf.mxu0
      %683 = vmatprep.mubr.bf16.mxu0 0
      %684 = vmatmul.mubr.bf16.gmra.mxu0 %v565
      %v685 = vpop.f32.mrf.mxu0
      %v686 = vadd.f32 %v452, %v685
      %v687 = vpop.f32.mrf.mxu0
      %v688 = vpop.f32.mrf.mxu0
      %v689 = vadd.f32 %v455, %v688
      %v690 = vpop.f32.mrf.mxu0
      %691 = vmatprep.mubr.bf16.mxu0 0
      %692 = vmatmul.mubr.bf16.gmra.mxu0 %v568
      %v693 = vpop.f32.mrf.mxu0
      %v694 = vadd.f32 %v460, %v693
      %v695 = vpop.f32.mrf.mxu0
      %v696 = vpop.f32.mrf.mxu0
      %v697 = vadd.f32 %v463, %v696
      %v698 = vpop.f32.mrf.mxu0
      %699 = vmatprep.mubr.bf16.mxu0 0
      %700 = vmatmul.mubr.bf16.gmra.mxu0 %v571
      %v701 = vpop.f32.mrf.mxu0
      %v702 = vadd.f32 %v468, %v701
      %v703 = vpop.f32.mrf.mxu0
      %v704 = vpop.f32.mrf.mxu0
      %v705 = vadd.f32 %v471, %v704
      %v706 = vpop.f32.mrf.mxu0
      %707 = vmatprep.mubr.bf16.mxu0 0
      %708 = vmatmul.mubr.bf16.gmra.mxu0 %v574
      %v709 = vpop.f32.mrf.mxu0
      %v710 = vadd.f32 %v476, %v709
      %v711 = vpop.f32.mrf.mxu0
      %v712 = vpop.f32.mrf.mxu0
      %v713 = vadd.f32 %v479, %v712
      %v714 = vpop.f32.mrf.mxu0
      %715 = vmatprep.mubr.bf16.mxu0 0
      %716 = vmatmul.mubr.bf16.gmra.mxu0 %v577
      %v717 = vpop.f32.mrf.mxu0
      %v718 = vadd.f32 %v484, %v717
      %v719 = vpop.f32.mrf.mxu0
      %v720 = vpop.f32.mrf.mxu0
      %v721 = vadd.f32 %v487, %v720
      %v722 = vpop.f32.mrf.mxu0
      %723 = vmatprep.mubr.bf16.mxu0 0
      %724 = vmatmul.mubr.bf16.gmra.mxu0 %v580
      %v725 = vpop.f32.mrf.mxu0
      %v726 = vadd.f32 %v492, %v725
      %v727 = vpop.f32.mrf.mxu0
      %v728 = vpop.f32.mrf.mxu0
      %v729 = vadd.f32 %v495, %v728
      %v730 = vpop.f32.mrf.mxu0
      %731 = vmatprep.mubr.bf16.mxu0 0
      %732 = vmatmul.mubr.bf16.gmra.mxu0 %v583
      %v733 = vpop.f32.mrf.mxu0
      %v734 = vadd.f32 %v500, %v733
      %v735 = vpop.f32.mrf.mxu0
      %v736 = vpop.f32.mrf.mxu0
      %v737 = vadd.f32 %v503, %v736
      %v738 = vpop.f32.mrf.mxu0
      %739 = vmatprep.mubr.bf16.mxu0 0
      %740 = vmatmul.mubr.bf16.gmra.mxu0 %v586
      %v741 = vpop.f32.mrf.mxu0
      %v742 = vadd.f32 %v508, %v741
      %v743 = vpop.f32.mrf.mxu0
      %v744 = vpop.f32.mrf.mxu0
      %v745 = vadd.f32 %v511, %v744
      %v746 = vpop.f32.mrf.mxu0
      %747 = vmatprep.mubr.bf16.mxu0 0
      %748 = vmatmul.mubr.bf16.gmra.mxu0 %v589
      %v749 = vpop.f32.mrf.mxu0
      %v750 = vadd.f32 %v516, %v749
      %v751 = vpop.f32.mrf.mxu0
      %v752 = vpop.f32.mrf.mxu0
      %v753 = vadd.f32 %v519, %v752
      %v754 = vpop.f32.mrf.mxu0
      %755 = vmatprep.mubr.bf16.mxu0 0
      %756 = vmatmul.mubr.bf16.gmra.mxu0 %v592
      %v757 = vpop.f32.mrf.mxu0
      %v758 = vadd.f32 %v524, %v757
      %v759 = vpop.f32.mrf.mxu0
      %v760 = vpop.f32.mrf.mxu0
      %v761 = vadd.f32 %v527, %v760
      %v762 = vpop.f32.mrf.mxu0
      %763 = vmatprep.mubr.bf16.mxu0 0
      %764 = vmatmul.mubr.bf16.gmra.mxu0 %v595
      %v765 = vpop.f32.mrf.mxu0
      %v766 = vadd.f32 %v532, %v765
      %v767 = vpop.f32.mrf.mxu0
      %v768 = vpop.f32.mrf.mxu0
      %v769 = vadd.f32 %v535, %v768
      %v770 = vpop.f32.mrf.mxu0
      %771 = vmatprep.mubr.bf16.mxu0 0
      %772 = vmatmul.mubr.bf16.gmra.mxu0 %v598
      %v773 = vpop.f32.mrf.mxu0
      %v774 = vadd.f32 %v540, %v773
      %v775 = vpop.f32.mrf.mxu0
      %v776 = vpop.f32.mrf.mxu0
      %v777 = vadd.f32 %v543, %v776
      %v778 = vpop.f32.mrf.mxu0
      %779 = vdwg.mxu0
      %v780 = vld [vmem:[%s192 + $0x2] sm:$0xff]
      %v781 = vld [vmem:[%s192 + $0xa] sm:$0xff]
      %v782 = vld [vmem:[%s192 + $0x12] sm:$0xff]
      %v783 = vld [vmem:[%s192 + $0x1a] sm:$0xff]
      %v784 = vld [vmem:[%s192 + $0x22] sm:$0xff]
      %v785 = vld [vmem:[%s192 + $0x2a] sm:$0xff]
      %v786 = vld [vmem:[%s192 + $0x32] sm:$0xff]
      %v787 = vld [vmem:[%s192 + $0x3a] sm:$0xff]
      %v788 = vld [vmem:[%s192 + $0x42] sm:$0xff]
      %v789 = vld [vmem:[%s192 + $0x4a] sm:$0xff]
      %v790 = vld [vmem:[%s192 + $0x52] sm:$0xff]
      %v791 = vld [vmem:[%s192 + $0x5a] sm:$0xff]
      %v792 = vld [vmem:[%s192 + $0x62] sm:$0xff]
      %v793 = vld [vmem:[%s192 + $0x6a] sm:$0xff]
      %v794 = vld [vmem:[%s192 + $0x72] sm:$0xff]
      %v795 = vld [vmem:[%s192 + $0x7a] sm:$0xff]
      %v796 = vld [vmem:[%s192 + $0x82] sm:$0xff]
      %v797 = vld [vmem:[%s192 + $0x8a] sm:$0xff]
      %v798 = vld [vmem:[%s192 + $0x92] sm:$0xff]
      %v799 = vld [vmem:[%s192 + $0x9a] sm:$0xff]
      %v800 = vld [vmem:[%s192 + $0xa2] sm:$0xff]
      %v801 = vld [vmem:[%s192 + $0xaa] sm:$0xff]
      %v802 = vld [vmem:[%s192 + $0xb2] sm:$0xff]
      %v803 = vld [vmem:[%s192 + $0xba] sm:$0xff]
      %v804 = vld [vmem:[%s192 + $0xc2] sm:$0xff]
      %v805 = vld [vmem:[%s192 + $0xca] sm:$0xff]
      %v806 = vld [vmem:[%s192 + $0xd2] sm:$0xff]
      %v807 = vld [vmem:[%s192 + $0xda] sm:$0xff]
      %v808 = vld [vmem:[%s192 + $0xe2] sm:$0xff]
      %v809 = vld [vmem:[%s192 + $0xea] sm:$0xff]
      %v810 = vld [vmem:[%s192 + $0xf2] sm:$0xff]
      %v811 = vld [vmem:[%s192 + $0xfa] sm:$0xff]
      %v812 = vld [vmem:[%s192 + $0x102] sm:$0xff]
      %v813 = vld [vmem:[%s192 + $0x10a] sm:$0xff]
      %v814 = vld [vmem:[%s192 + $0x112] sm:$0xff]
      %v815 = vld [vmem:[%s192 + $0x11a] sm:$0xff]
      %v816 = vpack.c.bf16 %v781, %v780
      %v817 = vpack.c.bf16 %v783, %v782
      %v818 = vpack.c.bf16 %v785, %v784
      %v819 = vpack.c.bf16 %v787, %v786
      %v820 = vpack.c.bf16 %v789, %v788
      %v821 = vpack.c.bf16 %v791, %v790
      %v822 = vpack.c.bf16 %v793, %v792
      %v823 = vpack.c.bf16 %v795, %v794
      %v824 = vpack.c.bf16 %v797, %v796
      %v825 = vpack.c.bf16 %v799, %v798
      %v826 = vpack.c.bf16 %v801, %v800
      %v827 = vpack.c.bf16 %v803, %v802
      %v828 = vpack.c.bf16 %v805, %v804
      %v829 = vpack.c.bf16 %v807, %v806
      %v830 = vpack.c.bf16 %v809, %v808
      %v831 = vpack.c.bf16 %v811, %v810
      %v832 = vpack.c.bf16 %v813, %v812
      %v833 = vpack.c.bf16 %v815, %v814
      %s834 = scalar_lea.vmem %s1, 8
      %v835 = vld [vmem:[%s834] sm:$0xf]
      %v837 = vsel %vm310, %v816, 0
      %v840 = vsel %vm310, %v817, 0
      %v843 = vsel %vm310, %v818, 0
      %v846 = vsel %vm310, %v819, 0
      %v849 = vsel %vm310, %v820, 0
      %v852 = vsel %vm310, %v821, 0
      %v855 = vsel %vm310, %v822, 0
      %v858 = vsel %vm310, %v823, 0
      %v861 = vsel %vm310, %v824, 0
      %v864 = vsel %vm310, %v825, 0
      %v867 = vsel %vm310, %v826, 0
      %v870 = vsel %vm310, %v827, 0
      %v873 = vsel %vm310, %v828, 0
      %v876 = vsel %vm310, %v829, 0
      %v879 = vsel %vm310, %v830, 0
      %v882 = vsel %vm310, %v831, 0
      %v885 = vsel %vm310, %v832, 0
      %v888 = vsel %vm310, %v833, 0
      %v891 = vsel %vm365, %v835, 0
      %893 = vmatprep.subr.bf16.mxu0 0
      %894 = vmatpush1.bf16.msra.mxu0 0
      %895 = vmatprep.subr.bf16.mxu0 0
      %896 = vmatpush1.bf16.msra.mxu0 0
      %897 = vmatprep.subr.bf16.mxu0 0
      %898 = vmatpush1.bf16.msra.mxu0 0
      %899 = vmatprep.subr.bf16.mxu0 0
      %900 = vmatpush1.bf16.msra.mxu0 0
      %901 = vmatprep.subr.bf16.mxu0 0
      %902 = vmatpush1.bf16.msra.mxu0 0
      %903 = vmatprep.subr.bf16.mxu0 0
      %904 = vmatpush1.bf16.msra.mxu0 0
      %905 = vmatprep.subr.bf16.mxu0 0
      %906 = vmatpush1.bf16.msra.mxu0 0
      %907 = vmatprep.subr.bf16.mxu0 0
      %908 = vmatpush1.bf16.msra.mxu0 %v891
      %909 = vmatprep.subr.bf16.mxu0 0
      %910 = vmatpush2.bf16.msra.mxu0 0
      %911 = vmatprep.subr.bf16.mxu0 0
      %912 = vmatpush2.bf16.msra.mxu0 0
      %913 = vmatprep.subr.bf16.mxu0 0
      %914 = vmatpush2.bf16.msra.mxu0 0
      %915 = vmatprep.subr.bf16.mxu0 0
      %916 = vmatpush2.bf16.msra.mxu0 0
      %917 = vmatprep.subr.bf16.mxu0 0
      %918 = vmatpush2.bf16.msra.mxu0 0
      %919 = vmatprep.subr.bf16.mxu0 0
      %920 = vmatpush2.bf16.msra.mxu0 0
      %921 = vmatprep.subr.bf16.mxu0 0
      %922 = vmatpush2.bf16.msra.mxu0 0
      %923 = vmatprep.subr.bf16.mxu0 0
      %924 = vmatpush2.bf16.msra.mxu0 0
      %925 = vmatprep.mubr.bf16.mxu0 0
      %926 = vmatmul.mubr.bf16.gmra.mxu0 %v837
      %v927 = vpop.f32.mrf.mxu0
      %v928 = vadd.f32 0.0, %v927
      %v929 = vpop.f32.mrf.mxu0
      %v930 = vpop.f32.mrf.mxu0
      %v931 = vadd.f32 0.0, %v930
      %v932 = vpop.f32.mrf.mxu0
      %933 = vmatprep.mubr.bf16.mxu0 0
      %934 = vmatmul.mubr.bf16.gmra.mxu0 %v840
      %v935 = vpop.f32.mrf.mxu0
      %v936 = vadd.f32 0.0, %v935
      %v937 = vpop.f32.mrf.mxu0
      %v938 = vpop.f32.mrf.mxu0
      %v939 = vadd.f32 0.0, %v938
      %v940 = vpop.f32.mrf.mxu0
      %941 = vmatprep.mubr.bf16.mxu0 0
      %942 = vmatmul.mubr.bf16.gmra.mxu0 %v843
      %v943 = vpop.f32.mrf.mxu0
      %v944 = vadd.f32 0.0, %v943
      %v945 = vpop.f32.mrf.mxu0
      %v946 = vpop.f32.mrf.mxu0
      %v947 = vadd.f32 0.0, %v946
      %v948 = vpop.f32.mrf.mxu0
      %949 = vmatprep.mubr.bf16.mxu0 0
      %950 = vmatmul.mubr.bf16.gmra.mxu0 %v846
      %v951 = vpop.f32.mrf.mxu0
      %v952 = vadd.f32 0.0, %v951
      %v953 = vpop.f32.mrf.mxu0
      %v954 = vpop.f32.mrf.mxu0
      %v955 = vadd.f32 0.0, %v954
      %v956 = vpop.f32.mrf.mxu0
      %957 = vmatprep.mubr.bf16.mxu0 0
      %958 = vmatmul.mubr.bf16.gmra.mxu0 %v849
      %v959 = vpop.f32.mrf.mxu0
      %v960 = vadd.f32 0.0, %v959
      %v961 = vpop.f32.mrf.mxu0
      %v962 = vpop.f32.mrf.mxu0
      %v963 = vadd.f32 0.0, %v962
      %v964 = vpop.f32.mrf.mxu0
      %965 = vmatprep.mubr.bf16.mxu0 0
      %966 = vmatmul.mubr.bf16.gmra.mxu0 %v852
      %v967 = vpop.f32.mrf.mxu0
      %v968 = vadd.f32 0.0, %v967
      %v969 = vpop.f32.mrf.mxu0
      %v970 = vpop.f32.mrf.mxu0
      %v971 = vadd.f32 0.0, %v970
      %v972 = vpop.f32.mrf.mxu0
      %973 = vmatprep.mubr.bf16.mxu0 0
      %974 = vmatmul.mubr.bf16.gmra.mxu0 %v855
      %v975 = vpop.f32.mrf.mxu0
      %v976 = vadd.f32 0.0, %v975
      %v977 = vpop.f32.mrf.mxu0
      %v978 = vpop.f32.mrf.mxu0
      %v979 = vadd.f32 0.0, %v978
      %v980 = vpop.f32.mrf.mxu0
      %981 = vmatprep.mubr.bf16.mxu0 0
      %982 = vmatmul.mubr.bf16.gmra.mxu0 %v858
      %v983 = vpop.f32.mrf.mxu0
      %v984 = vadd.f32 0.0, %v983
      %v985 = vpop.f32.mrf.mxu0
      %v986 = vpop.f32.mrf.mxu0
      %v987 = vadd.f32 0.0, %v986
      %v988 = vpop.f32.mrf.mxu0
      %989 = vmatprep.mubr.bf16.mxu0 0
      %990 = vmatmul.mubr.bf16.gmra.mxu0 %v861
      %v991 = vpop.f32.mrf.mxu0
      %v992 = vadd.f32 0.0, %v991
      %v993 = vpop.f32.mrf.mxu0
      %v994 = vpop.f32.mrf.mxu0
      %v995 = vadd.f32 0.0, %v994
      %v996 = vpop.f32.mrf.mxu0
      %997 = vmatprep.mubr.bf16.mxu0 0
      %998 = vmatmul.mubr.bf16.gmra.mxu0 %v864
      %v999 = vpop.f32.mrf.mxu0
      %v1000 = vadd.f32 0.0, %v999
      %v1001 = vpop.f32.mrf.mxu0
      %v1002 = vpop.f32.mrf.mxu0
      %v1003 = vadd.f32 0.0, %v1002
      %v1004 = vpop.f32.mrf.mxu0
      %1005 = vmatprep.mubr.bf16.mxu0 0
      %1006 = vmatmul.mubr.bf16.gmra.mxu0 %v867
      %v1007 = vpop.f32.mrf.mxu0
      %v1008 = vadd.f32 0.0, %v1007
      %v1009 = vpop.f32.mrf.mxu0
      %v1010 = vpop.f32.mrf.mxu0
      %v1011 = vadd.f32 0.0, %v1010
      %v1012 = vpop.f32.mrf.mxu0
      %1013 = vmatprep.mubr.bf16.mxu0 0
      %1014 = vmatmul.mubr.bf16.gmra.mxu0 %v870
      %v1015 = vpop.f32.mrf.mxu0
      %v1016 = vadd.f32 0.0, %v1015
      %v1017 = vpop.f32.mrf.mxu0
      %v1018 = vpop.f32.mrf.mxu0
      %v1019 = vadd.f32 0.0, %v1018
      %v1020 = vpop.f32.mrf.mxu0
      %1021 = vmatprep.mubr.bf16.mxu0 0
      %1022 = vmatmul.mubr.bf16.gmra.mxu0 %v873
      %v1023 = vpop.f32.mrf.mxu0
      %v1024 = vadd.f32 0.0, %v1023
      %v1025 = vpop.f32.mrf.mxu0
      %v1026 = vpop.f32.mrf.mxu0
      %v1027 = vadd.f32 0.0, %v1026
      %v1028 = vpop.f32.mrf.mxu0
      %1029 = vmatprep.mubr.bf16.mxu0 0
      %1030 = vmatmul.mubr.bf16.gmra.mxu0 %v876
      %v1031 = vpop.f32.mrf.mxu0
      %v1032 = vadd.f32 0.0, %v1031
      %v1033 = vpop.f32.mrf.mxu0
      %v1034 = vpop.f32.mrf.mxu0
      %v1035 = vadd.f32 0.0, %v1034
      %v1036 = vpop.f32.mrf.mxu0
      %1037 = vmatprep.mubr.bf16.mxu0 0
      %1038 = vmatmul.mubr.bf16.gmra.mxu0 %v879
      %v1039 = vpop.f32.mrf.mxu0
      %v1040 = vadd.f32 0.0, %v1039
      %v1041 = vpop.f32.mrf.mxu0
      %v1042 = vpop.f32.mrf.mxu0
      %v1043 = vadd.f32 0.0, %v1042
      %v1044 = vpop.f32.mrf.mxu0
      %1045 = vmatprep.mubr.bf16.mxu0 0
      %1046 = vmatmul.mubr.bf16.gmra.mxu0 %v882
      %v1047 = vpop.f32.mrf.mxu0
      %v1048 = vadd.f32 0.0, %v1047
      %v1049 = vpop.f32.mrf.mxu0
      %v1050 = vpop.f32.mrf.mxu0
      %v1051 = vadd.f32 0.0, %v1050
      %v1052 = vpop.f32.mrf.mxu0
      %1053 = vmatprep.mubr.bf16.mxu0 0
      %1054 = vmatmul.mubr.bf16.gmra.mxu0 %v885
      %v1055 = vpop.f32.mrf.mxu0
      %v1056 = vadd.f32 0.0, %v1055
      %v1057 = vpop.f32.mrf.mxu0
      %v1058 = vpop.f32.mrf.mxu0
      %v1059 = vadd.f32 0.0, %v1058
      %v1060 = vpop.f32.mrf.mxu0
      %1061 = vmatprep.mubr.bf16.mxu0 0
      %1062 = vmatmul.mubr.bf16.gmra.mxu0 %v888
      %v1063 = vpop.f32.mrf.mxu0
      %v1064 = vadd.f32 0.0, %v1063
      %v1065 = vpop.f32.mrf.mxu0
      %v1066 = vpop.f32.mrf.mxu0
      %v1067 = vadd.f32 0.0, %v1066
      %v1068 = vpop.f32.mrf.mxu0
      %1069 = vdwg.mxu0
      %v1070 = vadd.f32 %v638, %v928
      %v1071 = vadd.f32 %v641, %v931
      %v1072 = vadd.f32 %v646, %v936
      %v1073 = vadd.f32 %v649, %v939
      %v1074 = vadd.f32 %v654, %v944
      %v1075 = vadd.f32 %v657, %v947
      %v1076 = vadd.f32 %v662, %v952
      %v1077 = vadd.f32 %v665, %v955
      %v1078 = vadd.f32 %v670, %v960
      %v1079 = vadd.f32 %v673, %v963
      %v1080 = vadd.f32 %v678, %v968
      %v1081 = vadd.f32 %v681, %v971
      %v1082 = vadd.f32 %v686, %v976
      %v1083 = vadd.f32 %v689, %v979
      %v1084 = vadd.f32 %v694, %v984
      %v1085 = vadd.f32 %v697, %v987
      %v1086 = vadd.f32 %v702, %v992
      %v1087 = vadd.f32 %v705, %v995
      %v1088 = vadd.f32 %v710, %v1000
      %v1089 = vadd.f32 %v713, %v1003
      %v1090 = vadd.f32 %v718, %v1008
      %v1091 = vadd.f32 %v721, %v1011
      %v1092 = vadd.f32 %v726, %v1016
      %v1093 = vadd.f32 %v729, %v1019
      %v1094 = vadd.f32 %v734, %v1024
      %v1095 = vadd.f32 %v737, %v1027
      %v1096 = vadd.f32 %v742, %v1032
      %v1097 = vadd.f32 %v745, %v1035
      %v1098 = vadd.f32 %v750, %v1040
      %v1099 = vadd.f32 %v753, %v1043
      %v1100 = vadd.f32 %v758, %v1048
      %v1101 = vadd.f32 %v761, %v1051
      %v1102 = vadd.f32 %v766, %v1056
      %v1103 = vadd.f32 %v769, %v1059
      %v1104 = vadd.f32 %v774, %v1064
      %v1105 = vadd.f32 %v777, %v1067
      %v1106 = vld [vmem:[%s192 + $0x12] sm:$0xff]
      %v1107 = vld [vmem:[%s192 + $0x1a] sm:$0xff]
      %v1108 = vld [vmem:[%s192 + $0x22] sm:$0xff]
      %v1109 = vld [vmem:[%s192 + $0x2a] sm:$0xff]
      %v1110 = vld [vmem:[%s192 + $0x32] sm:$0xff]
      %v1111 = vld [vmem:[%s192 + $0x3a] sm:$0xff]
      %v1112 = vld [vmem:[%s192 + $0x42] sm:$0xff]
      %v1113 = vld [vmem:[%s192 + $0x4a] sm:$0xff]
      %v1114 = vld [vmem:[%s192 + $0x52] sm:$0xff]
      %v1115 = vld [vmem:[%s192 + $0x5a] sm:$0xff]
      %v1116 = vld [vmem:[%s192 + $0x62] sm:$0xff]
      %v1117 = vld [vmem:[%s192 + $0x6a] sm:$0xff]
      %v1118 = vld [vmem:[%s192 + $0x72] sm:$0xff]
      %v1119 = vld [vmem:[%s192 + $0x7a] sm:$0xff]
      %v1120 = vld [vmem:[%s192 + $0x82] sm:$0xff]
      %v1121 = vld [vmem:[%s192 + $0x8a] sm:$0xff]
      %v1122 = vld [vmem:[%s192 + $0x92] sm:$0xff]
      %v1123 = vld [vmem:[%s192 + $0x9a] sm:$0xff]
      %v1124 = vld [vmem:[%s192 + $0xa2] sm:$0xff]
      %v1125 = vld [vmem:[%s192 + $0xaa] sm:$0xff]
      %v1126 = vld [vmem:[%s192 + $0xb2] sm:$0xff]
      %v1127 = vld [vmem:[%s192 + $0xba] sm:$0xff]
      %v1128 = vld [vmem:[%s192 + $0xc2] sm:$0xff]
      %v1129 = vld [vmem:[%s192 + $0xca] sm:$0xff]
      %v1130 = vld [vmem:[%s192 + $0xd2] sm:$0xff]
      %v1131 = vld [vmem:[%s192 + $0xda] sm:$0xff]
      %v1132 = vld [vmem:[%s192 + $0xe2] sm:$0xff]
      %v1133 = vld [vmem:[%s192 + $0xea] sm:$0xff]
      %v1134 = vld [vmem:[%s192 + $0xf2] sm:$0xff]
      %v1135 = vld [vmem:[%s192 + $0xfa] sm:$0xff]
      %v1136 = vld [vmem:[%s192 + $0x102] sm:$0xff]
      %v1137 = vld [vmem:[%s192 + $0x10a] sm:$0xff]
      %v1138 = vld [vmem:[%s192 + $0x112] sm:$0xff]
      %v1139 = vld [vmem:[%s192 + $0x11a] sm:$0xff]
      %v1140 = vld [vmem:[%s192 + $0x122] sm:$0xff]
      %v1141 = vld [vmem:[%s192 + $0x12a] sm:$0xff]
      %v1142 = vpack.c.bf16 %v1107, %v1106
      %v1143 = vpack.c.bf16 %v1109, %v1108
      %v1144 = vpack.c.bf16 %v1111, %v1110
      %v1145 = vpack.c.bf16 %v1113, %v1112
      %v1146 = vpack.c.bf16 %v1115, %v1114
      %v1147 = vpack.c.bf16 %v1117, %v1116
      %v1148 = vpack.c.bf16 %v1119, %v1118
      %v1149 = vpack.c.bf16 %v1121, %v1120
      %v1150 = vpack.c.bf16 %v1123, %v1122
      %v1151 = vpack.c.bf16 %v1125, %v1124
      %v1152 = vpack.c.bf16 %v1127, %v1126
      %v1153 = vpack.c.bf16 %v1129, %v1128
      %v1154 = vpack.c.bf16 %v1131, %v1130
      %v1155 = vpack.c.bf16 %v1133, %v1132
      %v1156 = vpack.c.bf16 %v1135, %v1134
      %v1157 = vpack.c.bf16 %v1137, %v1136
      %v1158 = vpack.c.bf16 %v1139, %v1138
      %v1159 = vpack.c.bf16 %v1141, %v1140
      %s1160 = scalar_lea.vmem %s1, 12
      %v1161 = vld [vmem:[%s1160] sm:$0xf]
      %v1163 = vsel %vm310, %v1142, 0
      %v1166 = vsel %vm310, %v1143, 0
      %v1169 = vsel %vm310, %v1144, 0
      %v1172 = vsel %vm310, %v1145, 0
      %v1175 = vsel %vm310, %v1146, 0
      %v1178 = vsel %vm310, %v1147, 0
      %v1181 = vsel %vm310, %v1148, 0
      %v1184 = vsel %vm310, %v1149, 0
      %v1187 = vsel %vm310, %v1150, 0
      %v1190 = vsel %vm310, %v1151, 0
      %v1193 = vsel %vm310, %v1152, 0
      %v1196 = vsel %vm310, %v1153, 0
      %v1199 = vsel %vm310, %v1154, 0
      %v1202 = vsel %vm310, %v1155, 0
      %v1205 = vsel %vm310, %v1156, 0
      %v1208 = vsel %vm310, %v1157, 0
      %v1211 = vsel %vm310, %v1158, 0
      %v1214 = vsel %vm310, %v1159, 0
      %v1217 = vsel %vm365, %v1161, 0
      %1219 = vmatprep.subr.bf16.mxu0 0
      %1220 = vmatpush1.bf16.msra.mxu0 0
      %1221 = vmatprep.subr.bf16.mxu0 0
      %1222 = vmatpush1.bf16.msra.mxu0 0
      %1223 = vmatprep.subr.bf16.mxu0 0
      %1224 = vmatpush1.bf16.msra.mxu0 0
      %1225 = vmatprep.subr.bf16.mxu0 0
      %1226 = vmatpush1.bf16.msra.mxu0 0
      %1227 = vmatprep.subr.bf16.mxu0 0
      %1228 = vmatpush1.bf16.msra.mxu0 0
      %1229 = vmatprep.subr.bf16.mxu0 0
      %1230 = vmatpush1.bf16.msra.mxu0 0
      %1231 = vmatprep.subr.bf16.mxu0 0
      %1232 = vmatpush1.bf16.msra.mxu0 0
      %1233 = vmatprep.subr.bf16.mxu0 0
      %1234 = vmatpush1.bf16.msra.mxu0 %v1217
      %1235 = vmatprep.subr.bf16.mxu0 0
      %1236 = vmatpush2.bf16.msra.mxu0 0
      %1237 = vmatprep.subr.bf16.mxu0 0
      %1238 = vmatpush2.bf16.msra.mxu0 0
      %1239 = vmatprep.subr.bf16.mxu0 0
      %1240 = vmatpush2.bf16.msra.mxu0 0
      %1241 = vmatprep.subr.bf16.mxu0 0
      %1242 = vmatpush2.bf16.msra.mxu0 0
      %1243 = vmatprep.subr.bf16.mxu0 0
      %1244 = vmatpush2.bf16.msra.mxu0 0
      %1245 = vmatprep.subr.bf16.mxu0 0
      %1246 = vmatpush2.bf16.msra.mxu0 0
      %1247 = vmatprep.subr.bf16.mxu0 0
      %1248 = vmatpush2.bf16.msra.mxu0 0
      %1249 = vmatprep.subr.bf16.mxu0 0
      %1250 = vmatpush2.bf16.msra.mxu0 0
      %1251 = vmatprep.mubr.bf16.mxu0 0
      %1252 = vmatmul.mubr.bf16.gmra.mxu0 %v1163
      %v1253 = vpop.f32.mrf.mxu0
      %v1254 = vadd.f32 0.0, %v1253
      %v1255 = vpop.f32.mrf.mxu0
      %v1256 = vpop.f32.mrf.mxu0
      %v1257 = vadd.f32 0.0, %v1256
      %v1258 = vpop.f32.mrf.mxu0
      %1259 = vmatprep.mubr.bf16.mxu0 0
      %1260 = vmatmul.mubr.bf16.gmra.mxu0 %v1166
      %v1261 = vpop.f32.mrf.mxu0
      %v1262 = vadd.f32 0.0, %v1261
      %v1263 = vpop.f32.mrf.mxu0
      %v1264 = vpop.f32.mrf.mxu0
      %v1265 = vadd.f32 0.0, %v1264
      %v1266 = vpop.f32.mrf.mxu0
      %1267 = vmatprep.mubr.bf16.mxu0 0
      %1268 = vmatmul.mubr.bf16.gmra.mxu0 %v1169
      %v1269 = vpop.f32.mrf.mxu0
      %v1270 = vadd.f32 0.0, %v1269
      %v1271 = vpop.f32.mrf.mxu0
      %v1272 = vpop.f32.mrf.mxu0
      %v1273 = vadd.f32 0.0, %v1272
      %v1274 = vpop.f32.mrf.mxu0
      %1275 = vmatprep.mubr.bf16.mxu0 0
      %1276 = vmatmul.mubr.bf16.gmra.mxu0 %v1172
      %v1277 = vpop.f32.mrf.mxu0
      %v1278 = vadd.f32 0.0, %v1277
      %v1279 = vpop.f32.mrf.mxu0
      %v1280 = vpop.f32.mrf.mxu0
      %v1281 = vadd.f32 0.0, %v1280
      %v1282 = vpop.f32.mrf.mxu0
      %1283 = vmatprep.mubr.bf16.mxu0 0
      %1284 = vmatmul.mubr.bf16.gmra.mxu0 %v1175
      %v1285 = vpop.f32.mrf.mxu0
      %v1286 = vadd.f32 0.0, %v1285
      %v1287 = vpop.f32.mrf.mxu0
      %v1288 = vpop.f32.mrf.mxu0
      %v1289 = vadd.f32 0.0, %v1288
      %v1290 = vpop.f32.mrf.mxu0
      %1291 = vmatprep.mubr.bf16.mxu0 0
      %1292 = vmatmul.mubr.bf16.gmra.mxu0 %v1178
      %v1293 = vpop.f32.mrf.mxu0
      %v1294 = vadd.f32 0.0, %v1293
      %v1295 = vpop.f32.mrf.mxu0
      %v1296 = vpop.f32.mrf.mxu0
      %v1297 = vadd.f32 0.0, %v1296
      %v1298 = vpop.f32.mrf.mxu0
      %1299 = vmatprep.mubr.bf16.mxu0 0
      %1300 = vmatmul.mubr.bf16.gmra.mxu0 %v1181
      %v1301 = vpop.f32.mrf.mxu0
      %v1302 = vadd.f32 0.0, %v1301
      %v1303 = vpop.f32.mrf.mxu0
      %v1304 = vpop.f32.mrf.mxu0
      %v1305 = vadd.f32 0.0, %v1304
      %v1306 = vpop.f32.mrf.mxu0
      %1307 = vmatprep.mubr.bf16.mxu0 0
      %1308 = vmatmul.mubr.bf16.gmra.mxu0 %v1184
      %v1309 = vpop.f32.mrf.mxu0
      %v1310 = vadd.f32 0.0, %v1309
      %v1311 = vpop.f32.mrf.mxu0
      %v1312 = vpop.f32.mrf.mxu0
      %v1313 = vadd.f32 0.0, %v1312
      %v1314 = vpop.f32.mrf.mxu0
      %1315 = vmatprep.mubr.bf16.mxu0 0
      %1316 = vmatmul.mubr.bf16.gmra.mxu0 %v1187
      %v1317 = vpop.f32.mrf.mxu0
      %v1318 = vadd.f32 0.0, %v1317
      %v1319 = vpop.f32.mrf.mxu0
      %v1320 = vpop.f32.mrf.mxu0
      %v1321 = vadd.f32 0.0, %v1320
      %v1322 = vpop.f32.mrf.mxu0
      %1323 = vmatprep.mubr.bf16.mxu0 0
      %1324 = vmatmul.mubr.bf16.gmra.mxu0 %v1190
      %v1325 = vpop.f32.mrf.mxu0
      %v1326 = vadd.f32 0.0, %v1325
      %v1327 = vpop.f32.mrf.mxu0
      %v1328 = vpop.f32.mrf.mxu0
      %v1329 = vadd.f32 0.0, %v1328
      %v1330 = vpop.f32.mrf.mxu0
      %1331 = vmatprep.mubr.bf16.mxu0 0
      %1332 = vmatmul.mubr.bf16.gmra.mxu0 %v1193
      %v1333 = vpop.f32.mrf.mxu0
      %v1334 = vadd.f32 0.0, %v1333
      %v1335 = vpop.f32.mrf.mxu0
      %v1336 = vpop.f32.mrf.mxu0
      %v1337 = vadd.f32 0.0, %v1336
      %v1338 = vpop.f32.mrf.mxu0
      %1339 = vmatprep.mubr.bf16.mxu0 0
      %1340 = vmatmul.mubr.bf16.gmra.mxu0 %v1196
      %v1341 = vpop.f32.mrf.mxu0
      %v1342 = vadd.f32 0.0, %v1341
      %v1343 = vpop.f32.mrf.mxu0
      %v1344 = vpop.f32.mrf.mxu0
      %v1345 = vadd.f32 0.0, %v1344
      %v1346 = vpop.f32.mrf.mxu0
      %1347 = vmatprep.mubr.bf16.mxu0 0
      %1348 = vmatmul.mubr.bf16.gmra.mxu0 %v1199
      %v1349 = vpop.f32.mrf.mxu0
      %v1350 = vadd.f32 0.0, %v1349
      %v1351 = vpop.f32.mrf.mxu0
      %v1352 = vpop.f32.mrf.mxu0
      %v1353 = vadd.f32 0.0, %v1352
      %v1354 = vpop.f32.mrf.mxu0
      %1355 = vmatprep.mubr.bf16.mxu0 0
      %1356 = vmatmul.mubr.bf16.gmra.mxu0 %v1202
      %v1357 = vpop.f32.mrf.mxu0
      %v1358 = vadd.f32 0.0, %v1357
      %v1359 = vpop.f32.mrf.mxu0
      %v1360 = vpop.f32.mrf.mxu0
      %v1361 = vadd.f32 0.0, %v1360
      %v1362 = vpop.f32.mrf.mxu0
      %1363 = vmatprep.mubr.bf16.mxu0 0
      %1364 = vmatmul.mubr.bf16.gmra.mxu0 %v1205
      %v1365 = vpop.f32.mrf.mxu0
      %v1366 = vadd.f32 0.0, %v1365
      %v1367 = vpop.f32.mrf.mxu0
      %v1368 = vpop.f32.mrf.mxu0
      %v1369 = vadd.f32 0.0, %v1368
      %v1370 = vpop.f32.mrf.mxu0
      %1371 = vmatprep.mubr.bf16.mxu0 0
      %1372 = vmatmul.mubr.bf16.gmra.mxu0 %v1208
      %v1373 = vpop.f32.mrf.mxu0
      %v1374 = vadd.f32 0.0, %v1373
      %v1375 = vpop.f32.mrf.mxu0
      %v1376 = vpop.f32.mrf.mxu0
      %v1377 = vadd.f32 0.0, %v1376
      %v1378 = vpop.f32.mrf.mxu0
      %1379 = vmatprep.mubr.bf16.mxu0 0
      %1380 = vmatmul.mubr.bf16.gmra.mxu0 %v1211
      %v1381 = vpop.f32.mrf.mxu0
      %v1382 = vadd.f32 0.0, %v1381
      %v1383 = vpop.f32.mrf.mxu0
      %v1384 = vpop.f32.mrf.mxu0
      %v1385 = vadd.f32 0.0, %v1384
      %v1386 = vpop.f32.mrf.mxu0
      %1387 = vmatprep.mubr.bf16.mxu0 0
      %1388 = vmatmul.mubr.bf16.gmra.mxu0 %v1214
      %v1389 = vpop.f32.mrf.mxu0
      %v1390 = vadd.f32 0.0, %v1389
      %v1391 = vpop.f32.mrf.mxu0
      %v1392 = vpop.f32.mrf.mxu0
      %v1393 = vadd.f32 0.0, %v1392
      %v1394 = vpop.f32.mrf.mxu0
      %1395 = vdwg.mxu0
      %v1396 = vadd.f32 %v1070, %v1254
      %v1397 = vadd.f32 %v1071, %v1257
      %v1398 = vadd.f32 %v1072, %v1262
      %v1399 = vadd.f32 %v1073, %v1265
      %v1400 = vadd.f32 %v1074, %v1270
      %v1401 = vadd.f32 %v1075, %v1273
      %v1402 = vadd.f32 %v1076, %v1278
      %v1403 = vadd.f32 %v1077, %v1281
      %v1404 = vadd.f32 %v1078, %v1286
      %v1405 = vadd.f32 %v1079, %v1289
      %v1406 = vadd.f32 %v1080, %v1294
      %v1407 = vadd.f32 %v1081, %v1297
      %v1408 = vadd.f32 %v1082, %v1302
      %v1409 = vadd.f32 %v1083, %v1305
      %v1410 = vadd.f32 %v1084, %v1310
      %v1411 = vadd.f32 %v1085, %v1313
      %v1412 = vadd.f32 %v1086, %v1318
      %v1413 = vadd.f32 %v1087, %v1321
      %v1414 = vadd.f32 %v1088, %v1326
      %v1415 = vadd.f32 %v1089, %v1329
      %v1416 = vadd.f32 %v1090, %v1334
      %v1417 = vadd.f32 %v1091, %v1337
      %v1418 = vadd.f32 %v1092, %v1342
      %v1419 = vadd.f32 %v1093, %v1345
      %v1420 = vadd.f32 %v1094, %v1350
      %v1421 = vadd.f32 %v1095, %v1353
      %v1422 = vadd.f32 %v1096, %v1358
      %v1423 = vadd.f32 %v1097, %v1361
      %v1424 = vadd.f32 %v1098, %v1366
      %v1425 = vadd.f32 %v1099, %v1369
      %v1426 = vadd.f32 %v1100, %v1374
      %v1427 = vadd.f32 %v1101, %v1377
      %v1428 = vadd.f32 %v1102, %v1382
      %v1429 = vadd.f32 %v1103, %v1385
      %v1430 = vadd.f32 %v1104, %v1390
      %v1431 = vadd.f32 %v1105, %v1393
      %v1432 = vld [vmem:[%s192 + $0x13] sm:$0xff]
      %v1433 = vld [vmem:[%s192 + $0x1b] sm:$0xff]
      %v1434 = vld [vmem:[%s192 + $0x23] sm:$0xff]
      %v1435 = vld [vmem:[%s192 + $0x2b] sm:$0xff]
      %v1436 = vld [vmem:[%s192 + $0x33] sm:$0xff]
      %v1437 = vld [vmem:[%s192 + $0x3b] sm:$0xff]
      %v1438 = vld [vmem:[%s192 + $0x43] sm:$0xff]
      %v1439 = vld [vmem:[%s192 + $0x4b] sm:$0xff]
      %v1440 = vld [vmem:[%s192 + $0x53] sm:$0xff]
      %v1441 = vld [vmem:[%s192 + $0x5b] sm:$0xff]
      %v1442 = vld [vmem:[%s192 + $0x63] sm:$0xff]
      %v1443 = vld [vmem:[%s192 + $0x6b] sm:$0xff]
      %v1444 = vld [vmem:[%s192 + $0x73] sm:$0xff]
      %v1445 = vld [vmem:[%s192 + $0x7b] sm:$0xff]
      %v1446 = vld [vmem:[%s192 + $0x83] sm:$0xff]
      %v1447 = vld [vmem:[%s192 + $0x8b] sm:$0xff]
      %v1448 = vld [vmem:[%s192 + $0x93] sm:$0xff]
      %v1449 = vld [vmem:[%s192 + $0x9b] sm:$0xff]
      %v1450 = vld [vmem:[%s192 + $0xa3] sm:$0xff]
      %v1451 = vld [vmem:[%s192 + $0xab] sm:$0xff]
      %v1452 = vld [vmem:[%s192 + $0xb3] sm:$0xff]
      %v1453 = vld [vmem:[%s192 + $0xbb] sm:$0xff]
      %v1454 = vld [vmem:[%s192 + $0xc3] sm:$0xff]
      %v1455 = vld [vmem:[%s192 + $0xcb] sm:$0xff]
      %v1456 = vld [vmem:[%s192 + $0xd3] sm:$0xff]
      %v1457 = vld [vmem:[%s192 + $0xdb] sm:$0xff]
      %v1458 = vld [vmem:[%s192 + $0xe3] sm:$0xff]
      %v1459 = vld [vmem:[%s192 + $0xeb] sm:$0xff]
      %v1460 = vld [vmem:[%s192 + $0xf3] sm:$0xff]
      %v1461 = vld [vmem:[%s192 + $0xfb] sm:$0xff]
      %v1462 = vld [vmem:[%s192 + $0x103] sm:$0xff]
      %v1463 = vld [vmem:[%s192 + $0x10b] sm:$0xff]
      %v1464 = vld [vmem:[%s192 + $0x113] sm:$0xff]
      %v1465 = vld [vmem:[%s192 + $0x11b] sm:$0xff]
      %v1466 = vld [vmem:[%s192 + $0x123] sm:$0xff]
      %v1467 = vld [vmem:[%s192 + $0x12b] sm:$0xff]
      %v1468 = vpack.c.bf16 %v1433, %v1432
      %v1469 = vpack.c.bf16 %v1435, %v1434
      %v1470 = vpack.c.bf16 %v1437, %v1436
      %v1471 = vpack.c.bf16 %v1439, %v1438
      %v1472 = vpack.c.bf16 %v1441, %v1440
      %v1473 = vpack.c.bf16 %v1443, %v1442
      %v1474 = vpack.c.bf16 %v1445, %v1444
      %v1475 = vpack.c.bf16 %v1447, %v1446
      %v1476 = vpack.c.bf16 %v1449, %v1448
      %v1477 = vpack.c.bf16 %v1451, %v1450
      %v1478 = vpack.c.bf16 %v1453, %v1452
      %v1479 = vpack.c.bf16 %v1455, %v1454
      %v1480 = vpack.c.bf16 %v1457, %v1456
      %v1481 = vpack.c.bf16 %v1459, %v1458
      %v1482 = vpack.c.bf16 %v1461, %v1460
      %v1483 = vpack.c.bf16 %v1463, %v1462
      %v1484 = vpack.c.bf16 %v1465, %v1464
      %v1485 = vpack.c.bf16 %v1467, %v1466
      %s1486 = scalar_lea.vmem %s1, 16
      %v1487 = vld [vmem:[%s1486] sm:$0xf]
      %v1489 = vsel %vm310, %v1468, 0
      %v1492 = vsel %vm310, %v1469, 0
      %v1495 = vsel %vm310, %v1470, 0
      %v1498 = vsel %vm310, %v1471, 0
      %v1501 = vsel %vm310, %v1472, 0
      %v1504 = vsel %vm310, %v1473, 0
      %v1507 = vsel %vm310, %v1474, 0
      %v1510 = vsel %vm310, %v1475, 0
      %v1513 = vsel %vm310, %v1476, 0
      %v1516 = vsel %vm310, %v1477, 0
      %v1519 = vsel %vm310, %v1478, 0
      %v1522 = vsel %vm310, %v1479, 0
      %v1525 = vsel %vm310, %v1480, 0
      %v1528 = vsel %vm310, %v1481, 0
      %v1531 = vsel %vm310, %v1482, 0
      %v1534 = vsel %vm310, %v1483, 0
      %v1537 = vsel %vm310, %v1484, 0
      %v1540 = vsel %vm310, %v1485, 0
      %v1543 = vsel %vm365, %v1487, 0
      %1545 = vmatprep.subr.bf16.mxu0 0
      %1546 = vmatpush1.bf16.msra.mxu0 0
      %1547 = vmatprep.subr.bf16.mxu0 0
      %1548 = vmatpush1.bf16.msra.mxu0 0
      %1549 = vmatprep.subr.bf16.mxu0 0
      %1550 = vmatpush1.bf16.msra.mxu0 0
      %1551 = vmatprep.subr.bf16.mxu0 0
      %1552 = vmatpush1.bf16.msra.mxu0 0
      %1553 = vmatprep.subr.bf16.mxu0 0
      %1554 = vmatpush1.bf16.msra.mxu0 0
      %1555 = vmatprep.subr.bf16.mxu0 0
      %1556 = vmatpush1.bf16.msra.mxu0 0
      %1557 = vmatprep.subr.bf16.mxu0 0
      %1558 = vmatpush1.bf16.msra.mxu0 0
      %1559 = vmatprep.subr.bf16.mxu0 0
      %1560 = vmatpush1.bf16.msra.mxu0 %v1543
      %1561 = vmatprep.subr.bf16.mxu0 0
      %1562 = vmatpush2.bf16.msra.mxu0 0
      %1563 = vmatprep.subr.bf16.mxu0 0
      %1564 = vmatpush2.bf16.msra.mxu0 0
      %1565 = vmatprep.subr.bf16.mxu0 0
      %1566 = vmatpush2.bf16.msra.mxu0 0
      %1567 = vmatprep.subr.bf16.mxu0 0
      %1568 = vmatpush2.bf16.msra.mxu0 0
      %1569 = vmatprep.subr.bf16.mxu0 0
      %1570 = vmatpush2.bf16.msra.mxu0 0
      %1571 = vmatprep.subr.bf16.mxu0 0
      %1572 = vmatpush2.bf16.msra.mxu0 0
      %1573 = vmatprep.subr.bf16.mxu0 0
      %1574 = vmatpush2.bf16.msra.mxu0 0
      %1575 = vmatprep.subr.bf16.mxu0 0
      %1576 = vmatpush2.bf16.msra.mxu0 0
      %1577 = vmatprep.mubr.bf16.mxu0 0
      %1578 = vmatmul.mubr.bf16.gmra.mxu0 %v1489
      %v1579 = vpop.f32.mrf.mxu0
      %v1580 = vadd.f32 0.0, %v1579
      %v1581 = vpop.f32.mrf.mxu0
      %v1582 = vpop.f32.mrf.mxu0
      %v1583 = vadd.f32 0.0, %v1582
      %v1584 = vpop.f32.mrf.mxu0
      %1585 = vmatprep.mubr.bf16.mxu0 0
      %1586 = vmatmul.mubr.bf16.gmra.mxu0 %v1492
      %v1587 = vpop.f32.mrf.mxu0
      %v1588 = vadd.f32 0.0, %v1587
      %v1589 = vpop.f32.mrf.mxu0
      %v1590 = vpop.f32.mrf.mxu0
      %v1591 = vadd.f32 0.0, %v1590
      %v1592 = vpop.f32.mrf.mxu0
      %1593 = vmatprep.mubr.bf16.mxu0 0
      %1594 = vmatmul.mubr.bf16.gmra.mxu0 %v1495
      %v1595 = vpop.f32.mrf.mxu0
      %v1596 = vadd.f32 0.0, %v1595
      %v1597 = vpop.f32.mrf.mxu0
      %v1598 = vpop.f32.mrf.mxu0
      %v1599 = vadd.f32 0.0, %v1598
      %v1600 = vpop.f32.mrf.mxu0
      %1601 = vmatprep.mubr.bf16.mxu0 0
      %1602 = vmatmul.mubr.bf16.gmra.mxu0 %v1498
      %v1603 = vpop.f32.mrf.mxu0
      %v1604 = vadd.f32 0.0, %v1603
      %v1605 = vpop.f32.mrf.mxu0
      %v1606 = vpop.f32.mrf.mxu0
      %v1607 = vadd.f32 0.0, %v1606
      %v1608 = vpop.f32.mrf.mxu0
      %1609 = vmatprep.mubr.bf16.mxu0 0
      %1610 = vmatmul.mubr.bf16.gmra.mxu0 %v1501
      %v1611 = vpop.f32.mrf.mxu0
      %v1612 = vadd.f32 0.0, %v1611
      %v1613 = vpop.f32.mrf.mxu0
      %v1614 = vpop.f32.mrf.mxu0
      %v1615 = vadd.f32 0.0, %v1614
      %v1616 = vpop.f32.mrf.mxu0
      %1617 = vmatprep.mubr.bf16.mxu0 0
      %1618 = vmatmul.mubr.bf16.gmra.mxu0 %v1504
      %v1619 = vpop.f32.mrf.mxu0
      %v1620 = vadd.f32 0.0, %v1619
      %v1621 = vpop.f32.mrf.mxu0
      %v1622 = vpop.f32.mrf.mxu0
      %v1623 = vadd.f32 0.0, %v1622
      %v1624 = vpop.f32.mrf.mxu0
      %1625 = vmatprep.mubr.bf16.mxu0 0
      %1626 = vmatmul.mubr.bf16.gmra.mxu0 %v1507
      %v1627 = vpop.f32.mrf.mxu0
      %v1628 = vadd.f32 0.0, %v1627
      %v1629 = vpop.f32.mrf.mxu0
      %v1630 = vpop.f32.mrf.mxu0
      %v1631 = vadd.f32 0.0, %v1630
      %v1632 = vpop.f32.mrf.mxu0
      %1633 = vmatprep.mubr.bf16.mxu0 0
      %1634 = vmatmul.mubr.bf16.gmra.mxu0 %v1510
      %v1635 = vpop.f32.mrf.mxu0
      %v1636 = vadd.f32 0.0, %v1635
      %v1637 = vpop.f32.mrf.mxu0
      %v1638 = vpop.f32.mrf.mxu0
      %v1639 = vadd.f32 0.0, %v1638
      %v1640 = vpop.f32.mrf.mxu0
      %1641 = vmatprep.mubr.bf16.mxu0 0
      %1642 = vmatmul.mubr.bf16.gmra.mxu0 %v1513
      %v1643 = vpop.f32.mrf.mxu0
      %v1644 = vadd.f32 0.0, %v1643
      %v1645 = vpop.f32.mrf.mxu0
      %v1646 = vpop.f32.mrf.mxu0
      %v1647 = vadd.f32 0.0, %v1646
      %v1648 = vpop.f32.mrf.mxu0
      %1649 = vmatprep.mubr.bf16.mxu0 0
      %1650 = vmatmul.mubr.bf16.gmra.mxu0 %v1516
      %v1651 = vpop.f32.mrf.mxu0
      %v1652 = vadd.f32 0.0, %v1651
      %v1653 = vpop.f32.mrf.mxu0
      %v1654 = vpop.f32.mrf.mxu0
      %v1655 = vadd.f32 0.0, %v1654
      %v1656 = vpop.f32.mrf.mxu0
      %1657 = vmatprep.mubr.bf16.mxu0 0
      %1658 = vmatmul.mubr.bf16.gmra.mxu0 %v1519
      %v1659 = vpop.f32.mrf.mxu0
      %v1660 = vadd.f32 0.0, %v1659
      %v1661 = vpop.f32.mrf.mxu0
      %v1662 = vpop.f32.mrf.mxu0
      %v1663 = vadd.f32 0.0, %v1662
      %v1664 = vpop.f32.mrf.mxu0
      %1665 = vmatprep.mubr.bf16.mxu0 0
      %1666 = vmatmul.mubr.bf16.gmra.mxu0 %v1522
      %v1667 = vpop.f32.mrf.mxu0
      %v1668 = vadd.f32 0.0, %v1667
      %v1669 = vpop.f32.mrf.mxu0
      %v1670 = vpop.f32.mrf.mxu0
      %v1671 = vadd.f32 0.0, %v1670
      %v1672 = vpop.f32.mrf.mxu0
      %1673 = vmatprep.mubr.bf16.mxu0 0
      %1674 = vmatmul.mubr.bf16.gmra.mxu0 %v1525
      %v1675 = vpop.f32.mrf.mxu0
      %v1676 = vadd.f32 0.0, %v1675
      %v1677 = vpop.f32.mrf.mxu0
      %v1678 = vpop.f32.mrf.mxu0
      %v1679 = vadd.f32 0.0, %v1678
      %v1680 = vpop.f32.mrf.mxu0
      %1681 = vmatprep.mubr.bf16.mxu0 0
      %1682 = vmatmul.mubr.bf16.gmra.mxu0 %v1528
      %v1683 = vpop.f32.mrf.mxu0
      %v1684 = vadd.f32 0.0, %v1683
      %v1685 = vpop.f32.mrf.mxu0
      %v1686 = vpop.f32.mrf.mxu0
      %v1687 = vadd.f32 0.0, %v1686
      %v1688 = vpop.f32.mrf.mxu0
      %1689 = vmatprep.mubr.bf16.mxu0 0
      %1690 = vmatmul.mubr.bf16.gmra.mxu0 %v1531
      %v1691 = vpop.f32.mrf.mxu0
      %v1692 = vadd.f32 0.0, %v1691
      %v1693 = vpop.f32.mrf.mxu0
      %v1694 = vpop.f32.mrf.mxu0
      %v1695 = vadd.f32 0.0, %v1694
      %v1696 = vpop.f32.mrf.mxu0
      %1697 = vmatprep.mubr.bf16.mxu0 0
      %1698 = vmatmul.mubr.bf16.gmra.mxu0 %v1534
      %v1699 = vpop.f32.mrf.mxu0
      %v1700 = vadd.f32 0.0, %v1699
      %v1701 = vpop.f32.mrf.mxu0
      %v1702 = vpop.f32.mrf.mxu0
      %v1703 = vadd.f32 0.0, %v1702
      %v1704 = vpop.f32.mrf.mxu0
      %1705 = vmatprep.mubr.bf16.mxu0 0
      %1706 = vmatmul.mubr.bf16.gmra.mxu0 %v1537
      %v1707 = vpop.f32.mrf.mxu0
      %v1708 = vadd.f32 0.0, %v1707
      %v1709 = vpop.f32.mrf.mxu0
      %v1710 = vpop.f32.mrf.mxu0
      %v1711 = vadd.f32 0.0, %v1710
      %v1712 = vpop.f32.mrf.mxu0
      %1713 = vmatprep.mubr.bf16.mxu0 0
      %1714 = vmatmul.mubr.bf16.gmra.mxu0 %v1540
      %v1715 = vpop.f32.mrf.mxu0
      %v1716 = vadd.f32 0.0, %v1715
      %v1717 = vpop.f32.mrf.mxu0
      %v1718 = vpop.f32.mrf.mxu0
      %v1719 = vadd.f32 0.0, %v1718
      %v1720 = vpop.f32.mrf.mxu0
      %1721 = vdwg.mxu0
      %v1722 = vadd.f32 %v1396, %v1580
      %v1723 = vadd.f32 %v1397, %v1583
      %v1724 = vadd.f32 %v1398, %v1588
      %v1725 = vadd.f32 %v1399, %v1591
      %v1726 = vadd.f32 %v1400, %v1596
      %v1727 = vadd.f32 %v1401, %v1599
      %v1728 = vadd.f32 %v1402, %v1604
      %v1729 = vadd.f32 %v1403, %v1607
      %v1730 = vadd.f32 %v1404, %v1612
      %v1731 = vadd.f32 %v1405, %v1615
      %v1732 = vadd.f32 %v1406, %v1620
      %v1733 = vadd.f32 %v1407, %v1623
      %v1734 = vadd.f32 %v1408, %v1628
      %v1735 = vadd.f32 %v1409, %v1631
      %v1736 = vadd.f32 %v1410, %v1636
      %v1737 = vadd.f32 %v1411, %v1639
      %v1738 = vadd.f32 %v1412, %v1644
      %v1739 = vadd.f32 %v1413, %v1647
      %v1740 = vadd.f32 %v1414, %v1652
      %v1741 = vadd.f32 %v1415, %v1655
      %v1742 = vadd.f32 %v1416, %v1660
      %v1743 = vadd.f32 %v1417, %v1663
      %v1744 = vadd.f32 %v1418, %v1668
      %v1745 = vadd.f32 %v1419, %v1671
      %v1746 = vadd.f32 %v1420, %v1676
      %v1747 = vadd.f32 %v1421, %v1679
      %v1748 = vadd.f32 %v1422, %v1684
      %v1749 = vadd.f32 %v1423, %v1687
      %v1750 = vadd.f32 %v1424, %v1692
      %v1751 = vadd.f32 %v1425, %v1695
      %v1752 = vadd.f32 %v1426, %v1700
      %v1753 = vadd.f32 %v1427, %v1703
      %v1754 = vadd.f32 %v1428, %v1708
      %v1755 = vadd.f32 %v1429, %v1711
      %v1756 = vadd.f32 %v1430, %v1716
      %v1757 = vadd.f32 %v1431, %v1719
      %v1758 = vld [vmem:[%s192 + $0x14] sm:$0xff]
      %v1759 = vld [vmem:[%s192 + $0x1c] sm:$0xff]
      %v1760 = vld [vmem:[%s192 + $0x24] sm:$0xff]
      %v1761 = vld [vmem:[%s192 + $0x2c] sm:$0xff]
      %v1762 = vld [vmem:[%s192 + $0x34] sm:$0xff]
      %v1763 = vld [vmem:[%s192 + $0x3c] sm:$0xff]
      %v1764 = vld [vmem:[%s192 + $0x44] sm:$0xff]
      %v1765 = vld [vmem:[%s192 + $0x4c] sm:$0xff]
      %v1766 = vld [vmem:[%s192 + $0x54] sm:$0xff]
      %v1767 = vld [vmem:[%s192 + $0x5c] sm:$0xff]
      %v1768 = vld [vmem:[%s192 + $0x64] sm:$0xff]
      %v1769 = vld [vmem:[%s192 + $0x6c] sm:$0xff]
      %v1770 = vld [vmem:[%s192 + $0x74] sm:$0xff]
      %v1771 = vld [vmem:[%s192 + $0x7c] sm:$0xff]
      %v1772 = vld [vmem:[%s192 + $0x84] sm:$0xff]
      %v1773 = vld [vmem:[%s192 + $0x8c] sm:$0xff]
      %v1774 = vld [vmem:[%s192 + $0x94] sm:$0xff]
      %v1775 = vld [vmem:[%s192 + $0x9c] sm:$0xff]
      %v1776 = vld [vmem:[%s192 + $0xa4] sm:$0xff]
      %v1777 = vld [vmem:[%s192 + $0xac] sm:$0xff]
      %v1778 = vld [vmem:[%s192 + $0xb4] sm:$0xff]
      %v1779 = vld [vmem:[%s192 + $0xbc] sm:$0xff]
      %v1780 = vld [vmem:[%s192 + $0xc4] sm:$0xff]
      %v1781 = vld [vmem:[%s192 + $0xcc] sm:$0xff]
      %v1782 = vld [vmem:[%s192 + $0xd4] sm:$0xff]
      %v1783 = vld [vmem:[%s192 + $0xdc] sm:$0xff]
      %v1784 = vld [vmem:[%s192 + $0xe4] sm:$0xff]
      %v1785 = vld [vmem:[%s192 + $0xec] sm:$0xff]
      %v1786 = vld [vmem:[%s192 + $0xf4] sm:$0xff]
      %v1787 = vld [vmem:[%s192 + $0xfc] sm:$0xff]
      %v1788 = vld [vmem:[%s192 + $0x104] sm:$0xff]
      %v1789 = vld [vmem:[%s192 + $0x10c] sm:$0xff]
      %v1790 = vld [vmem:[%s192 + $0x114] sm:$0xff]
      %v1791 = vld [vmem:[%s192 + $0x11c] sm:$0xff]
      %v1792 = vld [vmem:[%s192 + $0x124] sm:$0xff]
      %v1793 = vld [vmem:[%s192 + $0x12c] sm:$0xff]
      %v1794 = vpack.c.bf16 %v1759, %v1758
      %v1795 = vpack.c.bf16 %v1761, %v1760
      %v1796 = vpack.c.bf16 %v1763, %v1762
      %v1797 = vpack.c.bf16 %v1765, %v1764
      %v1798 = vpack.c.bf16 %v1767, %v1766
      %v1799 = vpack.c.bf16 %v1769, %v1768
      %v1800 = vpack.c.bf16 %v1771, %v1770
      %v1801 = vpack.c.bf16 %v1773, %v1772
      %v1802 = vpack.c.bf16 %v1775, %v1774
      %v1803 = vpack.c.bf16 %v1777, %v1776
      %v1804 = vpack.c.bf16 %v1779, %v1778
      %v1805 = vpack.c.bf16 %v1781, %v1780
      %v1806 = vpack.c.bf16 %v1783, %v1782
      %v1807 = vpack.c.bf16 %v1785, %v1784
      %v1808 = vpack.c.bf16 %v1787, %v1786
      %v1809 = vpack.c.bf16 %v1789, %v1788
      %v1810 = vpack.c.bf16 %v1791, %v1790
      %v1811 = vpack.c.bf16 %v1793, %v1792
      %s1812 = scalar_lea.vmem %s1, 20
      %v1813 = vld [vmem:[%s1812] sm:$0xf]
      %v1815 = vsel %vm310, %v1794, 0
      %v1818 = vsel %vm310, %v1795, 0
      %v1821 = vsel %vm310, %v1796, 0
      %v1824 = vsel %vm310, %v1797, 0
      %v1827 = vsel %vm310, %v1798, 0
      %v1830 = vsel %vm310, %v1799, 0
      %v1833 = vsel %vm310, %v1800, 0
      %v1836 = vsel %vm310, %v1801, 0
      %v1839 = vsel %vm310, %v1802, 0
      %v1842 = vsel %vm310, %v1803, 0
      %v1845 = vsel %vm310, %v1804, 0
      %v1848 = vsel %vm310, %v1805, 0
      %v1851 = vsel %vm310, %v1806, 0
      %v1854 = vsel %vm310, %v1807, 0
      %v1857 = vsel %vm310, %v1808, 0
      %v1860 = vsel %vm310, %v1809, 0
      %v1863 = vsel %vm310, %v1810, 0
      %v1866 = vsel %vm310, %v1811, 0
      %v1869 = vsel %vm365, %v1813, 0
      %1871 = vmatprep.subr.bf16.mxu0 0
      %1872 = vmatpush1.bf16.msra.mxu0 0
      %1873 = vmatprep.subr.bf16.mxu0 0
      %1874 = vmatpush1.bf16.msra.mxu0 0
      %1875 = vmatprep.subr.bf16.mxu0 0
      %1876 = vmatpush1.bf16.msra.mxu0 0
      %1877 = vmatprep.subr.bf16.mxu0 0
      %1878 = vmatpush1.bf16.msra.mxu0 0
      %1879 = vmatprep.subr.bf16.mxu0 0
      %1880 = vmatpush1.bf16.msra.mxu0 0
      %1881 = vmatprep.subr.bf16.mxu0 0
      %1882 = vmatpush1.bf16.msra.mxu0 0
      %1883 = vmatprep.subr.bf16.mxu0 0
      %1884 = vmatpush1.bf16.msra.mxu0 0
      %1885 = vmatprep.subr.bf16.mxu0 0
      %1886 = vmatpush1.bf16.msra.mxu0 %v1869
      %1887 = vmatprep.subr.bf16.mxu0 0
      %1888 = vmatpush2.bf16.msra.mxu0 0
      %1889 = vmatprep.subr.bf16.mxu0 0
      %1890 = vmatpush2.bf16.msra.mxu0 0
      %1891 = vmatprep.subr.bf16.mxu0 0
      %1892 = vmatpush2.bf16.msra.mxu0 0
      %1893 = vmatprep.subr.bf16.mxu0 0
      %1894 = vmatpush2.bf16.msra.mxu0 0
      %1895 = vmatprep.subr.bf16.mxu0 0
      %1896 = vmatpush2.bf16.msra.mxu0 0
      %1897 = vmatprep.subr.bf16.mxu0 0
      %1898 = vmatpush2.bf16.msra.mxu0 0
      %1899 = vmatprep.subr.bf16.mxu0 0
      %1900 = vmatpush2.bf16.msra.mxu0 0
      %1901 = vmatprep.subr.bf16.mxu0 0
      %1902 = vmatpush2.bf16.msra.mxu0 0
      %1903 = vmatprep.mubr.bf16.mxu0 0
      %1904 = vmatmul.mubr.bf16.gmra.mxu0 %v1815
      %v1905 = vpop.f32.mrf.mxu0
      %v1906 = vadd.f32 0.0, %v1905
      %v1907 = vpop.f32.mrf.mxu0
      %v1908 = vpop.f32.mrf.mxu0
      %v1909 = vadd.f32 0.0, %v1908
      %v1910 = vpop.f32.mrf.mxu0
      %1911 = vmatprep.mubr.bf16.mxu0 0
      %1912 = vmatmul.mubr.bf16.gmra.mxu0 %v1818
      %v1913 = vpop.f32.mrf.mxu0
      %v1914 = vadd.f32 0.0, %v1913
      %v1915 = vpop.f32.mrf.mxu0
      %v1916 = vpop.f32.mrf.mxu0
      %v1917 = vadd.f32 0.0, %v1916
      %v1918 = vpop.f32.mrf.mxu0
      %1919 = vmatprep.mubr.bf16.mxu0 0
      %1920 = vmatmul.mubr.bf16.gmra.mxu0 %v1821
      %v1921 = vpop.f32.mrf.mxu0
      %v1922 = vadd.f32 0.0, %v1921
      %v1923 = vpop.f32.mrf.mxu0
      %v1924 = vpop.f32.mrf.mxu0
      %v1925 = vadd.f32 0.0, %v1924
      %v1926 = vpop.f32.mrf.mxu0
      %1927 = vmatprep.mubr.bf16.mxu0 0
      %1928 = vmatmul.mubr.bf16.gmra.mxu0 %v1824
      %v1929 = vpop.f32.mrf.mxu0
      %v1930 = vadd.f32 0.0, %v1929
      %v1931 = vpop.f32.mrf.mxu0
      %v1932 = vpop.f32.mrf.mxu0
      %v1933 = vadd.f32 0.0, %v1932
      %v1934 = vpop.f32.mrf.mxu0
      %1935 = vmatprep.mubr.bf16.mxu0 0
      %1936 = vmatmul.mubr.bf16.gmra.mxu0 %v1827
      %v1937 = vpop.f32.mrf.mxu0
      %v1938 = vadd.f32 0.0, %v1937
      %v1939 = vpop.f32.mrf.mxu0
      %v1940 = vpop.f32.mrf.mxu0
      %v1941 = vadd.f32 0.0, %v1940
      %v1942 = vpop.f32.mrf.mxu0
      %1943 = vmatprep.mubr.bf16.mxu0 0
      %1944 = vmatmul.mubr.bf16.gmra.mxu0 %v1830
      %v1945 = vpop.f32.mrf.mxu0
      %v1946 = vadd.f32 0.0, %v1945
      %v1947 = vpop.f32.mrf.mxu0
      %v1948 = vpop.f32.mrf.mxu0
      %v1949 = vadd.f32 0.0, %v1948
      %v1950 = vpop.f32.mrf.mxu0
      %1951 = vmatprep.mubr.bf16.mxu0 0
      %1952 = vmatmul.mubr.bf16.gmra.mxu0 %v1833
      %v1953 = vpop.f32.mrf.mxu0
      %v1954 = vadd.f32 0.0, %v1953
      %v1955 = vpop.f32.mrf.mxu0
      %v1956 = vpop.f32.mrf.mxu0
      %v1957 = vadd.f32 0.0, %v1956
      %v1958 = vpop.f32.mrf.mxu0
      %1959 = vmatprep.mubr.bf16.mxu0 0
      %1960 = vmatmul.mubr.bf16.gmra.mxu0 %v1836
      %v1961 = vpop.f32.mrf.mxu0
      %v1962 = vadd.f32 0.0, %v1961
      %v1963 = vpop.f32.mrf.mxu0
      %v1964 = vpop.f32.mrf.mxu0
      %v1965 = vadd.f32 0.0, %v1964
      %v1966 = vpop.f32.mrf.mxu0
      %1967 = vmatprep.mubr.bf16.mxu0 0
      %1968 = vmatmul.mubr.bf16.gmra.mxu0 %v1839
      %v1969 = vpop.f32.mrf.mxu0
      %v1970 = vadd.f32 0.0, %v1969
      %v1971 = vpop.f32.mrf.mxu0
      %v1972 = vpop.f32.mrf.mxu0
      %v1973 = vadd.f32 0.0, %v1972
      %v1974 = vpop.f32.mrf.mxu0
      %1975 = vmatprep.mubr.bf16.mxu0 0
      %1976 = vmatmul.mubr.bf16.gmra.mxu0 %v1842
      %v1977 = vpop.f32.mrf.mxu0
      %v1978 = vadd.f32 0.0, %v1977
      %v1979 = vpop.f32.mrf.mxu0
      %v1980 = vpop.f32.mrf.mxu0
      %v1981 = vadd.f32 0.0, %v1980
      %v1982 = vpop.f32.mrf.mxu0
      %1983 = vmatprep.mubr.bf16.mxu0 0
      %1984 = vmatmul.mubr.bf16.gmra.mxu0 %v1845
      %v1985 = vpop.f32.mrf.mxu0
      %v1986 = vadd.f32 0.0, %v1985
      %v1987 = vpop.f32.mrf.mxu0
      %v1988 = vpop.f32.mrf.mxu0
      %v1989 = vadd.f32 0.0, %v1988
      %v1990 = vpop.f32.mrf.mxu0
      %1991 = vmatprep.mubr.bf16.mxu0 0
      %1992 = vmatmul.mubr.bf16.gmra.mxu0 %v1848
      %v1993 = vpop.f32.mrf.mxu0
      %v1994 = vadd.f32 0.0, %v1993
      %v1995 = vpop.f32.mrf.mxu0
      %v1996 = vpop.f32.mrf.mxu0
      %v1997 = vadd.f32 0.0, %v1996
      %v1998 = vpop.f32.mrf.mxu0
      %1999 = vmatprep.mubr.bf16.mxu0 0
      %2000 = vmatmul.mubr.bf16.gmra.mxu0 %v1851
      %v2001 = vpop.f32.mrf.mxu0
      %v2002 = vadd.f32 0.0, %v2001
      %v2003 = vpop.f32.mrf.mxu0
      %v2004 = vpop.f32.mrf.mxu0
      %v2005 = vadd.f32 0.0, %v2004
      %v2006 = vpop.f32.mrf.mxu0
      %2007 = vmatprep.mubr.bf16.mxu0 0
      %2008 = vmatmul.mubr.bf16.gmra.mxu0 %v1854
      %v2009 = vpop.f32.mrf.mxu0
      %v2010 = vadd.f32 0.0, %v2009
      %v2011 = vpop.f32.mrf.mxu0
      %v2012 = vpop.f32.mrf.mxu0
      %v2013 = vadd.f32 0.0, %v2012
      %v2014 = vpop.f32.mrf.mxu0
      %2015 = vmatprep.mubr.bf16.mxu0 0
      %2016 = vmatmul.mubr.bf16.gmra.mxu0 %v1857
      %v2017 = vpop.f32.mrf.mxu0
      %v2018 = vadd.f32 0.0, %v2017
      %v2019 = vpop.f32.mrf.mxu0
      %v2020 = vpop.f32.mrf.mxu0
      %v2021 = vadd.f32 0.0, %v2020
      %v2022 = vpop.f32.mrf.mxu0
      %2023 = vmatprep.mubr.bf16.mxu0 0
      %2024 = vmatmul.mubr.bf16.gmra.mxu0 %v1860
      %v2025 = vpop.f32.mrf.mxu0
      %v2026 = vadd.f32 0.0, %v2025
      %v2027 = vpop.f32.mrf.mxu0
      %v2028 = vpop.f32.mrf.mxu0
      %v2029 = vadd.f32 0.0, %v2028
      %v2030 = vpop.f32.mrf.mxu0
      %2031 = vmatprep.mubr.bf16.mxu0 0
      %2032 = vmatmul.mubr.bf16.gmra.mxu0 %v1863
      %v2033 = vpop.f32.mrf.mxu0
      %v2034 = vadd.f32 0.0, %v2033
      %v2035 = vpop.f32.mrf.mxu0
      %v2036 = vpop.f32.mrf.mxu0
      %v2037 = vadd.f32 0.0, %v2036
      %v2038 = vpop.f32.mrf.mxu0
      %2039 = vmatprep.mubr.bf16.mxu0 0
      %2040 = vmatmul.mubr.bf16.gmra.mxu0 %v1866
      %v2041 = vpop.f32.mrf.mxu0
      %v2042 = vadd.f32 0.0, %v2041
      %v2043 = vpop.f32.mrf.mxu0
      %v2044 = vpop.f32.mrf.mxu0
      %v2045 = vadd.f32 0.0, %v2044
      %v2046 = vpop.f32.mrf.mxu0
      %2047 = vdwg.mxu0
      %v2048 = vadd.f32 %v1722, %v1906
      %v2049 = vadd.f32 %v1723, %v1909
      %v2050 = vadd.f32 %v1724, %v1914
      %v2051 = vadd.f32 %v1725, %v1917
      %v2052 = vadd.f32 %v1726, %v1922
      %v2053 = vadd.f32 %v1727, %v1925
      %v2054 = vadd.f32 %v1728, %v1930
      %v2055 = vadd.f32 %v1729, %v1933
      %v2056 = vadd.f32 %v1730, %v1938
      %v2057 = vadd.f32 %v1731, %v1941
      %v2058 = vadd.f32 %v1732, %v1946
      %v2059 = vadd.f32 %v1733, %v1949
      %v2060 = vadd.f32 %v1734, %v1954
      %v2061 = vadd.f32 %v1735, %v1957
      %v2062 = vadd.f32 %v1736, %v1962
      %v2063 = vadd.f32 %v1737, %v1965
      %v2064 = vadd.f32 %v1738, %v1970
      %v2065 = vadd.f32 %v1739, %v1973
      %v2066 = vadd.f32 %v1740, %v1978
      %v2067 = vadd.f32 %v1741, %v1981
      %v2068 = vadd.f32 %v1742, %v1986
      %v2069 = vadd.f32 %v1743, %v1989
      %v2070 = vadd.f32 %v1744, %v1994
      %v2071 = vadd.f32 %v1745, %v1997
      %v2072 = vadd.f32 %v1746, %v2002
      %v2073 = vadd.f32 %v1747, %v2005
      %v2074 = vadd.f32 %v1748, %v2010
      %v2075 = vadd.f32 %v1749, %v2013
      %v2076 = vadd.f32 %v1750, %v2018
      %v2077 = vadd.f32 %v1751, %v2021
      %v2078 = vadd.f32 %v1752, %v2026
      %v2079 = vadd.f32 %v1753, %v2029
      %v2080 = vadd.f32 %v1754, %v2034
      %v2081 = vadd.f32 %v1755, %v2037
      %v2082 = vadd.f32 %v1756, %v2042
      %v2083 = vadd.f32 %v1757, %v2045
      %v2084 = vld [vmem:[%s192 + $0x24] sm:$0xff]
      %v2085 = vld [vmem:[%s192 + $0x2c] sm:$0xff]
      %v2086 = vld [vmem:[%s192 + $0x34] sm:$0xff]
      %v2087 = vld [vmem:[%s192 + $0x3c] sm:$0xff]
      %v2088 = vld [vmem:[%s192 + $0x44] sm:$0xff]
      %v2089 = vld [vmem:[%s192 + $0x4c] sm:$0xff]
      %v2090 = vld [vmem:[%s192 + $0x54] sm:$0xff]
      %v2091 = vld [vmem:[%s192 + $0x5c] sm:$0xff]
      %v2092 = vld [vmem:[%s192 + $0x64] sm:$0xff]
      %v2093 = vld [vmem:[%s192 + $0x6c] sm:$0xff]
      %v2094 = vld [vmem:[%s192 + $0x74] sm:$0xff]
      %v2095 = vld [vmem:[%s192 + $0x7c] sm:$0xff]
      %v2096 = vld [vmem:[%s192 + $0x84] sm:$0xff]
      %v2097 = vld [vmem:[%s192 + $0x8c] sm:$0xff]
      %v2098 = vld [vmem:[%s192 + $0x94] sm:$0xff]
      %v2099 = vld [vmem:[%s192 + $0x9c] sm:$0xff]
      %v2100 = vld [vmem:[%s192 + $0xa4] sm:$0xff]
      %v2101 = vld [vmem:[%s192 + $0xac] sm:$0xff]
      %v2102 = vld [vmem:[%s192 + $0xb4] sm:$0xff]
      %v2103 = vld [vmem:[%s192 + $0xbc] sm:$0xff]
      %v2104 = vld [vmem:[%s192 + $0xc4] sm:$0xff]
      %v2105 = vld [vmem:[%s192 + $0xcc] sm:$0xff]
      %v2106 = vld [vmem:[%s192 + $0xd4] sm:$0xff]
      %v2107 = vld [vmem:[%s192 + $0xdc] sm:$0xff]
      %v2108 = vld [vmem:[%s192 + $0xe4] sm:$0xff]
      %v2109 = vld [vmem:[%s192 + $0xec] sm:$0xff]
      %v2110 = vld [vmem:[%s192 + $0xf4] sm:$0xff]
      %v2111 = vld [vmem:[%s192 + $0xfc] sm:$0xff]
      %v2112 = vld [vmem:[%s192 + $0x104] sm:$0xff]
      %v2113 = vld [vmem:[%s192 + $0x10c] sm:$0xff]
      %v2114 = vld [vmem:[%s192 + $0x114] sm:$0xff]
      %v2115 = vld [vmem:[%s192 + $0x11c] sm:$0xff]
      %v2116 = vld [vmem:[%s192 + $0x124] sm:$0xff]
      %v2117 = vld [vmem:[%s192 + $0x12c] sm:$0xff]
      %v2118 = vld [vmem:[%s192 + $0x134] sm:$0xff]
      %v2119 = vld [vmem:[%s192 + $0x13c] sm:$0xff]
      %v2120 = vpack.c.bf16 %v2085, %v2084
      %v2121 = vpack.c.bf16 %v2087, %v2086
      %v2122 = vpack.c.bf16 %v2089, %v2088
      %v2123 = vpack.c.bf16 %v2091, %v2090
      %v2124 = vpack.c.bf16 %v2093, %v2092
      %v2125 = vpack.c.bf16 %v2095, %v2094
      %v2126 = vpack.c.bf16 %v2097, %v2096
      %v2127 = vpack.c.bf16 %v2099, %v2098
      %v2128 = vpack.c.bf16 %v2101, %v2100
      %v2129 = vpack.c.bf16 %v2103, %v2102
      %v2130 = vpack.c.bf16 %v2105, %v2104
      %v2131 = vpack.c.bf16 %v2107, %v2106
      %v2132 = vpack.c.bf16 %v2109, %v2108
      %v2133 = vpack.c.bf16 %v2111, %v2110
      %v2134 = vpack.c.bf16 %v2113, %v2112
      %v2135 = vpack.c.bf16 %v2115, %v2114
      %v2136 = vpack.c.bf16 %v2117, %v2116
      %v2137 = vpack.c.bf16 %v2119, %v2118
      %s2138 = scalar_lea.vmem %s1, 24
      %v2139 = vld [vmem:[%s2138] sm:$0xf]
      %v2141 = vsel %vm310, %v2120, 0
      %v2144 = vsel %vm310, %v2121, 0
      %v2147 = vsel %vm310, %v2122, 0
      %v2150 = vsel %vm310, %v2123, 0
      %v2153 = vsel %vm310, %v2124, 0
      %v2156 = vsel %vm310, %v2125, 0
      %v2159 = vsel %vm310, %v2126, 0
      %v2162 = vsel %vm310, %v2127, 0
      %v2165 = vsel %vm310, %v2128, 0
      %v2168 = vsel %vm310, %v2129, 0
      %v2171 = vsel %vm310, %v2130, 0
      %v2174 = vsel %vm310, %v2131, 0
      %v2177 = vsel %vm310, %v2132, 0
      %v2180 = vsel %vm310, %v2133, 0
      %v2183 = vsel %vm310, %v2134, 0
      %v2186 = vsel %vm310, %v2135, 0
      %v2189 = vsel %vm310, %v2136, 0
      %v2192 = vsel %vm310, %v2137, 0
      %v2195 = vsel %vm365, %v2139, 0
      %2197 = vmatprep.subr.bf16.mxu0 0
      %2198 = vmatpush1.bf16.msra.mxu0 0
      %2199 = vmatprep.subr.bf16.mxu0 0
      %2200 = vmatpush1.bf16.msra.mxu0 0
      %2201 = vmatprep.subr.bf16.mxu0 0
      %2202 = vmatpush1.bf16.msra.mxu0 0
      %2203 = vmatprep.subr.bf16.mxu0 0
      %2204 = vmatpush1.bf16.msra.mxu0 0
      %2205 = vmatprep.subr.bf16.mxu0 0
      %2206 = vmatpush1.bf16.msra.mxu0 0
      %2207 = vmatprep.subr.bf16.mxu0 0
      %2208 = vmatpush1.bf16.msra.mxu0 0
      %2209 = vmatprep.subr.bf16.mxu0 0
      %2210 = vmatpush1.bf16.msra.mxu0 0
      %2211 = vmatprep.subr.bf16.mxu0 0
      %2212 = vmatpush1.bf16.msra.mxu0 %v2195
      %2213 = vmatprep.subr.bf16.mxu0 0
      %2214 = vmatpush2.bf16.msra.mxu0 0
      %2215 = vmatprep.subr.bf16.mxu0 0
      %2216 = vmatpush2.bf16.msra.mxu0 0
      %2217 = vmatprep.subr.bf16.mxu0 0
      %2218 = vmatpush2.bf16.msra.mxu0 0
      %2219 = vmatprep.subr.bf16.mxu0 0
      %2220 = vmatpush2.bf16.msra.mxu0 0
      %2221 = vmatprep.subr.bf16.mxu0 0
      %2222 = vmatpush2.bf16.msra.mxu0 0
      %2223 = vmatprep.subr.bf16.mxu0 0
      %2224 = vmatpush2.bf16.msra.mxu0 0
      %2225 = vmatprep.subr.bf16.mxu0 0
      %2226 = vmatpush2.bf16.msra.mxu0 0
      %2227 = vmatprep.subr.bf16.mxu0 0
      %2228 = vmatpush2.bf16.msra.mxu0 0
      %2229 = vmatprep.mubr.bf16.mxu0 0
      %2230 = vmatmul.mubr.bf16.gmra.mxu0 %v2141
      %v2231 = vpop.f32.mrf.mxu0
      %v2232 = vadd.f32 0.0, %v2231
      %v2233 = vpop.f32.mrf.mxu0
      %v2234 = vpop.f32.mrf.mxu0
      %v2235 = vadd.f32 0.0, %v2234
      %v2236 = vpop.f32.mrf.mxu0
      %2237 = vmatprep.mubr.bf16.mxu0 0
      %2238 = vmatmul.mubr.bf16.gmra.mxu0 %v2144
      %v2239 = vpop.f32.mrf.mxu0
      %v2240 = vadd.f32 0.0, %v2239
      %v2241 = vpop.f32.mrf.mxu0
      %v2242 = vpop.f32.mrf.mxu0
      %v2243 = vadd.f32 0.0, %v2242
      %v2244 = vpop.f32.mrf.mxu0
      %2245 = vmatprep.mubr.bf16.mxu0 0
      %2246 = vmatmul.mubr.bf16.gmra.mxu0 %v2147
      %v2247 = vpop.f32.mrf.mxu0
      %v2248 = vadd.f32 0.0, %v2247
      %v2249 = vpop.f32.mrf.mxu0
      %v2250 = vpop.f32.mrf.mxu0
      %v2251 = vadd.f32 0.0, %v2250
      %v2252 = vpop.f32.mrf.mxu0
      %2253 = vmatprep.mubr.bf16.mxu0 0
      %2254 = vmatmul.mubr.bf16.gmra.mxu0 %v2150
      %v2255 = vpop.f32.mrf.mxu0
      %v2256 = vadd.f32 0.0, %v2255
      %v2257 = vpop.f32.mrf.mxu0
      %v2258 = vpop.f32.mrf.mxu0
      %v2259 = vadd.f32 0.0, %v2258
      %v2260 = vpop.f32.mrf.mxu0
      %2261 = vmatprep.mubr.bf16.mxu0 0
      %2262 = vmatmul.mubr.bf16.gmra.mxu0 %v2153
      %v2263 = vpop.f32.mrf.mxu0
      %v2264 = vadd.f32 0.0, %v2263
      %v2265 = vpop.f32.mrf.mxu0
      %v2266 = vpop.f32.mrf.mxu0
      %v2267 = vadd.f32 0.0, %v2266
      %v2268 = vpop.f32.mrf.mxu0
      %2269 = vmatprep.mubr.bf16.mxu0 0
      %2270 = vmatmul.mubr.bf16.gmra.mxu0 %v2156
      %v2271 = vpop.f32.mrf.mxu0
      %v2272 = vadd.f32 0.0, %v2271
      %v2273 = vpop.f32.mrf.mxu0
      %v2274 = vpop.f32.mrf.mxu0
      %v2275 = vadd.f32 0.0, %v2274
      %v2276 = vpop.f32.mrf.mxu0
      %2277 = vmatprep.mubr.bf16.mxu0 0
      %2278 = vmatmul.mubr.bf16.gmra.mxu0 %v2159
      %v2279 = vpop.f32.mrf.mxu0
      %v2280 = vadd.f32 0.0, %v2279
      %v2281 = vpop.f32.mrf.mxu0
      %v2282 = vpop.f32.mrf.mxu0
      %v2283 = vadd.f32 0.0, %v2282
      %v2284 = vpop.f32.mrf.mxu0
      %2285 = vmatprep.mubr.bf16.mxu0 0
      %2286 = vmatmul.mubr.bf16.gmra.mxu0 %v2162
      %v2287 = vpop.f32.mrf.mxu0
      %v2288 = vadd.f32 0.0, %v2287
      %v2289 = vpop.f32.mrf.mxu0
      %v2290 = vpop.f32.mrf.mxu0
      %v2291 = vadd.f32 0.0, %v2290
      %v2292 = vpop.f32.mrf.mxu0
      %2293 = vmatprep.mubr.bf16.mxu0 0
      %2294 = vmatmul.mubr.bf16.gmra.mxu0 %v2165
      %v2295 = vpop.f32.mrf.mxu0
      %v2296 = vadd.f32 0.0, %v2295
      %v2297 = vpop.f32.mrf.mxu0
      %v2298 = vpop.f32.mrf.mxu0
      %v2299 = vadd.f32 0.0, %v2298
      %v2300 = vpop.f32.mrf.mxu0
      %2301 = vmatprep.mubr.bf16.mxu0 0
      %2302 = vmatmul.mubr.bf16.gmra.mxu0 %v2168
      %v2303 = vpop.f32.mrf.mxu0
      %v2304 = vadd.f32 0.0, %v2303
      %v2305 = vpop.f32.mrf.mxu0
      %v2306 = vpop.f32.mrf.mxu0
      %v2307 = vadd.f32 0.0, %v2306
      %v2308 = vpop.f32.mrf.mxu0
      %2309 = vmatprep.mubr.bf16.mxu0 0
      %2310 = vmatmul.mubr.bf16.gmra.mxu0 %v2171
      %v2311 = vpop.f32.mrf.mxu0
      %v2312 = vadd.f32 0.0, %v2311
      %v2313 = vpop.f32.mrf.mxu0
      %v2314 = vpop.f32.mrf.mxu0
      %v2315 = vadd.f32 0.0, %v2314
      %v2316 = vpop.f32.mrf.mxu0
      %2317 = vmatprep.mubr.bf16.mxu0 0
      %2318 = vmatmul.mubr.bf16.gmra.mxu0 %v2174
      %v2319 = vpop.f32.mrf.mxu0
      %v2320 = vadd.f32 0.0, %v2319
      %v2321 = vpop.f32.mrf.mxu0
      %v2322 = vpop.f32.mrf.mxu0
      %v2323 = vadd.f32 0.0, %v2322
      %v2324 = vpop.f32.mrf.mxu0
      %2325 = vmatprep.mubr.bf16.mxu0 0
      %2326 = vmatmul.mubr.bf16.gmra.mxu0 %v2177
      %v2327 = vpop.f32.mrf.mxu0
      %v2328 = vadd.f32 0.0, %v2327
      %v2329 = vpop.f32.mrf.mxu0
      %v2330 = vpop.f32.mrf.mxu0
      %v2331 = vadd.f32 0.0, %v2330
      %v2332 = vpop.f32.mrf.mxu0
      %2333 = vmatprep.mubr.bf16.mxu0 0
      %2334 = vmatmul.mubr.bf16.gmra.mxu0 %v2180
      %v2335 = vpop.f32.mrf.mxu0
      %v2336 = vadd.f32 0.0, %v2335
      %v2337 = vpop.f32.mrf.mxu0
      %v2338 = vpop.f32.mrf.mxu0
      %v2339 = vadd.f32 0.0, %v2338
      %v2340 = vpop.f32.mrf.mxu0
      %2341 = vmatprep.mubr.bf16.mxu0 0
      %2342 = vmatmul.mubr.bf16.gmra.mxu0 %v2183
      %v2343 = vpop.f32.mrf.mxu0
      %v2344 = vadd.f32 0.0, %v2343
      %v2345 = vpop.f32.mrf.mxu0
      %v2346 = vpop.f32.mrf.mxu0
      %v2347 = vadd.f32 0.0, %v2346
      %v2348 = vpop.f32.mrf.mxu0
      %2349 = vmatprep.mubr.bf16.mxu0 0
      %2350 = vmatmul.mubr.bf16.gmra.mxu0 %v2186
      %v2351 = vpop.f32.mrf.mxu0
      %v2352 = vadd.f32 0.0, %v2351
      %v2353 = vpop.f32.mrf.mxu0
      %v2354 = vpop.f32.mrf.mxu0
      %v2355 = vadd.f32 0.0, %v2354
      %v2356 = vpop.f32.mrf.mxu0
      %2357 = vmatprep.mubr.bf16.mxu0 0
      %2358 = vmatmul.mubr.bf16.gmra.mxu0 %v2189
      %v2359 = vpop.f32.mrf.mxu0
      %v2360 = vadd.f32 0.0, %v2359
      %v2361 = vpop.f32.mrf.mxu0
      %v2362 = vpop.f32.mrf.mxu0
      %v2363 = vadd.f32 0.0, %v2362
      %v2364 = vpop.f32.mrf.mxu0
      %2365 = vmatprep.mubr.bf16.mxu0 0
      %2366 = vmatmul.mubr.bf16.gmra.mxu0 %v2192
      %v2367 = vpop.f32.mrf.mxu0
      %v2368 = vadd.f32 0.0, %v2367
      %v2369 = vpop.f32.mrf.mxu0
      %v2370 = vpop.f32.mrf.mxu0
      %v2371 = vadd.f32 0.0, %v2370
      %v2372 = vpop.f32.mrf.mxu0
      %2373 = vdwg.mxu0
      %v2374 = vadd.f32 %v2048, %v2232
      %v2375 = vadd.f32 %v2049, %v2235
      %v2376 = vadd.f32 %v2050, %v2240
      %v2377 = vadd.f32 %v2051, %v2243
      %v2378 = vadd.f32 %v2052, %v2248
      %v2379 = vadd.f32 %v2053, %v2251
      %v2380 = vadd.f32 %v2054, %v2256
      %v2381 = vadd.f32 %v2055, %v2259
      %v2382 = vadd.f32 %v2056, %v2264
      %v2383 = vadd.f32 %v2057, %v2267
      %v2384 = vadd.f32 %v2058, %v2272
      %v2385 = vadd.f32 %v2059, %v2275
      %v2386 = vadd.f32 %v2060, %v2280
      %v2387 = vadd.f32 %v2061, %v2283
      %v2388 = vadd.f32 %v2062, %v2288
      %v2389 = vadd.f32 %v2063, %v2291
      %v2390 = vadd.f32 %v2064, %v2296
      %v2391 = vadd.f32 %v2065, %v2299
      %v2392 = vadd.f32 %v2066, %v2304
      %v2393 = vadd.f32 %v2067, %v2307
      %v2394 = vadd.f32 %v2068, %v2312
      %v2395 = vadd.f32 %v2069, %v2315
      %v2396 = vadd.f32 %v2070, %v2320
      %v2397 = vadd.f32 %v2071, %v2323
      %v2398 = vadd.f32 %v2072, %v2328
      %v2399 = vadd.f32 %v2073, %v2331
      %v2400 = vadd.f32 %v2074, %v2336
      %v2401 = vadd.f32 %v2075, %v2339
      %v2402 = vadd.f32 %v2076, %v2344
      %v2403 = vadd.f32 %v2077, %v2347
      %v2404 = vadd.f32 %v2078, %v2352
      %v2405 = vadd.f32 %v2079, %v2355
      %v2406 = vadd.f32 %v2080, %v2360
      %v2407 = vadd.f32 %v2081, %v2363
      %v2408 = vadd.f32 %v2082, %v2368
      %v2409 = vadd.f32 %v2083, %v2371
      %v2410 = vld [vmem:[%s192 + $0x25] sm:$0xff]
      %v2411 = vld [vmem:[%s192 + $0x2d] sm:$0xff]
      %v2412 = vld [vmem:[%s192 + $0x35] sm:$0xff]
      %v2413 = vld [vmem:[%s192 + $0x3d] sm:$0xff]
      %v2414 = vld [vmem:[%s192 + $0x45] sm:$0xff]
      %v2415 = vld [vmem:[%s192 + $0x4d] sm:$0xff]
      %v2416 = vld [vmem:[%s192 + $0x55] sm:$0xff]
      %v2417 = vld [vmem:[%s192 + $0x5d] sm:$0xff]
      %v2418 = vld [vmem:[%s192 + $0x65] sm:$0xff]
      %v2419 = vld [vmem:[%s192 + $0x6d] sm:$0xff]
      %v2420 = vld [vmem:[%s192 + $0x75] sm:$0xff]
      %v2421 = vld [vmem:[%s192 + $0x7d] sm:$0xff]
      %v2422 = vld [vmem:[%s192 + $0x85] sm:$0xff]
      %v2423 = vld [vmem:[%s192 + $0x8d] sm:$0xff]
      %v2424 = vld [vmem:[%s192 + $0x95] sm:$0xff]
      %v2425 = vld [vmem:[%s192 + $0x9d] sm:$0xff]
      %v2426 = vld [vmem:[%s192 + $0xa5] sm:$0xff]
      %v2427 = vld [vmem:[%s192 + $0xad] sm:$0xff]
      %v2428 = vld [vmem:[%s192 + $0xb5] sm:$0xff]
      %v2429 = vld [vmem:[%s192 + $0xbd] sm:$0xff]
      %v2430 = vld [vmem:[%s192 + $0xc5] sm:$0xff]
      %v2431 = vld [vmem:[%s192 + $0xcd] sm:$0xff]
      %v2432 = vld [vmem:[%s192 + $0xd5] sm:$0xff]
      %v2433 = vld [vmem:[%s192 + $0xdd] sm:$0xff]
      %v2434 = vld [vmem:[%s192 + $0xe5] sm:$0xff]
      %v2435 = vld [vmem:[%s192 + $0xed] sm:$0xff]
      %v2436 = vld [vmem:[%s192 + $0xf5] sm:$0xff]
      %v2437 = vld [vmem:[%s192 + $0xfd] sm:$0xff]
      %v2438 = vld [vmem:[%s192 + $0x105] sm:$0xff]
      %v2439 = vld [vmem:[%s192 + $0x10d] sm:$0xff]
      %v2440 = vld [vmem:[%s192 + $0x115] sm:$0xff]
      %v2441 = vld [vmem:[%s192 + $0x11d] sm:$0xff]
      %v2442 = vld [vmem:[%s192 + $0x125] sm:$0xff]
      %v2443 = vld [vmem:[%s192 + $0x12d] sm:$0xff]
      %v2444 = vld [vmem:[%s192 + $0x135] sm:$0xff]
      %v2445 = vld [vmem:[%s192 + $0x13d] sm:$0xff]
      %v2446 = vpack.c.bf16 %v2411, %v2410
      %v2447 = vpack.c.bf16 %v2413, %v2412
      %v2448 = vpack.c.bf16 %v2415, %v2414
      %v2449 = vpack.c.bf16 %v2417, %v2416
      %v2450 = vpack.c.bf16 %v2419, %v2418
      %v2451 = vpack.c.bf16 %v2421, %v2420
      %v2452 = vpack.c.bf16 %v2423, %v2422
      %v2453 = vpack.c.bf16 %v2425, %v2424
      %v2454 = vpack.c.bf16 %v2427, %v2426
      %v2455 = vpack.c.bf16 %v2429, %v2428
      %v2456 = vpack.c.bf16 %v2431, %v2430
      %v2457 = vpack.c.bf16 %v2433, %v2432
      %v2458 = vpack.c.bf16 %v2435, %v2434
      %v2459 = vpack.c.bf16 %v2437, %v2436
      %v2460 = vpack.c.bf16 %v2439, %v2438
      %v2461 = vpack.c.bf16 %v2441, %v2440
      %v2462 = vpack.c.bf16 %v2443, %v2442
      %v2463 = vpack.c.bf16 %v2445, %v2444
      %s2464 = scalar_lea.vmem %s1, 28
      %v2465 = vld [vmem:[%s2464] sm:$0xf]
      %v2467 = vsel %vm310, %v2446, 0
      %v2470 = vsel %vm310, %v2447, 0
      %v2473 = vsel %vm310, %v2448, 0
      %v2476 = vsel %vm310, %v2449, 0
      %v2479 = vsel %vm310, %v2450, 0
      %v2482 = vsel %vm310, %v2451, 0
      %v2485 = vsel %vm310, %v2452, 0
      %v2488 = vsel %vm310, %v2453, 0
      %v2491 = vsel %vm310, %v2454, 0
      %v2494 = vsel %vm310, %v2455, 0
      %v2497 = vsel %vm310, %v2456, 0
      %v2500 = vsel %vm310, %v2457, 0
      %v2503 = vsel %vm310, %v2458, 0
      %v2506 = vsel %vm310, %v2459, 0
      %v2509 = vsel %vm310, %v2460, 0
      %v2512 = vsel %vm310, %v2461, 0
      %v2515 = vsel %vm310, %v2462, 0
      %v2518 = vsel %vm310, %v2463, 0
      %v2521 = vsel %vm365, %v2465, 0
      %2523 = vmatprep.subr.bf16.mxu0 0
      %2524 = vmatpush1.bf16.msra.mxu0 0
      %2525 = vmatprep.subr.bf16.mxu0 0
      %2526 = vmatpush1.bf16.msra.mxu0 0
      %2527 = vmatprep.subr.bf16.mxu0 0
      %2528 = vmatpush1.bf16.msra.mxu0 0
      %2529 = vmatprep.subr.bf16.mxu0 0
      %2530 = vmatpush1.bf16.msra.mxu0 0
      %2531 = vmatprep.subr.bf16.mxu0 0
      %2532 = vmatpush1.bf16.msra.mxu0 0
      %2533 = vmatprep.subr.bf16.mxu0 0
      %2534 = vmatpush1.bf16.msra.mxu0 0
      %2535 = vmatprep.subr.bf16.mxu0 0
      %2536 = vmatpush1.bf16.msra.mxu0 0
      %2537 = vmatprep.subr.bf16.mxu0 0
      %2538 = vmatpush1.bf16.msra.mxu0 %v2521
      %2539 = vmatprep.subr.bf16.mxu0 0
      %2540 = vmatpush2.bf16.msra.mxu0 0
      %2541 = vmatprep.subr.bf16.mxu0 0
      %2542 = vmatpush2.bf16.msra.mxu0 0
      %2543 = vmatprep.subr.bf16.mxu0 0
      %2544 = vmatpush2.bf16.msra.mxu0 0
      %2545 = vmatprep.subr.bf16.mxu0 0
      %2546 = vmatpush2.bf16.msra.mxu0 0
      %2547 = vmatprep.subr.bf16.mxu0 0
      %2548 = vmatpush2.bf16.msra.mxu0 0
      %2549 = vmatprep.subr.bf16.mxu0 0
      %2550 = vmatpush2.bf16.msra.mxu0 0
      %2551 = vmatprep.subr.bf16.mxu0 0
      %2552 = vmatpush2.bf16.msra.mxu0 0
      %2553 = vmatprep.subr.bf16.mxu0 0
      %2554 = vmatpush2.bf16.msra.mxu0 0
      %2555 = vmatprep.mubr.bf16.mxu0 0
      %2556 = vmatmul.mubr.bf16.gmra.mxu0 %v2467
      %v2557 = vpop.f32.mrf.mxu0
      %v2558 = vadd.f32 0.0, %v2557
      %v2559 = vpop.f32.mrf.mxu0
      %v2560 = vpop.f32.mrf.mxu0
      %v2561 = vadd.f32 0.0, %v2560
      %v2562 = vpop.f32.mrf.mxu0
      %2563 = vmatprep.mubr.bf16.mxu0 0
      %2564 = vmatmul.mubr.bf16.gmra.mxu0 %v2470
      %v2565 = vpop.f32.mrf.mxu0
      %v2566 = vadd.f32 0.0, %v2565
      %v2567 = vpop.f32.mrf.mxu0
      %v2568 = vpop.f32.mrf.mxu0
      %v2569 = vadd.f32 0.0, %v2568
      %v2570 = vpop.f32.mrf.mxu0
      %2571 = vmatprep.mubr.bf16.mxu0 0
      %2572 = vmatmul.mubr.bf16.gmra.mxu0 %v2473
      %v2573 = vpop.f32.mrf.mxu0
      %v2574 = vadd.f32 0.0, %v2573
      %v2575 = vpop.f32.mrf.mxu0
      %v2576 = vpop.f32.mrf.mxu0
      %v2577 = vadd.f32 0.0, %v2576
      %v2578 = vpop.f32.mrf.mxu0
      %2579 = vmatprep.mubr.bf16.mxu0 0
      %2580 = vmatmul.mubr.bf16.gmra.mxu0 %v2476
      %v2581 = vpop.f32.mrf.mxu0
      %v2582 = vadd.f32 0.0, %v2581
      %v2583 = vpop.f32.mrf.mxu0
      %v2584 = vpop.f32.mrf.mxu0
      %v2585 = vadd.f32 0.0, %v2584
      %v2586 = vpop.f32.mrf.mxu0
      %2587 = vmatprep.mubr.bf16.mxu0 0
      %2588 = vmatmul.mubr.bf16.gmra.mxu0 %v2479
      %v2589 = vpop.f32.mrf.mxu0
      %v2590 = vadd.f32 0.0, %v2589
      %v2591 = vpop.f32.mrf.mxu0
      %v2592 = vpop.f32.mrf.mxu0
      %v2593 = vadd.f32 0.0, %v2592
      %v2594 = vpop.f32.mrf.mxu0
      %2595 = vmatprep.mubr.bf16.mxu0 0
      %2596 = vmatmul.mubr.bf16.gmra.mxu0 %v2482
      %v2597 = vpop.f32.mrf.mxu0
      %v2598 = vadd.f32 0.0, %v2597
      %v2599 = vpop.f32.mrf.mxu0
      %v2600 = vpop.f32.mrf.mxu0
      %v2601 = vadd.f32 0.0, %v2600
      %v2602 = vpop.f32.mrf.mxu0
      %2603 = vmatprep.mubr.bf16.mxu0 0
      %2604 = vmatmul.mubr.bf16.gmra.mxu0 %v2485
      %v2605 = vpop.f32.mrf.mxu0
      %v2606 = vadd.f32 0.0, %v2605
      %v2607 = vpop.f32.mrf.mxu0
      %v2608 = vpop.f32.mrf.mxu0
      %v2609 = vadd.f32 0.0, %v2608
      %v2610 = vpop.f32.mrf.mxu0
      %2611 = vmatprep.mubr.bf16.mxu0 0
      %2612 = vmatmul.mubr.bf16.gmra.mxu0 %v2488
      %v2613 = vpop.f32.mrf.mxu0
      %v2614 = vadd.f32 0.0, %v2613
      %v2615 = vpop.f32.mrf.mxu0
      %v2616 = vpop.f32.mrf.mxu0
      %v2617 = vadd.f32 0.0, %v2616
      %v2618 = vpop.f32.mrf.mxu0
      %2619 = vmatprep.mubr.bf16.mxu0 0
      %2620 = vmatmul.mubr.bf16.gmra.mxu0 %v2491
      %v2621 = vpop.f32.mrf.mxu0
      %v2622 = vadd.f32 0.0, %v2621
      %v2623 = vpop.f32.mrf.mxu0
      %v2624 = vpop.f32.mrf.mxu0
      %v2625 = vadd.f32 0.0, %v2624
      %v2626 = vpop.f32.mrf.mxu0
      %2627 = vmatprep.mubr.bf16.mxu0 0
      %2628 = vmatmul.mubr.bf16.gmra.mxu0 %v2494
      %v2629 = vpop.f32.mrf.mxu0
      %v2630 = vadd.f32 0.0, %v2629
      %v2631 = vpop.f32.mrf.mxu0
      %v2632 = vpop.f32.mrf.mxu0
      %v2633 = vadd.f32 0.0, %v2632
      %v2634 = vpop.f32.mrf.mxu0
      %2635 = vmatprep.mubr.bf16.mxu0 0
      %2636 = vmatmul.mubr.bf16.gmra.mxu0 %v2497
      %v2637 = vpop.f32.mrf.mxu0
      %v2638 = vadd.f32 0.0, %v2637
      %v2639 = vpop.f32.mrf.mxu0
      %v2640 = vpop.f32.mrf.mxu0
      %v2641 = vadd.f32 0.0, %v2640
      %v2642 = vpop.f32.mrf.mxu0
      %2643 = vmatprep.mubr.bf16.mxu0 0
      %2644 = vmatmul.mubr.bf16.gmra.mxu0 %v2500
      %v2645 = vpop.f32.mrf.mxu0
      %v2646 = vadd.f32 0.0, %v2645
      %v2647 = vpop.f32.mrf.mxu0
      %v2648 = vpop.f32.mrf.mxu0
      %v2649 = vadd.f32 0.0, %v2648
      %v2650 = vpop.f32.mrf.mxu0
      %2651 = vmatprep.mubr.bf16.mxu0 0
      %2652 = vmatmul.mubr.bf16.gmra.mxu0 %v2503
      %v2653 = vpop.f32.mrf.mxu0
      %v2654 = vadd.f32 0.0, %v2653
      %v2655 = vpop.f32.mrf.mxu0
      %v2656 = vpop.f32.mrf.mxu0
      %v2657 = vadd.f32 0.0, %v2656
      %v2658 = vpop.f32.mrf.mxu0
      %2659 = vmatprep.mubr.bf16.mxu0 0
      %2660 = vmatmul.mubr.bf16.gmra.mxu0 %v2506
      %v2661 = vpop.f32.mrf.mxu0
      %v2662 = vadd.f32 0.0, %v2661
      %v2663 = vpop.f32.mrf.mxu0
      %v2664 = vpop.f32.mrf.mxu0
      %v2665 = vadd.f32 0.0, %v2664
      %v2666 = vpop.f32.mrf.mxu0
      %2667 = vmatprep.mubr.bf16.mxu0 0
      %2668 = vmatmul.mubr.bf16.gmra.mxu0 %v2509
      %v2669 = vpop.f32.mrf.mxu0
      %v2670 = vadd.f32 0.0, %v2669
      %v2671 = vpop.f32.mrf.mxu0
      %v2672 = vpop.f32.mrf.mxu0
      %v2673 = vadd.f32 0.0, %v2672
      %v2674 = vpop.f32.mrf.mxu0
      %2675 = vmatprep.mubr.bf16.mxu0 0
      %2676 = vmatmul.mubr.bf16.gmra.mxu0 %v2512
      %v2677 = vpop.f32.mrf.mxu0
      %v2678 = vadd.f32 0.0, %v2677
      %v2679 = vpop.f32.mrf.mxu0
      %v2680 = vpop.f32.mrf.mxu0
      %v2681 = vadd.f32 0.0, %v2680
      %v2682 = vpop.f32.mrf.mxu0
      %2683 = vmatprep.mubr.bf16.mxu0 0
      %2684 = vmatmul.mubr.bf16.gmra.mxu0 %v2515
      %v2685 = vpop.f32.mrf.mxu0
      %v2686 = vadd.f32 0.0, %v2685
      %v2687 = vpop.f32.mrf.mxu0
      %v2688 = vpop.f32.mrf.mxu0
      %v2689 = vadd.f32 0.0, %v2688
      %v2690 = vpop.f32.mrf.mxu0
      %2691 = vmatprep.mubr.bf16.mxu0 0
      %2692 = vmatmul.mubr.bf16.gmra.mxu0 %v2518
      %v2693 = vpop.f32.mrf.mxu0
      %v2694 = vadd.f32 0.0, %v2693
      %v2695 = vpop.f32.mrf.mxu0
      %v2696 = vpop.f32.mrf.mxu0
      %v2697 = vadd.f32 0.0, %v2696
      %v2698 = vpop.f32.mrf.mxu0
      %2699 = vdwg.mxu0
      %v2700 = vadd.f32 %v2374, %v2558
      %v2701 = vadd.f32 %v2375, %v2561
      %v2702 = vadd.f32 %v2376, %v2566
      %v2703 = vadd.f32 %v2377, %v2569
      %v2704 = vadd.f32 %v2378, %v2574
      %v2705 = vadd.f32 %v2379, %v2577
      %v2706 = vadd.f32 %v2380, %v2582
      %v2707 = vadd.f32 %v2381, %v2585
      %v2708 = vadd.f32 %v2382, %v2590
      %v2709 = vadd.f32 %v2383, %v2593
      %v2710 = vadd.f32 %v2384, %v2598
      %v2711 = vadd.f32 %v2385, %v2601
      %v2712 = vadd.f32 %v2386, %v2606
      %v2713 = vadd.f32 %v2387, %v2609
      %v2714 = vadd.f32 %v2388, %v2614
      %v2715 = vadd.f32 %v2389, %v2617
      %v2716 = vadd.f32 %v2390, %v2622
      %v2717 = vadd.f32 %v2391, %v2625
      %v2718 = vadd.f32 %v2392, %v2630
      %v2719 = vadd.f32 %v2393, %v2633
      %v2720 = vadd.f32 %v2394, %v2638
      %v2721 = vadd.f32 %v2395, %v2641
      %v2722 = vadd.f32 %v2396, %v2646
      %v2723 = vadd.f32 %v2397, %v2649
      %v2724 = vadd.f32 %v2398, %v2654
      %v2725 = vadd.f32 %v2399, %v2657
      %v2726 = vadd.f32 %v2400, %v2662
      %v2727 = vadd.f32 %v2401, %v2665
      %v2728 = vadd.f32 %v2402, %v2670
      %v2729 = vadd.f32 %v2403, %v2673
      %v2730 = vadd.f32 %v2404, %v2678
      %v2731 = vadd.f32 %v2405, %v2681
      %v2732 = vadd.f32 %v2406, %v2686
      %v2733 = vadd.f32 %v2407, %v2689
      %v2734 = vadd.f32 %v2408, %v2694
      %v2735 = vadd.f32 %v2409, %v2697
      %v2736 = vld [vmem:[%s192 + $0x26] sm:$0xff]
      %v2737 = vld [vmem:[%s192 + $0x2e] sm:$0xff]
      %v2738 = vld [vmem:[%s192 + $0x36] sm:$0xff]
      %v2739 = vld [vmem:[%s192 + $0x3e] sm:$0xff]
      %v2740 = vld [vmem:[%s192 + $0x46] sm:$0xff]
      %v2741 = vld [vmem:[%s192 + $0x4e] sm:$0xff]
      %v2742 = vld [vmem:[%s192 + $0x56] sm:$0xff]
      %v2743 = vld [vmem:[%s192 + $0x5e] sm:$0xff]
      %v2744 = vld [vmem:[%s192 + $0x66] sm:$0xff]
      %v2745 = vld [vmem:[%s192 + $0x6e] sm:$0xff]
      %v2746 = vld [vmem:[%s192 + $0x76] sm:$0xff]
      %v2747 = vld [vmem:[%s192 + $0x7e] sm:$0xff]
      %v2748 = vld [vmem:[%s192 + $0x86] sm:$0xff]
      %v2749 = vld [vmem:[%s192 + $0x8e] sm:$0xff]
      %v2750 = vld [vmem:[%s192 + $0x96] sm:$0xff]
      %v2751 = vld [vmem:[%s192 + $0x9e] sm:$0xff]
      %v2752 = vld [vmem:[%s192 + $0xa6] sm:$0xff]
      %v2753 = vld [vmem:[%s192 + $0xae] sm:$0xff]
      %v2754 = vld [vmem:[%s192 + $0xb6] sm:$0xff]
      %v2755 = vld [vmem:[%s192 + $0xbe] sm:$0xff]
      %v2756 = vld [vmem:[%s192 + $0xc6] sm:$0xff]
      %v2757 = vld [vmem:[%s192 + $0xce] sm:$0xff]
      %v2758 = vld [vmem:[%s192 + $0xd6] sm:$0xff]
      %v2759 = vld [vmem:[%s192 + $0xde] sm:$0xff]
      %v2760 = vld [vmem:[%s192 + $0xe6] sm:$0xff]
      %v2761 = vld [vmem:[%s192 + $0xee] sm:$0xff]
      %v2762 = vld [vmem:[%s192 + $0xf6] sm:$0xff]
      %v2763 = vld [vmem:[%s192 + $0xfe] sm:$0xff]
      %v2764 = vld [vmem:[%s192 + $0x106] sm:$0xff]
      %v2765 = vld [vmem:[%s192 + $0x10e] sm:$0xff]
      %v2766 = vld [vmem:[%s192 + $0x116] sm:$0xff]
      %v2767 = vld [vmem:[%s192 + $0x11e] sm:$0xff]
      %v2768 = vld [vmem:[%s192 + $0x126] sm:$0xff]
      %v2769 = vld [vmem:[%s192 + $0x12e] sm:$0xff]
      %v2770 = vld [vmem:[%s192 + $0x136] sm:$0xff]
      %v2771 = vld [vmem:[%s192 + $0x13e] sm:$0xff]
      %v2772 = vpack.c.bf16 %v2737, %v2736
      %v2773 = vpack.c.bf16 %v2739, %v2738
      %v2774 = vpack.c.bf16 %v2741, %v2740
      %v2775 = vpack.c.bf16 %v2743, %v2742
      %v2776 = vpack.c.bf16 %v2745, %v2744
      %v2777 = vpack.c.bf16 %v2747, %v2746
      %v2778 = vpack.c.bf16 %v2749, %v2748
      %v2779 = vpack.c.bf16 %v2751, %v2750
      %v2780 = vpack.c.bf16 %v2753, %v2752
      %v2781 = vpack.c.bf16 %v2755, %v2754
      %v2782 = vpack.c.bf16 %v2757, %v2756
      %v2783 = vpack.c.bf16 %v2759, %v2758
      %v2784 = vpack.c.bf16 %v2761, %v2760
      %v2785 = vpack.c.bf16 %v2763, %v2762
      %v2786 = vpack.c.bf16 %v2765, %v2764
      %v2787 = vpack.c.bf16 %v2767, %v2766
      %v2788 = vpack.c.bf16 %v2769, %v2768
      %v2789 = vpack.c.bf16 %v2771, %v2770
      %s2790 = scalar_lea.vmem %s1, 32
      %v2791 = vld [vmem:[%s2790] sm:$0xf]
      %v2793 = vsel %vm310, %v2772, 0
      %v2796 = vsel %vm310, %v2773, 0
      %v2799 = vsel %vm310, %v2774, 0
      %v2802 = vsel %vm310, %v2775, 0
      %v2805 = vsel %vm310, %v2776, 0
      %v2808 = vsel %vm310, %v2777, 0
      %v2811 = vsel %vm310, %v2778, 0
      %v2814 = vsel %vm310, %v2779, 0
      %v2817 = vsel %vm310, %v2780, 0
      %v2820 = vsel %vm310, %v2781, 0
      %v2823 = vsel %vm310, %v2782, 0
      %v2826 = vsel %vm310, %v2783, 0
      %v2829 = vsel %vm310, %v2784, 0
      %v2832 = vsel %vm310, %v2785, 0
      %v2835 = vsel %vm310, %v2786, 0
      %v2838 = vsel %vm310, %v2787, 0
      %v2841 = vsel %vm310, %v2788, 0
      %v2844 = vsel %vm310, %v2789, 0
      %v2847 = vsel %vm365, %v2791, 0
      %2849 = vmatprep.subr.bf16.mxu0 0
      %2850 = vmatpush1.bf16.msra.mxu0 0
      %2851 = vmatprep.subr.bf16.mxu0 0
      %2852 = vmatpush1.bf16.msra.mxu0 0
      %2853 = vmatprep.subr.bf16.mxu0 0
      %2854 = vmatpush1.bf16.msra.mxu0 0
      %2855 = vmatprep.subr.bf16.mxu0 0
      %2856 = vmatpush1.bf16.msra.mxu0 0
      %2857 = vmatprep.subr.bf16.mxu0 0
      %2858 = vmatpush1.bf16.msra.mxu0 0
      %2859 = vmatprep.subr.bf16.mxu0 0
      %2860 = vmatpush1.bf16.msra.mxu0 0
      %2861 = vmatprep.subr.bf16.mxu0 0
      %2862 = vmatpush1.bf16.msra.mxu0 0
      %2863 = vmatprep.subr.bf16.mxu0 0
      %2864 = vmatpush1.bf16.msra.mxu0 %v2847
      %2865 = vmatprep.subr.bf16.mxu0 0
      %2866 = vmatpush2.bf16.msra.mxu0 0
      %2867 = vmatprep.subr.bf16.mxu0 0
      %2868 = vmatpush2.bf16.msra.mxu0 0
      %2869 = vmatprep.subr.bf16.mxu0 0
      %2870 = vmatpush2.bf16.msra.mxu0 0
      %2871 = vmatprep.subr.bf16.mxu0 0
      %2872 = vmatpush2.bf16.msra.mxu0 0
      %2873 = vmatprep.subr.bf16.mxu0 0
      %2874 = vmatpush2.bf16.msra.mxu0 0
      %2875 = vmatprep.subr.bf16.mxu0 0
      %2876 = vmatpush2.bf16.msra.mxu0 0
      %2877 = vmatprep.subr.bf16.mxu0 0
      %2878 = vmatpush2.bf16.msra.mxu0 0
      %2879 = vmatprep.subr.bf16.mxu0 0
      %2880 = vmatpush2.bf16.msra.mxu0 0
      %2881 = vmatprep.mubr.bf16.mxu0 0
      %2882 = vmatmul.mubr.bf16.gmra.mxu0 %v2793
      %v2883 = vpop.f32.mrf.mxu0
      %v2884 = vadd.f32 0.0, %v2883
      %v2885 = vpop.f32.mrf.mxu0
      %v2886 = vpop.f32.mrf.mxu0
      %v2887 = vadd.f32 0.0, %v2886
      %v2888 = vpop.f32.mrf.mxu0
      %2889 = vmatprep.mubr.bf16.mxu0 0
      %2890 = vmatmul.mubr.bf16.gmra.mxu0 %v2796
      %v2891 = vpop.f32.mrf.mxu0
      %v2892 = vadd.f32 0.0, %v2891
      %v2893 = vpop.f32.mrf.mxu0
      %v2894 = vpop.f32.mrf.mxu0
      %v2895 = vadd.f32 0.0, %v2894
      %v2896 = vpop.f32.mrf.mxu0
      %2897 = vmatprep.mubr.bf16.mxu0 0
      %2898 = vmatmul.mubr.bf16.gmra.mxu0 %v2799
      %v2899 = vpop.f32.mrf.mxu0
      %v2900 = vadd.f32 0.0, %v2899
      %v2901 = vpop.f32.mrf.mxu0
      %v2902 = vpop.f32.mrf.mxu0
      %v2903 = vadd.f32 0.0, %v2902
      %v2904 = vpop.f32.mrf.mxu0
      %2905 = vmatprep.mubr.bf16.mxu0 0
      %2906 = vmatmul.mubr.bf16.gmra.mxu0 %v2802
      %v2907 = vpop.f32.mrf.mxu0
      %v2908 = vadd.f32 0.0, %v2907
      %v2909 = vpop.f32.mrf.mxu0
      %v2910 = vpop.f32.mrf.mxu0
      %v2911 = vadd.f32 0.0, %v2910
      %v2912 = vpop.f32.mrf.mxu0
      %2913 = vmatprep.mubr.bf16.mxu0 0
      %2914 = vmatmul.mubr.bf16.gmra.mxu0 %v2805
      %v2915 = vpop.f32.mrf.mxu0
      %v2916 = vadd.f32 0.0, %v2915
      %v2917 = vpop.f32.mrf.mxu0
      %v2918 = vpop.f32.mrf.mxu0
      %v2919 = vadd.f32 0.0, %v2918
      %v2920 = vpop.f32.mrf.mxu0
      %2921 = vmatprep.mubr.bf16.mxu0 0
      %2922 = vmatmul.mubr.bf16.gmra.mxu0 %v2808
      %v2923 = vpop.f32.mrf.mxu0
      %v2924 = vadd.f32 0.0, %v2923
      %v2925 = vpop.f32.mrf.mxu0
      %v2926 = vpop.f32.mrf.mxu0
      %v2927 = vadd.f32 0.0, %v2926
      %v2928 = vpop.f32.mrf.mxu0
      %2929 = vmatprep.mubr.bf16.mxu0 0
      %2930 = vmatmul.mubr.bf16.gmra.mxu0 %v2811
      %v2931 = vpop.f32.mrf.mxu0
      %v2932 = vadd.f32 0.0, %v2931
      %v2933 = vpop.f32.mrf.mxu0
      %v2934 = vpop.f32.mrf.mxu0
      %v2935 = vadd.f32 0.0, %v2934
      %v2936 = vpop.f32.mrf.mxu0
      %2937 = vmatprep.mubr.bf16.mxu0 0
      %2938 = vmatmul.mubr.bf16.gmra.mxu0 %v2814
      %v2939 = vpop.f32.mrf.mxu0
      %v2940 = vadd.f32 0.0, %v2939
      %v2941 = vpop.f32.mrf.mxu0
      %v2942 = vpop.f32.mrf.mxu0
      %v2943 = vadd.f32 0.0, %v2942
      %v2944 = vpop.f32.mrf.mxu0
      %2945 = vmatprep.mubr.bf16.mxu0 0
      %2946 = vmatmul.mubr.bf16.gmra.mxu0 %v2817
      %v2947 = vpop.f32.mrf.mxu0
      %v2948 = vadd.f32 0.0, %v2947
      %v2949 = vpop.f32.mrf.mxu0
      %v2950 = vpop.f32.mrf.mxu0
      %v2951 = vadd.f32 0.0, %v2950
      %v2952 = vpop.f32.mrf.mxu0
      %2953 = vmatprep.mubr.bf16.mxu0 0
      %2954 = vmatmul.mubr.bf16.gmra.mxu0 %v2820
      %v2955 = vpop.f32.mrf.mxu0
      %v2956 = vadd.f32 0.0, %v2955
      %v2957 = vpop.f32.mrf.mxu0
      %v2958 = vpop.f32.mrf.mxu0
      %v2959 = vadd.f32 0.0, %v2958
      %v2960 = vpop.f32.mrf.mxu0
      %2961 = vmatprep.mubr.bf16.mxu0 0
      %2962 = vmatmul.mubr.bf16.gmra.mxu0 %v2823
      %v2963 = vpop.f32.mrf.mxu0
      %v2964 = vadd.f32 0.0, %v2963
      %v2965 = vpop.f32.mrf.mxu0
      %v2966 = vpop.f32.mrf.mxu0
      %v2967 = vadd.f32 0.0, %v2966
      %v2968 = vpop.f32.mrf.mxu0
      %2969 = vmatprep.mubr.bf16.mxu0 0
      %2970 = vmatmul.mubr.bf16.gmra.mxu0 %v2826
      %v2971 = vpop.f32.mrf.mxu0
      %v2972 = vadd.f32 0.0, %v2971
      %v2973 = vpop.f32.mrf.mxu0
      %v2974 = vpop.f32.mrf.mxu0
      %v2975 = vadd.f32 0.0, %v2974
      %v2976 = vpop.f32.mrf.mxu0
      %2977 = vmatprep.mubr.bf16.mxu0 0
      %2978 = vmatmul.mubr.bf16.gmra.mxu0 %v2829
      %v2979 = vpop.f32.mrf.mxu0
      %v2980 = vadd.f32 0.0, %v2979
      %v2981 = vpop.f32.mrf.mxu0
      %v2982 = vpop.f32.mrf.mxu0
      %v2983 = vadd.f32 0.0, %v2982
      %v2984 = vpop.f32.mrf.mxu0
      %2985 = vmatprep.mubr.bf16.mxu0 0
      %2986 = vmatmul.mubr.bf16.gmra.mxu0 %v2832
      %v2987 = vpop.f32.mrf.mxu0
      %v2988 = vadd.f32 0.0, %v2987
      %v2989 = vpop.f32.mrf.mxu0
      %v2990 = vpop.f32.mrf.mxu0
      %v2991 = vadd.f32 0.0, %v2990
      %v2992 = vpop.f32.mrf.mxu0
      %2993 = vmatprep.mubr.bf16.mxu0 0
      %2994 = vmatmul.mubr.bf16.gmra.mxu0 %v2835
      %v2995 = vpop.f32.mrf.mxu0
      %v2996 = vadd.f32 0.0, %v2995
      %v2997 = vpop.f32.mrf.mxu0
      %v2998 = vpop.f32.mrf.mxu0
      %v2999 = vadd.f32 0.0, %v2998
      %v3000 = vpop.f32.mrf.mxu0
      %3001 = vmatprep.mubr.bf16.mxu0 0
      %3002 = vmatmul.mubr.bf16.gmra.mxu0 %v2838
      %v3003 = vpop.f32.mrf.mxu0
      %v3004 = vadd.f32 0.0, %v3003
      %v3005 = vpop.f32.mrf.mxu0
      %v3006 = vpop.f32.mrf.mxu0
      %v3007 = vadd.f32 0.0, %v3006
      %v3008 = vpop.f32.mrf.mxu0
      %3009 = vmatprep.mubr.bf16.mxu0 0
      %3010 = vmatmul.mubr.bf16.gmra.mxu0 %v2841
      %v3011 = vpop.f32.mrf.mxu0
      %v3012 = vadd.f32 0.0, %v3011
      %v3013 = vpop.f32.mrf.mxu0
      %v3014 = vpop.f32.mrf.mxu0
      %v3015 = vadd.f32 0.0, %v3014
      %v3016 = vpop.f32.mrf.mxu0
      %3017 = vmatprep.mubr.bf16.mxu0 0
      %3018 = vmatmul.mubr.bf16.gmra.mxu0 %v2844
      %v3019 = vpop.f32.mrf.mxu0
      %v3020 = vadd.f32 0.0, %v3019
      %v3021 = vpop.f32.mrf.mxu0
      %v3022 = vpop.f32.mrf.mxu0
      %v3023 = vadd.f32 0.0, %v3022
      %v3024 = vpop.f32.mrf.mxu0
      %3025 = vdwg.mxu0
      %v3026 = vadd.f32 %v2700, %v2884
      %v3027 = vadd.f32 %v2701, %v2887
      %v3028 = vadd.f32 %v2702, %v2892
      %v3029 = vadd.f32 %v2703, %v2895
      %v3030 = vadd.f32 %v2704, %v2900
      %v3031 = vadd.f32 %v2705, %v2903
      %v3032 = vadd.f32 %v2706, %v2908
      %v3033 = vadd.f32 %v2707, %v2911
      %v3034 = vadd.f32 %v2708, %v2916
      %v3035 = vadd.f32 %v2709, %v2919
      %v3036 = vadd.f32 %v2710, %v2924
      %v3037 = vadd.f32 %v2711, %v2927
      %v3038 = vadd.f32 %v2712, %v2932
      %v3039 = vadd.f32 %v2713, %v2935
      %v3040 = vadd.f32 %v2714, %v2940
      %v3041 = vadd.f32 %v2715, %v2943
      %v3042 = vadd.f32 %v2716, %v2948
      %v3043 = vadd.f32 %v2717, %v2951
      %v3044 = vadd.f32 %v2718, %v2956
      %v3045 = vadd.f32 %v2719, %v2959
      %v3046 = vadd.f32 %v2720, %v2964
      %v3047 = vadd.f32 %v2721, %v2967
      %v3048 = vadd.f32 %v2722, %v2972
      %v3049 = vadd.f32 %v2723, %v2975
      %v3050 = vadd.f32 %v2724, %v2980
      %v3051 = vadd.f32 %v2725, %v2983
      %v3052 = vadd.f32 %v2726, %v2988
      %v3053 = vadd.f32 %v2727, %v2991
      %v3054 = vadd.f32 %v2728, %v2996
      %v3055 = vadd.f32 %v2729, %v2999
      %v3056 = vadd.f32 %v2730, %v3004
      %v3057 = vadd.f32 %v2731, %v3007
      %v3058 = vadd.f32 %v2732, %v3012
      %v3059 = vadd.f32 %v2733, %v3015
      %v3060 = vadd.f32 %v2734, %v3020
      %v3061 = vadd.f32 %v2735, %v3023
      %v3062 = vld [vmem:[%s2] sm:$0x1]
      %v3064 = vlaneseq
      %v3065 = vshrl.u32 %v3064, 7
      %v3066 = vsub.s32 0, %v3065
      %v3067 = vrot.slane %v3062, %v3066
      %v3069 = vmul.f32 %v3026, %v3067
      %v3070 = vmul.f32 %v3027, %v3067
      %v3071 = vmul.f32 %v3028, %v3067
      %v3072 = vmul.f32 %v3029, %v3067
      %v3073 = vmul.f32 %v3030, %v3067
      %v3074 = vmul.f32 %v3031, %v3067
      %v3075 = vmul.f32 %v3032, %v3067
      %v3076 = vmul.f32 %v3033, %v3067
      %v3077 = vmul.f32 %v3034, %v3067
      %v3078 = vmul.f32 %v3035, %v3067
      %v3079 = vmul.f32 %v3036, %v3067
      %v3080 = vmul.f32 %v3037, %v3067
      %v3081 = vmul.f32 %v3038, %v3067
      %v3082 = vmul.f32 %v3039, %v3067
      %v3083 = vmul.f32 %v3040, %v3067
      %v3084 = vmul.f32 %v3041, %v3067
      %v3085 = vmul.f32 %v3042, %v3067
      %v3086 = vmul.f32 %v3043, %v3067
      %v3087 = vmul.f32 %v3044, %v3067
      %v3088 = vmul.f32 %v3045, %v3067
      %v3089 = vmul.f32 %v3046, %v3067
      %v3090 = vmul.f32 %v3047, %v3067
      %v3091 = vmul.f32 %v3048, %v3067
      %v3092 = vmul.f32 %v3049, %v3067
      %v3093 = vmul.f32 %v3050, %v3067
      %v3094 = vmul.f32 %v3051, %v3067
      %v3095 = vmul.f32 %v3052, %v3067
      %v3096 = vmul.f32 %v3053, %v3067
      %v3097 = vmul.f32 %v3054, %v3067
      %v3098 = vmul.f32 %v3055, %v3067
      %v3099 = vmul.f32 %v3056, %v3067
      %v3100 = vmul.f32 %v3057, %v3067
      %v3101 = vmul.f32 %v3058, %v3067
      %v3102 = vmul.f32 %v3059, %v3067
      %v3103 = vmul.f32 %v3060, %v3067
      %v3104 = vmul.f32 %v3061, %v3067
      %v3105 = vld [vmem:[%s3] sm:$0x1]
      %v3107 = vlaneseq
      %v3108 = vshrl.u32 %v3107, 7
      %v3109 = vsub.s32 0, %v3108
      %v3110 = vrot.slane %v3105, %v3109
      %v3112 = vadd.f32 %v3069, %v3110
      %v3113 = vadd.f32 %v3070, %v3110
      %v3114 = vadd.f32 %v3071, %v3110
      %v3115 = vadd.f32 %v3072, %v3110
      %v3116 = vadd.f32 %v3073, %v3110
      %v3117 = vadd.f32 %v3074, %v3110
      %v3118 = vadd.f32 %v3075, %v3110
      %v3119 = vadd.f32 %v3076, %v3110
      %v3120 = vadd.f32 %v3077, %v3110
      %v3121 = vadd.f32 %v3078, %v3110
      %v3122 = vadd.f32 %v3079, %v3110
      %v3123 = vadd.f32 %v3080, %v3110
      %v3124 = vadd.f32 %v3081, %v3110
      %v3125 = vadd.f32 %v3082, %v3110
      %v3126 = vadd.f32 %v3083, %v3110
      %v3127 = vadd.f32 %v3084, %v3110
      %v3128 = vadd.f32 %v3085, %v3110
      %v3129 = vadd.f32 %v3086, %v3110
      %v3130 = vadd.f32 %v3087, %v3110
      %v3131 = vadd.f32 %v3088, %v3110
      %v3132 = vadd.f32 %v3089, %v3110
      %v3133 = vadd.f32 %v3090, %v3110
      %v3134 = vadd.f32 %v3091, %v3110
      %v3135 = vadd.f32 %v3092, %v3110
      %v3136 = vadd.f32 %v3093, %v3110
      %v3137 = vadd.f32 %v3094, %v3110
      %v3138 = vadd.f32 %v3095, %v3110
      %v3139 = vadd.f32 %v3096, %v3110
      %v3140 = vadd.f32 %v3097, %v3110
      %v3141 = vadd.f32 %v3098, %v3110
      %v3142 = vadd.f32 %v3099, %v3110
      %v3143 = vadd.f32 %v3100, %v3110
      %v3144 = vadd.f32 %v3101, %v3110
      %v3145 = vadd.f32 %v3102, %v3110
      %v3146 = vadd.f32 %v3103, %v3110
      %v3147 = vadd.f32 %v3104, %v3110
      %v3148 = vxor.u32 %v3112, 2147483648
      %v3149 = vxor.u32 %v3113, 2147483648
      %v3150 = vxor.u32 %v3114, 2147483648
      %v3151 = vxor.u32 %v3115, 2147483648
      %v3152 = vxor.u32 %v3116, 2147483648
      %v3153 = vxor.u32 %v3117, 2147483648
      %v3154 = vxor.u32 %v3118, 2147483648
      %v3155 = vxor.u32 %v3119, 2147483648
      %v3156 = vxor.u32 %v3120, 2147483648
      %v3157 = vxor.u32 %v3121, 2147483648
      %v3158 = vxor.u32 %v3122, 2147483648
      %v3159 = vxor.u32 %v3123, 2147483648
      %v3160 = vxor.u32 %v3124, 2147483648
      %v3161 = vxor.u32 %v3125, 2147483648
      %v3162 = vxor.u32 %v3126, 2147483648
      %v3163 = vxor.u32 %v3127, 2147483648
      %v3164 = vxor.u32 %v3128, 2147483648
      %v3165 = vxor.u32 %v3129, 2147483648
      %v3166 = vxor.u32 %v3130, 2147483648
      %v3167 = vxor.u32 %v3131, 2147483648
      %v3168 = vxor.u32 %v3132, 2147483648
      %v3169 = vxor.u32 %v3133, 2147483648
      %v3170 = vxor.u32 %v3134, 2147483648
      %v3171 = vxor.u32 %v3135, 2147483648
      %v3172 = vxor.u32 %v3136, 2147483648
      %v3173 = vxor.u32 %v3137, 2147483648
      %v3174 = vxor.u32 %v3138, 2147483648
      %v3175 = vxor.u32 %v3139, 2147483648
      %v3176 = vxor.u32 %v3140, 2147483648
      %v3177 = vxor.u32 %v3141, 2147483648
      %v3178 = vxor.u32 %v3142, 2147483648
      %v3179 = vxor.u32 %v3143, 2147483648
      %v3180 = vxor.u32 %v3144, 2147483648
      %v3181 = vxor.u32 %v3145, 2147483648
      %v3182 = vxor.u32 %v3146, 2147483648
      %v3183 = vxor.u32 %v3147, 2147483648
      %v3184 = vmul.f32 %v3148, 1.442695
      %v3185 = vpow.pop %v3184
      %v3186 = vmul.f32 %v3149, 1.442695
      %v3187 = vpow.pop %v3186
      %v3188 = vmul.f32 %v3150, 1.442695
      %v3189 = vpow.pop %v3188
      %v3190 = vmul.f32 %v3151, 1.442695
      %v3191 = vpow.pop %v3190
      %v3192 = vmul.f32 %v3152, 1.442695
      %v3193 = vpow.pop %v3192
      %v3194 = vmul.f32 %v3153, 1.442695
      %v3195 = vpow.pop %v3194
      %v3196 = vmul.f32 %v3154, 1.442695
      %v3197 = vpow.pop %v3196
      %v3198 = vmul.f32 %v3155, 1.442695
      %v3199 = vpow.pop %v3198
      %v3200 = vmul.f32 %v3156, 1.442695
      %v3201 = vpow.pop %v3200
      %v3202 = vmul.f32 %v3157, 1.442695
      %v3203 = vpow.pop %v3202
      %v3204 = vmul.f32 %v3158, 1.442695
      %v3205 = vpow.pop %v3204
      %v3206 = vmul.f32 %v3159, 1.442695
      %v3207 = vpow.pop %v3206
      %v3208 = vmul.f32 %v3160, 1.442695
      %v3209 = vpow.pop %v3208
      %v3210 = vmul.f32 %v3161, 1.442695
      %v3211 = vpow.pop %v3210
      %v3212 = vmul.f32 %v3162, 1.442695
      %v3213 = vpow.pop %v3212
      %v3214 = vmul.f32 %v3163, 1.442695
      %v3215 = vpow.pop %v3214
      %v3216 = vmul.f32 %v3164, 1.442695
      %v3217 = vpow.pop %v3216
      %v3218 = vmul.f32 %v3165, 1.442695
      %v3219 = vpow.pop %v3218
      %v3220 = vmul.f32 %v3166, 1.442695
      %v3221 = vpow.pop %v3220
      %v3222 = vmul.f32 %v3167, 1.442695
      %v3223 = vpow.pop %v3222
      %v3224 = vmul.f32 %v3168, 1.442695
      %v3225 = vpow.pop %v3224
      %v3226 = vmul.f32 %v3169, 1.442695
      %v3227 = vpow.pop %v3226
      %v3228 = vmul.f32 %v3170, 1.442695
      %v3229 = vpow.pop %v3228
      %v3230 = vmul.f32 %v3171, 1.442695
      %v3231 = vpow.pop %v3230
      %v3232 = vmul.f32 %v3172, 1.442695
      %v3233 = vpow.pop %v3232
      %v3234 = vmul.f32 %v3173, 1.442695
      %v3235 = vpow.pop %v3234
      %v3236 = vmul.f32 %v3174, 1.442695
      %v3237 = vpow.pop %v3236
      %v3238 = vmul.f32 %v3175, 1.442695
      %v3239 = vpow.pop %v3238
      %v3240 = vmul.f32 %v3176, 1.442695
      %v3241 = vpow.pop %v3240
      %v3242 = vmul.f32 %v3177, 1.442695
      %v3243 = vpow.pop %v3242
      %v3244 = vmul.f32 %v3178, 1.442695
      %v3245 = vpow.pop %v3244
      %v3246 = vmul.f32 %v3179, 1.442695
      %v3247 = vpow.pop %v3246
      %v3248 = vmul.f32 %v3180, 1.442695
      %v3249 = vpow.pop %v3248
      %v3250 = vmul.f32 %v3181, 1.442695
      %v3251 = vpow.pop %v3250
      %v3252 = vmul.f32 %v3182, 1.442695
      %v3253 = vpow.pop %v3252
      %v3254 = vmul.f32 %v3183, 1.442695
      %v3255 = vpow.pop %v3254
      %v3256 = vadd.f32 %v3185, 1.0
      %v3257 = vadd.f32 %v3187, 1.0
      %v3258 = vadd.f32 %v3189, 1.0
      %v3259 = vadd.f32 %v3191, 1.0
      %v3260 = vadd.f32 %v3193, 1.0
      %v3261 = vadd.f32 %v3195, 1.0
      %v3262 = vadd.f32 %v3197, 1.0
      %v3263 = vadd.f32 %v3199, 1.0
      %v3264 = vadd.f32 %v3201, 1.0
      %v3265 = vadd.f32 %v3203, 1.0
      %v3266 = vadd.f32 %v3205, 1.0
      %v3267 = vadd.f32 %v3207, 1.0
      %v3268 = vadd.f32 %v3209, 1.0
      %v3269 = vadd.f32 %v3211, 1.0
      %v3270 = vadd.f32 %v3213, 1.0
      %v3271 = vadd.f32 %v3215, 1.0
      %v3272 = vadd.f32 %v3217, 1.0
      %v3273 = vadd.f32 %v3219, 1.0
      %v3274 = vadd.f32 %v3221, 1.0
      %v3275 = vadd.f32 %v3223, 1.0
      %v3276 = vadd.f32 %v3225, 1.0
      %v3277 = vadd.f32 %v3227, 1.0
      %v3278 = vadd.f32 %v3229, 1.0
      %v3279 = vadd.f32 %v3231, 1.0
      %v3280 = vadd.f32 %v3233, 1.0
      %v3281 = vadd.f32 %v3235, 1.0
      %v3282 = vadd.f32 %v3237, 1.0
      %v3283 = vadd.f32 %v3239, 1.0
      %v3284 = vadd.f32 %v3241, 1.0
      %v3285 = vadd.f32 %v3243, 1.0
      %v3286 = vadd.f32 %v3245, 1.0
      %v3287 = vadd.f32 %v3247, 1.0
      %v3288 = vadd.f32 %v3249, 1.0
      %v3289 = vadd.f32 %v3251, 1.0
      %v3290 = vadd.f32 %v3253, 1.0
      %v3291 = vadd.f32 %v3255, 1.0
      %v3292 = vrcp.pop %v3256
      %v3293 = vmul.f32 1.0, %v3292
      %v3294 = vrcp.pop %v3257
      %v3295 = vmul.f32 1.0, %v3294
      %v3296 = vrcp.pop %v3258
      %v3297 = vmul.f32 1.0, %v3296
      %v3298 = vrcp.pop %v3259
      %v3299 = vmul.f32 1.0, %v3298
      %v3300 = vrcp.pop %v3260
      %v3301 = vmul.f32 1.0, %v3300
      %v3302 = vrcp.pop %v3261
      %v3303 = vmul.f32 1.0, %v3302
      %v3304 = vrcp.pop %v3262
      %v3305 = vmul.f32 1.0, %v3304
      %v3306 = vrcp.pop %v3263
      %v3307 = vmul.f32 1.0, %v3306
      %v3308 = vrcp.pop %v3264
      %v3309 = vmul.f32 1.0, %v3308
      %v3310 = vrcp.pop %v3265
      %v3311 = vmul.f32 1.0, %v3310
      %v3312 = vrcp.pop %v3266
      %v3313 = vmul.f32 1.0, %v3312
      %v3314 = vrcp.pop %v3267
      %v3315 = vmul.f32 1.0, %v3314
      %v3316 = vrcp.pop %v3268
      %v3317 = vmul.f32 1.0, %v3316
      %v3318 = vrcp.pop %v3269
      %v3319 = vmul.f32 1.0, %v3318
      %v3320 = vrcp.pop %v3270
      %v3321 = vmul.f32 1.0, %v3320
      %v3322 = vrcp.pop %v3271
      %v3323 = vmul.f32 1.0, %v3322
      %v3324 = vrcp.pop %v3272
      %v3325 = vmul.f32 1.0, %v3324
      %v3326 = vrcp.pop %v3273
      %v3327 = vmul.f32 1.0, %v3326
      %v3328 = vrcp.pop %v3274
      %v3329 = vmul.f32 1.0, %v3328
      %v3330 = vrcp.pop %v3275
      %v3331 = vmul.f32 1.0, %v3330
      %v3332 = vrcp.pop %v3276
      %v3333 = vmul.f32 1.0, %v3332
      %v3334 = vrcp.pop %v3277
      %v3335 = vmul.f32 1.0, %v3334
      %v3336 = vrcp.pop %v3278
      %v3337 = vmul.f32 1.0, %v3336
      %v3338 = vrcp.pop %v3279
      %v3339 = vmul.f32 1.0, %v3338
      %v3340 = vrcp.pop %v3280
      %v3341 = vmul.f32 1.0, %v3340
      %v3342 = vrcp.pop %v3281
      %v3343 = vmul.f32 1.0, %v3342
      %v3344 = vrcp.pop %v3282
      %v3345 = vmul.f32 1.0, %v3344
      %v3346 = vrcp.pop %v3283
      %v3347 = vmul.f32 1.0, %v3346
      %v3348 = vrcp.pop %v3284
      %v3349 = vmul.f32 1.0, %v3348
      %v3350 = vrcp.pop %v3285
      %v3351 = vmul.f32 1.0, %v3350
      %v3352 = vrcp.pop %v3286
      %v3353 = vmul.f32 1.0, %v3352
      %v3354 = vrcp.pop %v3287
      %v3355 = vmul.f32 1.0, %v3354
      %v3356 = vrcp.pop %v3288
      %v3357 = vmul.f32 1.0, %v3356
      %v3358 = vrcp.pop %v3289
      %v3359 = vmul.f32 1.0, %v3358
      %v3360 = vrcp.pop %v3290
      %v3361 = vmul.f32 1.0, %v3360
      %v3362 = vrcp.pop %v3291
      %v3363 = vmul.f32 1.0, %v3362
      %v3364 = vmul.f32 %v3112, %v3293
      %v3365 = vmul.f32 %v3113, %v3295
      %v3366 = vmul.f32 %v3114, %v3297
      %v3367 = vmul.f32 %v3115, %v3299
      %v3368 = vmul.f32 %v3116, %v3301
      %v3369 = vmul.f32 %v3117, %v3303
      %v3370 = vmul.f32 %v3118, %v3305
      %v3371 = vmul.f32 %v3119, %v3307
      %v3372 = vmul.f32 %v3120, %v3309
      %v3373 = vmul.f32 %v3121, %v3311
      %v3374 = vmul.f32 %v3122, %v3313
      %v3375 = vmul.f32 %v3123, %v3315
      %v3376 = vmul.f32 %v3124, %v3317
      %v3377 = vmul.f32 %v3125, %v3319
      %v3378 = vmul.f32 %v3126, %v3321
      %v3379 = vmul.f32 %v3127, %v3323
      %v3380 = vmul.f32 %v3128, %v3325
      %v3381 = vmul.f32 %v3129, %v3327
      %v3382 = vmul.f32 %v3130, %v3329
      %v3383 = vmul.f32 %v3131, %v3331
      %v3384 = vmul.f32 %v3132, %v3333
      %v3385 = vmul.f32 %v3133, %v3335
      %v3386 = vmul.f32 %v3134, %v3337
      %v3387 = vmul.f32 %v3135, %v3339
      %v3388 = vmul.f32 %v3136, %v3341
      %v3389 = vmul.f32 %v3137, %v3343
      %v3390 = vmul.f32 %v3138, %v3345
      %v3391 = vmul.f32 %v3139, %v3347
      %v3392 = vmul.f32 %v3140, %v3349
      %v3393 = vmul.f32 %v3141, %v3351
      %v3394 = vmul.f32 %v3142, %v3353
      %v3395 = vmul.f32 %v3143, %v3355
      %v3396 = vmul.f32 %v3144, %v3357
      %v3397 = vmul.f32 %v3145, %v3359
      %v3398 = vmul.f32 %v3146, %v3361
      %v3399 = vmul.f32 %v3147, %v3363
      %3400 = vst.msk [vmem:[%s197] sm:$0xff] %vm310, %v3364
      %3401 = vst.msk [vmem:[%s197 + $0x8] sm:$0xff] %vm310, %v3365
      %3402 = vst.msk [vmem:[%s197 + $0x10] sm:$0xff] %vm310, %v3366
      %3403 = vst.msk [vmem:[%s197 + $0x18] sm:$0xff] %vm310, %v3367
      %3404 = vst.msk [vmem:[%s197 + $0x20] sm:$0xff] %vm310, %v3368
      %3405 = vst.msk [vmem:[%s197 + $0x28] sm:$0xff] %vm310, %v3369
      %3406 = vst.msk [vmem:[%s197 + $0x30] sm:$0xff] %vm310, %v3370
      %3407 = vst.msk [vmem:[%s197 + $0x38] sm:$0xff] %vm310, %v3371
      %3408 = vst.msk [vmem:[%s197 + $0x40] sm:$0xff] %vm310, %v3372
      %3409 = vst.msk [vmem:[%s197 + $0x48] sm:$0xff] %vm310, %v3373
      %3410 = vst.msk [vmem:[%s197 + $0x50] sm:$0xff] %vm310, %v3374
      %3411 = vst.msk [vmem:[%s197 + $0x58] sm:$0xff] %vm310, %v3375
      %3412 = vst.msk [vmem:[%s197 + $0x60] sm:$0xff] %vm310, %v3376
      %3413 = vst.msk [vmem:[%s197 + $0x68] sm:$0xff] %vm310, %v3377
      %3414 = vst.msk [vmem:[%s197 + $0x70] sm:$0xff] %vm310, %v3378
      %3415 = vst.msk [vmem:[%s197 + $0x78] sm:$0xff] %vm310, %v3379
      %3416 = vst.msk [vmem:[%s197 + $0x80] sm:$0xff] %vm310, %v3380
      %3417 = vst.msk [vmem:[%s197 + $0x88] sm:$0xff] %vm310, %v3381
      %3418 = vst.msk [vmem:[%s197 + $0x90] sm:$0xff] %vm310, %v3382
      %3419 = vst.msk [vmem:[%s197 + $0x98] sm:$0xff] %vm310, %v3383
      %3420 = vst.msk [vmem:[%s197 + $0xa0] sm:$0xff] %vm310, %v3384
      %3421 = vst.msk [vmem:[%s197 + $0xa8] sm:$0xff] %vm310, %v3385
      %3422 = vst.msk [vmem:[%s197 + $0xb0] sm:$0xff] %vm310, %v3386
      %3423 = vst.msk [vmem:[%s197 + $0xb8] sm:$0xff] %vm310, %v3387
      %3424 = vst.msk [vmem:[%s197 + $0xc0] sm:$0xff] %vm310, %v3388
      %3425 = vst.msk [vmem:[%s197 + $0xc8] sm:$0xff] %vm310, %v3389
      %3426 = vst.msk [vmem:[%s197 + $0xd0] sm:$0xff] %vm310, %v3390
      %3427 = vst.msk [vmem:[%s197 + $0xd8] sm:$0xff] %vm310, %v3391
      %3428 = vst.msk [vmem:[%s197 + $0xe0] sm:$0xff] %vm310, %v3392
      %3429 = vst.msk [vmem:[%s197 + $0xe8] sm:$0xff] %vm310, %v3393
      %3430 = vst.msk [vmem:[%s197 + $0xf0] sm:$0xff] %vm310, %v3394
      %3431 = vst.msk [vmem:[%s197 + $0xf8] sm:$0xff] %vm310, %v3395
      %3432 = vst.msk [vmem:[%s197 + $0x100] sm:$0xff] %vm310, %v3396
      %3433 = vst.msk [vmem:[%s197 + $0x108] sm:$0xff] %vm310, %v3397
      %3434 = vst.msk [vmem:[%s197 + $0x110] sm:$0xff] %vm310, %v3398
      %3435 = vst.msk [vmem:[%s197 + $0x118] sm:$0xff] %vm310, %v3399
      %p3436 = scmp.lt.s32.totalorder %s15, 1
      %s3437 = scalar_select %p3436, %s15, 1
      %s3438 = smul.addr %s3437, 36
      %s3439 = smul.addr %s3438, 8
      %s3440 = scalar_lea.vmem %s4, %s3439
      // Predicated region
      $region37: #{c2f_mhsa_forward.6} parent=35 // pred_check
        %p3441 = pneg %p122
      $region38: #{c2f_mhsa_forward.6} parent=35 // pred_check_branch
        %3443 = sbr.rel (%p3441) target = $region40
      $region39: #{c2f_mhsa_forward.6} parent=35 // pred_region
        _
      $region40: #{c2f_mhsa_forward.6} parent=35 // pred_fallthru
        _
    $region36: #{c2f_mhsa_forward.6} parent=5 // pred_fallthru
      _
    %p3444 = scmp.le.s32.totalorder 2, %s10
    // Predicated region
    $region41: #{c2f_mhsa_forward.6} parent=5 // pred_check
      %p3445 = pneg %p3444
    $region42: #{c2f_mhsa_forward.6} parent=5 // pred_check_branch
      %3447 = sbr.rel (%p3445) target = $region44
    $region43: #{c2f_mhsa_forward.6} parent=5 // pred_region
      %s3448 = ssub.s32 %s10, 2
      // Predicated region
      $region45: #{c2f_mhsa_forward.6} parent=43 // pred_check
        %p3449 = pneg %p128
      $region46: #{c2f_mhsa_forward.6} parent=43 // pred_check_branch
        %3451 = sbr.rel (%p3449) target = $region48
      $region47: #{c2f_mhsa_forward.6} parent=43 // pred_region
        %p3452 = scmp.lt.s32.totalorder %s16, 1
        %s3453 = scalar_select %p3452, %s16, 1
        %s3454 = smul.addr %s3453, 36
        %s3455 = smul.addr %s3454, 8
        %s3456 = scalar_lea.vmem %s4, %s3455
      $region48: #{c2f_mhsa_forward.6} parent=43 // pred_fallthru
        _
    $region44: #{c2f_mhsa_forward.6} parent=5 // pred_fallthru
      _
  $region6: #{c2f_mhsa_forward.6} parent=0 // loop_footer
    %s14 = sadd.s32 1, %s10
  $region7: #{c2f_mhsa_forward.6} parent=0 // loop_footer_branch
    %9 = sbr.rel target = $region3
  $region8: #{c2f_mhsa_forward.6} parent=0 // loop_exit
    _

// kernel: c2f_mhsa_forward.8
$region0: #{c2f_mhsa_forward.8}
  #allocation0 [shape = 'u32[]', space=smem, size = 0x4, offset = 0x4, fixed_abs, tag = 'smem constant byte address 0x4 - core index']
  #allocation1 [shape = 'u32[144,128]{1,0:T(1,128)}', space=vmem, size = 0x12000, scoped, tag = 'internal scratch']
  %s0 = inlined_call_operand.vmem [shape: f32[512,8], index: 0, kind: input, shape index: {}]
  %s1 = inlined_call_operand.vmem [shape: bf16[3,8,8], index: 1, kind: input, shape index: {}]
  %s2 = inlined_call_operand.vmem [shape: f32[3,1,8], index: 2, kind: input, shape index: {}]
  %s3 = inlined_call_operand.vmem [shape: f32[512,8], index: 3, kind: output, shape index: {}]
  %s4 = sld [smem:[#allocation0]]
  $region45: #{c2f_mhsa_forward.8} parent=0
    _
  %s6 = ssub.s32 1, %s4
  %s7 = scalar_select 0, %s6, %s4
  loop: start=0, step=1, limit=4
  $region2: #{c2f_mhsa_forward.8} parent=0 // loop_pre_header
    _
  $region3: #{c2f_mhsa_forward.8} parent=0 // loop_header
    %s9 = sphi 0, %s13
    %p10 = scmp.ge.s32.totalorder %s9, 4
    %s19 = sphi 0, %s21
    %s22 = sphi 0, %s19
    %s23 = sphi 0, %s22
    %s39 = sphi 0, %s23
    %s43 = sphi 0, %s43
    %s45 = sphi 0, %s43
    %s46 = sphi 0, %s45
    %s60 = sphi 0, %s46
    %s64 = sphi 0, %s64
    %s66 = sphi 0, %s64
    %s67 = sphi 0, %s66
    %s81 = sphi 0, %s67
    %s87 = sphi 0, %s89
    %s90 = sphi 0, %s87
    %s91 = sphi 0, %s90
    %s107 = sphi 0, %s91
  $region4: #{c2f_mhsa_forward.8} parent=0 // loop_header_branch
    %12 = sbr.rel (%p10) target = $region8
  $region5: #{c2f_mhsa_forward.8} parent=0 // loop_body
    %s14 = ssub.s32 %s9, 1
    %s15 = ssub.s32 %s9, 2
    %s16 = sadd.s32 %s9, 1
    %s17 = ssub.s32 %s9, %s16
    %p18 = scmp.eq.s32.totalorder %s17, 0
    %s20 = sadd.s32 %s19, 1
    %s21 = scalar_select %p18, %s19, %s20
    %p24 = pneg %p18
    %p25 = scmp.eq.s32.totalorder %s9, 1
    %p26 = por %p24, %p25
    %p27 = scmp.ne.s32.totalorder %s19, %s22
    %p28 = scmp.eq.s32.totalorder %s9, 0
    %p29 = por %p27, %p28
    %p30 = scmp.ne.s32.totalorder %s19, %s22
    %p31 = scmp.eq.s32.totalorder %s14, 1
    %p32 = por %p30, %p31
    %p33 = scmp.ne.s32.totalorder %s22, %s23
    %p34 = scmp.eq.s32.totalorder %s14, 0
    %p35 = por %p33, %p34
    %p36 = scmp.ne.s32.totalorder %s22, %s23
    %p37 = scmp.eq.s32.totalorder %s15, 1
    %p38 = por %p36, %p37
    %p40 = scmp.ne.s32.totalorder %s23, %s39
    %p41 = scmp.eq.s32.totalorder %s15, 0
    %p42 = por %p40, %p41
    %s44 = sadd.s32 %s43, 1
    %p47 = scmp.eq.s32.totalorder %s9, 1
    %p48 = scmp.ne.s32.totalorder %s43, %s45
    %p49 = scmp.eq.s32.totalorder %s9, 0
    %p50 = por %p48, %p49
    %p51 = scmp.ne.s32.totalorder %s43, %s45
    %p52 = scmp.eq.s32.totalorder %s14, 1
    %p53 = por %p51, %p52
    %p54 = scmp.ne.s32.totalorder %s45, %s46
    %p55 = scmp.eq.s32.totalorder %s14, 0
    %p56 = por %p54, %p55
    %p57 = scmp.ne.s32.totalorder %s45, %s46
    %p58 = scmp.eq.s32.totalorder %s15, 1
    %p59 = por %p57, %p58
    %p61 = scmp.ne.s32.totalorder %s46, %s60
    %p62 = scmp.eq.s32.totalorder %s15, 0
    %p63 = por %p61, %p62
    %s65 = sadd.s32 %s64, 1
    %p68 = scmp.eq.s32.totalorder %s9, 1
    %p69 = scmp.ne.s32.totalorder %s64, %s66
    %p70 = scmp.eq.s32.totalorder %s9, 0
    %p71 = por %p69, %p70
    %p72 = scmp.ne.s32.totalorder %s64, %s66
    %p73 = scmp.eq.s32.totalorder %s14, 1
    %p74 = por %p72, %p73
    %p75 = scmp.ne.s32.totalorder %s66, %s67
    %p76 = scmp.eq.s32.totalorder %s14, 0
    %p77 = por %p75, %p76
    %p78 = scmp.ne.s32.totalorder %s66, %s67
    %p79 = scmp.eq.s32.totalorder %s15, 1
    %p80 = por %p78, %p79
    %p82 = scmp.ne.s32.totalorder %s67, %s81
    %p83 = scmp.eq.s32.totalorder %s15, 0
    %p84 = por %p82, %p83
    %s85 = ssub.s32 %s9, %s16
    %p86 = scmp.eq.s32.totalorder %s85, 0
    %s88 = sadd.s32 %s87, 1
    %s89 = scalar_select %p86, %s87, %s88
    %p92 = pneg %p86
    %p93 = scmp.eq.s32.totalorder %s9, 1
    %p94 = por %p92, %p93
    %p95 = scmp.ne.s32.totalorder %s87, %s90
    %p96 = scmp.eq.s32.totalorder %s9, 0
    %p97 = por %p95, %p96
    %p98 = scmp.ne.s32.totalorder %s87, %s90
    %p99 = scmp.eq.s32.totalorder %s14, 1
    %p100 = por %p98, %p99
    %p101 = scmp.ne.s32.totalorder %s90, %s91
    %p102 = scmp.eq.s32.totalorder %s14, 0
    %p103 = por %p101, %p102
    %p104 = scmp.ne.s32.totalorder %s90, %s91
    %p105 = scmp.eq.s32.totalorder %s15, 1
    %p106 = por %p104, %p105
    %p108 = scmp.ne.s32.totalorder %s91, %s107
    %p109 = scmp.eq.s32.totalorder %s15, 0
    %p110 = por %p108, %p109
    %p111 = scmp.le.s32.totalorder 1, %s9
    %p112 = scmp.lt.s32.totalorder %s9, 3
    %p113 = pnand %p111, %p112
    %p114 = pneg %p113
    // Predicated region
    $region9: #{c2f_mhsa_forward.8} parent=5 // pred_check
      _
    $region10: #{c2f_mhsa_forward.8} parent=5 // pred_check_branch
      %116 = sbr.rel (%p113) target = $region12
    $region11: #{c2f_mhsa_forward.8} parent=5 // pred_region
      %s117 = ssub.s32 %s9, 1
      // Predicated region
      $region13: #{c2f_mhsa_forward.8} parent=11 // pred_check
        %p118 = pneg %p56
      $region14: #{c2f_mhsa_forward.8} parent=11 // pred_check_branch
        %120 = sbr.rel (%p118) target = $region16
      $region15: #{c2f_mhsa_forward.8} parent=11 // pred_region
        _
      $region16: #{c2f_mhsa_forward.8} parent=11 // pred_fallthru
        _
      // Predicated region
      $region17: #{c2f_mhsa_forward.8} parent=11 // pred_check
        %p121 = pneg %p77
      $region18: #{c2f_mhsa_forward.8} parent=11 // pred_check_branch
        %123 = sbr.rel (%p121) target = $region20
      $region19: #{c2f_mhsa_forward.8} parent=11 // pred_region
        _
      $region20: #{c2f_mhsa_forward.8} parent=11 // pred_fallthru
        _
    $region12: #{c2f_mhsa_forward.8} parent=5 // pred_fallthru
      _
    %p124 = scmp.lt.s32.totalorder %s9, 2
    // Predicated region
    $region21: #{c2f_mhsa_forward.8} parent=5 // pred_check
      %p125 = pneg %p124
    $region22: #{c2f_mhsa_forward.8} parent=5 // pred_check_branch
      %127 = sbr.rel (%p125) target = $region24
    $region23: #{c2f_mhsa_forward.8} parent=5 // pred_region
      // Predicated region
      $region25: #{c2f_mhsa_forward.8} parent=23 // pred_check
        %p128 = pneg %p29
      $region26: #{c2f_mhsa_forward.8} parent=23 // pred_check_branch
        %130 = sbr.rel (%p128) target = $region28
      $region27: #{c2f_mhsa_forward.8} parent=23 // pred_region
        %s131 = smul.u32 32, %s9
        %p132 = scmp.lt.s32.totalorder %s131, 63
        %s133 = scalar_select %p132, %s131, 63
        %s134 = smul.addr %s133, 8
        %s135 = scalar_lea.vmem %s0, %s134
        %s136 = smul.u32 32, %s9
      $region28: #{c2f_mhsa_forward.8} parent=23 // pred_fallthru
        _
    $region24: #{c2f_mhsa_forward.8} parent=5 // pred_fallthru
      _
    %p137 = scmp.le.s32.totalorder 1, %s9
    %p138 = scmp.lt.s32.totalorder %s9, 3
    %p139 = pnand %p137, %p138
    %p140 = pneg %p139
    // Predicated region
    $region29: #{c2f_mhsa_forward.8} parent=5 // pred_check
      _
    $region30: #{c2f_mhsa_forward.8} parent=5 // pred_check_branch
      %142 = sbr.rel (%p139) target = $region32
    $region31: #{c2f_mhsa_forward.8} parent=5 // pred_region
      %s143 = ssub.s32 %s9, 1
      %s144 = smul.u32 32, %s14
      %p145 = scmp.lt.s32.totalorder %s144, 63
      %s146 = scalar_select %p145, %s144, 63
      %s147 = smul.addr %s146, 8
      %s148 = scalar_lea.vmem %s0, %s147
      %p149 = pneg %p35
      %p150 = pneg %p32
      %p151 = pneg %p56
      %p152 = pneg %p53
      %p153 = pneg %p77
      %p154 = pneg %p74
      %p155 = pneg %p103
      %p156 = pneg %p100
      %s157 = smul.u32 32, %s14
      %p158 = scmp.lt.s32.totalorder %s157, 63
      %s159 = scalar_select %p158, %s157, 63
      %s160 = smul.addr %s159, 8
      %s161 = scalar_lea.vmem %s3, %s160
      %s162 = smul.u32 32, %s14
      %p163 = scmp.lt.s32.totalorder %s162, 63
      %s164 = scalar_select %p163, %s162, 63
      %s165 = smul.addr %s164, 8
      %s166 = scalar_lea.vmem %s0, %s165
      %s167 = smul.u32 32, %s14
      %s168 = smul.u32 32, %s14
      %p169 = scmp.lt.s32.totalorder %s168, 63
      %s170 = scalar_select %p169, %s168, 63
      %s171 = smul.addr %s170, 8
      %s172 = scalar_lea.vmem %s3, %s171
      %s173 = smul.u32 32, %s14
      %v175 = vld [vmem:[%s166] sm:$0xff]
      %v176 = vld [vmem:[%s166 + $0x8] sm:$0xff]
      %v177 = vld [vmem:[%s166 + $0x10] sm:$0xff]
      %v178 = vld [vmem:[%s166 + $0x18] sm:$0xff]
      %v179 = vld [vmem:[%s166 + $0x20] sm:$0xff]
      %v180 = vld [vmem:[%s166 + $0x28] sm:$0xff]
      %v181 = vld [vmem:[%s166 + $0x30] sm:$0xff]
      %v182 = vld [vmem:[%s166 + $0x38] sm:$0xff]
      %v183 = vld [vmem:[%s166 + $0x40] sm:$0xff]
      %v184 = vld [vmem:[%s166 + $0x48] sm:$0xff]
      %v185 = vld [vmem:[%s166 + $0x50] sm:$0xff]
      %v186 = vld [vmem:[%s166 + $0x58] sm:$0xff]
      %v187 = vld [vmem:[%s166 + $0x60] sm:$0xff]
      %v188 = vld [vmem:[%s166 + $0x68] sm:$0xff]
      %v189 = vld [vmem:[%s166 + $0x70] sm:$0xff]
      %v190 = vld [vmem:[%s166 + $0x78] sm:$0xff]
      %v191 = vld [vmem:[%s166 + $0x80] sm:$0xff]
      %v192 = vld [vmem:[%s166 + $0x88] sm:$0xff]
      %v193 = vld [vmem:[%s166 + $0x90] sm:$0xff]
      %v194 = vld [vmem:[%s166 + $0x98] sm:$0xff]
      %v195 = vld [vmem:[%s166 + $0xa0] sm:$0xff]
      %v196 = vld [vmem:[%s166 + $0xa8] sm:$0xff]
      %v197 = vld [vmem:[%s166 + $0xb0] sm:$0xff]
      %v198 = vld [vmem:[%s166 + $0xb8] sm:$0xff]
      %v199 = vld [vmem:[%s166 + $0xc0] sm:$0xff]
      %v200 = vld [vmem:[%s166 + $0xc8] sm:$0xff]
      %v201 = vld [vmem:[%s166 + $0xd0] sm:$0xff]
      %v202 = vld [vmem:[%s166 + $0xd8] sm:$0xff]
      %v203 = vld [vmem:[%s166 + $0xe0] sm:$0xff]
      %v204 = vld [vmem:[%s166 + $0xe8] sm:$0xff]
      %v205 = vld [vmem:[%s166 + $0xf0] sm:$0xff]
      %v206 = vld [vmem:[%s166 + $0xf8] sm:$0xff]
      %v207 = vpack.c.bf16 %v176, %v175
      %v208 = vpack.c.bf16 %v178, %v177
      %v209 = vpack.c.bf16 %v180, %v179
      %v210 = vpack.c.bf16 %v182, %v181
      %v211 = vpack.c.bf16 %v184, %v183
      %v212 = vpack.c.bf16 %v186, %v185
      %v213 = vpack.c.bf16 %v188, %v187
      %v214 = vpack.c.bf16 %v190, %v189
      %v215 = vpack.c.bf16 %v192, %v191
      %v216 = vpack.c.bf16 %v194, %v193
      %v217 = vpack.c.bf16 %v196, %v195
      %v218 = vpack.c.bf16 %v198, %v197
      %v219 = vpack.c.bf16 %v200, %v199
      %v220 = vpack.c.bf16 %v202, %v201
      %v221 = vpack.c.bf16 %v204, %v203
      %v222 = vpack.c.bf16 %v206, %v205
      %v223 = vld [vmem:[%s1] sm:$0xf]
      %v224 = vld [vmem:[%s2] sm:$0x1]
      %v226 = vlaneseq
      %v227 = vshrl.u32 %v226, 7
      %v228 = vsub.s32 0, %v227
      %v229 = vrot.slane %v224, %v228
      %vm231 = vcmask 64512
      %v233 = vsel %vm231, %v207, 0
      %v236 = vsel %vm231, %v208, 0
      %v239 = vsel %vm231, %v209, 0
      %v242 = vsel %vm231, %v210, 0
      %v245 = vsel %vm231, %v211, 0
      %v248 = vsel %vm231, %v212, 0
      %v251 = vsel %vm231, %v213, 0
      %v254 = vsel %vm231, %v214, 0
      %v257 = vsel %vm231, %v215, 0
      %v260 = vsel %vm231, %v216, 0
      %v263 = vsel %vm231, %v217, 0
      %v266 = vsel %vm231, %v218, 0
      %v269 = vsel %vm231, %v219, 0
      %v272 = vsel %vm231, %v220, 0
      %v275 = vsel %vm231, %v221, 0
      %v278 = vsel %vm231, %v222, 0
      %vm280 = vcmask 1043456
      %v282 = vsel %vm280, %v223, 0
      %284 = vmatprep.subr.bf16.mxu0 0
      %285 = vmatpush1.bf16.msra.mxu0 0
      %286 = vmatprep.subr.bf16.mxu0 0
      %287 = vmatpush1.bf16.msra.mxu0 0
      %288 = vmatprep.subr.bf16.mxu0 0
      %289 = vmatpush1.bf16.msra.mxu0 0
      %290 = vmatprep.subr.bf16.mxu0 0
      %291 = vmatpush1.bf16.msra.mxu0 0
      %292 = vmatprep.subr.bf16.mxu0 0
      %293 = vmatpush1.bf16.msra.mxu0 0
      %294 = vmatprep.subr.bf16.mxu0 0
      %295 = vmatpush1.bf16.msra.mxu0 0
      %296 = vmatprep.subr.bf16.mxu0 0
      %297 = vmatpush1.bf16.msra.mxu0 0
      %298 = vmatprep.subr.bf16.mxu0 0
      %299 = vmatpush1.bf16.msra.mxu0 %v282
      %300 = vmatprep.subr.bf16.mxu0 0
      %301 = vmatpush2.bf16.msra.mxu0 0
      %302 = vmatprep.subr.bf16.mxu0 0
      %303 = vmatpush2.bf16.msra.mxu0 0
      %304 = vmatprep.subr.bf16.mxu0 0
      %305 = vmatpush2.bf16.msra.mxu0 0
      %306 = vmatprep.subr.bf16.mxu0 0
      %307 = vmatpush2.bf16.msra.mxu0 0
      %308 = vmatprep.subr.bf16.mxu0 0
      %309 = vmatpush2.bf16.msra.mxu0 0
      %310 = vmatprep.subr.bf16.mxu0 0
      %311 = vmatpush2.bf16.msra.mxu0 0
      %312 = vmatprep.subr.bf16.mxu0 0
      %313 = vmatpush2.bf16.msra.mxu0 0
      %314 = vmatprep.subr.bf16.mxu0 0
      %315 = vmatpush2.bf16.msra.mxu0 0
      %316 = vmatprep.mubr.bf16.mxu0 0
      %317 = vmatmul.mubr.bf16.gmra.mxu0 %v233
      %v318 = vpop.f32.mrf.mxu0
      %v319 = vadd.f32 %v229, %v318
      %v320 = vpop.f32.mrf.mxu0
      %v321 = vpop.f32.mrf.mxu0
      %v322 = vadd.f32 %v229, %v321
      %v323 = vpop.f32.mrf.mxu0
      %324 = vmatprep.mubr.bf16.mxu0 0
      %325 = vmatmul.mubr.bf16.gmra.mxu0 %v236
      %v326 = vpop.f32.mrf.mxu0
      %v327 = vadd.f32 %v229, %v326
      %v328 = vpop.f32.mrf.mxu0
      %v329 = vpop.f32.mrf.mxu0
      %v330 = vadd.f32 %v229, %v329
      %v331 = vpop.f32.mrf.mxu0
      %332 = vmatprep.mubr.bf16.mxu0 0
      %333 = vmatmul.mubr.bf16.gmra.mxu0 %v239
      %v334 = vpop.f32.mrf.mxu0
      %v335 = vadd.f32 %v229, %v334
      %v336 = vpop.f32.mrf.mxu0
      %v337 = vpop.f32.mrf.mxu0
      %v338 = vadd.f32 %v229, %v337
      %v339 = vpop.f32.mrf.mxu0
      %340 = vmatprep.mubr.bf16.mxu0 0
      %341 = vmatmul.mubr.bf16.gmra.mxu0 %v242
      %v342 = vpop.f32.mrf.mxu0
      %v343 = vadd.f32 %v229, %v342
      %v344 = vpop.f32.mrf.mxu0
      %v345 = vpop.f32.mrf.mxu0
      %v346 = vadd.f32 %v229, %v345
      %v347 = vpop.f32.mrf.mxu0
      %348 = vmatprep.mubr.bf16.mxu0 0
      %349 = vmatmul.mubr.bf16.gmra.mxu0 %v245
      %v350 = vpop.f32.mrf.mxu0
      %v351 = vadd.f32 %v229, %v350
      %v352 = vpop.f32.mrf.mxu0
      %v353 = vpop.f32.mrf.mxu0
      %v354 = vadd.f32 %v229, %v353
      %v355 = vpop.f32.mrf.mxu0
      %356 = vmatprep.mubr.bf16.mxu0 0
      %357 = vmatmul.mubr.bf16.gmra.mxu0 %v248
      %v358 = vpop.f32.mrf.mxu0
      %v359 = vadd.f32 %v229, %v358
      %v360 = vpop.f32.mrf.mxu0
      %v361 = vpop.f32.mrf.mxu0
      %v362 = vadd.f32 %v229, %v361
      %v363 = vpop.f32.mrf.mxu0
      %364 = vmatprep.mubr.bf16.mxu0 0
      %365 = vmatmul.mubr.bf16.gmra.mxu0 %v251
      %v366 = vpop.f32.mrf.mxu0
      %v367 = vadd.f32 %v229, %v366
      %v368 = vpop.f32.mrf.mxu0
      %v369 = vpop.f32.mrf.mxu0
      %v370 = vadd.f32 %v229, %v369
      %v371 = vpop.f32.mrf.mxu0
      %372 = vmatprep.mubr.bf16.mxu0 0
      %373 = vmatmul.mubr.bf16.gmra.mxu0 %v254
      %v374 = vpop.f32.mrf.mxu0
      %v375 = vadd.f32 %v229, %v374
      %v376 = vpop.f32.mrf.mxu0
      %v377 = vpop.f32.mrf.mxu0
      %v378 = vadd.f32 %v229, %v377
      %v379 = vpop.f32.mrf.mxu0
      %380 = vmatprep.mubr.bf16.mxu0 0
      %381 = vmatmul.mubr.bf16.gmra.mxu0 %v257
      %v382 = vpop.f32.mrf.mxu0
      %v383 = vadd.f32 %v229, %v382
      %v384 = vpop.f32.mrf.mxu0
      %v385 = vpop.f32.mrf.mxu0
      %v386 = vadd.f32 %v229, %v385
      %v387 = vpop.f32.mrf.mxu0
      %388 = vmatprep.mubr.bf16.mxu0 0
      %389 = vmatmul.mubr.bf16.gmra.mxu0 %v260
      %v390 = vpop.f32.mrf.mxu0
      %v391 = vadd.f32 %v229, %v390
      %v392 = vpop.f32.mrf.mxu0
      %v393 = vpop.f32.mrf.mxu0
      %v394 = vadd.f32 %v229, %v393
      %v395 = vpop.f32.mrf.mxu0
      %396 = vmatprep.mubr.bf16.mxu0 0
      %397 = vmatmul.mubr.bf16.gmra.mxu0 %v263
      %v398 = vpop.f32.mrf.mxu0
      %v399 = vadd.f32 %v229, %v398
      %v400 = vpop.f32.mrf.mxu0
      %v401 = vpop.f32.mrf.mxu0
      %v402 = vadd.f32 %v229, %v401
      %v403 = vpop.f32.mrf.mxu0
      %404 = vmatprep.mubr.bf16.mxu0 0
      %405 = vmatmul.mubr.bf16.gmra.mxu0 %v266
      %v406 = vpop.f32.mrf.mxu0
      %v407 = vadd.f32 %v229, %v406
      %v408 = vpop.f32.mrf.mxu0
      %v409 = vpop.f32.mrf.mxu0
      %v410 = vadd.f32 %v229, %v409
      %v411 = vpop.f32.mrf.mxu0
      %412 = vmatprep.mubr.bf16.mxu0 0
      %413 = vmatmul.mubr.bf16.gmra.mxu0 %v269
      %v414 = vpop.f32.mrf.mxu0
      %v415 = vadd.f32 %v229, %v414
      %v416 = vpop.f32.mrf.mxu0
      %v417 = vpop.f32.mrf.mxu0
      %v418 = vadd.f32 %v229, %v417
      %v419 = vpop.f32.mrf.mxu0
      %420 = vmatprep.mubr.bf16.mxu0 0
      %421 = vmatmul.mubr.bf16.gmra.mxu0 %v272
      %v422 = vpop.f32.mrf.mxu0
      %v423 = vadd.f32 %v229, %v422
      %v424 = vpop.f32.mrf.mxu0
      %v425 = vpop.f32.mrf.mxu0
      %v426 = vadd.f32 %v229, %v425
      %v427 = vpop.f32.mrf.mxu0
      %428 = vmatprep.mubr.bf16.mxu0 0
      %429 = vmatmul.mubr.bf16.gmra.mxu0 %v275
      %v430 = vpop.f32.mrf.mxu0
      %v431 = vadd.f32 %v229, %v430
      %v432 = vpop.f32.mrf.mxu0
      %v433 = vpop.f32.mrf.mxu0
      %v434 = vadd.f32 %v229, %v433
      %v435 = vpop.f32.mrf.mxu0
      %436 = vmatprep.mubr.bf16.mxu0 0
      %437 = vmatmul.mubr.bf16.gmra.mxu0 %v278
      %v438 = vpop.f32.mrf.mxu0
      %v439 = vadd.f32 %v229, %v438
      %v440 = vpop.f32.mrf.mxu0
      %v441 = vpop.f32.mrf.mxu0
      %v442 = vadd.f32 %v229, %v441
      %v443 = vpop.f32.mrf.mxu0
      %444 = vdwg.mxu0
      %s445 = scalar_lea.vmem %s1, 4
      %v446 = vld [vmem:[%s445] sm:$0xf]
      %s447 = scalar_lea.vmem %s2, 1
      %v448 = vld [vmem:[%s447] sm:$0x1]
      %v450 = vlaneseq
      %v451 = vshrl.u32 %v450, 7
      %v452 = vsub.s32 0, %v451
      %v453 = vrot.slane %v448, %v452
      %v456 = vsel %vm280, %v446, 0
      %458 = vmatprep.subr.bf16.mxu0 0
      %459 = vmatpush1.bf16.msra.mxu0 0
      %460 = vmatprep.subr.bf16.mxu0 0
      %461 = vmatpush1.bf16.msra.mxu0 0
      %462 = vmatprep.subr.bf16.mxu0 0
      %463 = vmatpush1.bf16.msra.mxu0 0
      %464 = vmatprep.subr.bf16.mxu0 0
      %465 = vmatpush1.bf16.msra.mxu0 0
      %466 = vmatprep.subr.bf16.mxu0 0
      %467 = vmatpush1.bf16.msra.mxu0 0
      %468 = vmatprep.subr.bf16.mxu0 0
      %469 = vmatpush1.bf16.msra.mxu0 0
      %470 = vmatprep.subr.bf16.mxu0 0
      %471 = vmatpush1.bf16.msra.mxu0 0
      %472 = vmatprep.subr.bf16.mxu0 0
      %473 = vmatpush1.bf16.msra.mxu0 %v456
      %474 = vmatprep.subr.bf16.mxu0 0
      %475 = vmatpush2.bf16.msra.mxu0 0
      %476 = vmatprep.subr.bf16.mxu0 0
      %477 = vmatpush2.bf16.msra.mxu0 0
      %478 = vmatprep.subr.bf16.mxu0 0
      %479 = vmatpush2.bf16.msra.mxu0 0
      %480 = vmatprep.subr.bf16.mxu0 0
      %481 = vmatpush2.bf16.msra.mxu0 0
      %482 = vmatprep.subr.bf16.mxu0 0
      %483 = vmatpush2.bf16.msra.mxu0 0
      %484 = vmatprep.subr.bf16.mxu0 0
      %485 = vmatpush2.bf16.msra.mxu0 0
      %486 = vmatprep.subr.bf16.mxu0 0
      %487 = vmatpush2.bf16.msra.mxu0 0
      %488 = vmatprep.subr.bf16.mxu0 0
      %489 = vmatpush2.bf16.msra.mxu0 0
      %490 = vmatprep.mubr.bf16.mxu0 0
      %491 = vmatmul.mubr.bf16.gmra.mxu0 %v233
      %v492 = vpop.f32.mrf.mxu0
      %v493 = vadd.f32 %v453, %v492
      %v494 = vpop.f32.mrf.mxu0
      %v495 = vpop.f32.mrf.mxu0
      %v496 = vadd.f32 %v453, %v495
      %v497 = vpop.f32.mrf.mxu0
      %498 = vmatprep.mubr.bf16.mxu0 0
      %499 = vmatmul.mubr.bf16.gmra.mxu0 %v236
      %v500 = vpop.f32.mrf.mxu0
      %v501 = vadd.f32 %v453, %v500
      %v502 = vpop.f32.mrf.mxu0
      %v503 = vpop.f32.mrf.mxu0
      %v504 = vadd.f32 %v453, %v503
      %v505 = vpop.f32.mrf.mxu0
      %506 = vmatprep.mubr.bf16.mxu0 0
      %507 = vmatmul.mubr.bf16.gmra.mxu0 %v239
      %v508 = vpop.f32.mrf.mxu0
      %v509 = vadd.f32 %v453, %v508
      %v510 = vpop.f32.mrf.mxu0
      %v511 = vpop.f32.mrf.mxu0
      %v512 = vadd.f32 %v453, %v511
      %v513 = vpop.f32.mrf.mxu0
      %514 = vmatprep.mubr.bf16.mxu0 0
      %515 = vmatmul.mubr.bf16.gmra.mxu0 %v242
      %v516 = vpop.f32.mrf.mxu0
      %v517 = vadd.f32 %v453, %v516
      %v518 = vpop.f32.mrf.mxu0
      %v519 = vpop.f32.mrf.mxu0
      %v520 = vadd.f32 %v453, %v519
      %v521 = vpop.f32.mrf.mxu0
      %522 = vmatprep.mubr.bf16.mxu0 0
      %523 = vmatmul.mubr.bf16.gmra.mxu0 %v245
      %v524 = vpop.f32.mrf.mxu0
      %v525 = vadd.f32 %v453, %v524
      %v526 = vpop.f32.mrf.mxu0
      %v527 = vpop.f32.mrf.mxu0
      %v528 = vadd.f32 %v453, %v527
      %v529 = vpop.f32.mrf.mxu0
      %530 = vmatprep.mubr.bf16.mxu0 0
      %531 = vmatmul.mubr.bf16.gmra.mxu0 %v248
      %v532 = vpop.f32.mrf.mxu0
      %v533 = vadd.f32 %v453, %v532
      %v534 = vpop.f32.mrf.mxu0
      %v535 = vpop.f32.mrf.mxu0
      %v536 = vadd.f32 %v453, %v535
      %v537 = vpop.f32.mrf.mxu0
      %538 = vmatprep.mubr.bf16.mxu0 0
      %539 = vmatmul.mubr.bf16.gmra.mxu0 %v251
      %v540 = vpop.f32.mrf.mxu0
      %v541 = vadd.f32 %v453, %v540
      %v542 = vpop.f32.mrf.mxu0
      %v543 = vpop.f32.mrf.mxu0
      %v544 = vadd.f32 %v453, %v543
      %v545 = vpop.f32.mrf.mxu0
      %546 = vmatprep.mubr.bf16.mxu0 0
      %547 = vmatmul.mubr.bf16.gmra.mxu0 %v254
      %v548 = vpop.f32.mrf.mxu0
      %v549 = vadd.f32 %v453, %v548
      %v550 = vpop.f32.mrf.mxu0
      %v551 = vpop.f32.mrf.mxu0
      %v552 = vadd.f32 %v453, %v551
      %v553 = vpop.f32.mrf.mxu0
      %554 = vmatprep.mubr.bf16.mxu0 0
      %555 = vmatmul.mubr.bf16.gmra.mxu0 %v257
      %v556 = vpop.f32.mrf.mxu0
      %v557 = vadd.f32 %v453, %v556
      %v558 = vpop.f32.mrf.mxu0
      %v559 = vpop.f32.mrf.mxu0
      %v560 = vadd.f32 %v453, %v559
      %v561 = vpop.f32.mrf.mxu0
      %562 = vmatprep.mubr.bf16.mxu0 0
      %563 = vmatmul.mubr.bf16.gmra.mxu0 %v260
      %v564 = vpop.f32.mrf.mxu0
      %v565 = vadd.f32 %v453, %v564
      %v566 = vpop.f32.mrf.mxu0
      %v567 = vpop.f32.mrf.mxu0
      %v568 = vadd.f32 %v453, %v567
      %v569 = vpop.f32.mrf.mxu0
      %570 = vmatprep.mubr.bf16.mxu0 0
      %571 = vmatmul.mubr.bf16.gmra.mxu0 %v263
      %v572 = vpop.f32.mrf.mxu0
      %v573 = vadd.f32 %v453, %v572
      %v574 = vpop.f32.mrf.mxu0
      %v575 = vpop.f32.mrf.mxu0
      %v576 = vadd.f32 %v453, %v575
      %v577 = vpop.f32.mrf.mxu0
      %578 = vmatprep.mubr.bf16.mxu0 0
      %579 = vmatmul.mubr.bf16.gmra.mxu0 %v266
      %v580 = vpop.f32.mrf.mxu0
      %v581 = vadd.f32 %v453, %v580
      %v582 = vpop.f32.mrf.mxu0
      %v583 = vpop.f32.mrf.mxu0
      %v584 = vadd.f32 %v453, %v583
      %v585 = vpop.f32.mrf.mxu0
      %586 = vmatprep.mubr.bf16.mxu0 0
      %587 = vmatmul.mubr.bf16.gmra.mxu0 %v269
      %v588 = vpop.f32.mrf.mxu0
      %v589 = vadd.f32 %v453, %v588
      %v590 = vpop.f32.mrf.mxu0
      %v591 = vpop.f32.mrf.mxu0
      %v592 = vadd.f32 %v453, %v591
      %v593 = vpop.f32.mrf.mxu0
      %594 = vmatprep.mubr.bf16.mxu0 0
      %595 = vmatmul.mubr.bf16.gmra.mxu0 %v272
      %v596 = vpop.f32.mrf.mxu0
      %v597 = vadd.f32 %v453, %v596
      %v598 = vpop.f32.mrf.mxu0
      %v599 = vpop.f32.mrf.mxu0
      %v600 = vadd.f32 %v453, %v599
      %v601 = vpop.f32.mrf.mxu0
      %602 = vmatprep.mubr.bf16.mxu0 0
      %603 = vmatmul.mubr.bf16.gmra.mxu0 %v275
      %v604 = vpop.f32.mrf.mxu0
      %v605 = vadd.f32 %v453, %v604
      %v606 = vpop.f32.mrf.mxu0
      %v607 = vpop.f32.mrf.mxu0
      %v608 = vadd.f32 %v453, %v607
      %v609 = vpop.f32.mrf.mxu0
      %610 = vmatprep.mubr.bf16.mxu0 0
      %611 = vmatmul.mubr.bf16.gmra.mxu0 %v278
      %v612 = vpop.f32.mrf.mxu0
      %v613 = vadd.f32 %v453, %v612
      %v614 = vpop.f32.mrf.mxu0
      %v615 = vpop.f32.mrf.mxu0
      %v616 = vadd.f32 %v453, %v615
      %v617 = vpop.f32.mrf.mxu0
      %618 = vdwg.mxu0
      %s619 = scalar_lea.vmem %s1, 8
      %v620 = vld [vmem:[%s619] sm:$0xf]
      %s621 = scalar_lea.vmem %s2, 2
      %v622 = vld [vmem:[%s621] sm:$0x1]
      %v624 = vlaneseq
      %v625 = vshrl.u32 %v624, 7
      %v626 = vsub.s32 0, %v625
      %v627 = vrot.slane %v622, %v626
      %v630 = vsel %vm280, %v620, 0
      %632 = vmatprep.subr.bf16.mxu0 0
      %633 = vmatpush1.bf16.msra.mxu0 0
      %634 = vmatprep.subr.bf16.mxu0 0
      %635 = vmatpush1.bf16.msra.mxu0 0
      %636 = vmatprep.subr.bf16.mxu0 0
      %637 = vmatpush1.bf16.msra.mxu0 0
      %638 = vmatprep.subr.bf16.mxu0 0
      %639 = vmatpush1.bf16.msra.mxu0 0
      %640 = vmatprep.subr.bf16.mxu0 0
      %641 = vmatpush1.bf16.msra.mxu0 0
      %642 = vmatprep.subr.bf16.mxu0 0
      %643 = vmatpush1.bf16.msra.mxu0 0
      %644 = vmatprep.subr.bf16.mxu0 0
      %645 = vmatpush1.bf16.msra.mxu0 0
      %646 = vmatprep.subr.bf16.mxu0 0
      %647 = vmatpush1.bf16.msra.mxu0 %v630
      %648 = vmatprep.subr.bf16.mxu0 0
      %649 = vmatpush2.bf16.msra.mxu0 0
      %650 = vmatprep.subr.bf16.mxu0 0
      %651 = vmatpush2.bf16.msra.mxu0 0
      %652 = vmatprep.subr.bf16.mxu0 0
      %653 = vmatpush2.bf16.msra.mxu0 0
      %654 = vmatprep.subr.bf16.mxu0 0
      %655 = vmatpush2.bf16.msra.mxu0 0
      %656 = vmatprep.subr.bf16.mxu0 0
      %657 = vmatpush2.bf16.msra.mxu0 0
      %658 = vmatprep.subr.bf16.mxu0 0
      %659 = vmatpush2.bf16.msra.mxu0 0
      %660 = vmatprep.subr.bf16.mxu0 0
      %661 = vmatpush2.bf16.msra.mxu0 0
      %662 = vmatprep.subr.bf16.mxu0 0
      %663 = vmatpush2.bf16.msra.mxu0 0
      %664 = vmatprep.mubr.bf16.mxu0 0
      %665 = vmatmul.mubr.bf16.gmra.mxu0 %v233
      %v666 = vpop.f32.mrf.mxu0
      %v667 = vadd.f32 %v627, %v666
      %v668 = vpop.f32.mrf.mxu0
      %v669 = vpop.f32.mrf.mxu0
      %v670 = vadd.f32 %v627, %v669
      %v671 = vpop.f32.mrf.mxu0
      %672 = vmatprep.mubr.bf16.mxu0 0
      %673 = vmatmul.mubr.bf16.gmra.mxu0 %v236
      %v674 = vpop.f32.mrf.mxu0
      %v675 = vadd.f32 %v627, %v674
      %v676 = vpop.f32.mrf.mxu0
      %v677 = vpop.f32.mrf.mxu0
      %v678 = vadd.f32 %v627, %v677
      %v679 = vpop.f32.mrf.mxu0
      %680 = vmatprep.mubr.bf16.mxu0 0
      %681 = vmatmul.mubr.bf16.gmra.mxu0 %v239
      %v682 = vpop.f32.mrf.mxu0
      %v683 = vadd.f32 %v627, %v682
      %v684 = vpop.f32.mrf.mxu0
      %v685 = vpop.f32.mrf.mxu0
      %v686 = vadd.f32 %v627, %v685
      %v687 = vpop.f32.mrf.mxu0
      %688 = vmatprep.mubr.bf16.mxu0 0
      %689 = vmatmul.mubr.bf16.gmra.mxu0 %v242
      %v690 = vpop.f32.mrf.mxu0
      %v691 = vadd.f32 %v627, %v690
      %v692 = vpop.f32.mrf.mxu0
      %v693 = vpop.f32.mrf.mxu0
      %v694 = vadd.f32 %v627, %v693
      %v695 = vpop.f32.mrf.mxu0
      %696 = vmatprep.mubr.bf16.mxu0 0
      %697 = vmatmul.mubr.bf16.gmra.mxu0 %v245
      %v698 = vpop.f32.mrf.mxu0
      %v699 = vadd.f32 %v627, %v698
      %v700 = vpop.f32.mrf.mxu0
      %v701 = vpop.f32.mrf.mxu0
      %v702 = vadd.f32 %v627, %v701
      %v703 = vpop.f32.mrf.mxu0
      %704 = vmatprep.mubr.bf16.mxu0 0
      %705 = vmatmul.mubr.bf16.gmra.mxu0 %v248
      %v706 = vpop.f32.mrf.mxu0
      %v707 = vadd.f32 %v627, %v706
      %v708 = vpop.f32.mrf.mxu0
      %v709 = vpop.f32.mrf.mxu0
      %v710 = vadd.f32 %v627, %v709
      %v711 = vpop.f32.mrf.mxu0
      %712 = vmatprep.mubr.bf16.mxu0 0
      %713 = vmatmul.mubr.bf16.gmra.mxu0 %v251
      %v714 = vpop.f32.mrf.mxu0
      %v715 = vadd.f32 %v627, %v714
      %v716 = vpop.f32.mrf.mxu0
      %v717 = vpop.f32.mrf.mxu0
      %v718 = vadd.f32 %v627, %v717
      %v719 = vpop.f32.mrf.mxu0
      %720 = vmatprep.mubr.bf16.mxu0 0
      %721 = vmatmul.mubr.bf16.gmra.mxu0 %v254
      %v722 = vpop.f32.mrf.mxu0
      %v723 = vadd.f32 %v627, %v722
      %v724 = vpop.f32.mrf.mxu0
      %v725 = vpop.f32.mrf.mxu0
      %v726 = vadd.f32 %v627, %v725
      %v727 = vpop.f32.mrf.mxu0
      %728 = vmatprep.mubr.bf16.mxu0 0
      %729 = vmatmul.mubr.bf16.gmra.mxu0 %v257
      %v730 = vpop.f32.mrf.mxu0
      %v731 = vadd.f32 %v627, %v730
      %v732 = vpop.f32.mrf.mxu0
      %v733 = vpop.f32.mrf.mxu0
      %v734 = vadd.f32 %v627, %v733
      %v735 = vpop.f32.mrf.mxu0
      %736 = vmatprep.mubr.bf16.mxu0 0
      %737 = vmatmul.mubr.bf16.gmra.mxu0 %v260
      %v738 = vpop.f32.mrf.mxu0
      %v739 = vadd.f32 %v627, %v738
      %v740 = vpop.f32.mrf.mxu0
      %v741 = vpop.f32.mrf.mxu0
      %v742 = vadd.f32 %v627, %v741
      %v743 = vpop.f32.mrf.mxu0
      %744 = vmatprep.mubr.bf16.mxu0 0
      %745 = vmatmul.mubr.bf16.gmra.mxu0 %v263
      %v746 = vpop.f32.mrf.mxu0
      %v747 = vadd.f32 %v627, %v746
      %v748 = vpop.f32.mrf.mxu0
      %v749 = vpop.f32.mrf.mxu0
      %v750 = vadd.f32 %v627, %v749
      %v751 = vpop.f32.mrf.mxu0
      %752 = vmatprep.mubr.bf16.mxu0 0
      %753 = vmatmul.mubr.bf16.gmra.mxu0 %v266
      %v754 = vpop.f32.mrf.mxu0
      %v755 = vadd.f32 %v627, %v754
      %v756 = vpop.f32.mrf.mxu0
      %v757 = vpop.f32.mrf.mxu0
      %v758 = vadd.f32 %v627, %v757
      %v759 = vpop.f32.mrf.mxu0
      %760 = vmatprep.mubr.bf16.mxu0 0
      %761 = vmatmul.mubr.bf16.gmra.mxu0 %v269
      %v762 = vpop.f32.mrf.mxu0
      %v763 = vadd.f32 %v627, %v762
      %v764 = vpop.f32.mrf.mxu0
      %v765 = vpop.f32.mrf.mxu0
      %v766 = vadd.f32 %v627, %v765
      %v767 = vpop.f32.mrf.mxu0
      %768 = vmatprep.mubr.bf16.mxu0 0
      %769 = vmatmul.mubr.bf16.gmra.mxu0 %v272
      %v770 = vpop.f32.mrf.mxu0
      %v771 = vadd.f32 %v627, %v770
      %v772 = vpop.f32.mrf.mxu0
      %v773 = vpop.f32.mrf.mxu0
      %v774 = vadd.f32 %v627, %v773
      %v775 = vpop.f32.mrf.mxu0
      %776 = vmatprep.mubr.bf16.mxu0 0
      %777 = vmatmul.mubr.bf16.gmra.mxu0 %v275
      %v778 = vpop.f32.mrf.mxu0
      %v779 = vadd.f32 %v627, %v778
      %v780 = vpop.f32.mrf.mxu0
      %v781 = vpop.f32.mrf.mxu0
      %v782 = vadd.f32 %v627, %v781
      %v783 = vpop.f32.mrf.mxu0
      %784 = vmatprep.mubr.bf16.mxu0 0
      %785 = vmatmul.mubr.bf16.gmra.mxu0 %v278
      %v786 = vpop.f32.mrf.mxu0
      %v787 = vadd.f32 %v627, %v786
      %v788 = vpop.f32.mrf.mxu0
      %v789 = vpop.f32.mrf.mxu0
      %v790 = vadd.f32 %v627, %v789
      %v791 = vpop.f32.mrf.mxu0
      %792 = vdwg.mxu0
      %v793 = vlaneseq
      %v794 = vand.u32 %v793, 127
      %vm795 = vcmp.ge.s32.totalorder %v794, 0
      %vm796 = vcmp.lt.s32.totalorder %v794, 2
      %vm797 = vmand %vm795, %vm796
      %v798 = vsel %vm797, 1, 0
      %v799 = vcvt.s32.f32 %v798
      %v800 = vmul.f32 %v493, %v799
      %v801 = vmul.f32 %v496, %v799
      %v802 = vmul.f32 %v501, %v799
      %v803 = vmul.f32 %v504, %v799
      %v804 = vmul.f32 %v509, %v799
      %v805 = vmul.f32 %v512, %v799
      %v806 = vmul.f32 %v517, %v799
      %v807 = vmul.f32 %v520, %v799
      %v808 = vmul.f32 %v525, %v799
      %v809 = vmul.f32 %v528, %v799
      %v810 = vmul.f32 %v533, %v799
      %v811 = vmul.f32 %v536, %v799
      %v812 = vmul.f32 %v541, %v799
      %v813 = vmul.f32 %v544, %v799
      %v814 = vmul.f32 %v549, %v799
      %v815 = vmul.f32 %v552, %v799
      %v816 = vmul.f32 %v557, %v799
      %v817 = vmul.f32 %v560, %v799
      %v818 = vmul.f32 %v565, %v799
      %v819 = vmul.f32 %v568, %v799
      %v820 = vmul.f32 %v573, %v799
      %v821 = vmul.f32 %v576, %v799
      %v822 = vmul.f32 %v581, %v799
      %v823 = vmul.f32 %v584, %v799
      %v824 = vmul.f32 %v589, %v799
      %v825 = vmul.f32 %v592, %v799
      %v826 = vmul.f32 %v597, %v799
      %v827 = vmul.f32 %v600, %v799
      %v828 = vmul.f32 %v605, %v799
      %v829 = vmul.f32 %v608, %v799
      %v830 = vmul.f32 %v613, %v799
      %v831 = vmul.f32 %v616, %v799
      %v833 = vsel %vm231, %v319, 0
      %v836 = vsel %vm231, %v322, 0
      %v839 = vsel %vm231, %v327, 0
      %v842 = vsel %vm231, %v330, 0
      %v845 = vsel %vm231, %v335, 0
      %v848 = vsel %vm231, %v338, 0
      %v851 = vsel %vm231, %v343, 0
      %v854 = vsel %vm231, %v346, 0
      %v857 = vsel %vm231, %v351, 0
      %v860 = vsel %vm231, %v354, 0
      %v863 = vsel %vm231, %v359, 0
      %v866 = vsel %vm231, %v362, 0
      %v869 = vsel %vm231, %v367, 0
      %v872 = vsel %vm231, %v370, 0
      %v875 = vsel %vm231, %v375, 0
      %v878 = vsel %vm231, %v378, 0
      %v881 = vsel %vm231, %v383, 0
      %v884 = vsel %vm231, %v386, 0
      %v887 = vsel %vm231, %v391, 0
      %v890 = vsel %vm231, %v394, 0
      %v893 = vsel %vm231, %v399, 0
      %v896 = vsel %vm231, %v402, 0
      %v899 = vsel %vm231, %v407, 0
      %v902 = vsel %vm231, %v410, 0
      %v905 = vsel %vm231, %v415, 0
      %v908 = vsel %vm231, %v418, 0
      %v911 = vsel %vm231, %v423, 0
      %v914 = vsel %vm231, %v426, 0
      %v917 = vsel %vm231, %v431, 0
      %v920 = vsel %vm231, %v434, 0
      %v923 = vsel %vm231, %v439, 0
      %v926 = vsel %vm231, %v442, 0
      %v929 = vsel %vm231, %v800, 0
      %v932 = vsel %vm231, %v801, 0
      %v935 = vsel %vm231, %v802, 0
      %v938 = vsel %vm231, %v803, 0
      %v941 = vsel %vm231, %v804, 0
      %v944 = vsel %vm231, %v805, 0
      %v947 = vsel %vm231, %v806, 0
      %v950 = vsel %vm231, %v807, 0
      %v953 = vsel %vm231, %v808, 0
      %v956 = vsel %vm231, %v809, 0
      %v959 = vsel %vm231, %v810, 0
      %v962 = vsel %vm231, %v811, 0
      %v965 = vsel %vm231, %v812, 0
      %v968 = vsel %vm231, %v813, 0
      %v971 = vsel %vm231, %v814, 0
      %v974 = vsel %vm231, %v815, 0
      %v977 = vsel %vm231, %v816, 0
      %v980 = vsel %vm231, %v817, 0
      %v983 = vsel %vm231, %v818, 0
      %v986 = vsel %vm231, %v819, 0
      %v989 = vsel %vm231, %v820, 0
      %v992 = vsel %vm231, %v821, 0
      %v995 = vsel %vm231, %v822, 0
      %v998 = vsel %vm231, %v823, 0
      %v1001 = vsel %vm231, %v824, 0
      %v1004 = vsel %vm231, %v825, 0
      %v1007 = vsel %vm231, %v826, 0
      %v1010 = vsel %vm231, %v827, 0
      %v1013 = vsel %vm231, %v828, 0
      %v1016 = vsel %vm231, %v829, 0
      %v1019 = vsel %vm231, %v830, 0
      %v1022 = vsel %vm231, %v831, 0
      %1024 = vmatprep.subr.mxu0 0.0
      %1025 = vmatpush1.xpose.msra.mxu0 %v974
      %1026 = vmatprep.subr.mxu0 0.0
      %1027 = vmatpush1.xpose.msra.mxu0 %v971
      %1028 = vmatprep.subr.mxu0 0.0
      %1029 = vmatpush1.xpose.msra.mxu0 %v968
      %1030 = vmatprep.subr.mxu0 0.0
      %1031 = vmatpush1.xpose.msra.mxu0 %v965
      %1032 = vmatprep.subr.mxu0 0.0
      %1033 = vmatpush1.xpose.msra.mxu0 %v962
      %1034 = vmatprep.subr.mxu0 0.0
      %1035 = vmatpush1.xpose.msra.mxu0 %v959
      %1036 = vmatprep.subr.mxu0 0.0
      %1037 = vmatpush1.xpose.msra.mxu0 %v956
      %1038 = vmatprep.subr.mxu0 0.0
      %1039 = vmatpush1.xpose.msra.mxu0 %v953
      %1040 = vmatprep.subr.mxu0 0.0
      %1041 = vmatpush1.xpose.msra.mxu0 %v950
      %1042 = vmatprep.subr.mxu0 0.0
      %1043 = vmatpush1.xpose.msra.mxu0 %v947
      %1044 = vmatprep.subr.mxu0 0.0
      %1045 = vmatpush1.xpose.msra.mxu0 %v944
      %1046 = vmatprep.subr.mxu0 0.0
      %1047 = vmatpush1.xpose.msra.mxu0 %v941
      %1048 = vmatprep.subr.mxu0 0.0
      %1049 = vmatpush1.xpose.msra.mxu0 %v938
      %1050 = vmatprep.subr.mxu0 0.0
      %1051 = vmatpush1.xpose.msra.mxu0 %v935
      %1052 = vmatprep.subr.mxu0 0.0
      %1053 = vmatpush1.xpose.msra.mxu0 %v932
      %1054 = vmatprep.subr.mxu0 0.0
      %1055 = vmatpush1.xpose.msra.mxu0 %v929
      %1056 = vmatprep.subr.mxu0 0.0
      %1057 = vmatpush2.xpose.msra.mxu0 %v1022
      %1058 = vmatprep.subr.mxu0 0.0
      %1059 = vmatpush2.xpose.msra.mxu0 %v1019
      %1060 = vmatprep.subr.mxu0 0.0
      %1061 = vmatpush2.xpose.msra.mxu0 %v1016
      %1062 = vmatprep.subr.mxu0 0.0
      %1063 = vmatpush2.xpose.msra.mxu0 %v1013
      %1064 = vmatprep.subr.mxu0 0.0
      %1065 = vmatpush2.xpose.msra.mxu0 %v1010
      %1066 = vmatprep.subr.mxu0 0.0
      %1067 = vmatpush2.xpose.msra.mxu0 %v1007
      %1068 = vmatprep.subr.mxu0 0.0
      %1069 = vmatpush2.xpose.msra.mxu0 %v1004
      %1070 = vmatprep.subr.mxu0 0.0
      %1071 = vmatpush2.xpose.msra.mxu0 %v1001
      %1072 = vmatprep.subr.mxu0 0.0
      %1073 = vmatpush2.xpose.msra.mxu0 %v998
      %1074 = vmatprep.subr.mxu0 0.0
      %1075 = vmatpush2.xpose.msra.mxu0 %v995
      %1076 = vmatprep.subr.mxu0 0.0
      %1077 = vmatpush2.xpose.msra.mxu0 %v992
      %1078 = vmatprep.subr.mxu0 0.0
      %1079 = vmatpush2.xpose.msra.mxu0 %v989
      %1080 = vmatprep.subr.mxu0 0.0
      %1081 = vmatpush2.xpose.msra.mxu0 %v986
      %1082 = vmatprep.subr.mxu0 0.0
      %1083 = vmatpush2.xpose.msra.mxu0 %v983
      %1084 = vmatprep.subr.mxu0 0.0
      %1085 = vmatpush2.xpose.msra.mxu0 %v980
      %1086 = vmatprep.subr.mxu0 0.0
      %1087 = vmatpush2.xpose.msra.mxu0 %v977
      %1088 = vmatprep.mubr.f32.mxu0 0.0
      %1089 = vmatmul.mubr.f32.gmra.mxu0 %v833
      %v1090 = vpop.f32.mrf.mxu0
      %v1091 = vadd.f32 0.0, %v1090
      %v1092 = vpop.f32.mrf.mxu0
      %v1093 = vadd.f32 0.0, %v1092
      %1094 = vmatprep.mubr.f32.mxu0 0.0
      %1095 = vmatmul.mubr.f32.gmra.mxu0 %v836
      %v1096 = vpop.f32.mrf.mxu0
      %v1097 = vadd.f32 0.0, %v1096
      %v1098 = vpop.f32.mrf.mxu0
      %v1099 = vadd.f32 0.0, %v1098
      %1100 = vmatprep.mubr.f32.mxu0 0.0
      %1101 = vmatmul.mubr.f32.gmra.mxu0 %v839
      %v1102 = vpop.f32.mrf.mxu0
      %v1103 = vadd.f32 0.0, %v1102
      %v1104 = vpop.f32.mrf.mxu0
      %v1105 = vadd.f32 0.0, %v1104
      %1106 = vmatprep.mubr.f32.mxu0 0.0
      %1107 = vmatmul.mubr.f32.gmra.mxu0 %v842
      %v1108 = vpop.f32.mrf.mxu0
      %v1109 = vadd.f32 0.0, %v1108
      %v1110 = vpop.f32.mrf.mxu0
      %v1111 = vadd.f32 0.0, %v1110
      %1112 = vmatprep.mubr.f32.mxu0 0.0
      %1113 = vmatmul.mubr.f32.gmra.mxu0 %v845
      %v1114 = vpop.f32.mrf.mxu0
      %v1115 = vadd.f32 0.0, %v1114
      %v1116 = vpop.f32.mrf.mxu0
      %v1117 = vadd.f32 0.0, %v1116
      %1118 = vmatprep.mubr.f32.mxu0 0.0
      %1119 = vmatmul.mubr.f32.gmra.mxu0 %v848
      %v1120 = vpop.f32.mrf.mxu0
      %v1121 = vadd.f32 0.0, %v1120
      %v1122 = vpop.f32.mrf.mxu0
      %v1123 = vadd.f32 0.0, %v1122
      %1124 = vmatprep.mubr.f32.mxu0 0.0
      %1125 = vmatmul.mubr.f32.gmra.mxu0 %v851
      %v1126 = vpop.f32.mrf.mxu0
      %v1127 = vadd.f32 0.0, %v1126
      %v1128 = vpop.f32.mrf.mxu0
      %v1129 = vadd.f32 0.0, %v1128
      %1130 = vmatprep.mubr.f32.mxu0 0.0
      %1131 = vmatmul.mubr.f32.gmra.mxu0 %v854
      %v1132 = vpop.f32.mrf.mxu0
      %v1133 = vadd.f32 0.0, %v1132
      %v1134 = vpop.f32.mrf.mxu0
      %v1135 = vadd.f32 0.0, %v1134
      %1136 = vmatprep.mubr.f32.mxu0 0.0
      %1137 = vmatmul.mubr.f32.gmra.mxu0 %v857
      %v1138 = vpop.f32.mrf.mxu0
      %v1139 = vadd.f32 0.0, %v1138
      %v1140 = vpop.f32.mrf.mxu0
      %v1141 = vadd.f32 0.0, %v1140
      %1142 = vmatprep.mubr.f32.mxu0 0.0
      %1143 = vmatmul.mubr.f32.gmra.mxu0 %v860
      %v1144 = vpop.f32.mrf.mxu0
      %v1145 = vadd.f32 0.0, %v1144
      %v1146 = vpop.f32.mrf.mxu0
      %v1147 = vadd.f32 0.0, %v1146
      %1148 = vmatprep.mubr.f32.mxu0 0.0
      %1149 = vmatmul.mubr.f32.gmra.mxu0 %v863
      %v1150 = vpop.f32.mrf.mxu0
      %v1151 = vadd.f32 0.0, %v1150
      %v1152 = vpop.f32.mrf.mxu0
      %v1153 = vadd.f32 0.0, %v1152
      %1154 = vmatprep.mubr.f32.mxu0 0.0
      %1155 = vmatmul.mubr.f32.gmra.mxu0 %v866
      %v1156 = vpop.f32.mrf.mxu0
      %v1157 = vadd.f32 0.0, %v1156
      %v1158 = vpop.f32.mrf.mxu0
      %v1159 = vadd.f32 0.0, %v1158
      %1160 = vmatprep.mubr.f32.mxu0 0.0
      %1161 = vmatmul.mubr.f32.gmra.mxu0 %v869
      %v1162 = vpop.f32.mrf.mxu0
      %v1163 = vadd.f32 0.0, %v1162
      %v1164 = vpop.f32.mrf.mxu0
      %v1165 = vadd.f32 0.0, %v1164
      %1166 = vmatprep.mubr.f32.mxu0 0.0
      %1167 = vmatmul.mubr.f32.gmra.mxu0 %v872
      %v1168 = vpop.f32.mrf.mxu0
      %v1169 = vadd.f32 0.0, %v1168
      %v1170 = vpop.f32.mrf.mxu0
      %v1171 = vadd.f32 0.0, %v1170
      %1172 = vmatprep.mubr.f32.mxu0 0.0
      %1173 = vmatmul.mubr.f32.gmra.mxu0 %v875
      %v1174 = vpop.f32.mrf.mxu0
      %v1175 = vadd.f32 0.0, %v1174
      %v1176 = vpop.f32.mrf.mxu0
      %v1177 = vadd.f32 0.0, %v1176
      %1178 = vmatprep.mubr.f32.mxu0 0.0
      %1179 = vmatmul.mubr.f32.gmra.mxu0 %v878
      %v1180 = vpop.f32.mrf.mxu0
      %v1181 = vadd.f32 0.0, %v1180
      %v1182 = vpop.f32.mrf.mxu0
      %v1183 = vadd.f32 0.0, %v1182
      %1184 = vmatprep.mubr.f32.mxu0 0.0
      %1185 = vmatmul.mubr.f32.gmra.mxu0 %v881
      %v1186 = vpop.f32.mrf.mxu0
      %v1187 = vadd.f32 0.0, %v1186
      %v1188 = vpop.f32.mrf.mxu0
      %v1189 = vadd.f32 0.0, %v1188
      %1190 = vmatprep.mubr.f32.mxu0 0.0
      %1191 = vmatmul.mubr.f32.gmra.mxu0 %v884
      %v1192 = vpop.f32.mrf.mxu0
      %v1193 = vadd.f32 0.0, %v1192
      %v1194 = vpop.f32.mrf.mxu0
      %v1195 = vadd.f32 0.0, %v1194
      %1196 = vmatprep.mubr.f32.mxu0 0.0
      %1197 = vmatmul.mubr.f32.gmra.mxu0 %v887
      %v1198 = vpop.f32.mrf.mxu0
      %v1199 = vadd.f32 0.0, %v1198
      %v1200 = vpop.f32.mrf.mxu0
      %v1201 = vadd.f32 0.0, %v1200
      %1202 = vmatprep.mubr.f32.mxu0 0.0
      %1203 = vmatmul.mubr.f32.gmra.mxu0 %v890
      %v1204 = vpop.f32.mrf.mxu0
      %v1205 = vadd.f32 0.0, %v1204
      %v1206 = vpop.f32.mrf.mxu0
      %v1207 = vadd.f32 0.0, %v1206
      %1208 = vmatprep.mubr.f32.mxu0 0.0
      %1209 = vmatmul.mubr.f32.gmra.mxu0 %v893
      %v1210 = vpop.f32.mrf.mxu0
      %v1211 = vadd.f32 0.0, %v1210
      %v1212 = vpop.f32.mrf.mxu0
      %v1213 = vadd.f32 0.0, %v1212
      %1214 = vmatprep.mubr.f32.mxu0 0.0
      %1215 = vmatmul.mubr.f32.gmra.mxu0 %v896
      %v1216 = vpop.f32.mrf.mxu0
      %v1217 = vadd.f32 0.0, %v1216
      %v1218 = vpop.f32.mrf.mxu0
      %v1219 = vadd.f32 0.0, %v1218
      %1220 = vmatprep.mubr.f32.mxu0 0.0
      %1221 = vmatmul.mubr.f32.gmra.mxu0 %v899
      %v1222 = vpop.f32.mrf.mxu0
      %v1223 = vadd.f32 0.0, %v1222
      %v1224 = vpop.f32.mrf.mxu0
      %v1225 = vadd.f32 0.0, %v1224
      %1226 = vmatprep.mubr.f32.mxu0 0.0
      %1227 = vmatmul.mubr.f32.gmra.mxu0 %v902
      %v1228 = vpop.f32.mrf.mxu0
      %v1229 = vadd.f32 0.0, %v1228
      %v1230 = vpop.f32.mrf.mxu0
      %v1231 = vadd.f32 0.0, %v1230
      %1232 = vmatprep.mubr.f32.mxu0 0.0
      %1233 = vmatmul.mubr.f32.gmra.mxu0 %v905
      %v1234 = vpop.f32.mrf.mxu0
      %v1235 = vadd.f32 0.0, %v1234
      %v1236 = vpop.f32.mrf.mxu0
      %v1237 = vadd.f32 0.0, %v1236
      %1238 = vmatprep.mubr.f32.mxu0 0.0
      %1239 = vmatmul.mubr.f32.gmra.mxu0 %v908
      %v1240 = vpop.f32.mrf.mxu0
      %v1241 = vadd.f32 0.0, %v1240
      %v1242 = vpop.f32.mrf.mxu0
      %v1243 = vadd.f32 0.0, %v1242
      %1244 = vmatprep.mubr.f32.mxu0 0.0
      %1245 = vmatmul.mubr.f32.gmra.mxu0 %v911
      %v1246 = vpop.f32.mrf.mxu0
      %v1247 = vadd.f32 0.0, %v1246
      %v1248 = vpop.f32.mrf.mxu0
      %v1249 = vadd.f32 0.0, %v1248
      %1250 = vmatprep.mubr.f32.mxu0 0.0
      %1251 = vmatmul.mubr.f32.gmra.mxu0 %v914
      %v1252 = vpop.f32.mrf.mxu0
      %v1253 = vadd.f32 0.0, %v1252
      %v1254 = vpop.f32.mrf.mxu0
      %v1255 = vadd.f32 0.0, %v1254
      %1256 = vmatprep.mubr.f32.mxu0 0.0
      %1257 = vmatmul.mubr.f32.gmra.mxu0 %v917
      %v1258 = vpop.f32.mrf.mxu0
      %v1259 = vadd.f32 0.0, %v1258
      %v1260 = vpop.f32.mrf.mxu0
      %v1261 = vadd.f32 0.0, %v1260
      %1262 = vmatprep.mubr.f32.mxu0 0.0
      %1263 = vmatmul.mubr.f32.gmra.mxu0 %v920
      %v1264 = vpop.f32.mrf.mxu0
      %v1265 = vadd.f32 0.0, %v1264
      %v1266 = vpop.f32.mrf.mxu0
      %v1267 = vadd.f32 0.0, %v1266
      %1268 = vmatprep.mubr.f32.mxu0 0.0
      %1269 = vmatmul.mubr.f32.gmra.mxu0 %v923
      %v1270 = vpop.f32.mrf.mxu0
      %v1271 = vadd.f32 0.0, %v1270
      %v1272 = vpop.f32.mrf.mxu0
      %v1273 = vadd.f32 0.0, %v1272
      %1274 = vmatprep.mubr.f32.mxu0 0.0
      %1275 = vmatmul.mubr.f32.gmra.mxu0 %v926
      %v1276 = vpop.f32.mrf.mxu0
      %v1277 = vadd.f32 0.0, %v1276
      %v1278 = vpop.f32.mrf.mxu0
      %v1279 = vadd.f32 0.0, %v1278
      %1280 = vdwg.mxu0
      %v1281 = vmax.f32 %v1091, %v1093
      %1282 = vmax.xlane.f32.xlu0 %v1281
      %v1283 = vpop.xlane.xlu0 %1282
      %v1284 = vmax.f32 %v1097, %v1099
      %1285 = vmax.xlane.f32.xlu0 %v1284
      %v1286 = vpop.xlane.xlu0 %1285
      %v1287 = vmax.f32 %v1103, %v1105
      %1288 = vmax.xlane.f32.xlu0 %v1287
      %v1289 = vpop.xlane.xlu0 %1288
      %v1290 = vmax.f32 %v1109, %v1111
      %1291 = vmax.xlane.f32.xlu0 %v1290
      %v1292 = vpop.xlane.xlu0 %1291
      %v1293 = vmax.f32 %v1115, %v1117
      %1294 = vmax.xlane.f32.xlu0 %v1293
      %v1295 = vpop.xlane.xlu0 %1294
      %v1296 = vmax.f32 %v1121, %v1123
      %1297 = vmax.xlane.f32.xlu0 %v1296
      %v1298 = vpop.xlane.xlu0 %1297
      %v1299 = vmax.f32 %v1127, %v1129
      %1300 = vmax.xlane.f32.xlu0 %v1299
      %v1301 = vpop.xlane.xlu0 %1300
      %v1302 = vmax.f32 %v1133, %v1135
      %1303 = vmax.xlane.f32.xlu0 %v1302
      %v1304 = vpop.xlane.xlu0 %1303
      %v1305 = vmax.f32 %v1139, %v1141
      %1306 = vmax.xlane.f32.xlu0 %v1305
      %v1307 = vpop.xlane.xlu0 %1306
      %v1308 = vmax.f32 %v1145, %v1147
      %1309 = vmax.xlane.f32.xlu0 %v1308
      %v1310 = vpop.xlane.xlu0 %1309
      %v1311 = vmax.f32 %v1151, %v1153
      %1312 = vmax.xlane.f32.xlu0 %v1311
      %v1313 = vpop.xlane.xlu0 %1312
      %v1314 = vmax.f32 %v1157, %v1159
      %1315 = vmax.xlane.f32.xlu0 %v1314
      %v1316 = vpop.xlane.xlu0 %1315
      %v1317 = vmax.f32 %v1163, %v1165
      %1318 = vmax.xlane.f32.xlu0 %v1317
      %v1319 = vpop.xlane.xlu0 %1318
      %v1320 = vmax.f32 %v1169, %v1171
      %1321 = vmax.xlane.f32.xlu0 %v1320
      %v1322 = vpop.xlane.xlu0 %1321
      %v1323 = vmax.f32 %v1175, %v1177
      %1324 = vmax.xlane.f32.xlu0 %v1323
      %v1325 = vpop.xlane.xlu0 %1324
      %v1326 = vmax.f32 %v1181, %v1183
      %1327 = vmax.xlane.f32.xlu0 %v1326
      %v1328 = vpop.xlane.xlu0 %1327
      %v1329 = vmax.f32 %v1187, %v1189
      %1330 = vmax.xlane.f32.xlu0 %v1329
      %v1331 = vpop.xlane.xlu0 %1330
      %v1332 = vmax.f32 %v1193, %v1195
      %1333 = vmax.xlane.f32.xlu0 %v1332
      %v1334 = vpop.xlane.xlu0 %1333
      %v1335 = vmax.f32 %v1199, %v1201
      %1336 = vmax.xlane.f32.xlu0 %v1335
      %v1337 = vpop.xlane.xlu0 %1336
      %v1338 = vmax.f32 %v1205, %v1207
      %1339 = vmax.xlane.f32.xlu0 %v1338
      %v1340 = vpop.xlane.xlu0 %1339
      %v1341 = vmax.f32 %v1211, %v1213
      %1342 = vmax.xlane.f32.xlu0 %v1341
      %v1343 = vpop.xlane.xlu0 %1342
      %v1344 = vmax.f32 %v1217, %v1219
      %1345 = vmax.xlane.f32.xlu0 %v1344
      %v1346 = vpop.xlane.xlu0 %1345
      %v1347 = vmax.f32 %v1223, %v1225
      %1348 = vmax.xlane.f32.xlu0 %v1347
      %v1349 = vpop.xlane.xlu0 %1348
      %v1350 = vmax.f32 %v1229, %v1231
      %1351 = vmax.xlane.f32.xlu0 %v1350
      %v1352 = vpop.xlane.xlu0 %1351
      %v1353 = vmax.f32 %v1235, %v1237
      %1354 = vmax.xlane.f32.xlu0 %v1353
      %v1355 = vpop.xlane.xlu0 %1354
      %v1356 = vmax.f32 %v1241, %v1243
      %1357 = vmax.xlane.f32.xlu0 %v1356
      %v1358 = vpop.xlane.xlu0 %1357
      %v1359 = vmax.f32 %v1247, %v1249
      %1360 = vmax.xlane.f32.xlu0 %v1359
      %v1361 = vpop.xlane.xlu0 %1360
      %v1362 = vmax.f32 %v1253, %v1255
      %1363 = vmax.xlane.f32.xlu0 %v1362
      %v1364 = vpop.xlane.xlu0 %1363
      %v1365 = vmax.f32 %v1259, %v1261
      %1366 = vmax.xlane.f32.xlu0 %v1365
      %v1367 = vpop.xlane.xlu0 %1366
      %v1368 = vmax.f32 %v1265, %v1267
      %1369 = vmax.xlane.f32.xlu0 %v1368
      %v1370 = vpop.xlane.xlu0 %1369
      %v1371 = vmax.f32 %v1271, %v1273
      %1372 = vmax.xlane.f32.xlu0 %v1371
      %v1373 = vpop.xlane.xlu0 %1372
      %v1374 = vmax.f32 %v1277, %v1279
      %1375 = vmax.xlane.f32.xlu0 %v1374
      %v1376 = vpop.xlane.xlu0 %1375
      %v1377 = vsub.f32 %v1091, %v1283
      %v1378 = vsub.f32 %v1093, %v1283
      %v1379 = vsub.f32 %v1097, %v1286
      %v1380 = vsub.f32 %v1099, %v1286
      %v1381 = vsub.f32 %v1103, %v1289
      %v1382 = vsub.f32 %v1105, %v1289
      %v1383 = vsub.f32 %v1109, %v1292
      %v1384 = vsub.f32 %v1111, %v1292
      %v1385 = vsub.f32 %v1115, %v1295
      %v1386 = vsub.f32 %v1117, %v1295
      %v1387 = vsub.f32 %v1121, %v1298
      %v1388 = vsub.f32 %v1123, %v1298
      %v1389 = vsub.f32 %v1127, %v1301
      %v1390 = vsub.f32 %v1129, %v1301
      %v1391 = vsub.f32 %v1133, %v1304
      %v1392 = vsub.f32 %v1135, %v1304
      %v1393 = vsub.f32 %v1139, %v1307
      %v1394 = vsub.f32 %v1141, %v1307
      %v1395 = vsub.f32 %v1145, %v1310
      %v1396 = vsub.f32 %v1147, %v1310
      %v1397 = vsub.f32 %v1151, %v1313
      %v1398 = vsub.f32 %v1153, %v1313
      %v1399 = vsub.f32 %v1157, %v1316
      %v1400 = vsub.f32 %v1159, %v1316
      %v1401 = vsub.f32 %v1163, %v1319
      %v1402 = vsub.f32 %v1165, %v1319
      %v1403 = vsub.f32 %v1169, %v1322
      %v1404 = vsub.f32 %v1171, %v1322
      %v1405 = vsub.f32 %v1175, %v1325
      %v1406 = vsub.f32 %v1177, %v1325
      %v1407 = vsub.f32 %v1181, %v1328
      %v1408 = vsub.f32 %v1183, %v1328
      %v1409 = vsub.f32 %v1187, %v1331
      %v1410 = vsub.f32 %v1189, %v1331
      %v1411 = vsub.f32 %v1193, %v1334
      %v1412 = vsub.f32 %v1195, %v1334
      %v1413 = vsub.f32 %v1199, %v1337
      %v1414 = vsub.f32 %v1201, %v1337
      %v1415 = vsub.f32 %v1205, %v1340
      %v1416 = vsub.f32 %v1207, %v1340
      %v1417 = vsub.f32 %v1211, %v1343
      %v1418 = vsub.f32 %v1213, %v1343
      %v1419 = vsub.f32 %v1217, %v1346
      %v1420 = vsub.f32 %v1219, %v1346
      %v1421 = vsub.f32 %v1223, %v1349
      %v1422 = vsub.f32 %v1225, %v1349
      %v1423 = vsub.f32 %v1229, %v1352
      %v1424 = vsub.f32 %v1231, %v1352
      %v1425 = vsub.f32 %v1235, %v1355
      %v1426 = vsub.f32 %v1237, %v1355
      %v1427 = vsub.f32 %v1241, %v1358
      %v1428 = vsub.f32 %v1243, %v1358
      %v1429 = vsub.f32 %v1247, %v1361
      %v1430 = vsub.f32 %v1249, %v1361
      %v1431 = vsub.f32 %v1253, %v1364
      %v1432 = vsub.f32 %v1255, %v1364
      %v1433 = vsub.f32 %v1259, %v1367
      %v1434 = vsub.f32 %v1261, %v1367
      %v1435 = vsub.f32 %v1265, %v1370
      %v1436 = vsub.f32 %v1267, %v1370
      %v1437 = vsub.f32 %v1271, %v1373
      %v1438 = vsub.f32 %v1273, %v1373
      %v1439 = vsub.f32 %v1277, %v1376
      %v1440 = vsub.f32 %v1279, %v1376
      %v1441 = vmul.f32 %v1377, 1.442695
      %v1442 = vpow.pop %v1441
      %v1443 = vmul.f32 %v1378, 1.442695
      %v1444 = vpow.pop %v1443
      %v1445 = vmul.f32 %v1379, 1.442695
      %v1446 = vpow.pop %v1445
      %v1447 = vmul.f32 %v1380, 1.442695
      %v1448 = vpow.pop %v1447
      %v1449 = vmul.f32 %v1381, 1.442695
      %v1450 = vpow.pop %v1449
      %v1451 = vmul.f32 %v1382, 1.442695
      %v1452 = vpow.pop %v1451
      %v1453 = vmul.f32 %v1383, 1.442695
      %v1454 = vpow.pop %v1453
      %v1455 = vmul.f32 %v1384, 1.442695
      %v1456 = vpow.pop %v1455
      %v1457 = vmul.f32 %v1385, 1.442695
      %v1458 = vpow.pop %v1457
      %v1459 = vmul.f32 %v1386, 1.442695
      %v1460 = vpow.pop %v1459
      %v1461 = vmul.f32 %v1387, 1.442695
      %v1462 = vpow.pop %v1461
      %v1463 = vmul.f32 %v1388, 1.442695
      %v1464 = vpow.pop %v1463
      %v1465 = vmul.f32 %v1389, 1.442695
      %v1466 = vpow.pop %v1465
      %v1467 = vmul.f32 %v1390, 1.442695
      %v1468 = vpow.pop %v1467
      %v1469 = vmul.f32 %v1391, 1.442695
      %v1470 = vpow.pop %v1469
      %v1471 = vmul.f32 %v1392, 1.442695
      %v1472 = vpow.pop %v1471
      %v1473 = vmul.f32 %v1393, 1.442695
      %v1474 = vpow.pop %v1473
      %v1475 = vmul.f32 %v1394, 1.442695
      %v1476 = vpow.pop %v1475
      %v1477 = vmul.f32 %v1395, 1.442695
      %v1478 = vpow.pop %v1477
      %v1479 = vmul.f32 %v1396, 1.442695
      %v1480 = vpow.pop %v1479
      %v1481 = vmul.f32 %v1397, 1.442695
      %v1482 = vpow.pop %v1481
      %v1483 = vmul.f32 %v1398, 1.442695
      %v1484 = vpow.pop %v1483
      %v1485 = vmul.f32 %v1399, 1.442695
      %v1486 = vpow.pop %v1485
      %v1487 = vmul.f32 %v1400, 1.442695
      %v1488 = vpow.pop %v1487
      %v1489 = vmul.f32 %v1401, 1.442695
      %v1490 = vpow.pop %v1489
      %v1491 = vmul.f32 %v1402, 1.442695
      %v1492 = vpow.pop %v1491
      %v1493 = vmul.f32 %v1403, 1.442695
      %v1494 = vpow.pop %v1493
      %v1495 = vmul.f32 %v1404, 1.442695
      %v1496 = vpow.pop %v1495
      %v1497 = vmul.f32 %v1405, 1.442695
      %v1498 = vpow.pop %v1497
      %v1499 = vmul.f32 %v1406, 1.442695
      %v1500 = vpow.pop %v1499
      %v1501 = vmul.f32 %v1407, 1.442695
      %v1502 = vpow.pop %v1501
      %v1503 = vmul.f32 %v1408, 1.442695
      %v1504 = vpow.pop %v1503
      %v1505 = vmul.f32 %v1409, 1.442695
      %v1506 = vpow.pop %v1505
      %v1507 = vmul.f32 %v1410, 1.442695
      %v1508 = vpow.pop %v1507
      %v1509 = vmul.f32 %v1411, 1.442695
      %v1510 = vpow.pop %v1509
      %v1511 = vmul.f32 %v1412, 1.442695
      %v1512 = vpow.pop %v1511
      %v1513 = vmul.f32 %v1413, 1.442695
      %v1514 = vpow.pop %v1513
      %v1515 = vmul.f32 %v1414, 1.442695
      %v1516 = vpow.pop %v1515
      %v1517 = vmul.f32 %v1415, 1.442695
      %v1518 = vpow.pop %v1517
      %v1519 = vmul.f32 %v1416, 1.442695
      %v1520 = vpow.pop %v1519
      %v1521 = vmul.f32 %v1417, 1.442695
      %v1522 = vpow.pop %v1521
      %v1523 = vmul.f32 %v1418, 1.442695
      %v1524 = vpow.pop %v1523
      %v1525 = vmul.f32 %v1419, 1.442695
      %v1526 = vpow.pop %v1525
      %v1527 = vmul.f32 %v1420, 1.442695
      %v1528 = vpow.pop %v1527
      %v1529 = vmul.f32 %v1421, 1.442695
      %v1530 = vpow.pop %v1529
      %v1531 = vmul.f32 %v1422, 1.442695
      %v1532 = vpow.pop %v1531
      %v1533 = vmul.f32 %v1423, 1.442695
      %v1534 = vpow.pop %v1533
      %v1535 = vmul.f32 %v1424, 1.442695
      %v1536 = vpow.pop %v1535
      %v1537 = vmul.f32 %v1425, 1.442695
      %v1538 = vpow.pop %v1537
      %v1539 = vmul.f32 %v1426, 1.442695
      %v1540 = vpow.pop %v1539
      %v1541 = vmul.f32 %v1427, 1.442695
      %v1542 = vpow.pop %v1541
      %v1543 = vmul.f32 %v1428, 1.442695
      %v1544 = vpow.pop %v1543
      %v1545 = vmul.f32 %v1429, 1.442695
      %v1546 = vpow.pop %v1545
      %v1547 = vmul.f32 %v1430, 1.442695
      %v1548 = vpow.pop %v1547
      %v1549 = vmul.f32 %v1431, 1.442695
      %v1550 = vpow.pop %v1549
      %v1551 = vmul.f32 %v1432, 1.442695
      %v1552 = vpow.pop %v1551
      %v1553 = vmul.f32 %v1433, 1.442695
      %v1554 = vpow.pop %v1553
      %v1555 = vmul.f32 %v1434, 1.442695
      %v1556 = vpow.pop %v1555
      %v1557 = vmul.f32 %v1435, 1.442695
      %v1558 = vpow.pop %v1557
      %v1559 = vmul.f32 %v1436, 1.442695
      %v1560 = vpow.pop %v1559
      %v1561 = vmul.f32 %v1437, 1.442695
      %v1562 = vpow.pop %v1561
      %v1563 = vmul.f32 %v1438, 1.442695
      %v1564 = vpow.pop %v1563
      %v1565 = vmul.f32 %v1439, 1.442695
      %v1566 = vpow.pop %v1565
      %v1567 = vmul.f32 %v1440, 1.442695
      %v1568 = vpow.pop %v1567
      %v1569 = vadd.f32 %v1442, %v1444
      %1570 = vadd.xlane.f32.xlu0 %v1569
      %v1571 = vpop.xlane.xlu0 %1570
      %v1572 = vadd.f32 %v1446, %v1448
      %1573 = vadd.xlane.f32.xlu0 %v1572
      %v1574 = vpop.xlane.xlu0 %1573
      %v1575 = vadd.f32 %v1450, %v1452
      %1576 = vadd.xlane.f32.xlu0 %v1575
      %v1577 = vpop.xlane.xlu0 %1576
      %v1578 = vadd.f32 %v1454, %v1456
      %1579 = vadd.xlane.f32.xlu0 %v1578
      %v1580 = vpop.xlane.xlu0 %1579
      %v1581 = vadd.f32 %v1458, %v1460
      %1582 = vadd.xlane.f32.xlu0 %v1581
      %v1583 = vpop.xlane.xlu0 %1582
      %v1584 = vadd.f32 %v1462, %v1464
      %1585 = vadd.xlane.f32.xlu0 %v1584
      %v1586 = vpop.xlane.xlu0 %1585
      %v1587 = vadd.f32 %v1466, %v1468
      %1588 = vadd.xlane.f32.xlu0 %v1587
      %v1589 = vpop.xlane.xlu0 %1588
      %v1590 = vadd.f32 %v1470, %v1472
      %1591 = vadd.xlane.f32.xlu0 %v1590
      %v1592 = vpop.xlane.xlu0 %1591
      %v1593 = vadd.f32 %v1474, %v1476
      %1594 = vadd.xlane.f32.xlu0 %v1593
      %v1595 = vpop.xlane.xlu0 %1594
      %v1596 = vadd.f32 %v1478, %v1480
      %1597 = vadd.xlane.f32.xlu0 %v1596
      %v1598 = vpop.xlane.xlu0 %1597
      %v1599 = vadd.f32 %v1482, %v1484
      %1600 = vadd.xlane.f32.xlu0 %v1599
      %v1601 = vpop.xlane.xlu0 %1600
      %v1602 = vadd.f32 %v1486, %v1488
      %1603 = vadd.xlane.f32.xlu0 %v1602
      %v1604 = vpop.xlane.xlu0 %1603
      %v1605 = vadd.f32 %v1490, %v1492
      %1606 = vadd.xlane.f32.xlu0 %v1605
      %v1607 = vpop.xlane.xlu0 %1606
      %v1608 = vadd.f32 %v1494, %v1496
      %1609 = vadd.xlane.f32.xlu0 %v1608
      %v1610 = vpop.xlane.xlu0 %1609
      %v1611 = vadd.f32 %v1498, %v1500
      %1612 = vadd.xlane.f32.xlu0 %v1611
      %v1613 = vpop.xlane.xlu0 %1612
      %v1614 = vadd.f32 %v1502, %v1504
      %1615 = vadd.xlane.f32.xlu0 %v1614
      %v1616 = vpop.xlane.xlu0 %1615
      %v1617 = vadd.f32 %v1506, %v1508
      %1618 = vadd.xlane.f32.xlu0 %v1617
      %v1619 = vpop.xlane.xlu0 %1618
      %v1620 = vadd.f32 %v1510, %v1512
      %1621 = vadd.xlane.f32.xlu0 %v1620
      %v1622 = vpop.xlane.xlu0 %1621
      %v1623 = vadd.f32 %v1514, %v1516
      %1624 = vadd.xlane.f32.xlu0 %v1623
      %v1625 = vpop.xlane.xlu0 %1624
      %v1626 = vadd.f32 %v1518, %v1520
      %1627 = vadd.xlane.f32.xlu0 %v1626
      %v1628 = vpop.xlane.xlu0 %1627
      %v1629 = vadd.f32 %v1522, %v1524
      %1630 = vadd.xlane.f32.xlu0 %v1629
      %v1631 = vpop.xlane.xlu0 %1630
      %v1632 = vadd.f32 %v1526, %v1528
      %1633 = vadd.xlane.f32.xlu0 %v1632
      %v1634 = vpop.xlane.xlu0 %1633
      %v1635 = vadd.f32 %v1530, %v1532
      %1636 = vadd.xlane.f32.xlu0 %v1635
      %v1637 = vpop.xlane.xlu0 %1636
      %v1638 = vadd.f32 %v1534, %v1536
      %1639 = vadd.xlane.f32.xlu0 %v1638
      %v1640 = vpop.xlane.xlu0 %1639
      %v1641 = vadd.f32 %v1538, %v1540
      %1642 = vadd.xlane.f32.xlu0 %v1641
      %v1643 = vpop.xlane.xlu0 %1642
      %v1644 = vadd.f32 %v1542, %v1544
      %1645 = vadd.xlane.f32.xlu0 %v1644
      %v1646 = vpop.xlane.xlu0 %1645
      %v1647 = vadd.f32 %v1546, %v1548
      %1648 = vadd.xlane.f32.xlu0 %v1647
      %v1649 = vpop.xlane.xlu0 %1648
      %v1650 = vadd.f32 %v1550, %v1552
      %1651 = vadd.xlane.f32.xlu0 %v1650
      %v1652 = vpop.xlane.xlu0 %1651
      %v1653 = vadd.f32 %v1554, %v1556
      %1654 = vadd.xlane.f32.xlu0 %v1653
      %v1655 = vpop.xlane.xlu0 %1654
      %v1656 = vadd.f32 %v1558, %v1560
      %1657 = vadd.xlane.f32.xlu0 %v1656
      %v1658 = vpop.xlane.xlu0 %1657
      %v1659 = vadd.f32 %v1562, %v1564
      %1660 = vadd.xlane.f32.xlu0 %v1659
      %v1661 = vpop.xlane.xlu0 %1660
      %v1662 = vadd.f32 %v1566, %v1568
      %1663 = vadd.xlane.f32.xlu0 %v1662
      %v1664 = vpop.xlane.xlu0 %1663
      %v1665 = vrcp.pop %v1571
      %v1666 = vrcp.pop %v1574
      %v1667 = vrcp.pop %v1577
      %v1668 = vrcp.pop %v1580
      %v1669 = vrcp.pop %v1583
      %v1670 = vrcp.pop %v1586
      %v1671 = vrcp.pop %v1589
      %v1672 = vrcp.pop %v1592
      %v1673 = vrcp.pop %v1595
      %v1674 = vrcp.pop %v1598
      %v1675 = vrcp.pop %v1601
      %v1676 = vrcp.pop %v1604
      %v1677 = vrcp.pop %v1607
      %v1678 = vrcp.pop %v1610
      %v1679 = vrcp.pop %v1613
      %v1680 = vrcp.pop %v1616
      %v1681 = vrcp.pop %v1619
      %v1682 = vrcp.pop %v1622
      %v1683 = vrcp.pop %v1625
      %v1684 = vrcp.pop %v1628
      %v1685 = vrcp.pop %v1631
      %v1686 = vrcp.pop %v1634
      %v1687 = vrcp.pop %v1637
      %v1688 = vrcp.pop %v1640
      %v1689 = vrcp.pop %v1643
      %v1690 = vrcp.pop %v1646
      %v1691 = vrcp.pop %v1649
      %v1692 = vrcp.pop %v1652
      %v1693 = vrcp.pop %v1655
      %v1694 = vrcp.pop %v1658
      %v1695 = vrcp.pop %v1661
      %v1696 = vrcp.pop %v1664
      %v1697 = vmul.f32 %v1442, %v1665
      %v1698 = vmul.f32 %v1444, %v1665
      %v1699 = vmul.f32 %v1446, %v1666
      %v1700 = vmul.f32 %v1448, %v1666
      %v1701 = vmul.f32 %v1450, %v1667
      %v1702 = vmul.f32 %v1452, %v1667
      %v1703 = vmul.f32 %v1454, %v1668
      %v1704 = vmul.f32 %v1456, %v1668
      %v1705 = vmul.f32 %v1458, %v1669
      %v1706 = vmul.f32 %v1460, %v1669
      %v1707 = vmul.f32 %v1462, %v1670
      %v1708 = vmul.f32 %v1464, %v1670
      %v1709 = vmul.f32 %v1466, %v1671
      %v1710 = vmul.f32 %v1468, %v1671
      %v1711 = vmul.f32 %v1470, %v1672
      %v1712 = vmul.f32 %v1472, %v1672
      %v1713 = vmul.f32 %v1474, %v1673
      %v1714 = vmul.f32 %v1476, %v1673
      %v1715 = vmul.f32 %v1478, %v1674
      %v1716 = vmul.f32 %v1480, %v1674
      %v1717 = vmul.f32 %v1482, %v1675
      %v1718 = vmul.f32 %v1484, %v1675
      %v1719 = vmul.f32 %v1486, %v1676
      %v1720 = vmul.f32 %v1488, %v1676
      %v1721 = vmul.f32 %v1490, %v1677
      %v1722 = vmul.f32 %v1492, %v1677
      %v1723 = vmul.f32 %v1494, %v1678
      %v1724 = vmul.f32 %v1496, %v1678
      %v1725 = vmul.f32 %v1498, %v1679
      %v1726 = vmul.f32 %v1500, %v1679
      %v1727 = vmul.f32 %v1502, %v1680
      %v1728 = vmul.f32 %v1504, %v1680
      %v1729 = vmul.f32 %v1506, %v1681
      %v1730 = vmul.f32 %v1508, %v1681
      %v1731 = vmul.f32 %v1510, %v1682
      %v1732 = vmul.f32 %v1512, %v1682
      %v1733 = vmul.f32 %v1514, %v1683
      %v1734 = vmul.f32 %v1516, %v1683
      %v1735 = vmul.f32 %v1518, %v1684
      %v1736 = vmul.f32 %v1520, %v1684
      %v1737 = vmul.f32 %v1522, %v1685
      %v1738 = vmul.f32 %v1524, %v1685
      %v1739 = vmul.f32 %v1526, %v1686
      %v1740 = vmul.f32 %v1528, %v1686
      %v1741 = vmul.f32 %v1530, %v1687
      %v1742 = vmul.f32 %v1532, %v1687
      %v1743 = vmul.f32 %v1534, %v1688
      %v1744 = vmul.f32 %v1536, %v1688
      %v1745 = vmul.f32 %v1538, %v1689
      %v1746 = vmul.f32 %v1540, %v1689
      %v1747 = vmul.f32 %v1542, %v1690
      %v1748 = vmul.f32 %v1544, %v1690
      %v1749 = vmul.f32 %v1546, %v1691
      %v1750 = vmul.f32 %v1548, %v1691
      %v1751 = vmul.f32 %v1550, %v1692
      %v1752 = vmul.f32 %v1552, %v1692
      %v1753 = vmul.f32 %v1554, %v1693
      %v1754 = vmul.f32 %v1556, %v1693
      %v1755 = vmul.f32 %v1558, %v1694
      %v1756 = vmul.f32 %v1560, %v1694
      %v1757 = vmul.f32 %v1562, %v1695
      %v1758 = vmul.f32 %v1564, %v1695
      %v1759 = vmul.f32 %v1566, %v1696
      %v1760 = vmul.f32 %v1568, %v1696
      %v1761 = vmul.f32 %v667, %v799
      %v1762 = vmul.f32 %v670, %v799
      %v1763 = vmul.f32 %v675, %v799
      %v1764 = vmul.f32 %v678, %v799
      %v1765 = vmul.f32 %v683, %v799
      %v1766 = vmul.f32 %v686, %v799
      %v1767 = vmul.f32 %v691, %v799
      %v1768 = vmul.f32 %v694, %v799
      %v1769 = vmul.f32 %v699, %v799
      %v1770 = vmul.f32 %v702, %v799
      %v1771 = vmul.f32 %v707, %v799
      %v1772 = vmul.f32 %v710, %v799
      %v1773 = vmul.f32 %v715, %v799
      %v1774 = vmul.f32 %v718, %v799
      %v1775 = vmul.f32 %v723, %v799
      %v1776 = vmul.f32 %v726, %v799
      %v1777 = vmul.f32 %v731, %v799
      %v1778 = vmul.f32 %v734, %v799
      %v1779 = vmul.f32 %v739, %v799
      %v1780 = vmul.f32 %v742, %v799
      %v1781 = vmul.f32 %v747, %v799
      %v1782 = vmul.f32 %v750, %v799
      %v1783 = vmul.f32 %v755, %v799
      %v1784 = vmul.f32 %v758, %v799
      %v1785 = vmul.f32 %v763, %v799
      %v1786 = vmul.f32 %v766, %v799
      %v1787 = vmul.f32 %v771, %v799
      %v1788 = vmul.f32 %v774, %v799
      %v1789 = vmul.f32 %v779, %v799
      %v1790 = vmul.f32 %v782, %v799
      %v1791 = vmul.f32 %v787, %v799
      %v1792 = vmul.f32 %v790, %v799
      %vm1793 = vcmp.ge.s32.totalorder %v794, 2
      %vm1794 = vcmp.lt.s32.totalorder %v794, 4
      %vm1795 = vmand %vm1793, %vm1794
      %v1796 = vsel %vm1795, 1, 0
      %v1797 = vcvt.s32.f32 %v1796
      %v1798 = vmul.f32 %v493, %v1797
      %v1799 = vmul.f32 %v496, %v1797
      %v1800 = vmul.f32 %v501, %v1797
      %v1801 = vmul.f32 %v504, %v1797
      %v1802 = vmul.f32 %v509, %v1797
      %v1803 = vmul.f32 %v512, %v1797
      %v1804 = vmul.f32 %v517, %v1797
      %v1805 = vmul.f32 %v520, %v1797
      %v1806 = vmul.f32 %v525, %v1797
      %v1807 = vmul.f32 %v528, %v1797
      %v1808 = vmul.f32 %v533, %v1797
      %v1809 = vmul.f32 %v536, %v1797
      %v1810 = vmul.f32 %v541, %v1797
      %v1811 = vmul.f32 %v544, %v1797
      %v1812 = vmul.f32 %v549, %v1797
      %v1813 = vmul.f32 %v552, %v1797
      %v1814 = vmul.f32 %v557, %v1797
      %v1815 = vmul.f32 %v560, %v1797
      %v1816 = vmul.f32 %v565, %v1797
      %v1817 = vmul.f32 %v568, %v1797
      %v1818 = vmul.f32 %v573, %v1797
      %v1819 = vmul.f32 %v576, %v1797
      %v1820 = vmul.f32 %v581, %v1797
      %v1821 = vmul.f32 %v584, %v1797
      %v1822 = vmul.f32 %v589, %v1797
      %v1823 = vmul.f32 %v592, %v1797
      %v1824 = vmul.f32 %v597, %v1797
      %v1825 = vmul.f32 %v600, %v1797
      %v1826 = vmul.f32 %v605, %v1797
      %v1827 = vmul.f32 %v608, %v1797
      %v1828 = vmul.f32 %v613, %v1797
      %v1829 = vmul.f32 %v616, %v1797
      %v1831 = vsel %vm231, %v1798, 0
      %v1834 = vsel %vm231, %v1799, 0
      %v1837 = vsel %vm231, %v1800, 0
      %v1840 = vsel %vm231, %v1801, 0
      %v1843 = vsel %vm231, %v1802, 0
      %v1846 = vsel %vm231, %v1803, 0
      %v1849 = vsel %vm231, %v1804, 0
      %v1852 = vsel %vm231, %v1805, 0
      %v1855 = vsel %vm231, %v1806, 0
      %v1858 = vsel %vm231, %v1807, 0
      %v1861 = vsel %vm231, %v1808, 0
      %v1864 = vsel %vm231, %v1809, 0
      %v1867 = vsel %vm231, %v1810, 0
      %v1870 = vsel %vm231, %v1811, 0
      %v1873 = vsel %vm231, %v1812, 0
      %v1876 = vsel %vm231, %v1813, 0
      %v1879 = vsel %vm231, %v1814, 0
      %v1882 = vsel %vm231, %v1815, 0
      %v1885 = vsel %vm231, %v1816, 0
      %v1888 = vsel %vm231, %v1817, 0
      %v1891 = vsel %vm231, %v1818, 0
      %v1894 = vsel %vm231, %v1819, 0
      %v1897 = vsel %vm231, %v1820, 0
      %v1900 = vsel %vm231, %v1821, 0
      %v1903 = vsel %vm231, %v1822, 0
      %v1906 = vsel %vm231, %v1823, 0
      %v1909 = vsel %vm231, %v1824, 0
      %v1912 = vsel %vm231, %v1825, 0
      %v1915 = vsel %vm231, %v1826, 0
      %v1918 = vsel %vm231, %v1827, 0
      %v1921 = vsel %vm231, %v1828, 0
      %v1924 = vsel %vm231, %v1829, 0
      %1926 = vmatprep.subr.mxu0 0.0
      %1927 = vmatpush1.xpose.msra.mxu0 %v1876
      %1928 = vmatprep.subr.mxu0 0.0
      %1929 = vmatpush1.xpose.msra.mxu0 %v1873
      %1930 = vmatprep.subr.mxu0 0.0
      %1931 = vmatpush1.xpose.msra.mxu0 %v1870
      %1932 = vmatprep.subr.mxu0 0.0
      %1933 = vmatpush1.xpose.msra.mxu0 %v1867
      %1934 = vmatprep.subr.mxu0 0.0
      %1935 = vmatpush1.xpose.msra.mxu0 %v1864
      %1936 = vmatprep.subr.mxu0 0.0
      %1937 = vmatpush1.xpose.msra.mxu0 %v1861
      %1938 = vmatprep.subr.mxu0 0.0
      %1939 = vmatpush1.xpose.msra.mxu0 %v1858
      %1940 = vmatprep.subr.mxu0 0.0
      %1941 = vmatpush1.xpose.msra.mxu0 %v1855
      %1942 = vmatprep.subr.mxu0 0.0
      %1943 = vmatpush1.xpose.msra.mxu0 %v1852
      %1944 = vmatprep.subr.mxu0 0.0
      %1945 = vmatpush1.xpose.msra.mxu0 %v1849
      %1946 = vmatprep.subr.mxu0 0.0
      %1947 = vmatpush1.xpose.msra.mxu0 %v1846
      %1948 = vmatprep.subr.mxu0 0.0
      %1949 = vmatpush1.xpose.msra.mxu0 %v1843
      %1950 = vmatprep.subr.mxu0 0.0
      %1951 = vmatpush1.xpose.msra.mxu0 %v1840
      %1952 = vmatprep.subr.mxu0 0.0
      %1953 = vmatpush1.xpose.msra.mxu0 %v1837
      %1954 = vmatprep.subr.mxu0 0.0
      %1955 = vmatpush1.xpose.msra.mxu0 %v1834
      %1956 = vmatprep.subr.mxu0 0.0
      %1957 = vmatpush1.xpose.msra.mxu0 %v1831
      %1958 = vmatprep.subr.mxu0 0.0
      %1959 = vmatpush2.xpose.msra.mxu0 %v1924
      %1960 = vmatprep.subr.mxu0 0.0
      %1961 = vmatpush2.xpose.msra.mxu0 %v1921
      %1962 = vmatprep.subr.mxu0 0.0
      %1963 = vmatpush2.xpose.msra.mxu0 %v1918
      %1964 = vmatprep.subr.mxu0 0.0
      %1965 = vmatpush2.xpose.msra.mxu0 %v1915
      %1966 = vmatprep.subr.mxu0 0.0
      %1967 = vmatpush2.xpose.msra.mxu0 %v1912
      %1968 = vmatprep.subr.mxu0 0.0
      %1969 = vmatpush2.xpose.msra.mxu0 %v1909
      %1970 = vmatprep.subr.mxu0 0.0
      %1971 = vmatpush2.xpose.msra.mxu0 %v1906
      %1972 = vmatprep.subr.mxu0 0.0
      %1973 = vmatpush2.xpose.msra.mxu0 %v1903
      %1974 = vmatprep.subr.mxu0 0.0
      %1975 = vmatpush2.xpose.msra.mxu0 %v1900
      %1976 = vmatprep.subr.mxu0 0.0
      %1977 = vmatpush2.xpose.msra.mxu0 %v1897
      %1978 = vmatprep.subr.mxu0 0.0
      %1979 = vmatpush2.xpose.msra.mxu0 %v1894
      %1980 = vmatprep.subr.mxu0 0.0
      %1981 = vmatpush2.xpose.msra.mxu0 %v1891
      %1982 = vmatprep.subr.mxu0 0.0
      %1983 = vmatpush2.xpose.msra.mxu0 %v1888
      %1984 = vmatprep.subr.mxu0 0.0
      %1985 = vmatpush2.xpose.msra.mxu0 %v1885
      %1986 = vmatprep.subr.mxu0 0.0
      %1987 = vmatpush2.xpose.msra.mxu0 %v1882
      %1988 = vmatprep.subr.mxu0 0.0
      %1989 = vmatpush2.xpose.msra.mxu0 %v1879
      %1990 = vmatprep.mubr.f32.mxu0 0.0
      %1991 = vmatmul.mubr.f32.gmra.mxu0 %v833
      %v1992 = vpop.f32.mrf.mxu0
      %v1993 = vadd.f32 0.0, %v1992
      %v1994 = vpop.f32.mrf.mxu0
      %v1995 = vadd.f32 0.0, %v1994
      %1996 = vmatprep.mubr.f32.mxu0 0.0
      %1997 = vmatmul.mubr.f32.gmra.mxu0 %v836
      %v1998 = vpop.f32.mrf.mxu0
      %v1999 = vadd.f32 0.0, %v1998
      %v2000 = vpop.f32.mrf.mxu0
      %v2001 = vadd.f32 0.0, %v2000
      %2002 = vmatprep.mubr.f32.mxu0 0.0
      %2003 = vmatmul.mubr.f32.gmra.mxu0 %v839
      %v2004 = vpop.f32.mrf.mxu0
      %v2005 = vadd.f32 0.0, %v2004
      %v2006 = vpop.f32.mrf.mxu0
      %v2007 = vadd.f32 0.0, %v2006
      %2008 = vmatprep.mubr.f32.mxu0 0.0
      %2009 = vmatmul.mubr.f32.gmra.mxu0 %v842
      %v2010 = vpop.f32.mrf.mxu0
      %v2011 = vadd.f32 0.0, %v2010
      %v2012 = vpop.f32.mrf.mxu0
      %v2013 = vadd.f32 0.0, %v2012
      %2014 = vmatprep.mubr.f32.mxu0 0.0
      %2015 = vmatmul.mubr.f32.gmra.mxu0 %v845
      %v2016 = vpop.f32.mrf.mxu0
      %v2017 = vadd.f32 0.0, %v2016
      %v2018 = vpop.f32.mrf.mxu0
      %v2019 = vadd.f32 0.0, %v2018
      %2020 = vmatprep.mubr.f32.mxu0 0.0
      %2021 = vmatmul.mubr.f32.gmra.mxu0 %v848
      %v2022 = vpop.f32.mrf.mxu0
      %v2023 = vadd.f32 0.0, %v2022
      %v2024 = vpop.f32.mrf.mxu0
      %v2025 = vadd.f32 0.0, %v2024
      %2026 = vmatprep.mubr.f32.mxu0 0.0
      %2027 = vmatmul.mubr.f32.gmra.mxu0 %v851
      %v2028 = vpop.f32.mrf.mxu0
      %v2029 = vadd.f32 0.0, %v2028
      %v2030 = vpop.f32.mrf.mxu0
      %v2031 = vadd.f32 0.0, %v2030
      %2032 = vmatprep.mubr.f32.mxu0 0.0
      %2033 = vmatmul.mubr.f32.gmra.mxu0 %v854
      %v2034 = vpop.f32.mrf.mxu0
      %v2035 = vadd.f32 0.0, %v2034
      %v2036 = vpop.f32.mrf.mxu0
      %v2037 = vadd.f32 0.0, %v2036
      %2038 = vmatprep.mubr.f32.mxu0 0.0
      %2039 = vmatmul.mubr.f32.gmra.mxu0 %v857
      %v2040 = vpop.f32.mrf.mxu0
      %v2041 = vadd.f32 0.0, %v2040
      %v2042 = vpop.f32.mrf.mxu0
      %v2043 = vadd.f32 0.0, %v2042
      %2044 = vmatprep.mubr.f32.mxu0 0.0
      %2045 = vmatmul.mubr.f32.gmra.mxu0 %v860
      %v2046 = vpop.f32.mrf.mxu0
      %v2047 = vadd.f32 0.0, %v2046
      %v2048 = vpop.f32.mrf.mxu0
      %v2049 = vadd.f32 0.0, %v2048
      %2050 = vmatprep.mubr.f32.mxu0 0.0
      %2051 = vmatmul.mubr.f32.gmra.mxu0 %v863
      %v2052 = vpop.f32.mrf.mxu0
      %v2053 = vadd.f32 0.0, %v2052
      %v2054 = vpop.f32.mrf.mxu0
      %v2055 = vadd.f32 0.0, %v2054
      %2056 = vmatprep.mubr.f32.mxu0 0.0
      %2057 = vmatmul.mubr.f32.gmra.mxu0 %v866
      %v2058 = vpop.f32.mrf.mxu0
      %v2059 = vadd.f32 0.0, %v2058
      %v2060 = vpop.f32.mrf.mxu0
      %v2061 = vadd.f32 0.0, %v2060
      %2062 = vmatprep.mubr.f32.mxu0 0.0
      %2063 = vmatmul.mubr.f32.gmra.mxu0 %v869
      %v2064 = vpop.f32.mrf.mxu0
      %v2065 = vadd.f32 0.0, %v2064
      %v2066 = vpop.f32.mrf.mxu0
      %v2067 = vadd.f32 0.0, %v2066
      %2068 = vmatprep.mubr.f32.mxu0 0.0
      %2069 = vmatmul.mubr.f32.gmra.mxu0 %v872
      %v2070 = vpop.f32.mrf.mxu0
      %v2071 = vadd.f32 0.0, %v2070
      %v2072 = vpop.f32.mrf.mxu0
      %v2073 = vadd.f32 0.0, %v2072
      %2074 = vmatprep.mubr.f32.mxu0 0.0
      %2075 = vmatmul.mubr.f32.gmra.mxu0 %v875
      %v2076 = vpop.f32.mrf.mxu0
      %v2077 = vadd.f32 0.0, %v2076
      %v2078 = vpop.f32.mrf.mxu0
      %v2079 = vadd.f32 0.0, %v2078
      %2080 = vmatprep.mubr.f32.mxu0 0.0
      %2081 = vmatmul.mubr.f32.gmra.mxu0 %v878
      %v2082 = vpop.f32.mrf.mxu0
      %v2083 = vadd.f32 0.0, %v2082
      %v2084 = vpop.f32.mrf.mxu0
      %v2085 = vadd.f32 0.0, %v2084
      %2086 = vmatprep.mubr.f32.mxu0 0.0
      %2087 = vmatmul.mubr.f32.gmra.mxu0 %v881
      %v2088 = vpop.f32.mrf.mxu0
      %v2089 = vadd.f32 0.0, %v2088
      %v2090 = vpop.f32.mrf.mxu0
      %v2091 = vadd.f32 0.0, %v2090
      %2092 = vmatprep.mubr.f32.mxu0 0.0
      %2093 = vmatmul.mubr.f32.gmra.mxu0 %v884
      %v2094 = vpop.f32.mrf.mxu0
      %v2095 = vadd.f32 0.0, %v2094
      %v2096 = vpop.f32.mrf.mxu0
      %v2097 = vadd.f32 0.0, %v2096
      %2098 = vmatprep.mubr.f32.mxu0 0.0
      %2099 = vmatmul.mubr.f32.gmra.mxu0 %v887
      %v2100 = vpop.f32.mrf.mxu0
      %v2101 = vadd.f32 0.0, %v2100
      %v2102 = vpop.f32.mrf.mxu0
      %v2103 = vadd.f32 0.0, %v2102
      %2104 = vmatprep.mubr.f32.mxu0 0.0
      %2105 = vmatmul.mubr.f32.gmra.mxu0 %v890
      %v2106 = vpop.f32.mrf.mxu0
      %v2107 = vadd.f32 0.0, %v2106
      %v2108 = vpop.f32.mrf.mxu0
      %v2109 = vadd.f32 0.0, %v2108
      %2110 = vmatprep.mubr.f32.mxu0 0.0
      %2111 = vmatmul.mubr.f32.gmra.mxu0 %v893
      %v2112 = vpop.f32.mrf.mxu0
      %v2113 = vadd.f32 0.0, %v2112
      %v2114 = vpop.f32.mrf.mxu0
      %v2115 = vadd.f32 0.0, %v2114
      %2116 = vmatprep.mubr.f32.mxu0 0.0
      %2117 = vmatmul.mubr.f32.gmra.mxu0 %v896
      %v2118 = vpop.f32.mrf.mxu0
      %v2119 = vadd.f32 0.0, %v2118
      %v2120 = vpop.f32.mrf.mxu0
      %v2121 = vadd.f32 0.0, %v2120
      %2122 = vmatprep.mubr.f32.mxu0 0.0
      %2123 = vmatmul.mubr.f32.gmra.mxu0 %v899
      %v2124 = vpop.f32.mrf.mxu0
      %v2125 = vadd.f32 0.0, %v2124
      %v2126 = vpop.f32.mrf.mxu0
      %v2127 = vadd.f32 0.0, %v2126
      %2128 = vmatprep.mubr.f32.mxu0 0.0
      %2129 = vmatmul.mubr.f32.gmra.mxu0 %v902
      %v2130 = vpop.f32.mrf.mxu0
      %v2131 = vadd.f32 0.0, %v2130
      %v2132 = vpop.f32.mrf.mxu0
      %v2133 = vadd.f32 0.0, %v2132
      %2134 = vmatprep.mubr.f32.mxu0 0.0
      %2135 = vmatmul.mubr.f32.gmra.mxu0 %v905
      %v2136 = vpop.f32.mrf.mxu0
      %v2137 = vadd.f32 0.0, %v2136
      %v2138 = vpop.f32.mrf.mxu0
      %v2139 = vadd.f32 0.0, %v2138
      %2140 = vmatprep.mubr.f32.mxu0 0.0
      %2141 = vmatmul.mubr.f32.gmra.mxu0 %v908
      %v2142 = vpop.f32.mrf.mxu0
      %v2143 = vadd.f32 0.0, %v2142
      %v2144 = vpop.f32.mrf.mxu0
      %v2145 = vadd.f32 0.0, %v2144
      %2146 = vmatprep.mubr.f32.mxu0 0.0
      %2147 = vmatmul.mubr.f32.gmra.mxu0 %v911
      %v2148 = vpop.f32.mrf.mxu0
      %v2149 = vadd.f32 0.0, %v2148
      %v2150 = vpop.f32.mrf.mxu0
      %v2151 = vadd.f32 0.0, %v2150
      %2152 = vmatprep.mubr.f32.mxu0 0.0
      %2153 = vmatmul.mubr.f32.gmra.mxu0 %v914
      %v2154 = vpop.f32.mrf.mxu0
      %v2155 = vadd.f32 0.0, %v2154
      %v2156 = vpop.f32.mrf.mxu0
      %v2157 = vadd.f32 0.0, %v2156
      %2158 = vmatprep.mubr.f32.mxu0 0.0
      %2159 = vmatmul.mubr.f32.gmra.mxu0 %v917
      %v2160 = vpop.f32.mrf.mxu0
      %v2161 = vadd.f32 0.0, %v2160
      %v2162 = vpop.f32.mrf.mxu0
      %v2163 = vadd.f32 0.0, %v2162
      %2164 = vmatprep.mubr.f32.mxu0 0.0
      %2165 = vmatmul.mubr.f32.gmra.mxu0 %v920
      %v2166 = vpop.f32.mrf.mxu0
      %v2167 = vadd.f32 0.0, %v2166
      %v2168 = vpop.f32.mrf.mxu0
      %v2169 = vadd.f32 0.0, %v2168
      %2170 = vmatprep.mubr.f32.mxu0 0.0
      %2171 = vmatmul.mubr.f32.gmra.mxu0 %v923
      %v2172 = vpop.f32.mrf.mxu0
      %v2173 = vadd.f32 0.0, %v2172
      %v2174 = vpop.f32.mrf.mxu0
      %v2175 = vadd.f32 0.0, %v2174
      %2176 = vmatprep.mubr.f32.mxu0 0.0
      %2177 = vmatmul.mubr.f32.gmra.mxu0 %v926
      %v2178 = vpop.f32.mrf.mxu0
      %v2179 = vadd.f32 0.0, %v2178
      %v2180 = vpop.f32.mrf.mxu0
      %v2181 = vadd.f32 0.0, %v2180
      %2182 = vdwg.mxu0
      %v2183 = vmax.f32 %v1993, %v1995
      %2184 = vmax.xlane.f32.xlu0 %v2183
      %v2185 = vpop.xlane.xlu0 %2184
      %v2186 = vmax.f32 %v1999, %v2001
      %2187 = vmax.xlane.f32.xlu0 %v2186
      %v2188 = vpop.xlane.xlu0 %2187
      %v2189 = vmax.f32 %v2005, %v2007
      %2190 = vmax.xlane.f32.xlu0 %v2189
      %v2191 = vpop.xlane.xlu0 %2190
      %v2192 = vmax.f32 %v2011, %v2013
      %2193 = vmax.xlane.f32.xlu0 %v2192
      %v2194 = vpop.xlane.xlu0 %2193
      %v2195 = vmax.f32 %v2017, %v2019
      %2196 = vmax.xlane.f32.xlu0 %v2195
      %v2197 = vpop.xlane.xlu0 %2196
      %v2198 = vmax.f32 %v2023, %v2025
      %2199 = vmax.xlane.f32.xlu0 %v2198
      %v2200 = vpop.xlane.xlu0 %2199
      %v2201 = vmax.f32 %v2029, %v2031
      %2202 = vmax.xlane.f32.xlu0 %v2201
      %v2203 = vpop.xlane.xlu0 %2202
      %v2204 = vmax.f32 %v2035, %v2037
      %2205 = vmax.xlane.f32.xlu0 %v2204
      %v2206 = vpop.xlane.xlu0 %2205
      %v2207 = vmax.f32 %v2041, %v2043
      %2208 = vmax.xlane.f32.xlu0 %v2207
      %v2209 = vpop.xlane.xlu0 %2208
      %v2210 = vmax.f32 %v2047, %v2049
      %2211 = vmax.xlane.f32.xlu0 %v2210
      %v2212 = vpop.xlane.xlu0 %2211
      %v2213 = vmax.f32 %v2053, %v2055
      %2214 = vmax.xlane.f32.xlu0 %v2213
      %v2215 = vpop.xlane.xlu0 %2214
      %v2216 = vmax.f32 %v2059, %v2061
      %2217 = vmax.xlane.f32.xlu0 %v2216
      %v2218 = vpop.xlane.xlu0 %2217
      %v2219 = vmax.f32 %v2065, %v2067
      %2220 = vmax.xlane.f32.xlu0 %v2219
      %v2221 = vpop.xlane.xlu0 %2220
      %v2222 = vmax.f32 %v2071, %v2073
      %2223 = vmax.xlane.f32.xlu0 %v2222
      %v2224 = vpop.xlane.xlu0 %2223
      %v2225 = vmax.f32 %v2077, %v2079
      %2226 = vmax.xlane.f32.xlu0 %v2225
      %v2227 = vpop.xlane.xlu0 %2226
      %v2228 = vmax.f32 %v2083, %v2085
      %2229 = vmax.xlane.f32.xlu0 %v2228
      %v2230 = vpop.xlane.xlu0 %2229
      %v2231 = vmax.f32 %v2089, %v2091
      %2232 = vmax.xlane.f32.xlu0 %v2231
      %v2233 = vpop.xlane.xlu0 %2232
      %v2234 = vmax.f32 %v2095, %v2097
      %2235 = vmax.xlane.f32.xlu0 %v2234
      %v2236 = vpop.xlane.xlu0 %2235
      %v2237 = vmax.f32 %v2101, %v2103
      %2238 = vmax.xlane.f32.xlu0 %v2237
      %v2239 = vpop.xlane.xlu0 %2238
      %v2240 = vmax.f32 %v2107, %v2109
      %2241 = vmax.xlane.f32.xlu0 %v2240
      %v2242 = vpop.xlane.xlu0 %2241
      %v2243 = vmax.f32 %v2113, %v2115
      %2244 = vmax.xlane.f32.xlu0 %v2243
      %v2245 = vpop.xlane.xlu0 %2244
      %v2246 = vmax.f32 %v2119, %v2121
      %2247 = vmax.xlane.f32.xlu0 %v2246
      %v2248 = vpop.xlane.xlu0 %2247
      %v2249 = vmax.f32 %v2125, %v2127
      %2250 = vmax.xlane.f32.xlu0 %v2249
      %v2251 = vpop.xlane.xlu0 %2250
      %v2252 = vmax.f32 %v2131, %v2133
      %2253 = vmax.xlane.f32.xlu0 %v2252
      %v2254 = vpop.xlane.xlu0 %2253
      %v2255 = vmax.f32 %v2137, %v2139
      %2256 = vmax.xlane.f32.xlu0 %v2255
      %v2257 = vpop.xlane.xlu0 %2256
      %v2258 = vmax.f32 %v2143, %v2145
      %2259 = vmax.xlane.f32.xlu0 %v2258
      %v2260 = vpop.xlane.xlu0 %2259
      %v2261 = vmax.f32 %v2149, %v2151
      %2262 = vmax.xlane.f32.xlu0 %v2261
      %v2263 = vpop.xlane.xlu0 %2262
      %v2264 = vmax.f32 %v2155, %v2157
      %2265 = vmax.xlane.f32.xlu0 %v2264
      %v2266 = vpop.xlane.xlu0 %2265
      %v2267 = vmax.f32 %v2161, %v2163
      %2268 = vmax.xlane.f32.xlu0 %v2267
      %v2269 = vpop.xlane.xlu0 %2268
      %v2270 = vmax.f32 %v2167, %v2169
      %2271 = vmax.xlane.f32.xlu0 %v2270
      %v2272 = vpop.xlane.xlu0 %2271
      %v2273 = vmax.f32 %v2173, %v2175
      %2274 = vmax.xlane.f32.xlu0 %v2273
      %v2275 = vpop.xlane.xlu0 %2274
      %v2276 = vmax.f32 %v2179, %v2181
      %2277 = vmax.xlane.f32.xlu0 %v2276
      %v2278 = vpop.xlane.xlu0 %2277
      %v2279 = vsub.f32 %v1993, %v2185
      %v2280 = vsub.f32 %v1995, %v2185
      %v2281 = vsub.f32 %v1999, %v2188
      %v2282 = vsub.f32 %v2001, %v2188
      %v2283 = vsub.f32 %v2005, %v2191
      %v2284 = vsub.f32 %v2007, %v2191
      %v2285 = vsub.f32 %v2011, %v2194
      %v2286 = vsub.f32 %v2013, %v2194
      %v2287 = vsub.f32 %v2017, %v2197
      %v2288 = vsub.f32 %v2019, %v2197
      %v2289 = vsub.f32 %v2023, %v2200
      %v2290 = vsub.f32 %v2025, %v2200
      %v2291 = vsub.f32 %v2029, %v2203
      %v2292 = vsub.f32 %v2031, %v2203
      %v2293 = vsub.f32 %v2035, %v2206
      %v2294 = vsub.f32 %v2037, %v2206
      %v2295 = vsub.f32 %v2041, %v2209
      %v2296 = vsub.f32 %v2043, %v2209
      %v2297 = vsub.f32 %v2047, %v2212
      %v2298 = vsub.f32 %v2049, %v2212
      %v2299 = vsub.f32 %v2053, %v2215
      %v2300 = vsub.f32 %v2055, %v2215
      %v2301 = vsub.f32 %v2059, %v2218
      %v2302 = vsub.f32 %v2061, %v2218
      %v2303 = vsub.f32 %v2065, %v2221
      %v2304 = vsub.f32 %v2067, %v2221
      %v2305 = vsub.f32 %v2071, %v2224
      %v2306 = vsub.f32 %v2073, %v2224
      %v2307 = vsub.f32 %v2077, %v2227
      %v2308 = vsub.f32 %v2079, %v2227
      %v2309 = vsub.f32 %v2083, %v2230
      %v2310 = vsub.f32 %v2085, %v2230
      %v2311 = vsub.f32 %v2089, %v2233
      %v2312 = vsub.f32 %v2091, %v2233
      %v2313 = vsub.f32 %v2095, %v2236
      %v2314 = vsub.f32 %v2097, %v2236
      %v2315 = vsub.f32 %v2101, %v2239
      %v2316 = vsub.f32 %v2103, %v2239
      %v2317 = vsub.f32 %v2107, %v2242
      %v2318 = vsub.f32 %v2109, %v2242
      %v2319 = vsub.f32 %v2113, %v2245
      %v2320 = vsub.f32 %v2115, %v2245
      %v2321 = vsub.f32 %v2119, %v2248
      %v2322 = vsub.f32 %v2121, %v2248
      %v2323 = vsub.f32 %v2125, %v2251
      %v2324 = vsub.f32 %v2127, %v2251
      %v2325 = vsub.f32 %v2131, %v2254
      %v2326 = vsub.f32 %v2133, %v2254
      %v2327 = vsub.f32 %v2137, %v2257
      %v2328 = vsub.f32 %v2139, %v2257
      %v2329 = vsub.f32 %v2143, %v2260
      %v2330 = vsub.f32 %v2145, %v2260
      %v2331 = vsub.f32 %v2149, %v2263
      %v2332 = vsub.f32 %v2151, %v2263
      %v2333 = vsub.f32 %v2155, %v2266
      %v2334 = vsub.f32 %v2157, %v2266
      %v2335 = vsub.f32 %v2161, %v2269
      %v2336 = vsub.f32 %v2163, %v2269
      %v2337 = vsub.f32 %v2167, %v2272
      %v2338 = vsub.f32 %v2169, %v2272
      %v2339 = vsub.f32 %v2173, %v2275
      %v2340 = vsub.f32 %v2175, %v2275
      %v2341 = vsub.f32 %v2179, %v2278
      %v2342 = vsub.f32 %v2181, %v2278
      %v2343 = vmul.f32 %v2279, 1.442695
      %v2344 = vpow.pop %v2343
      %v2345 = vmul.f32 %v2280, 1.442695
      %v2346 = vpow.pop %v2345
      %v2347 = vmul.f32 %v2281, 1.442695
      %v2348 = vpow.pop %v2347
      %v2349 = vmul.f32 %v2282, 1.442695
      %v2350 = vpow.pop %v2349
      %v2351 = vmul.f32 %v2283, 1.442695
      %v2352 = vpow.pop %v2351
      %v2353 = vmul.f32 %v2284, 1.442695
      %v2354 = vpow.pop %v2353
      %v2355 = vmul.f32 %v2285, 1.442695
      %v2356 = vpow.pop %v2355
      %v2357 = vmul.f32 %v2286, 1.442695
      %v2358 = vpow.pop %v2357
      %v2359 = vmul.f32 %v2287, 1.442695
      %v2360 = vpow.pop %v2359
      %v2361 = vmul.f32 %v2288, 1.442695
      %v2362 = vpow.pop %v2361
      %v2363 = vmul.f32 %v2289, 1.442695
      %v2364 = vpow.pop %v2363
      %v2365 = vmul.f32 %v2290, 1.442695
      %v2366 = vpow.pop %v2365
      %v2367 = vmul.f32 %v2291, 1.442695
      %v2368 = vpow.pop %v2367
      %v2369 = vmul.f32 %v2292, 1.442695
      %v2370 = vpow.pop %v2369
      %v2371 = vmul.f32 %v2293, 1.442695
      %v2372 = vpow.pop %v2371
      %v2373 = vmul.f32 %v2294, 1.442695
      %v2374 = vpow.pop %v2373
      %v2375 = vmul.f32 %v2295, 1.442695
      %v2376 = vpow.pop %v2375
      %v2377 = vmul.f32 %v2296, 1.442695
      %v2378 = vpow.pop %v2377
      %v2379 = vmul.f32 %v2297, 1.442695
      %v2380 = vpow.pop %v2379
      %v2381 = vmul.f32 %v2298, 1.442695
      %v2382 = vpow.pop %v2381
      %v2383 = vmul.f32 %v2299, 1.442695
      %v2384 = vpow.pop %v2383
      %v2385 = vmul.f32 %v2300, 1.442695
      %v2386 = vpow.pop %v2385
      %v2387 = vmul.f32 %v2301, 1.442695
      %v2388 = vpow.pop %v2387
      %v2389 = vmul.f32 %v2302, 1.442695
      %v2390 = vpow.pop %v2389
      %v2391 = vmul.f32 %v2303, 1.442695
      %v2392 = vpow.pop %v2391
      %v2393 = vmul.f32 %v2304, 1.442695
      %v2394 = vpow.pop %v2393
      %v2395 = vmul.f32 %v2305, 1.442695
      %v2396 = vpow.pop %v2395
      %v2397 = vmul.f32 %v2306, 1.442695
      %v2398 = vpow.pop %v2397
      %v2399 = vmul.f32 %v2307, 1.442695
      %v2400 = vpow.pop %v2399
      %v2401 = vmul.f32 %v2308, 1.442695
      %v2402 = vpow.pop %v2401
      %v2403 = vmul.f32 %v2309, 1.442695
      %v2404 = vpow.pop %v2403
      %v2405 = vmul.f32 %v2310, 1.442695
      %v2406 = vpow.pop %v2405
      %v2407 = vmul.f32 %v2311, 1.442695
      %v2408 = vpow.pop %v2407
      %v2409 = vmul.f32 %v2312, 1.442695
      %v2410 = vpow.pop %v2409
      %v2411 = vmul.f32 %v2313, 1.442695
      %v2412 = vpow.pop %v2411
      %v2413 = vmul.f32 %v2314, 1.442695
      %v2414 = vpow.pop %v2413
      %v2415 = vmul.f32 %v2315, 1.442695
      %v2416 = vpow.pop %v2415
      %v2417 = vmul.f32 %v2316, 1.442695
      %v2418 = vpow.pop %v2417
      %v2419 = vmul.f32 %v2317, 1.442695
      %v2420 = vpow.pop %v2419
      %v2421 = vmul.f32 %v2318, 1.442695
      %v2422 = vpow.pop %v2421
      %v2423 = vmul.f32 %v2319, 1.442695
      %v2424 = vpow.pop %v2423
      %v2425 = vmul.f32 %v2320, 1.442695
      %v2426 = vpow.pop %v2425
      %v2427 = vmul.f32 %v2321, 1.442695
      %v2428 = vpow.pop %v2427
      %v2429 = vmul.f32 %v2322, 1.442695
      %v2430 = vpow.pop %v2429
      %v2431 = vmul.f32 %v2323, 1.442695
      %v2432 = vpow.pop %v2431
      %v2433 = vmul.f32 %v2324, 1.442695
      %v2434 = vpow.pop %v2433
      %v2435 = vmul.f32 %v2325, 1.442695
      %v2436 = vpow.pop %v2435
      %v2437 = vmul.f32 %v2326, 1.442695
      %v2438 = vpow.pop %v2437
      %v2439 = vmul.f32 %v2327, 1.442695
      %v2440 = vpow.pop %v2439
      %v2441 = vmul.f32 %v2328, 1.442695
      %v2442 = vpow.pop %v2441
      %v2443 = vmul.f32 %v2329, 1.442695
      %v2444 = vpow.pop %v2443
      %v2445 = vmul.f32 %v2330, 1.442695
      %v2446 = vpow.pop %v2445
      %v2447 = vmul.f32 %v2331, 1.442695
      %v2448 = vpow.pop %v2447
      %v2449 = vmul.f32 %v2332, 1.442695
      %v2450 = vpow.pop %v2449
      %v2451 = vmul.f32 %v2333, 1.442695
      %v2452 = vpow.pop %v2451
      %v2453 = vmul.f32 %v2334, 1.442695
      %v2454 = vpow.pop %v2453
      %v2455 = vmul.f32 %v2335, 1.442695
      %v2456 = vpow.pop %v2455
      %v2457 = vmul.f32 %v2336, 1.442695
      %v2458 = vpow.pop %v2457
      %v2459 = vmul.f32 %v2337, 1.442695
      %v2460 = vpow.pop %v2459
      %v2461 = vmul.f32 %v2338, 1.442695
      %v2462 = vpow.pop %v2461
      %v2463 = vmul.f32 %v2339, 1.442695
      %v2464 = vpow.pop %v2463
      %v2465 = vmul.f32 %v2340, 1.442695
      %v2466 = vpow.pop %v2465
      %v2467 = vmul.f32 %v2341, 1.442695
      %v2468 = vpow.pop %v2467
      %v2469 = vmul.f32 %v2342, 1.442695
      %v2470 = vpow.pop %v2469
      %v2471 = vadd.f32 %v2344, %v2346
      %2472 = vadd.xlane.f32.xlu0 %v2471
      %v2473 = vpop.xlane.xlu0 %2472
      %v2474 = vadd.f32 %v2348, %v2350
      %2475 = vadd.xlane.f32.xlu0 %v2474
      %v2476 = vpop.xlane.xlu0 %2475
      %v2477 = vadd.f32 %v2352, %v2354
      %2478 = vadd.xlane.f32.xlu0 %v2477
      %v2479 = vpop.xlane.xlu0 %2478
      %v2480 = vadd.f32 %v2356, %v2358
      %2481 = vadd.xlane.f32.xlu0 %v2480
      %v2482 = vpop.xlane.xlu0 %2481
      %v2483 = vadd.f32 %v2360, %v2362
      %2484 = vadd.xlane.f32.xlu0 %v2483
      %v2485 = vpop.xlane.xlu0 %2484
      %v2486 = vadd.f32 %v2364, %v2366
      %2487 = vadd.xlane.f32.xlu0 %v2486
      %v2488 = vpop.xlane.xlu0 %2487
      %v2489 = vadd.f32 %v2368, %v2370
      %2490 = vadd.xlane.f32.xlu0 %v2489
      %v2491 = vpop.xlane.xlu0 %2490
      %v2492 = vadd.f32 %v2372, %v2374
      %2493 = vadd.xlane.f32.xlu0 %v2492
      %v2494 = vpop.xlane.xlu0 %2493
      %v2495 = vadd.f32 %v2376, %v2378
      %2496 = vadd.xlane.f32.xlu0 %v2495
      %v2497 = vpop.xlane.xlu0 %2496
      %v2498 = vadd.f32 %v2380, %v2382
      %2499 = vadd.xlane.f32.xlu0 %v2498
      %v2500 = vpop.xlane.xlu0 %2499
      %v2501 = vadd.f32 %v2384, %v2386
      %2502 = vadd.xlane.f32.xlu0 %v2501
      %v2503 = vpop.xlane.xlu0 %2502
      %v2504 = vadd.f32 %v2388, %v2390
      %2505 = vadd.xlane.f32.xlu0 %v2504
      %v2506 = vpop.xlane.xlu0 %2505
      %v2507 = vadd.f32 %v2392, %v2394
      %2508 = vadd.xlane.f32.xlu0 %v2507
      %v2509 = vpop.xlane.xlu0 %2508
      %v2510 = vadd.f32 %v2396, %v2398
      %2511 = vadd.xlane.f32.xlu0 %v2510
      %v2512 = vpop.xlane.xlu0 %2511
      %v2513 = vadd.f32 %v2400, %v2402
      %2514 = vadd.xlane.f32.xlu0 %v2513
      %v2515 = vpop.xlane.xlu0 %2514
      %v2516 = vadd.f32 %v2404, %v2406
      %2517 = vadd.xlane.f32.xlu0 %v2516
      %v2518 = vpop.xlane.xlu0 %2517
      %v2519 = vadd.f32 %v2408, %v2410
      %2520 = vadd.xlane.f32.xlu0 %v2519
      %v2521 = vpop.xlane.xlu0 %2520
      %v2522 = vadd.f32 %v2412, %v2414
      %2523 = vadd.xlane.f32.xlu0 %v2522
      %v2524 = vpop.xlane.xlu0 %2523
      %v2525 = vadd.f32 %v2416, %v2418
      %2526 = vadd.xlane.f32.xlu0 %v2525
      %v2527 = vpop.xlane.xlu0 %2526
      %v2528 = vadd.f32 %v2420, %v2422
      %2529 = vadd.xlane.f32.xlu0 %v2528
      %v2530 = vpop.xlane.xlu0 %2529
      %v2531 = vadd.f32 %v2424, %v2426
      %2532 = vadd.xlane.f32.xlu0 %v2531
      %v2533 = vpop.xlane.xlu0 %2532
      %v2534 = vadd.f32 %v2428, %v2430
      %2535 = vadd.xlane.f32.xlu0 %v2534
      %v2536 = vpop.xlane.xlu0 %2535
      %v2537 = vadd.f32 %v2432, %v2434
      %2538 = vadd.xlane.f32.xlu0 %v2537
      %v2539 = vpop.xlane.xlu0 %2538
      %v2540 = vadd.f32 %v2436, %v2438
      %2541 = vadd.xlane.f32.xlu0 %v2540
      %v2542 = vpop.xlane.xlu0 %2541
      %v2543 = vadd.f32 %v2440, %v2442
      %2544 = vadd.xlane.f32.xlu0 %v2543
      %v2545 = vpop.xlane.xlu0 %2544
      %v2546 = vadd.f32 %v2444, %v2446
      %2547 = vadd.xlane.f32.xlu0 %v2546
      %v2548 = vpop.xlane.xlu0 %2547
      %v2549 = vadd.f32 %v2448, %v2450
      %2550 = vadd.xlane.f32.xlu0 %v2549
      %v2551 = vpop.xlane.xlu0 %2550
      %v2552 = vadd.f32 %v2452, %v2454
      %2553 = vadd.xlane.f32.xlu0 %v2552
      %v2554 = vpop.xlane.xlu0 %2553
      %v2555 = vadd.f32 %v2456, %v2458
      %2556 = vadd.xlane.f32.xlu0 %v2555
      %v2557 = vpop.xlane.xlu0 %2556
      %v2558 = vadd.f32 %v2460, %v2462
      %2559 = vadd.xlane.f32.xlu0 %v2558
      %v2560 = vpop.xlane.xlu0 %2559
      %v2561 = vadd.f32 %v2464, %v2466
      %2562 = vadd.xlane.f32.xlu0 %v2561
      %v2563 = vpop.xlane.xlu0 %2562
      %v2564 = vadd.f32 %v2468, %v2470
      %2565 = vadd.xlane.f32.xlu0 %v2564
      %v2566 = vpop.xlane.xlu0 %2565
      %v2567 = vrcp.pop %v2473
      %v2568 = vrcp.pop %v2476
      %v2569 = vrcp.pop %v2479
      %v2570 = vrcp.pop %v2482
      %v2571 = vrcp.pop %v2485
      %v2572 = vrcp.pop %v2488
      %v2573 = vrcp.pop %v2491
      %v2574 = vrcp.pop %v2494
      %v2575 = vrcp.pop %v2497
      %v2576 = vrcp.pop %v2500
      %v2577 = vrcp.pop %v2503
      %v2578 = vrcp.pop %v2506
      %v2579 = vrcp.pop %v2509
      %v2580 = vrcp.pop %v2512
      %v2581 = vrcp.pop %v2515
      %v2582 = vrcp.pop %v2518
      %v2583 = vrcp.pop %v2521
      %v2584 = vrcp.pop %v2524
      %v2585 = vrcp.pop %v2527
      %v2586 = vrcp.pop %v2530
      %v2587 = vrcp.pop %v2533
      %v2588 = vrcp.pop %v2536
      %v2589 = vrcp.pop %v2539
      %v2590 = vrcp.pop %v2542
      %v2591 = vrcp.pop %v2545
      %v2592 = vrcp.pop %v2548
      %v2593 = vrcp.pop %v2551
      %v2594 = vrcp.pop %v2554
      %v2595 = vrcp.pop %v2557
      %v2596 = vrcp.pop %v2560
      %v2597 = vrcp.pop %v2563
      %v2598 = vrcp.pop %v2566
      %v2599 = vmul.f32 %v2344, %v2567
      %v2600 = vmul.f32 %v2346, %v2567
      %v2601 = vmul.f32 %v2348, %v2568
      %v2602 = vmul.f32 %v2350, %v2568
      %v2603 = vmul.f32 %v2352, %v2569
      %v2604 = vmul.f32 %v2354, %v2569
      %v2605 = vmul.f32 %v2356, %v2570
      %v2606 = vmul.f32 %v2358, %v2570
      %v2607 = vmul.f32 %v2360, %v2571
      %v2608 = vmul.f32 %v2362, %v2571
      %v2609 = vmul.f32 %v2364, %v2572
      %v2610 = vmul.f32 %v2366, %v2572
      %v2611 = vmul.f32 %v2368, %v2573
      %v2612 = vmul.f32 %v2370, %v2573
      %v2613 = vmul.f32 %v2372, %v2574
      %v2614 = vmul.f32 %v2374, %v2574
      %v2615 = vmul.f32 %v2376, %v2575
      %v2616 = vmul.f32 %v2378, %v2575
      %v2617 = vmul.f32 %v2380, %v2576
      %v2618 = vmul.f32 %v2382, %v2576
      %v2619 = vmul.f32 %v2384, %v2577
      %v2620 = vmul.f32 %v2386, %v2577
      %v2621 = vmul.f32 %v2388, %v2578
      %v2622 = vmul.f32 %v2390, %v2578
      %v2623 = vmul.f32 %v2392, %v2579
      %v2624 = vmul.f32 %v2394, %v2579
      %v2625 = vmul.f32 %v2396, %v2580
      %v2626 = vmul.f32 %v2398, %v2580
      %v2627 = vmul.f32 %v2400, %v2581
      %v2628 = vmul.f32 %v2402, %v2581
      %v2629 = vmul.f32 %v2404, %v2582
      %v2630 = vmul.f32 %v2406, %v2582
      %v2631 = vmul.f32 %v2408, %v2583
      %v2632 = vmul.f32 %v2410, %v2583
      %v2633 = vmul.f32 %v2412, %v2584
      %v2634 = vmul.f32 %v2414, %v2584
      %v2635 = vmul.f32 %v2416, %v2585
      %v2636 = vmul.f32 %v2418, %v2585
      %v2637 = vmul.f32 %v2420, %v2586
      %v2638 = vmul.f32 %v2422, %v2586
      %v2639 = vmul.f32 %v2424, %v2587
      %v2640 = vmul.f32 %v2426, %v2587
      %v2641 = vmul.f32 %v2428, %v2588
      %v2642 = vmul.f32 %v2430, %v2588
      %v2643 = vmul.f32 %v2432, %v2589
      %v2644 = vmul.f32 %v2434, %v2589
      %v2645 = vmul.f32 %v2436, %v2590
      %v2646 = vmul.f32 %v2438, %v2590
      %v2647 = vmul.f32 %v2440, %v2591
      %v2648 = vmul.f32 %v2442, %v2591
      %v2649 = vmul.f32 %v2444, %v2592
      %v2650 = vmul.f32 %v2446, %v2592
      %v2651 = vmul.f32 %v2448, %v2593
      %v2652 = vmul.f32 %v2450, %v2593
      %v2653 = vmul.f32 %v2452, %v2594
      %v2654 = vmul.f32 %v2454, %v2594
      %v2655 = vmul.f32 %v2456, %v2595
      %v2656 = vmul.f32 %v2458, %v2595
      %v2657 = vmul.f32 %v2460, %v2596
      %v2658 = vmul.f32 %v2462, %v2596
      %v2659 = vmul.f32 %v2464, %v2597
      %v2660 = vmul.f32 %v2466, %v2597
      %v2661 = vmul.f32 %v2468, %v2598
      %v2662 = vmul.f32 %v2470, %v2598
      %v2663 = vmul.f32 %v667, %v1797
      %v2664 = vmul.f32 %v670, %v1797
      %v2665 = vmul.f32 %v675, %v1797
      %v2666 = vmul.f32 %v678, %v1797
      %v2667 = vmul.f32 %v683, %v1797
      %v2668 = vmul.f32 %v686, %v1797
      %v2669 = vmul.f32 %v691, %v1797
      %v2670 = vmul.f32 %v694, %v1797
      %v2671 = vmul.f32 %v699, %v1797
      %v2672 = vmul.f32 %v702, %v1797
      %v2673 = vmul.f32 %v707, %v1797
      %v2674 = vmul.f32 %v710, %v1797
      %v2675 = vmul.f32 %v715, %v1797
      %v2676 = vmul.f32 %v718, %v1797
      %v2677 = vmul.f32 %v723, %v1797
      %v2678 = vmul.f32 %v726, %v1797
      %v2679 = vmul.f32 %v731, %v1797
      %v2680 = vmul.f32 %v734, %v1797
      %v2681 = vmul.f32 %v739, %v1797
      %v2682 = vmul.f32 %v742, %v1797
      %v2683 = vmul.f32 %v747, %v1797
      %v2684 = vmul.f32 %v750, %v1797
      %v2685 = vmul.f32 %v755, %v1797
      %v2686 = vmul.f32 %v758, %v1797
      %v2687 = vmul.f32 %v763, %v1797
      %v2688 = vmul.f32 %v766, %v1797
      %v2689 = vmul.f32 %v771, %v1797
      %v2690 = vmul.f32 %v774, %v1797
      %v2691 = vmul.f32 %v779, %v1797
      %v2692 = vmul.f32 %v782, %v1797
      %v2693 = vmul.f32 %v787, %v1797
      %v2694 = vmul.f32 %v790, %v1797
      %2695 = vmatprep.subr.mxu0 0.0
      %2696 = vmatpush1.msra.mxu0 %v2678
      %2697 = vmatprep.subr.mxu0 0.0
      %2698 = vmatpush1.msra.mxu0 %v2677
      %2699 = vmatprep.subr.mxu0 0.0
      %2700 = vmatpush1.msra.mxu0 %v2676
      %2701 = vmatprep.subr.mxu0 0.0
      %2702 = vmatpush1.msra.mxu0 %v2675
      %2703 = vmatprep.subr.mxu0 0.0
      %2704 = vmatpush1.msra.mxu0 %v2674
      %2705 = vmatprep.subr.mxu0 0.0
      %2706 = vmatpush1.msra.mxu0 %v2673
      %2707 = vmatprep.subr.mxu0 0.0
      %2708 = vmatpush1.msra.mxu0 %v2672
      %2709 = vmatprep.subr.mxu0 0.0
      %2710 = vmatpush1.msra.mxu0 %v2671
      %2711 = vmatprep.subr.mxu0 0.0
      %2712 = vmatpush1.msra.mxu0 %v2670
      %2713 = vmatprep.subr.mxu0 0.0
      %2714 = vmatpush1.msra.mxu0 %v2669
      %2715 = vmatprep.subr.mxu0 0.0
      %2716 = vmatpush1.msra.mxu0 %v2668
      %2717 = vmatprep.subr.mxu0 0.0
      %2718 = vmatpush1.msra.mxu0 %v2667
      %2719 = vmatprep.subr.mxu0 0.0
      %2720 = vmatpush1.msra.mxu0 %v2666
      %2721 = vmatprep.subr.mxu0 0.0
      %2722 = vmatpush1.msra.mxu0 %v2665
      %2723 = vmatprep.subr.mxu0 0.0
      %2724 = vmatpush1.msra.mxu0 %v2664
      %2725 = vmatprep.subr.mxu0 0.0
      %2726 = vmatpush1.msra.mxu0 %v2663
      %2727 = vmatprep.subr.mxu0 0.0
      %2728 = vmatpush2.msra.mxu0 %v2694
      %2729 = vmatprep.subr.mxu0 0.0
      %2730 = vmatpush2.msra.mxu0 %v2693
      %2731 = vmatprep.subr.mxu0 0.0
      %2732 = vmatpush2.msra.mxu0 %v2692
      %2733 = vmatprep.subr.mxu0 0.0
      %2734 = vmatpush2.msra.mxu0 %v2691
      %2735 = vmatprep.subr.mxu0 0.0
      %2736 = vmatpush2.msra.mxu0 %v2690
      %2737 = vmatprep.subr.mxu0 0.0
      %2738 = vmatpush2.msra.mxu0 %v2689
      %2739 = vmatprep.subr.mxu0 0.0
      %2740 = vmatpush2.msra.mxu0 %v2688
      %2741 = vmatprep.subr.mxu0 0.0
      %2742 = vmatpush2.msra.mxu0 %v2687
      %2743 = vmatprep.subr.mxu0 0.0
      %2744 = vmatpush2.msra.mxu0 %v2686
      %2745 = vmatprep.subr.mxu0 0.0
      %2746 = vmatpush2.msra.mxu0 %v2685
      %2747 = vmatprep.subr.mxu0 0.0
      %2748 = vmatpush2.msra.mxu0 %v2684
      %2749 = vmatprep.subr.mxu0 0.0
      %2750 = vmatpush2.msra.mxu0 %v2683
      %2751 = vmatprep.subr.mxu0 0.0
      %2752 = vmatpush2.msra.mxu0 %v2682
      %2753 = vmatprep.subr.mxu0 0.0
      %2754 = vmatpush2.msra.mxu0 %v2681
      %2755 = vmatprep.subr.mxu0 0.0
      %2756 = vmatpush2.msra.mxu0 %v2680
      %2757 = vmatprep.subr.mxu0 0.0
      %2758 = vmatpush2.msra.mxu0 %v2679
      %2759 = vmatprep.mubr.f32.mxu0 %v2600
      %2760 = vmatmul.mubr.f32.gmra.mxu0 %v2599
      %v2761 = vpop.f32.mrf.mxu0
      %v2762 = vadd.f32 0.0, %v2761
      %v2763 = vpop.f32.mrf.mxu0
      %2764 = vmatprep.mubr.f32.mxu0 %v2602
      %2765 = vmatmul.mubr.f32.gmra.mxu0 %v2601
      %v2766 = vpop.f32.mrf.mxu0
      %v2767 = vadd.f32 0.0, %v2766
      %v2768 = vpop.f32.mrf.mxu0
      %2769 = vmatprep.mubr.f32.mxu0 %v2604
      %2770 = vmatmul.mubr.f32.gmra.mxu0 %v2603
      %v2771 = vpop.f32.mrf.mxu0
      %v2772 = vadd.f32 0.0, %v2771
      %v2773 = vpop.f32.mrf.mxu0
      %2774 = vmatprep.mubr.f32.mxu0 %v2606
      %2775 = vmatmul.mubr.f32.gmra.mxu0 %v2605
      %v2776 = vpop.f32.mrf.mxu0
      %v2777 = vadd.f32 0.0, %v2776
      %v2778 = vpop.f32.mrf.mxu0
      %2779 = vmatprep.mubr.f32.mxu0 %v2608
      %2780 = vmatmul.mubr.f32.gmra.mxu0 %v2607
      %v2781 = vpop.f32.mrf.mxu0
      %v2782 = vadd.f32 0.0, %v2781
      %v2783 = vpop.f32.mrf.mxu0
      %2784 = vmatprep.mubr.f32.mxu0 %v2610
      %2785 = vmatmul.mubr.f32.gmra.mxu0 %v2609
      %v2786 = vpop.f32.mrf.mxu0
      %v2787 = vadd.f32 0.0, %v2786
      %v2788 = vpop.f32.mrf.mxu0
      %2789 = vmatprep.mubr.f32.mxu0 %v2612
      %2790 = vmatmul.mubr.f32.gmra.mxu0 %v2611
      %v2791 = vpop.f32.mrf.mxu0
      %v2792 = vadd.f32 0.0, %v2791
      %v2793 = vpop.f32.mrf.mxu0
      %2794 = vmatprep.mubr.f32.mxu0 %v2614
      %2795 = vmatmul.mubr.f32.gmra.mxu0 %v2613
      %v2796 = vpop.f32.mrf.mxu0
      %v2797 = vadd.f32 0.0, %v2796
      %v2798 = vpop.f32.mrf.mxu0
      %2799 = vmatprep.mubr.f32.mxu0 %v2616
      %2800 = vmatmul.mubr.f32.gmra.mxu0 %v2615
      %v2801 = vpop.f32.mrf.mxu0
      %v2802 = vadd.f32 0.0, %v2801
      %v2803 = vpop.f32.mrf.mxu0
      %2804 = vmatprep.mubr.f32.mxu0 %v2618
      %2805 = vmatmul.mubr.f32.gmra.mxu0 %v2617
      %v2806 = vpop.f32.mrf.mxu0
      %v2807 = vadd.f32 0.0, %v2806
      %v2808 = vpop.f32.mrf.mxu0
      %2809 = vmatprep.mubr.f32.mxu0 %v2620
      %2810 = vmatmul.mubr.f32.gmra.mxu0 %v2619
      %v2811 = vpop.f32.mrf.mxu0
      %v2812 = vadd.f32 0.0, %v2811
      %v2813 = vpop.f32.mrf.mxu0
      %2814 = vmatprep.mubr.f32.mxu0 %v2622
      %2815 = vmatmul.mubr.f32.gmra.mxu0 %v2621
      %v2816 = vpop.f32.mrf.mxu0
      %v2817 = vadd.f32 0.0, %v2816
      %v2818 = vpop.f32.mrf.mxu0
      %2819 = vmatprep.mubr.f32.mxu0 %v2624
      %2820 = vmatmul.mubr.f32.gmra.mxu0 %v2623
      %v2821 = vpop.f32.mrf.mxu0
      %v2822 = vadd.f32 0.0, %v2821
      %v2823 = vpop.f32.mrf.mxu0
      %2824 = vmatprep.mubr.f32.mxu0 %v2626
      %2825 = vmatmul.mubr.f32.gmra.mxu0 %v2625
      %v2826 = vpop.f32.mrf.mxu0
      %v2827 = vadd.f32 0.0, %v2826
      %v2828 = vpop.f32.mrf.mxu0
      %2829 = vmatprep.mubr.f32.mxu0 %v2628
      %2830 = vmatmul.mubr.f32.gmra.mxu0 %v2627
      %v2831 = vpop.f32.mrf.mxu0
      %v2832 = vadd.f32 0.0, %v2831
      %v2833 = vpop.f32.mrf.mxu0
      %2834 = vmatprep.mubr.f32.mxu0 %v2630
      %2835 = vmatmul.mubr.f32.gmra.mxu0 %v2629
      %v2836 = vpop.f32.mrf.mxu0
      %v2837 = vadd.f32 0.0, %v2836
      %v2838 = vpop.f32.mrf.mxu0
      %2839 = vmatprep.mubr.f32.mxu0 %v2632
      %2840 = vmatmul.mubr.f32.gmra.mxu0 %v2631
      %v2841 = vpop.f32.mrf.mxu0
      %v2842 = vadd.f32 0.0, %v2841
      %v2843 = vpop.f32.mrf.mxu0
      %2844 = vmatprep.mubr.f32.mxu0 %v2634
      %2845 = vmatmul.mubr.f32.gmra.mxu0 %v2633
      %v2846 = vpop.f32.mrf.mxu0
      %v2847 = vadd.f32 0.0, %v2846
      %v2848 = vpop.f32.mrf.mxu0
      %2849 = vmatprep.mubr.f32.mxu0 %v2636
      %2850 = vmatmul.mubr.f32.gmra.mxu0 %v2635
      %v2851 = vpop.f32.mrf.mxu0
      %v2852 = vadd.f32 0.0, %v2851
      %v2853 = vpop.f32.mrf.mxu0
      %2854 = vmatprep.mubr.f32.mxu0 %v2638
      %2855 = vmatmul.mubr.f32.gmra.mxu0 %v2637
      %v2856 = vpop.f32.mrf.mxu0
      %v2857 = vadd.f32 0.0, %v2856
      %v2858 = vpop.f32.mrf.mxu0
      %2859 = vmatprep.mubr.f32.mxu0 %v2640
      %2860 = vmatmul.mubr.f32.gmra.mxu0 %v2639
      %v2861 = vpop.f32.mrf.mxu0
      %v2862 = vadd.f32 0.0, %v2861
      %v2863 = vpop.f32.mrf.mxu0
      %2864 = vmatprep.mubr.f32.mxu0 %v2642
      %2865 = vmatmul.mubr.f32.gmra.mxu0 %v2641
      %v2866 = vpop.f32.mrf.mxu0
      %v2867 = vadd.f32 0.0, %v2866
      %v2868 = vpop.f32.mrf.mxu0
      %2869 = vmatprep.mubr.f32.mxu0 %v2644
      %2870 = vmatmul.mubr.f32.gmra.mxu0 %v2643
      %v2871 = vpop.f32.mrf.mxu0
      %v2872 = vadd.f32 0.0, %v2871
      %v2873 = vpop.f32.mrf.mxu0
      %2874 = vmatprep.mubr.f32.mxu0 %v2646
      %2875 = vmatmul.mubr.f32.gmra.mxu0 %v2645
      %v2876 = vpop.f32.mrf.mxu0
      %v2877 = vadd.f32 0.0, %v2876
      %v2878 = vpop.f32.mrf.mxu0
      %2879 = vmatprep.mubr.f32.mxu0 %v2648
      %2880 = vmatmul.mubr.f32.gmra.mxu0 %v2647
      %v2881 = vpop.f32.mrf.mxu0
      %v2882 = vadd.f32 0.0, %v2881
      %v2883 = vpop.f32.mrf.mxu0
      %2884 = vmatprep.mubr.f32.mxu0 %v2650
      %2885 = vmatmul.mubr.f32.gmra.mxu0 %v2649
      %v2886 = vpop.f32.mrf.mxu0
      %v2887 = vadd.f32 0.0, %v2886
      %v2888 = vpop.f32.mrf.mxu0
      %2889 = vmatprep.mubr.f32.mxu0 %v2652
      %2890 = vmatmul.mubr.f32.gmra.mxu0 %v2651
      %v2891 = vpop.f32.mrf.mxu0
      %v2892 = vadd.f32 0.0, %v2891
      %v2893 = vpop.f32.mrf.mxu0
      %2894 = vmatprep.mubr.f32.mxu0 %v2654
      %2895 = vmatmul.mubr.f32.gmra.mxu0 %v2653
      %v2896 = vpop.f32.mrf.mxu0
      %v2897 = vadd.f32 0.0, %v2896
      %v2898 = vpop.f32.mrf.mxu0
      %2899 = vmatprep.mubr.f32.mxu0 %v2656
      %2900 = vmatmul.mubr.f32.gmra.mxu0 %v2655
      %v2901 = vpop.f32.mrf.mxu0
      %v2902 = vadd.f32 0.0, %v2901
      %v2903 = vpop.f32.mrf.mxu0
      %2904 = vmatprep.mubr.f32.mxu0 %v2658
      %2905 = vmatmul.mubr.f32.gmra.mxu0 %v2657
      %v2906 = vpop.f32.mrf.mxu0
      %v2907 = vadd.f32 0.0, %v2906
      %v2908 = vpop.f32.mrf.mxu0
      %2909 = vmatprep.mubr.f32.mxu0 %v2660
      %2910 = vmatmul.mubr.f32.gmra.mxu0 %v2659
      %v2911 = vpop.f32.mrf.mxu0
      %v2912 = vadd.f32 0.0, %v2911
      %v2913 = vpop.f32.mrf.mxu0
      %2914 = vmatprep.mubr.f32.mxu0 %v2662
      %2915 = vmatmul.mubr.f32.gmra.mxu0 %v2661
      %v2916 = vpop.f32.mrf.mxu0
      %v2917 = vadd.f32 0.0, %v2916
      %v2918 = vpop.f32.mrf.mxu0
      %2919 = vdwg.mxu0
      %2920 = vmatprep.subr.mxu0 0.0
      %2921 = vmatpush1.msra.mxu0 %v1776
      %2922 = vmatprep.subr.mxu0 0.0
      %2923 = vmatpush1.msra.mxu0 %v1775
      %2924 = vmatprep.subr.mxu0 0.0
      %2925 = vmatpush1.msra.mxu0 %v1774
      %2926 = vmatprep.subr.mxu0 0.0
      %2927 = vmatpush1.msra.mxu0 %v1773
      %2928 = vmatprep.subr.mxu0 0.0
      %2929 = vmatpush1.msra.mxu0 %v1772
      %2930 = vmatprep.subr.mxu0 0.0
      %2931 = vmatpush1.msra.mxu0 %v1771
      %2932 = vmatprep.subr.mxu0 0.0
      %2933 = vmatpush1.msra.mxu0 %v1770
      %2934 = vmatprep.subr.mxu0 0.0
      %2935 = vmatpush1.msra.mxu0 %v1769
      %2936 = vmatprep.subr.mxu0 0.0
      %2937 = vmatpush1.msra.mxu0 %v1768
      %2938 = vmatprep.subr.mxu0 0.0
      %2939 = vmatpush1.msra.mxu0 %v1767
      %2940 = vmatprep.subr.mxu0 0.0
      %2941 = vmatpush1.msra.mxu0 %v1766
      %2942 = vmatprep.subr.mxu0 0.0
      %2943 = vmatpush1.msra.mxu0 %v1765
      %2944 = vmatprep.subr.mxu0 0.0
      %2945 = vmatpush1.msra.mxu0 %v1764
      %2946 = vmatprep.subr.mxu0 0.0
      %2947 = vmatpush1.msra.mxu0 %v1763
      %2948 = vmatprep.subr.mxu0 0.0
      %2949 = vmatpush1.msra.mxu0 %v1762
      %2950 = vmatprep.subr.mxu0 0.0
      %2951 = vmatpush1.msra.mxu0 %v1761
      %2952 = vmatprep.subr.mxu0 0.0
      %2953 = vmatpush2.msra.mxu0 %v1792
      %2954 = vmatprep.subr.mxu0 0.0
      %2955 = vmatpush2.msra.mxu0 %v1791
      %2956 = vmatprep.subr.mxu0 0.0
      %2957 = vmatpush2.msra.mxu0 %v1790
      %2958 = vmatprep.subr.mxu0 0.0
      %2959 = vmatpush2.msra.mxu0 %v1789
      %2960 = vmatprep.subr.mxu0 0.0
      %2961 = vmatpush2.msra.mxu0 %v1788
      %2962 = vmatprep.subr.mxu0 0.0
      %2963 = vmatpush2.msra.mxu0 %v1787
      %2964 = vmatprep.subr.mxu0 0.0
      %2965 = vmatpush2.msra.mxu0 %v1786
      %2966 = vmatprep.subr.mxu0 0.0
      %2967 = vmatpush2.msra.mxu0 %v1785
      %2968 = vmatprep.subr.mxu0 0.0
      %2969 = vmatpush2.msra.mxu0 %v1784
      %2970 = vmatprep.subr.mxu0 0.0
      %2971 = vmatpush2.msra.mxu0 %v1783
      %2972 = vmatprep.subr.mxu0 0.0
      %2973 = vmatpush2.msra.mxu0 %v1782
      %2974 = vmatprep.subr.mxu0 0.0
      %2975 = vmatpush2.msra.mxu0 %v1781
      %2976 = vmatprep.subr.mxu0 0.0
      %2977 = vmatpush2.msra.mxu0 %v1780
      %2978 = vmatprep.subr.mxu0 0.0
      %2979 = vmatpush2.msra.mxu0 %v1779
      %2980 = vmatprep.subr.mxu0 0.0
      %2981 = vmatpush2.msra.mxu0 %v1778
      %2982 = vmatprep.subr.mxu0 0.0
      %2983 = vmatpush2.msra.mxu0 %v1777
      %2984 = vmatprep.mubr.f32.mxu0 %v1698
      %2985 = vmatmul.mubr.f32.gmra.mxu0 %v1697
      %v2986 = vpop.f32.mrf.mxu0
      %v2987 = vadd.f32 %v2762, %v2986
      %v2988 = vpop.f32.mrf.mxu0
      %2989 = vmatprep.mubr.f32.mxu0 %v1700
      %2990 = vmatmul.mubr.f32.gmra.mxu0 %v1699
      %v2991 = vpop.f32.mrf.mxu0
      %v2992 = vadd.f32 %v2767, %v2991
      %v2993 = vpop.f32.mrf.mxu0
      %2994 = vmatprep.mubr.f32.mxu0 %v1702
      %2995 = vmatmul.mubr.f32.gmra.mxu0 %v1701
      %v2996 = vpop.f32.mrf.mxu0
      %v2997 = vadd.f32 %v2772, %v2996
      %v2998 = vpop.f32.mrf.mxu0
      %2999 = vmatprep.mubr.f32.mxu0 %v1704
      %3000 = vmatmul.mubr.f32.gmra.mxu0 %v1703
      %v3001 = vpop.f32.mrf.mxu0
      %v3002 = vadd.f32 %v2777, %v3001
      %v3003 = vpop.f32.mrf.mxu0
      %3004 = vmatprep.mubr.f32.mxu0 %v1706
      %3005 = vmatmul.mubr.f32.gmra.mxu0 %v1705
      %v3006 = vpop.f32.mrf.mxu0
      %v3007 = vadd.f32 %v2782, %v3006
      %v3008 = vpop.f32.mrf.mxu0
      %3009 = vmatprep.mubr.f32.mxu0 %v1708
      %3010 = vmatmul.mubr.f32.gmra.mxu0 %v1707
      %v3011 = vpop.f32.mrf.mxu0
      %v3012 = vadd.f32 %v2787, %v3011
      %v3013 = vpop.f32.mrf.mxu0
      %3014 = vmatprep.mubr.f32.mxu0 %v1710
      %3015 = vmatmul.mubr.f32.gmra.mxu0 %v1709
      %v3016 = vpop.f32.mrf.mxu0
      %v3017 = vadd.f32 %v2792, %v3016
      %v3018 = vpop.f32.mrf.mxu0
      %3019 = vmatprep.mubr.f32.mxu0 %v1712
      %3020 = vmatmul.mubr.f32.gmra.mxu0 %v1711
      %v3021 = vpop.f32.mrf.mxu0
      %v3022 = vadd.f32 %v2797, %v3021
      %v3023 = vpop.f32.mrf.mxu0
      %3024 = vmatprep.mubr.f32.mxu0 %v1714
      %3025 = vmatmul.mubr.f32.gmra.mxu0 %v1713
      %v3026 = vpop.f32.mrf.mxu0
      %v3027 = vadd.f32 %v2802, %v3026
      %v3028 = vpop.f32.mrf.mxu0
      %3029 = vmatprep.mubr.f32.mxu0 %v1716
      %3030 = vmatmul.mubr.f32.gmra.mxu0 %v1715
      %v3031 = vpop.f32.mrf.mxu0
      %v3032 = vadd.f32 %v2807, %v3031
      %v3033 = vpop.f32.mrf.mxu0
      %3034 = vmatprep.mubr.f32.mxu0 %v1718
      %3035 = vmatmul.mubr.f32.gmra.mxu0 %v1717
      %v3036 = vpop.f32.mrf.mxu0
      %v3037 = vadd.f32 %v2812, %v3036
      %v3038 = vpop.f32.mrf.mxu0
      %3039 = vmatprep.mubr.f32.mxu0 %v1720
      %3040 = vmatmul.mubr.f32.gmra.mxu0 %v1719
      %v3041 = vpop.f32.mrf.mxu0
      %v3042 = vadd.f32 %v2817, %v3041
      %v3043 = vpop.f32.mrf.mxu0
      %3044 = vmatprep.mubr.f32.mxu0 %v1722
      %3045 = vmatmul.mubr.f32.gmra.mxu0 %v1721
      %v3046 = vpop.f32.mrf.mxu0
      %v3047 = vadd.f32 %v2822, %v3046
      %v3048 = vpop.f32.mrf.mxu0
      %3049 = vmatprep.mubr.f32.mxu0 %v1724
      %3050 = vmatmul.mubr.f32.gmra.mxu0 %v1723
      %v3051 = vpop.f32.mrf.mxu0
      %v3052 = vadd.f32 %v2827, %v3051
      %v3053 = vpop.f32.mrf.mxu0
      %3054 = vmatprep.mubr.f32.mxu0 %v1726
      %3055 = vmatmul.mubr.f32.gmra.mxu0 %v1725
      %v3056 = vpop.f32.mrf.mxu0
      %v3057 = vadd.f32 %v2832, %v3056
      %v3058 = vpop.f32.mrf.mxu0
      %3059 = vmatprep.mubr.f32.mxu0 %v1728
      %3060 = vmatmul.mubr.f32.gmra.mxu0 %v1727
      %v3061 = vpop.f32.mrf.mxu0
      %v3062 = vadd.f32 %v2837, %v3061
      %v3063 = vpop.f32.mrf.mxu0
      %3064 = vmatprep.mubr.f32.mxu0 %v1730
      %3065 = vmatmul.mubr.f32.gmra.mxu0 %v1729
      %v3066 = vpop.f32.mrf.mxu0
      %v3067 = vadd.f32 %v2842, %v3066
      %v3068 = vpop.f32.mrf.mxu0
      %3069 = vmatprep.mubr.f32.mxu0 %v1732
      %3070 = vmatmul.mubr.f32.gmra.mxu0 %v1731
      %v3071 = vpop.f32.mrf.mxu0
      %v3072 = vadd.f32 %v2847, %v3071
      %v3073 = vpop.f32.mrf.mxu0
      %3074 = vmatprep.mubr.f32.mxu0 %v1734
      %3075 = vmatmul.mubr.f32.gmra.mxu0 %v1733
      %v3076 = vpop.f32.mrf.mxu0
      %v3077 = vadd.f32 %v2852, %v3076
      %v3078 = vpop.f32.mrf.mxu0
      %3079 = vmatprep.mubr.f32.mxu0 %v1736
      %3080 = vmatmul.mubr.f32.gmra.mxu0 %v1735
      %v3081 = vpop.f32.mrf.mxu0
      %v3082 = vadd.f32 %v2857, %v3081
      %v3083 = vpop.f32.mrf.mxu0
      %3084 = vmatprep.mubr.f32.mxu0 %v1738
      %3085 = vmatmul.mubr.f32.gmra.mxu0 %v1737
      %v3086 = vpop.f32.mrf.mxu0
      %v3087 = vadd.f32 %v2862, %v3086
      %v3088 = vpop.f32.mrf.mxu0
      %3089 = vmatprep.mubr.f32.mxu0 %v1740
      %3090 = vmatmul.mubr.f32.gmra.mxu0 %v1739
      %v3091 = vpop.f32.mrf.mxu0
      %v3092 = vadd.f32 %v2867, %v3091
      %v3093 = vpop.f32.mrf.mxu0
      %3094 = vmatprep.mubr.f32.mxu0 %v1742
      %3095 = vmatmul.mubr.f32.gmra.mxu0 %v1741
      %v3096 = vpop.f32.mrf.mxu0
      %v3097 = vadd.f32 %v2872, %v3096
      %v3098 = vpop.f32.mrf.mxu0
      %3099 = vmatprep.mubr.f32.mxu0 %v1744
      %3100 = vmatmul.mubr.f32.gmra.mxu0 %v1743
      %v3101 = vpop.f32.mrf.mxu0
      %v3102 = vadd.f32 %v2877, %v3101
      %v3103 = vpop.f32.mrf.mxu0
      %3104 = vmatprep.mubr.f32.mxu0 %v1746
      %3105 = vmatmul.mubr.f32.gmra.mxu0 %v1745
      %v3106 = vpop.f32.mrf.mxu0
      %v3107 = vadd.f32 %v2882, %v3106
      %v3108 = vpop.f32.mrf.mxu0
      %3109 = vmatprep.mubr.f32.mxu0 %v1748
      %3110 = vmatmul.mubr.f32.gmra.mxu0 %v1747
      %v3111 = vpop.f32.mrf.mxu0
      %v3112 = vadd.f32 %v2887, %v3111
      %v3113 = vpop.f32.mrf.mxu0
      %3114 = vmatprep.mubr.f32.mxu0 %v1750
      %3115 = vmatmul.mubr.f32.gmra.mxu0 %v1749
      %v3116 = vpop.f32.mrf.mxu0
      %v3117 = vadd.f32 %v2892, %v3116
      %v3118 = vpop.f32.mrf.mxu0
      %3119 = vmatprep.mubr.f32.mxu0 %v1752
      %3120 = vmatmul.mubr.f32.gmra.mxu0 %v1751
      %v3121 = vpop.f32.mrf.mxu0
      %v3122 = vadd.f32 %v2897, %v3121
      %v3123 = vpop.f32.mrf.mxu0
      %3124 = vmatprep.mubr.f32.mxu0 %v1754
      %3125 = vmatmul.mubr.f32.gmra.mxu0 %v1753
      %v3126 = vpop.f32.mrf.mxu0
      %v3127 = vadd.f32 %v2902, %v3126
      %v3128 = vpop.f32.mrf.mxu0
      %3129 = vmatprep.mubr.f32.mxu0 %v1756
      %3130 = vmatmul.mubr.f32.gmra.mxu0 %v1755
      %v3131 = vpop.f32.mrf.mxu0
      %v3132 = vadd.f32 %v2907, %v3131
      %v3133 = vpop.f32.mrf.mxu0
      %3134 = vmatprep.mubr.f32.mxu0 %v1758
      %3135 = vmatmul.mubr.f32.gmra.mxu0 %v1757
      %v3136 = vpop.f32.mrf.mxu0
      %v3137 = vadd.f32 %v2912, %v3136
      %v3138 = vpop.f32.mrf.mxu0
      %3139 = vmatprep.mubr.f32.mxu0 %v1760
      %3140 = vmatmul.mubr.f32.gmra.mxu0 %v1759
      %v3141 = vpop.f32.mrf.mxu0
      %v3142 = vadd.f32 %v2917, %v3141
      %v3143 = vpop.f32.mrf.mxu0
      %3144 = vdwg.mxu0
      %vm3145 = vcmp.ge.s32.totalorder %v794, 4
      %vm3146 = vcmp.lt.s32.totalorder %v794, 6
      %vm3147 = vmand %vm3145, %vm3146
      %v3148 = vsel %vm3147, 1, 0
      %v3149 = vcvt.s32.f32 %v3148
      %v3150 = vmul.f32 %v493, %v3149
      %v3151 = vmul.f32 %v496, %v3149
      %v3152 = vmul.f32 %v501, %v3149
      %v3153 = vmul.f32 %v504, %v3149
      %v3154 = vmul.f32 %v509, %v3149
      %v3155 = vmul.f32 %v512, %v3149
      %v3156 = vmul.f32 %v517, %v3149
      %v3157 = vmul.f32 %v520, %v3149
      %v3158 = vmul.f32 %v525, %v3149
      %v3159 = vmul.f32 %v528, %v3149
      %v3160 = vmul.f32 %v533, %v3149
      %v3161 = vmul.f32 %v536, %v3149
      %v3162 = vmul.f32 %v541, %v3149
      %v3163 = vmul.f32 %v544, %v3149
      %v3164 = vmul.f32 %v549, %v3149
      %v3165 = vmul.f32 %v552, %v3149
      %v3166 = vmul.f32 %v557, %v3149
      %v3167 = vmul.f32 %v560, %v3149
      %v3168 = vmul.f32 %v565, %v3149
      %v3169 = vmul.f32 %v568, %v3149
      %v3170 = vmul.f32 %v573, %v3149
      %v3171 = vmul.f32 %v576, %v3149
      %v3172 = vmul.f32 %v581, %v3149
      %v3173 = vmul.f32 %v584, %v3149
      %v3174 = vmul.f32 %v589, %v3149
      %v3175 = vmul.f32 %v592, %v3149
      %v3176 = vmul.f32 %v597, %v3149
      %v3177 = vmul.f32 %v600, %v3149
      %v3178 = vmul.f32 %v605, %v3149
      %v3179 = vmul.f32 %v608, %v3149
      %v3180 = vmul.f32 %v613, %v3149
      %v3181 = vmul.f32 %v616, %v3149
      %v3183 = vsel %vm231, %v3150, 0
      %v3186 = vsel %vm231, %v3151, 0
      %v3189 = vsel %vm231, %v3152, 0
      %v3192 = vsel %vm231, %v3153, 0
      %v3195 = vsel %vm231, %v3154, 0
      %v3198 = vsel %vm231, %v3155, 0
      %v3201 = vsel %vm231, %v3156, 0
      %v3204 = vsel %vm231, %v3157, 0
      %v3207 = vsel %vm231, %v3158, 0
      %v3210 = vsel %vm231, %v3159, 0
      %v3213 = vsel %vm231, %v3160, 0
      %v3216 = vsel %vm231, %v3161, 0
      %v3219 = vsel %vm231, %v3162, 0
      %v3222 = vsel %vm231, %v3163, 0
      %v3225 = vsel %vm231, %v3164, 0
      %v3228 = vsel %vm231, %v3165, 0
      %v3231 = vsel %vm231, %v3166, 0
      %v3234 = vsel %vm231, %v3167, 0
      %v3237 = vsel %vm231, %v3168, 0
      %v3240 = vsel %vm231, %v3169, 0
      %v3243 = vsel %vm231, %v3170, 0
      %v3246 = vsel %vm231, %v3171, 0
      %v3249 = vsel %vm231, %v3172, 0
      %v3252 = vsel %vm231, %v3173, 0
      %v3255 = vsel %vm231, %v3174, 0
      %v3258 = vsel %vm231, %v3175, 0
      %v3261 = vsel %vm231, %v3176, 0
      %v3264 = vsel %vm231, %v3177, 0
      %v3267 = vsel %vm231, %v3178, 0
      %v3270 = vsel %vm231, %v3179, 0
      %v3273 = vsel %vm231, %v3180, 0
      %v3276 = vsel %vm231, %v3181, 0
      %3278 = vmatprep.subr.mxu0 0.0
      %3279 = vmatpush1.xpose.msra.mxu0 %v3228
      %3280 = vmatprep.subr.mxu0 0.0
      %3281 = vmatpush1.xpose.msra.mxu0 %v3225
      %3282 = vmatprep.subr.mxu0 0.0
      %3283 = vmatpush1.xpose.msra.mxu0 %v3222
      %3284 = vmatprep.subr.mxu0 0.0
      %3285 = vmatpush1.xpose.msra.mxu0 %v3219
      %3286 = vmatprep.subr.mxu0 0.0
      %3287 = vmatpush1.xpose.msra.mxu0 %v3216
      %3288 = vmatprep.subr.mxu0 0.0
      %3289 = vmatpush1.xpose.msra.mxu0 %v3213
      %3290 = vmatprep.subr.mxu0 0.0
      %3291 = vmatpush1.xpose.msra.mxu0 %v3210
      %3292 = vmatprep.subr.mxu0 0.0
      %3293 = vmatpush1.xpose.msra.mxu0 %v3207
      %3294 = vmatprep.subr.mxu0 0.0
      %3295 = vmatpush1.xpose.msra.mxu0 %v3204
      %3296 = vmatprep.subr.mxu0 0.0
      %3297 = vmatpush1.xpose.msra.mxu0 %v3201
      %3298 = vmatprep.subr.mxu0 0.0
      %3299 = vmatpush1.xpose.msra.mxu0 %v3198
      %3300 = vmatprep.subr.mxu0 0.0
      %3301 = vmatpush1.xpose.msra.mxu0 %v3195
      %3302 = vmatprep.subr.mxu0 0.0
      %3303 = vmatpush1.xpose.msra.mxu0 %v3192
      %3304 = vmatprep.subr.mxu0 0.0
      %3305 = vmatpush1.xpose.msra.mxu0 %v3189
      %3306 = vmatprep.subr.mxu0 0.0
      %3307 = vmatpush1.xpose.msra.mxu0 %v3186
      %3308 = vmatprep.subr.mxu0 0.0
      %3309 = vmatpush1.xpose.msra.mxu0 %v3183
      %3310 = vmatprep.subr.mxu0 0.0
      %3311 = vmatpush2.xpose.msra.mxu0 %v3276
      %3312 = vmatprep.subr.mxu0 0.0
      %3313 = vmatpush2.xpose.msra.mxu0 %v3273
      %3314 = vmatprep.subr.mxu0 0.0
      %3315 = vmatpush2.xpose.msra.mxu0 %v3270
      %3316 = vmatprep.subr.mxu0 0.0
      %3317 = vmatpush2.xpose.msra.mxu0 %v3267
      %3318 = vmatprep.subr.mxu0 0.0
      %3319 = vmatpush2.xpose.msra.mxu0 %v3264
      %3320 = vmatprep.subr.mxu0 0.0
      %3321 = vmatpush2.xpose.msra.mxu0 %v3261
      %3322 = vmatprep.subr.mxu0 0.0
      %3323 = vmatpush2.xpose.msra.mxu0 %v3258
      %3324 = vmatprep.subr.mxu0 0.0
      %3325 = vmatpush2.xpose.msra.mxu0 %v3255
      %3326 = vmatprep.subr.mxu0 0.0
      %3327 = vmatpush2.xpose.msra.mxu0 %v3252
      %3328 = vmatprep.subr.mxu0 0.0
      %3329 = vmatpush2.xpose.msra.mxu0 %v3249
      %3330 = vmatprep.subr.mxu0 0.0
      %3331 = vmatpush2.xpose.msra.mxu0 %v3246
      %3332 = vmatprep.subr.mxu0 0.0
      %3333 = vmatpush2.xpose.msra.mxu0 %v3243
      %3334 = vmatprep.subr.mxu0 0.0
      %3335 = vmatpush2.xpose.msra.mxu0 %v3240
      %3336 = vmatprep.subr.mxu0 0.0
      %3337 = vmatpush2.xpose.msra.mxu0 %v3237
      %3338 = vmatprep.subr.mxu0 0.0
      %3339 = vmatpush2.xpose.msra.mxu0 %v3234
      %3340 = vmatprep.subr.mxu0 0.0
      %3341 = vmatpush2.xpose.msra.mxu0 %v3231
      %3342 = vmatprep.mubr.f32.mxu0 0.0
      %3343 = vmatmul.mubr.f32.gmra.mxu0 %v833
      %v3344 = vpop.f32.mrf.mxu0
      %v3345 = vadd.f32 0.0, %v3344
      %v3346 = vpop.f32.mrf.mxu0
      %v3347 = vadd.f32 0.0, %v3346
      %3348 = vmatprep.mubr.f32.mxu0 0.0
      %3349 = vmatmul.mubr.f32.gmra.mxu0 %v836
      %v3350 = vpop.f32.mrf.mxu0
      %v3351 = vadd.f32 0.0, %v3350
      %v3352 = vpop.f32.mrf.mxu0
      %v3353 = vadd.f32 0.0, %v3352
      %3354 = vmatprep.mubr.f32.mxu0 0.0
      %3355 = vmatmul.mubr.f32.gmra.mxu0 %v839
      %v3356 = vpop.f32.mrf.mxu0
      %v3357 = vadd.f32 0.0, %v3356
      %v3358 = vpop.f32.mrf.mxu0
      %v3359 = vadd.f32 0.0, %v3358
      %3360 = vmatprep.mubr.f32.mxu0 0.0
      %3361 = vmatmul.mubr.f32.gmra.mxu0 %v842
      %v3362 = vpop.f32.mrf.mxu0
      %v3363 = vadd.f32 0.0, %v3362
      %v3364 = vpop.f32.mrf.mxu0
      %v3365 = vadd.f32 0.0, %v3364
      %3366 = vmatprep.mubr.f32.mxu0 0.0
      %3367 = vmatmul.mubr.f32.gmra.mxu0 %v845
      %v3368 = vpop.f32.mrf.mxu0
      %v3369 = vadd.f32 0.0, %v3368
      %v3370 = vpop.f32.mrf.mxu0
      %v3371 = vadd.f32 0.0, %v3370
      %3372 = vmatprep.mubr.f32.mxu0 0.0
      %3373 = vmatmul.mubr.f32.gmra.mxu0 %v848
      %v3374 = vpop.f32.mrf.mxu0
      %v3375 = vadd.f32 0.0, %v3374
      %v3376 = vpop.f32.mrf.mxu0
      %v3377 = vadd.f32 0.0, %v3376
      %3378 = vmatprep.mubr.f32.mxu0 0.0
      %3379 = vmatmul.mubr.f32.gmra.mxu0 %v851
      %v3380 = vpop.f32.mrf.mxu0
      %v3381 = vadd.f32 0.0, %v3380
      %v3382 = vpop.f32.mrf.mxu0
      %v3383 = vadd.f32 0.0, %v3382
      %3384 = vmatprep.mubr.f32.mxu0 0.0
      %3385 = vmatmul.mubr.f32.gmra.mxu0 %v854
      %v3386 = vpop.f32.mrf.mxu0
      %v3387 = vadd.f32 0.0, %v3386
      %v3388 = vpop.f32.mrf.mxu0
      %v3389 = vadd.f32 0.0, %v3388
      %3390 = vmatprep.mubr.f32.mxu0 0.0
      %3391 = vmatmul.mubr.f32.gmra.mxu0 %v857
      %v3392 = vpop.f32.mrf.mxu0
      %v3393 = vadd.f32 0.0, %v3392
      %v3394 = vpop.f32.mrf.mxu0
      %v3395 = vadd.f32 0.0, %v3394
      %3396 = vmatprep.mubr.f32.mxu0 0.0
      %3397 = vmatmul.mubr.f32.gmra.mxu0 %v860
      %v3398 = vpop.f32.mrf.mxu0
      %v3399 = vadd.f32 0.0, %v3398
      %v3400 = vpop.f32.mrf.mxu0
      %v3401 = vadd.f32 0.0, %v3400
      %3402 = vmatprep.mubr.f32.mxu0 0.0
      %3403 = vmatmul.mubr.f32.gmra.mxu0 %v863
      %v3404 = vpop.f32.mrf.mxu0
      %v3405 = vadd.f32 0.0, %v3404
      %v3406 = vpop.f32.mrf.mxu0
      %v3407 = vadd.f32 0.0, %v3406
      %3408 = vmatprep.mubr.f32.mxu0 0.0
      %3409 = vmatmul.mubr.f32.gmra.mxu0 %v866
      %v3410 = vpop.f32.mrf.mxu0
      %v3411 = vadd.f32 0.0, %v3410
      %v3412 = vpop.f32.mrf.mxu0
      %v3413 = vadd.f32 0.0, %v3412
      %3414 = vmatprep.mubr.f32.mxu0 0.0
      %3415 = vmatmul.mubr.f32.gmra.mxu0 %v869
      %v3416 = vpop.f32.mrf.mxu0
      %v3417 = vadd.f32 0.0, %v3416
      %v3418 = vpop.f32.mrf.mxu0
      %v3419 = vadd.f32 0.0, %v3418
      %3420 = vmatprep.mubr.f32.mxu0 0.0
      %3421 = vmatmul.mubr.f32.gmra.mxu0 %v872
      %v3422 = vpop.f32.mrf.mxu0
      %v3423 = vadd.f32 0.0, %v3422
      %v3424 = vpop.f32.mrf.mxu0
      %v3425 = vadd.f32 0.0, %v3424
      %3426 = vmatprep.mubr.f32.mxu0 0.0
      %3427 = vmatmul.mubr.f32.gmra.mxu0 %v875
      %v3428 = vpop.f32.mrf.mxu0
      %v3429 = vadd.f32 0.0, %v3428
      %v3430 = vpop.f32.mrf.mxu0
      %v3431 = vadd.f32 0.0, %v3430
      %3432 = vmatprep.mubr.f32.mxu0 0.0
      %3433 = vmatmul.mubr.f32.gmra.mxu0 %v878
      %v3434 = vpop.f32.mrf.mxu0
      %v3435 = vadd.f32 0.0, %v3434
      %v3436 = vpop.f32.mrf.mxu0
      %v3437 = vadd.f32 0.0, %v3436
      %3438 = vmatprep.mubr.f32.mxu0 0.0
      %3439 = vmatmul.mubr.f32.gmra.mxu0 %v881
      %v3440 = vpop.f32.mrf.mxu0
      %v3441 = vadd.f32 0.0, %v3440
      %v3442 = vpop.f32.mrf.mxu0
      %v3443 = vadd.f32 0.0, %v3442
      %3444 = vmatprep.mubr.f32.mxu0 0.0
      %3445 = vmatmul.mubr.f32.gmra.mxu0 %v884
      %v3446 = vpop.f32.mrf.mxu0
      %v3447 = vadd.f32 0.0, %v3446
      %v3448 = vpop.f32.mrf.mxu0
      %v3449 = vadd.f32 0.0, %v3448
      %3450 = vmatprep.mubr.f32.mxu0 0.0
      %3451 = vmatmul.mubr.f32.gmra.mxu0 %v887
      %v3452 = vpop.f32.mrf.mxu0
      %v3453 = vadd.f32 0.0, %v3452
      %v3454 = vpop.f32.mrf.mxu0
      %v3455 = vadd.f32 0.0, %v3454
      %3456 = vmatprep.mubr.f32.mxu0 0.0
      %3457 = vmatmul.mubr.f32.gmra.mxu0 %v890
      %v3458 = vpop.f32.mrf.mxu0
      %v3459 = vadd.f32 0.0, %v3458
      %v3460 = vpop.f32.mrf.mxu0
      %v3461 = vadd.f32 0.0, %v3460
      %3462 = vmatprep.mubr.f32.mxu0 0.0
      %3463 = vmatmul.mubr.f32.gmra.mxu0 %v893
      %v3464 = vpop.f32.mrf.mxu0
      %v3465 = vadd.f32 0.0, %v3464
      %v3466 = vpop.f32.mrf.mxu0
      %v3467 = vadd.f32 0.0, %v3466
      %3468 = vmatprep.mubr.f32.mxu0 0.0
      %3469 = vmatmul.mubr.f32.gmra.mxu0 %v896
      %v3470 = vpop.f32.mrf.mxu0
      %v3471 = vadd.f32 0.0, %v3470
      %v3472 = vpop.f32.mrf.mxu0
      %v3473 = vadd.f32 0.0, %v3472
      %3474 = vmatprep.mubr.f32.mxu0 0.0
      %3475 = vmatmul.mubr.f32.gmra.mxu0 %v899
      %v3476 = vpop.f32.mrf.mxu0
      %v3477 = vadd.f32 0.0, %v3476
      %v3478 = vpop.f32.mrf.mxu0
      %v3479 = vadd.f32 0.0, %v3478
      %3480 = vmatprep.mubr.f32.mxu0 0.0
      %3481 = vmatmul.mubr.f32.gmra.mxu0 %v902
      %v3482 = vpop.f32.mrf.mxu0
      %v3483 = vadd.f32 0.0, %v3482
      %v3484 = vpop.f32.mrf.mxu0
      %v3485 = vadd.f32 0.0, %v3484
      %3486 = vmatprep.mubr.f32.mxu0 0.0
      %3487 = vmatmul.mubr.f32.gmra.mxu0 %v905
      %v3488 = vpop.f32.mrf.mxu0
      %v3489 = vadd.f32 0.0, %v3488
      %v3490 = vpop.f32.mrf.mxu0
      %v3491 = vadd.f32 0.0, %v3490
      %3492 = vmatprep.mubr.f32.mxu0 0.0
      %3493 = vmatmul.mubr.f32.gmra.mxu0 %v908
      %v3494 = vpop.f32.mrf.mxu0
      %v3495 = vadd.f32 0.0, %v3494
      %v3496 = vpop.f32.mrf.mxu0
      %v3497 = vadd.f32 0.0, %v3496
      %3498 = vmatprep.mubr.f32.mxu0 0.0
      %3499 = vmatmul.mubr.f32.gmra.mxu0 %v911
      %v3500 = vpop.f32.mrf.mxu0
      %v3501 = vadd.f32 0.0, %v3500
      %v3502 = vpop.f32.mrf.mxu0
      %v3503 = vadd.f32 0.0, %v3502
      %3504 = vmatprep.mubr.f32.mxu0 0.0
      %3505 = vmatmul.mubr.f32.gmra.mxu0 %v914
      %v3506 = vpop.f32.mrf.mxu0
      %v3507 = vadd.f32 0.0, %v3506
      %v3508 = vpop.f32.mrf.mxu0
      %v3509 = vadd.f32 0.0, %v3508
      %3510 = vmatprep.mubr.f32.mxu0 0.0
      %3511 = vmatmul.mubr.f32.gmra.mxu0 %v917
      %v3512 = vpop.f32.mrf.mxu0
      %v3513 = vadd.f32 0.0, %v3512
      %v3514 = vpop.f32.mrf.mxu0
      %v3515 = vadd.f32 0.0, %v3514
      %3516 = vmatprep.mubr.f32.mxu0 0.0
      %3517 = vmatmul.mubr.f32.gmra.mxu0 %v920
      %v3518 = vpop.f32.mrf.mxu0
      %v3519 = vadd.f32 0.0, %v3518
      %v3520 = vpop.f32.mrf.mxu0
      %v3521 = vadd.f32 0.0, %v3520
      %3522 = vmatprep.mubr.f32.mxu0 0.0
      %3523 = vmatmul.mubr.f32.gmra.mxu0 %v923
      %v3524 = vpop.f32.mrf.mxu0
      %v3525 = vadd.f32 0.0, %v3524
      %v3526 = vpop.f32.mrf.mxu0
      %v3527 = vadd.f32 0.0, %v3526
      %3528 = vmatprep.mubr.f32.mxu0 0.0
      %3529 = vmatmul.mubr.f32.gmra.mxu0 %v926
      %v3530 = vpop.f32.mrf.mxu0
      %v3531 = vadd.f32 0.0, %v3530
      %v3532 = vpop.f32.mrf.mxu0
      %v3533 = vadd.f32 0.0, %v3532
      %3534 = vdwg.mxu0
      %v3535 = vmax.f32 %v3345, %v3347
      %3536 = vmax.xlane.f32.xlu0 %v3535
      %v3537 = vpop.xlane.xlu0 %3536
      %v3538 = vmax.f32 %v3351, %v3353
      %3539 = vmax.xlane.f32.xlu0 %v3538
      %v3540 = vpop.xlane.xlu0 %3539
      %v3541 = vmax.f32 %v3357, %v3359
      %3542 = vmax.xlane.f32.xlu0 %v3541
      %v3543 = vpop.xlane.xlu0 %3542
      %v3544 = vmax.f32 %v3363, %v3365
      %3545 = vmax.xlane.f32.xlu0 %v3544
      %v3546 = vpop.xlane.xlu0 %3545
      %v3547 = vmax.f32 %v3369, %v3371
      %3548 = vmax.xlane.f32.xlu0 %v3547
      %v3549 = vpop.xlane.xlu0 %3548
      %v3550 = vmax.f32 %v3375, %v3377
      %3551 = vmax.xlane.f32.xlu0 %v3550
      %v3552 = vpop.xlane.xlu0 %3551
      %v3553 = vmax.f32 %v3381, %v3383
      %3554 = vmax.xlane.f32.xlu0 %v3553
      %v3555 = vpop.xlane.xlu0 %3554
      %v3556 = vmax.f32 %v3387, %v3389
      %3557 = vmax.xlane.f32.xlu0 %v3556
      %v3558 = vpop.xlane.xlu0 %3557
      %v3559 = vmax.f32 %v3393, %v3395
      %3560 = vmax.xlane.f32.xlu0 %v3559
      %v3561 = vpop.xlane.xlu0 %3560
      %v3562 = vmax.f32 %v3399, %v3401
      %3563 = vmax.xlane.f32.xlu0 %v3562
      %v3564 = vpop.xlane.xlu0 %3563
      %v3565 = vmax.f32 %v3405, %v3407
      %3566 = vmax.xlane.f32.xlu0 %v3565
      %v3567 = vpop.xlane.xlu0 %3566
      %v3568 = vmax.f32 %v3411, %v3413
      %3569 = vmax.xlane.f32.xlu0 %v3568
      %v3570 = vpop.xlane.xlu0 %3569
      %v3571 = vmax.f32 %v3417, %v3419
      %3572 = vmax.xlane.f32.xlu0 %v3571
      %v3573 = vpop.xlane.xlu0 %3572
      %v3574 = vmax.f32 %v3423, %v3425
      %3575 = vmax.xlane.f32.xlu0 %v3574
      %v3576 = vpop.xlane.xlu0 %3575
      %v3577 = vmax.f32 %v3429, %v3431
      %3578 = vmax.xlane.f32.xlu0 %v3577
      %v3579 = vpop.xlane.xlu0 %3578
      %v3580 = vmax.f32 %v3435, %v3437
      %3581 = vmax.xlane.f32.xlu0 %v3580
      %v3582 = vpop.xlane.xlu0 %3581
      %v3583 = vmax.f32 %v3441, %v3443
      %3584 = vmax.xlane.f32.xlu0 %v3583
      %v3585 = vpop.xlane.xlu0 %3584
      %v3586 = vmax.f32 %v3447, %v3449
      %3587 = vmax.xlane.f32.xlu0 %v3586
      %v3588 = vpop.xlane.xlu0 %3587
      %v3589 = vmax.f32 %v3453, %v3455
      %3590 = vmax.xlane.f32.xlu0 %v3589
      %v3591 = vpop.xlane.xlu0 %3590
      %v3592 = vmax.f32 %v3459, %v3461
      %3593 = vmax.xlane.f32.xlu0 %v3592
      %v3594 = vpop.xlane.xlu0 %3593
      %v3595 = vmax.f32 %v3465, %v3467
      %3596 = vmax.xlane.f32.xlu0 %v3595
      %v3597 = vpop.xlane.xlu0 %3596
      %v3598 = vmax.f32 %v3471, %v3473
      %3599 = vmax.xlane.f32.xlu0 %v3598
      %v3600 = vpop.xlane.xlu0 %3599
      %v3601 = vmax.f32 %v3477, %v3479
      %3602 = vmax.xlane.f32.xlu0 %v3601
      %v3603 = vpop.xlane.xlu0 %3602
      %v3604 = vmax.f32 %v3483, %v3485
      %3605 = vmax.xlane.f32.xlu0 %v3604
      %v3606 = vpop.xlane.xlu0 %3605
      %v3607 = vmax.f32 %v3489, %v3491
      %3608 = vmax.xlane.f32.xlu0 %v3607
      %v3609 = vpop.xlane.xlu0 %3608
      %v3610 = vmax.f32 %v3495, %v3497
      %3611 = vmax.xlane.f32.xlu0 %v3610
      %v3612 = vpop.xlane.xlu0 %3611
      %v3613 = vmax.f32 %v3501, %v3503
      %3614 = vmax.xlane.f32.xlu0 %v3613
      %v3615 = vpop.xlane.xlu0 %3614
      %v3616 = vmax.f32 %v3507, %v3509
      %3617 = vmax.xlane.f32.xlu0 %v3616
      %v3618 = vpop.xlane.xlu0 %3617
      %v3619 = vmax.f32 %v3513, %v3515
      %3620 = vmax.xlane.f32.xlu0 %v3619
      %v3621 = vpop.xlane.xlu0 %3620
      %v3622 = vmax.f32 %v3519, %v3521
      %3623 = vmax.xlane.f32.xlu0 %v3622
      %v3624 = vpop.xlane.xlu0 %3623
      %v3625 = vmax.f32 %v3525, %v3527
      %3626 = vmax.xlane.f32.xlu0 %v3625
      %v3627 = vpop.xlane.xlu0 %3626
      %v3628 = vmax.f32 %v3531, %v3533
      %3629 = vmax.xlane.f32.xlu0 %v3628
      %v3630 = vpop.xlane.xlu0 %3629
      %v3631 = vsub.f32 %v3345, %v3537
      %v3632 = vsub.f32 %v3347, %v3537
      %v3633 = vsub.f32 %v3351, %v3540
      %v3634 = vsub.f32 %v3353, %v3540
      %v3635 = vsub.f32 %v3357, %v3543
      %v3636 = vsub.f32 %v3359, %v3543
      %v3637 = vsub.f32 %v3363, %v3546
      %v3638 = vsub.f32 %v3365, %v3546
      %v3639 = vsub.f32 %v3369, %v3549
      %v3640 = vsub.f32 %v3371, %v3549
      %v3641 = vsub.f32 %v3375, %v3552
      %v3642 = vsub.f32 %v3377, %v3552
      %v3643 = vsub.f32 %v3381, %v3555
      %v3644 = vsub.f32 %v3383, %v3555
      %v3645 = vsub.f32 %v3387, %v3558
      %v3646 = vsub.f32 %v3389, %v3558
      %v3647 = vsub.f32 %v3393, %v3561
      %v3648 = vsub.f32 %v3395, %v3561
      %v3649 = vsub.f32 %v3399, %v3564
      %v3650 = vsub.f32 %v3401, %v3564
      %v3651 = vsub.f32 %v3405, %v3567
      %v3652 = vsub.f32 %v3407, %v3567
      %v3653 = vsub.f32 %v3411, %v3570
      %v3654 = vsub.f32 %v3413, %v3570
      %v3655 = vsub.f32 %v3417, %v3573
      %v3656 = vsub.f32 %v3419, %v3573
      %v3657 = vsub.f32 %v3423, %v3576
      %v3658 = vsub.f32 %v3425, %v3576
      %v3659 = vsub.f32 %v3429, %v3579
      %v3660 = vsub.f32 %v3431, %v3579
      %v3661 = vsub.f32 %v3435, %v3582
      %v3662 = vsub.f32 %v3437, %v3582
      %v3663 = vsub.f32 %v3441, %v3585
      %v3664 = vsub.f32 %v3443, %v3585
      %v3665 = vsub.f32 %v3447, %v3588
      %v3666 = vsub.f32 %v3449, %v3588
      %v3667 = vsub.f32 %v3453, %v3591
      %v3668 = vsub.f32 %v3455, %v3591
      %v3669 = vsub.f32 %v3459, %v3594
      %v3670 = vsub.f32 %v3461, %v3594
      %v3671 = vsub.f32 %v3465, %v3597
      %v3672 = vsub.f32 %v3467, %v3597
      %v3673 = vsub.f32 %v3471, %v3600
      %v3674 = vsub.f32 %v3473, %v3600
      %v3675 = vsub.f32 %v3477, %v3603
      %v3676 = vsub.f32 %v3479, %v3603
      %v3677 = vsub.f32 %v3483, %v3606
      %v3678 = vsub.f32 %v3485, %v3606
      %v3679 = vsub.f32 %v3489, %v3609
      %v3680 = vsub.f32 %v3491, %v3609
      %v3681 = vsub.f32 %v3495, %v3612
      %v3682 = vsub.f32 %v3497, %v3612
      %v3683 = vsub.f32 %v3501, %v3615
      %v3684 = vsub.f32 %v3503, %v3615
      %v3685 = vsub.f32 %v3507, %v3618
      %v3686 = vsub.f32 %v3509, %v3618
      %v3687 = vsub.f32 %v3513, %v3621
      %v3688 = vsub.f32 %v3515, %v3621
      %v3689 = vsub.f32 %v3519, %v3624
      %v3690 = vsub.f32 %v3521, %v3624
      %v3691 = vsub.f32 %v3525, %v3627
      %v3692 = vsub.f32 %v3527, %v3627
      %v3693 = vsub.f32 %v3531, %v3630
      %v3694 = vsub.f32 %v3533, %v3630
      %v3695 = vmul.f32 %v3631, 1.442695
      %v3696 = vpow.pop %v3695
      %v3697 = vmul.f32 %v3632, 1.442695
      %v3698 = vpow.pop %v3697
      %v3699 = vmul.f32 %v3633, 1.442695
      %v3700 = vpow.pop %v3699
      %v3701 = vmul.f32 %v3634, 1.442695
      %v3702 = vpow.pop %v3701
      %v3703 = vmul.f32 %v3635, 1.442695
      %v3704 = vpow.pop %v3703
      %v3705 = vmul.f32 %v3636, 1.442695
      %v3706 = vpow.pop %v3705
      %v3707 = vmul.f32 %v3637, 1.442695
      %v3708 = vpow.pop %v3707
      %v3709 = vmul.f32 %v3638, 1.442695
      %v3710 = vpow.pop %v3709
      %v3711 = vmul.f32 %v3639, 1.442695
      %v3712 = vpow.pop %v3711
      %v3713 = vmul.f32 %v3640, 1.442695
      %v3714 = vpow.pop %v3713
      %v3715 = vmul.f32 %v3641, 1.442695
      %v3716 = vpow.pop %v3715
      %v3717 = vmul.f32 %v3642, 1.442695
      %v3718 = vpow.pop %v3717
      %v3719 = vmul.f32 %v3643, 1.442695
      %v3720 = vpow.pop %v3719
      %v3721 = vmul.f32 %v3644, 1.442695
      %v3722 = vpow.pop %v3721
      %v3723 = vmul.f32 %v3645, 1.442695
      %v3724 = vpow.pop %v3723
      %v3725 = vmul.f32 %v3646, 1.442695
      %v3726 = vpow.pop %v3725
      %v3727 = vmul.f32 %v3647, 1.442695
      %v3728 = vpow.pop %v3727
      %v3729 = vmul.f32 %v3648, 1.442695
      %v3730 = vpow.pop %v3729
      %v3731 = vmul.f32 %v3649, 1.442695
      %v3732 = vpow.pop %v3731
      %v3733 = vmul.f32 %v3650, 1.442695
      %v3734 = vpow.pop %v3733
      %v3735 = vmul.f32 %v3651, 1.442695
      %v3736 = vpow.pop %v3735
      %v3737 = vmul.f32 %v3652, 1.442695
      %v3738 = vpow.pop %v3737
      %v3739 = vmul.f32 %v3653, 1.442695
      %v3740 = vpow.pop %v3739
      %v3741 = vmul.f32 %v3654, 1.442695
      %v3742 = vpow.pop %v3741
      %v3743 = vmul.f32 %v3655, 1.442695
      %v3744 = vpow.pop %v3743
      %v3745 = vmul.f32 %v3656, 1.442695
      %v3746 = vpow.pop %v3745
      %v3747 = vmul.f32 %v3657, 1.442695
      %v3748 = vpow.pop %v3747
      %v3749 = vmul.f32 %v3658, 1.442695
      %v3750 = vpow.pop %v3749
      %v3751 = vmul.f32 %v3659, 1.442695
      %v3752 = vpow.pop %v3751
      %v3753 = vmul.f32 %v3660, 1.442695
      %v3754 = vpow.pop %v3753
      %v3755 = vmul.f32 %v3661, 1.442695
      %v3756 = vpow.pop %v3755
      %v3757 = vmul.f32 %v3662, 1.442695
      %v3758 = vpow.pop %v3757
      %v3759 = vmul.f32 %v3663, 1.442695
      %v3760 = vpow.pop %v3759
      %v3761 = vmul.f32 %v3664, 1.442695
      %v3762 = vpow.pop %v3761
      %v3763 = vmul.f32 %v3665, 1.442695
      %v3764 = vpow.pop %v3763
      %v3765 = vmul.f32 %v3666, 1.442695
      %v3766 = vpow.pop %v3765
      %v3767 = vmul.f32 %v3667, 1.442695
      %v3768 = vpow.pop %v3767
      %v3769 = vmul.f32 %v3668, 1.442695
      %v3770 = vpow.pop %v3769
      %v3771 = vmul.f32 %v3669, 1.442695
      %v3772 = vpow.pop %v3771
      %v3773 = vmul.f32 %v3670, 1.442695
      %v3774 = vpow.pop %v3773
      %v3775 = vmul.f32 %v3671, 1.442695
      %v3776 = vpow.pop %v3775
      %v3777 = vmul.f32 %v3672, 1.442695
      %v3778 = vpow.pop %v3777
      %v3779 = vmul.f32 %v3673, 1.442695
      %v3780 = vpow.pop %v3779
      %v3781 = vmul.f32 %v3674, 1.442695
      %v3782 = vpow.pop %v3781
      %v3783 = vmul.f32 %v3675, 1.442695
      %v3784 = vpow.pop %v3783
      %v3785 = vmul.f32 %v3676, 1.442695
      %v3786 = vpow.pop %v3785
      %v3787 = vmul.f32 %v3677, 1.442695
      %v3788 = vpow.pop %v3787
      %v3789 = vmul.f32 %v3678, 1.442695
      %v3790 = vpow.pop %v3789
      %v3791 = vmul.f32 %v3679, 1.442695
      %v3792 = vpow.pop %v3791
      %v3793 = vmul.f32 %v3680, 1.442695
      %v3794 = vpow.pop %v3793
      %v3795 = vmul.f32 %v3681, 1.442695
      %v3796 = vpow.pop %v3795
      %v3797 = vmul.f32 %v3682, 1.442695
      %v3798 = vpow.pop %v3797
      %v3799 = vmul.f32 %v3683, 1.442695
      %v3800 = vpow.pop %v3799
      %v3801 = vmul.f32 %v3684, 1.442695
      %v3802 = vpow.pop %v3801
      %v3803 = vmul.f32 %v3685, 1.442695
      %v3804 = vpow.pop %v3803
      %v3805 = vmul.f32 %v3686, 1.442695
      %v3806 = vpow.pop %v3805
      %v3807 = vmul.f32 %v3687, 1.442695
      %v3808 = vpow.pop %v3807
      %v3809 = vmul.f32 %v3688, 1.442695
      %v3810 = vpow.pop %v3809
      %v3811 = vmul.f32 %v3689, 1.442695
      %v3812 = vpow.pop %v3811
      %v3813 = vmul.f32 %v3690, 1.442695
      %v3814 = vpow.pop %v3813
      %v3815 = vmul.f32 %v3691, 1.442695
      %v3816 = vpow.pop %v3815
      %v3817 = vmul.f32 %v3692, 1.442695
      %v3818 = vpow.pop %v3817
      %v3819 = vmul.f32 %v3693, 1.442695
      %v3820 = vpow.pop %v3819
      %v3821 = vmul.f32 %v3694, 1.442695
      %v3822 = vpow.pop %v3821
      %v3823 = vadd.f32 %v3696, %v3698
      %3824 = vadd.xlane.f32.xlu0 %v3823
      %v3825 = vpop.xlane.xlu0 %3824
      %v3826 = vadd.f32 %v3700, %v3702
      %3827 = vadd.xlane.f32.xlu0 %v3826
      %v3828 = vpop.xlane.xlu0 %3827
      %v3829 = vadd.f32 %v3704, %v3706
      %3830 = vadd.xlane.f32.xlu0 %v3829
      %v3831 = vpop.xlane.xlu0 %3830
      %v3832 = vadd.f32 %v3708, %v3710
      %3833 = vadd.xlane.f32.xlu0 %v3832
      %v3834 = vpop.xlane.xlu0 %3833
      %v3835 = vadd.f32 %v3712, %v3714
      %3836 = vadd.xlane.f32.xlu0 %v3835
      %v3837 = vpop.xlane.xlu0 %3836
      %v3838 = vadd.f32 %v3716, %v3718
      %3839 = vadd.xlane.f32.xlu0 %v3838
      %v3840 = vpop.xlane.xlu0 %3839
      %v3841 = vadd.f32 %v3720, %v3722
      %3842 = vadd.xlane.f32.xlu0 %v3841
      %v3843 = vpop.xlane.xlu0 %3842
      %v3844 = vadd.f32 %v3724, %v3726
      %3845 = vadd.xlane.f32.xlu0 %v3844
      %v3846 = vpop.xlane.xlu0 %3845
      %v3847 = vadd.f32 %v3728, %v3730
      %3848 = vadd.xlane.f32.xlu0 %v3847
      %v3849 = vpop.xlane.xlu0 %3848
      %v3850 = vadd.f32 %v3732, %v3734
      %3851 = vadd.xlane.f32.xlu0 %v3850
      %v3852 = vpop.xlane.xlu0 %3851
      %v3853 = vadd.f32 %v3736, %v3738
      %3854 = vadd.xlane.f32.xlu0 %v3853
      %v3855 = vpop.xlane.xlu0 %3854
      %v3856 = vadd.f32 %v3740, %v3742
      %3857 = vadd.xlane.f32.xlu0 %v3856
      %v3858 = vpop.xlane.xlu0 %3857
      %v3859 = vadd.f32 %v3744, %v3746
      %3860 = vadd.xlane.f32.xlu0 %v3859
      %v3861 = vpop.xlane.xlu0 %3860
      %v3862 = vadd.f32 %v3748, %v3750
      %3863 = vadd.xlane.f32.xlu0 %v3862
      %v3864 = vpop.xlane.xlu0 %3863
      %v3865 = vadd.f32 %v3752, %v3754
      %3866 = vadd.xlane.f32.xlu0 %v3865
      %v3867 = vpop.xlane.xlu0 %3866
      %v3868 = vadd.f32 %v3756, %v3758
      %3869 = vadd.xlane.f32.xlu0 %v3868
      %v3870 = vpop.xlane.xlu0 %3869
      %v3871 = vadd.f32 %v3760, %v3762
      %3872 = vadd.xlane.f32.xlu0 %v3871
      %v3873 = vpop.xlane.xlu0 %3872
      %v3874 = vadd.f32 %v3764, %v3766
      %3875 = vadd.xlane.f32.xlu0 %v3874
      %v3876 = vpop.xlane.xlu0 %3875
      %v3877 = vadd.f32 %v3768, %v3770
      %3878 = vadd.xlane.f32.xlu0 %v3877
      %v3879 = vpop.xlane.xlu0 %3878
      %v3880 = vadd.f32 %v3772, %v3774
      %3881 = vadd.xlane.f32.xlu0 %v3880
      %v3882 = vpop.xlane.xlu0 %3881
      %v3883 = vadd.f32 %v3776, %v3778
      %3884 = vadd.xlane.f32.xlu0 %v3883
      %v3885 = vpop.xlane.xlu0 %3884
      %v3886 = vadd.f32 %v3780, %v3782
      %3887 = vadd.xlane.f32.xlu0 %v3886
      %v3888 = vpop.xlane.xlu0 %3887
      %v3889 = vadd.f32 %v3784, %v3786
      %3890 = vadd.xlane.f32.xlu0 %v3889
      %v3891 = vpop.xlane.xlu0 %3890
      %v3892 = vadd.f32 %v3788, %v3790
      %3893 = vadd.xlane.f32.xlu0 %v3892
      %v3894 = vpop.xlane.xlu0 %3893
      %v3895 = vadd.f32 %v3792, %v3794
      %3896 = vadd.xlane.f32.xlu0 %v3895
      %v3897 = vpop.xlane.xlu0 %3896
      %v3898 = vadd.f32 %v3796, %v3798
      %3899 = vadd.xlane.f32.xlu0 %v3898
      %v3900 = vpop.xlane.xlu0 %3899
      %v3901 = vadd.f32 %v3800, %v3802
      %3902 = vadd.xlane.f32.xlu0 %v3901
      %v3903 = vpop.xlane.xlu0 %3902
      %v3904 = vadd.f32 %v3804, %v3806
      %3905 = vadd.xlane.f32.xlu0 %v3904
      %v3906 = vpop.xlane.xlu0 %3905
      %v3907 = vadd.f32 %v3808, %v3810
      %3908 = vadd.xlane.f32.xlu0 %v3907
      %v3909 = vpop.xlane.xlu0 %3908
      %v3910 = vadd.f32 %v3812, %v3814
      %3911 = vadd.xlane.f32.xlu0 %v3910
      %v3912 = vpop.xlane.xlu0 %3911
      %v3913 = vadd.f32 %v3816, %v3818
      %3914 = vadd.xlane.f32.xlu0 %v3913
      %v3915 = vpop.xlane.xlu0 %3914
      %v3916 = vadd.f32 %v3820, %v3822
      %3917 = vadd.xlane.f32.xlu0 %v3916
      %v3918 = vpop.xlane.xlu0 %3917
      %v3919 = vrcp.pop %v3825
      %v3920 = vrcp.pop %v3828
      %v3921 = vrcp.pop %v3831
      %v3922 = vrcp.pop %v3834
      %v3923 = vrcp.pop %v3837
      %v3924 = vrcp.pop %v3840
      %v3925 = vrcp.pop %v3843
      %v3926 = vrcp.pop %v3846
      %v3927 = vrcp.pop %v3849
      %v3928 = vrcp.pop %v3852
      %v3929 = vrcp.pop %v3855
      %v3930 = vrcp.pop %v3858
      %v3931 = vrcp.pop %v3861
      %v3932 = vrcp.pop %v3864
      %v3933 = vrcp.pop %v3867
      %v3934 = vrcp.pop %v3870
      %v3935 = vrcp.pop %v3873
      %v3936 = vrcp.pop %v3876
      %v3937 = vrcp.pop %v3879
      %v3938 = vrcp.pop %v3882
      %v3939 = vrcp.pop %v3885
      %v3940 = vrcp.pop %v3888
      %v3941 = vrcp.pop %v3891
      %v3942 = vrcp.pop %v3894
      %v3943 = vrcp.pop %v3897
      %v3944 = vrcp.pop %v3900
      %v3945 = vrcp.pop %v3903
      %v3946 = vrcp.pop %v3906
      %v3947 = vrcp.pop %v3909
      %v3948 = vrcp.pop %v3912
      %v3949 = vrcp.pop %v3915
      %v3950 = vrcp.pop %v3918
      %v3951 = vmul.f32 %v3696, %v3919
      %v3952 = vmul.f32 %v3698, %v3919
      %v3953 = vmul.f32 %v3700, %v3920
      %v3954 = vmul.f32 %v3702, %v3920
      %v3955 = vmul.f32 %v3704, %v3921
      %v3956 = vmul.f32 %v3706, %v3921
      %v3957 = vmul.f32 %v3708, %v3922
      %v3958 = vmul.f32 %v3710, %v3922
      %v3959 = vmul.f32 %v3712, %v3923
      %v3960 = vmul.f32 %v3714, %v3923
      %v3961 = vmul.f32 %v3716, %v3924
      %v3962 = vmul.f32 %v3718, %v3924
      %v3963 = vmul.f32 %v3720, %v3925
      %v3964 = vmul.f32 %v3722, %v3925
      %v3965 = vmul.f32 %v3724, %v3926
      %v3966 = vmul.f32 %v3726, %v3926
      %v3967 = vmul.f32 %v3728, %v3927
      %v3968 = vmul.f32 %v3730, %v3927
      %v3969 = vmul.f32 %v3732, %v3928
      %v3970 = vmul.f32 %v3734, %v3928
      %v3971 = vmul.f32 %v3736, %v3929
      %v3972 = vmul.f32 %v3738, %v3929
      %v3973 = vmul.f32 %v3740, %v3930
      %v3974 = vmul.f32 %v3742, %v3930
      %v3975 = vmul.f32 %v3744, %v3931
      %v3976 = vmul.f32 %v3746, %v3931
      %v3977 = vmul.f32 %v3748, %v3932
      %v3978 = vmul.f32 %v3750, %v3932
      %v3979 = vmul.f32 %v3752, %v3933
      %v3980 = vmul.f32 %v3754, %v3933
      %v3981 = vmul.f32 %v3756, %v3934
      %v3982 = vmul.f32 %v3758, %v3934
      %v3983 = vmul.f32 %v3760, %v3935
      %v3984 = vmul.f32 %v3762, %v3935
      %v3985 = vmul.f32 %v3764, %v3936
      %v3986 = vmul.f32 %v3766, %v3936
      %v3987 = vmul.f32 %v3768, %v3937
      %v3988 = vmul.f32 %v3770, %v3937
      %v3989 = vmul.f32 %v3772, %v3938
      %v3990 = vmul.f32 %v3774, %v3938
      %v3991 = vmul.f32 %v3776, %v3939
      %v3992 = vmul.f32 %v3778, %v3939
      %v3993 = vmul.f32 %v3780, %v3940
      %v3994 = vmul.f32 %v3782, %v3940
      %v3995 = vmul.f32 %v3784, %v3941
      %v3996 = vmul.f32 %v3786, %v3941
      %v3997 = vmul.f32 %v3788, %v3942
      %v3998 = vmul.f32 %v3790, %v3942
      %v3999 = vmul.f32 %v3792, %v3943
      %v4000 = vmul.f32 %v3794, %v3943
      %v4001 = vmul.f32 %v3796, %v3944
      %v4002 = vmul.f32 %v3798, %v3944
      %v4003 = vmul.f32 %v3800, %v3945
      %v4004 = vmul.f32 %v3802, %v3945
      %v4005 = vmul.f32 %v3804, %v3946
      %v4006 = vmul.f32 %v3806, %v3946
      %v4007 = vmul.f32 %v3808, %v3947
      %v4008 = vmul.f32 %v3810, %v3947
      %v4009 = vmul.f32 %v3812, %v3948
      %v4010 = vmul.f32 %v3814, %v3948
      %v4011 = vmul.f32 %v3816, %v3949
      %v4012 = vmul.f32 %v3818, %v3949
      %v4013 = vmul.f32 %v3820, %v3950
      %v4014 = vmul.f32 %v3822, %v3950
      %v4015 = vmul.f32 %v667, %v3149
      %v4016 = vmul.f32 %v670, %v3149
      %v4017 = vmul.f32 %v675, %v3149
      %v4018 = vmul.f32 %v678, %v3149
      %v4019 = vmul.f32 %v683, %v3149
      %v4020 = vmul.f32 %v686, %v3149
      %v4021 = vmul.f32 %v691, %v3149
      %v4022 = vmul.f32 %v694, %v3149
      %v4023 = vmul.f32 %v699, %v3149
      %v4024 = vmul.f32 %v702, %v3149
      %v4025 = vmul.f32 %v707, %v3149
      %v4026 = vmul.f32 %v710, %v3149
      %v4027 = vmul.f32 %v715, %v3149
      %v4028 = vmul.f32 %v718, %v3149
      %v4029 = vmul.f32 %v723, %v3149
      %v4030 = vmul.f32 %v726, %v3149
      %v4031 = vmul.f32 %v731, %v3149
      %v4032 = vmul.f32 %v734, %v3149
      %v4033 = vmul.f32 %v739, %v3149
      %v4034 = vmul.f32 %v742, %v3149
      %v4035 = vmul.f32 %v747, %v3149
      %v4036 = vmul.f32 %v750, %v3149
      %v4037 = vmul.f32 %v755, %v3149
      %v4038 = vmul.f32 %v758, %v3149
      %v4039 = vmul.f32 %v763, %v3149
      %v4040 = vmul.f32 %v766, %v3149
      %v4041 = vmul.f32 %v771, %v3149
      %v4042 = vmul.f32 %v774, %v3149
      %v4043 = vmul.f32 %v779, %v3149
      %v4044 = vmul.f32 %v782, %v3149
      %v4045 = vmul.f32 %v787, %v3149
      %v4046 = vmul.f32 %v790, %v3149
      %4047 = vmatprep.subr.mxu0 0.0
      %4048 = vmatpush1.msra.mxu0 %v4030
      %4049 = vmatprep.subr.mxu0 0.0
      %4050 = vmatpush1.msra.mxu0 %v4029
      %4051 = vmatprep.subr.mxu0 0.0
      %4052 = vmatpush1.msra.mxu0 %v4028
      %4053 = vmatprep.subr.mxu0 0.0
      %4054 = vmatpush1.msra.mxu0 %v4027
      %4055 = vmatprep.subr.mxu0 0.0
      %4056 = vmatpush1.msra.mxu0 %v4026
      %4057 = vmatprep.subr.mxu0 0.0
      %4058 = vmatpush1.msra.mxu0 %v4025
      %4059 = vmatprep.subr.mxu0 0.0
      %4060 = vmatpush1.msra.mxu0 %v4024
      %4061 = vmatprep.subr.mxu0 0.0
      %4062 = vmatpush1.msra.mxu0 %v4023
      %4063 = vmatprep.subr.mxu0 0.0
      %4064 = vmatpush1.msra.mxu0 %v4022
      %4065 = vmatprep.subr.mxu0 0.0
      %4066 = vmatpush1.msra.mxu0 %v4021
      %4067 = vmatprep.subr.mxu0 0.0
      %4068 = vmatpush1.msra.mxu0 %v4020
      %4069 = vmatprep.subr.mxu0 0.0
      %4070 = vmatpush1.msra.mxu0 %v4019
      %4071 = vmatprep.subr.mxu0 0.0
      %4072 = vmatpush1.msra.mxu0 %v4018
      %4073 = vmatprep.subr.mxu0 0.0
      %4074 = vmatpush1.msra.mxu0 %v4017
      %4075 = vmatprep.subr.mxu0 0.0
      %4076 = vmatpush1.msra.mxu0 %v4016
      %4077 = vmatprep.subr.mxu0 0.0
      %4078 = vmatpush1.msra.mxu0 %v4015
      %4079 = vmatprep.subr.mxu0 0.0
      %4080 = vmatpush2.msra.mxu0 %v4046
      %4081 = vmatprep.subr.mxu0 0.0
      %4082 = vmatpush2.msra.mxu0 %v4045
      %4083 = vmatprep.subr.mxu0 0.0
      %4084 = vmatpush2.msra.mxu0 %v4044
      %4085 = vmatprep.subr.mxu0 0.0
      %4086 = vmatpush2.msra.mxu0 %v4043
      %4087 = vmatprep.subr.mxu0 0.0
      %4088 = vmatpush2.msra.mxu0 %v4042
      %4089 = vmatprep.subr.mxu0 0.0
      %4090 = vmatpush2.msra.mxu0 %v4041
      %4091 = vmatprep.subr.mxu0 0.0
      %4092 = vmatpush2.msra.mxu0 %v4040
      %4093 = vmatprep.subr.mxu0 0.0
      %4094 = vmatpush2.msra.mxu0 %v4039
      %4095 = vmatprep.subr.mxu0 0.0
      %4096 = vmatpush2.msra.mxu0 %v4038
      %4097 = vmatprep.subr.mxu0 0.0
      %4098 = vmatpush2.msra.mxu0 %v4037
      %4099 = vmatprep.subr.mxu0 0.0
      %4100 = vmatpush2.msra.mxu0 %v4036
      %4101 = vmatprep.subr.mxu0 0.0
      %4102 = vmatpush2.msra.mxu0 %v4035
      %4103 = vmatprep.subr.mxu0 0.0
      %4104 = vmatpush2.msra.mxu0 %v4034
      %4105 = vmatprep.subr.mxu0 0.0
      %4106 = vmatpush2.msra.mxu0 %v4033
      %4107 = vmatprep.subr.mxu0 0.0
      %4108 = vmatpush2.msra.mxu0 %v4032
      %4109 = vmatprep.subr.mxu0 0.0
      %4110 = vmatpush2.msra.mxu0 %v4031
      %4111 = vmatprep.mubr.f32.mxu0 %v3952
      %4112 = vmatmul.mubr.f32.gmra.mxu0 %v3951
      %v4113 = vpop.f32.mrf.mxu0
      %v4114 = vadd.f32 0.0, %v4113
      %v4115 = vpop.f32.mrf.mxu0
      %4116 = vmatprep.mubr.f32.mxu0 %v3954
      %4117 = vmatmul.mubr.f32.gmra.mxu0 %v3953
      %v4118 = vpop.f32.mrf.mxu0
      %v4119 = vadd.f32 0.0, %v4118
      %v4120 = vpop.f32.mrf.mxu0
      %4121 = vmatprep.mubr.f32.mxu0 %v3956
      %4122 = vmatmul.mubr.f32.gmra.mxu0 %v3955
      %v4123 = vpop.f32.mrf.mxu0
      %v4124 = vadd.f32 0.0, %v4123
      %v4125 = vpop.f32.mrf.mxu0
      %4126 = vmatprep.mubr.f32.mxu0 %v3958
      %4127 = vmatmul.mubr.f32.gmra.mxu0 %v3957
      %v4128 = vpop.f32.mrf.mxu0
      %v4129 = vadd.f32 0.0, %v4128
      %v4130 = vpop.f32.mrf.mxu0
      %4131 = vmatprep.mubr.f32.mxu0 %v3960
      %4132 = vmatmul.mubr.f32.gmra.mxu0 %v3959
      %v4133 = vpop.f32.mrf.mxu0
      %v4134 = vadd.f32 0.0, %v4133
      %v4135 = vpop.f32.mrf.mxu0
      %4136 = vmatprep.mubr.f32.mxu0 %v3962
      %4137 = vmatmul.mubr.f32.gmra.mxu0 %v3961
      %v4138 = vpop.f32.mrf.mxu0
      %v4139 = vadd.f32 0.0, %v4138
      %v4140 = vpop.f32.mrf.mxu0
      %4141 = vmatprep.mubr.f32.mxu0 %v3964
      %4142 = vmatmul.mubr.f32.gmra.mxu0 %v3963
      %v4143 = vpop.f32.mrf.mxu0
      %v4144 = vadd.f32 0.0, %v4143
      %v4145 = vpop.f32.mrf.mxu0
      %4146 = vmatprep.mubr.f32.mxu0 %v3966
      %4147 = vmatmul.mubr.f32.gmra.mxu0 %v3965
      %v4148 = vpop.f32.mrf.mxu0
      %v4149 = vadd.f32 0.0, %v4148
      %v4150 = vpop.f32.mrf.mxu0
      %4151 = vmatprep.mubr.f32.mxu0 %v3968
      %4152 = vmatmul.mubr.f32.gmra.mxu0 %v3967
      %v4153 = vpop.f32.mrf.mxu0
      %v4154 = vadd.f32 0.0, %v4153
      %v4155 = vpop.f32.mrf.mxu0
      %4156 = vmatprep.mubr.f32.mxu0 %v3970
      %4157 = vmatmul.mubr.f32.gmra.mxu0 %v3969
      %v4158 = vpop.f32.mrf.mxu0
      %v4159 = vadd.f32 0.0, %v4158
      %v4160 = vpop.f32.mrf.mxu0
      %4161 = vmatprep.mubr.f32.mxu0 %v3972
      %4162 = vmatmul.mubr.f32.gmra.mxu0 %v3971
      %v4163 = vpop.f32.mrf.mxu0
      %v4164 = vadd.f32 0.0, %v4163
      %v4165 = vpop.f32.mrf.mxu0
      %4166 = vmatprep.mubr.f32.mxu0 %v3974
      %4167 = vmatmul.mubr.f32.gmra.mxu0 %v3973
      %v4168 = vpop.f32.mrf.mxu0
      %v4169 = vadd.f32 0.0, %v4168
      %v4170 = vpop.f32.mrf.mxu0
      %4171 = vmatprep.mubr.f32.mxu0 %v3976
      %4172 = vmatmul.mubr.f32.gmra.mxu0 %v3975
      %v4173 = vpop.f32.mrf.mxu0
      %v4174 = vadd.f32 0.0, %v4173
      %v4175 = vpop.f32.mrf.mxu0
      %4176 = vmatprep.mubr.f32.mxu0 %v3978
      %4177 = vmatmul.mubr.f32.gmra.mxu0 %v3977
      %v4178 = vpop.f32.mrf.mxu0
      %v4179 = vadd.f32 0.0, %v4178
      %v4180 = vpop.f32.mrf.mxu0
      %4181 = vmatprep.mubr.f32.mxu0 %v3980
      %4182 = vmatmul.mubr.f32.gmra.mxu0 %v3979
      %v4183 = vpop.f32.mrf.mxu0
      %v4184 = vadd.f32 0.0, %v4183
      %v4185 = vpop.f32.mrf.mxu0
      %4186 = vmatprep.mubr.f32.mxu0 %v3982
      %4187 = vmatmul.mubr.f32.gmra.mxu0 %v3981
      %v4188 = vpop.f32.mrf.mxu0
      %v4189 = vadd.f32 0.0, %v4188
      %v4190 = vpop.f32.mrf.mxu0
      %4191 = vmatprep.mubr.f32.mxu0 %v3984
      %4192 = vmatmul.mubr.f32.gmra.mxu0 %v3983
      %v4193 = vpop.f32.mrf.mxu0
      %v4194 = vadd.f32 0.0, %v4193
      %v4195 = vpop.f32.mrf.mxu0
      %4196 = vmatprep.mubr.f32.mxu0 %v3986
      %4197 = vmatmul.mubr.f32.gmra.mxu0 %v3985
      %v4198 = vpop.f32.mrf.mxu0
      %v4199 = vadd.f32 0.0, %v4198
      %v4200 = vpop.f32.mrf.mxu0
      %4201 = vmatprep.mubr.f32.mxu0 %v3988
      %4202 = vmatmul.mubr.f32.gmra.mxu0 %v3987
      %v4203 = vpop.f32.mrf.mxu0
      %v4204 = vadd.f32 0.0, %v4203
      %v4205 = vpop.f32.mrf.mxu0
      %4206 = vmatprep.mubr.f32.mxu0 %v3990
      %4207 = vmatmul.mubr.f32.gmra.mxu0 %v3989
      %v4208 = vpop.f32.mrf.mxu0
      %v4209 = vadd.f32 0.0, %v4208
      %v4210 = vpop.f32.mrf.mxu0
      %4211 = vmatprep.mubr.f32.mxu0 %v3992
      %4212 = vmatmul.mubr.f32.gmra.mxu0 %v3991
      %v4213 = vpop.f32.mrf.mxu0
      %v4214 = vadd.f32 0.0, %v4213
      %v4215 = vpop.f32.mrf.mxu0
      %4216 = vmatprep.mubr.f32.mxu0 %v3994
      %4217 = vmatmul.mubr.f32.gmra.mxu0 %v3993
      %v4218 = vpop.f32.mrf.mxu0
      %v4219 = vadd.f32 0.0, %v4218
      %v4220 = vpop.f32.mrf.mxu0
      %4221 = vmatprep.mubr.f32.mxu0 %v3996
      %4222 = vmatmul.mubr.f32.gmra.mxu0 %v3995
      %v4223 = vpop.f32.mrf.mxu0
      %v4224 = vadd.f32 0.0, %v4223
      %v4225 = vpop.f32.mrf.mxu0
      %4226 = vmatprep.mubr.f32.mxu0 %v3998
      %4227 = vmatmul.mubr.f32.gmra.mxu0 %v3997
      %v4228 = vpop.f32.mrf.mxu0
      %v4229 = vadd.f32 0.0, %v4228
      %v4230 = vpop.f32.mrf.mxu0
      %4231 = vmatprep.mubr.f32.mxu0 %v4000
      %4232 = vmatmul.mubr.f32.gmra.mxu0 %v3999
      %v4233 = vpop.f32.mrf.mxu0
      %v4234 = vadd.f32 0.0, %v4233
      %v4235 = vpop.f32.mrf.mxu0
      %4236 = vmatprep.mubr.f32.mxu0 %v4002
      %4237 = vmatmul.mubr.f32.gmra.mxu0 %v4001
      %v4238 = vpop.f32.mrf.mxu0
      %v4239 = vadd.f32 0.0, %v4238
      %v4240 = vpop.f32.mrf.mxu0
      %4241 = vmatprep.mubr.f32.mxu0 %v4004
      %4242 = vmatmul.mubr.f32.gmra.mxu0 %v4003
      %v4243 = vpop.f32.mrf.mxu0
      %v4244 = vadd.f32 0.0, %v4243
      %v4245 = vpop.f32.mrf.mxu0
      %4246 = vmatprep.mubr.f32.mxu0 %v4006
      %4247 = vmatmul.mubr.f32.gmra.mxu0 %v4005
      %v4248 = vpop.f32.mrf.mxu0
      %v4249 = vadd.f32 0.0, %v4248
      %v4250 = vpop.f32.mrf.mxu0
      %4251 = vmatprep.mubr.f32.mxu0 %v4008
      %4252 = vmatmul.mubr.f32.gmra.mxu0 %v4007
      %v4253 = vpop.f32.mrf.mxu0
      %v4254 = vadd.f32 0.0, %v4253
      %v4255 = vpop.f32.mrf.mxu0
      %4256 = vmatprep.mubr.f32.mxu0 %v4010
      %4257 = vmatmul.mubr.f32.gmra.mxu0 %v4009
      %v4258 = vpop.f32.mrf.mxu0
      %v4259 = vadd.f32 0.0, %v4258
      %v4260 = vpop.f32.mrf.mxu0
      %4261 = vmatprep.mubr.f32.mxu0 %v4012
      %4262 = vmatmul.mubr.f32.gmra.mxu0 %v4011
      %v4263 = vpop.f32.mrf.mxu0
      %v4264 = vadd.f32 0.0, %v4263
      %v4265 = vpop.f32.mrf.mxu0
      %4266 = vmatprep.mubr.f32.mxu0 %v4014
      %4267 = vmatmul.mubr.f32.gmra.mxu0 %v4013
      %v4268 = vpop.f32.mrf.mxu0
      %v4269 = vadd.f32 0.0, %v4268
      %v4270 = vpop.f32.mrf.mxu0
      %4271 = vdwg.mxu0
      %v4272 = vadd.f32 %v2987, %v4114
      %v4273 = vadd.f32 %v2992, %v4119
      %v4274 = vadd.f32 %v2997, %v4124
      %v4275 = vadd.f32 %v3002, %v4129
      %v4276 = vadd.f32 %v3007, %v4134
      %v4277 = vadd.f32 %v3012, %v4139
      %v4278 = vadd.f32 %v3017, %v4144
      %v4279 = vadd.f32 %v3022, %v4149
      %v4280 = vadd.f32 %v3027, %v4154
      %v4281 = vadd.f32 %v3032, %v4159
      %v4282 = vadd.f32 %v3037, %v4164
      %v4283 = vadd.f32 %v3042, %v4169
      %v4284 = vadd.f32 %v3047, %v4174
      %v4285 = vadd.f32 %v3052, %v4179
      %v4286 = vadd.f32 %v3057, %v4184
      %v4287 = vadd.f32 %v3062, %v4189
      %v4288 = vadd.f32 %v3067, %v4194
      %v4289 = vadd.f32 %v3072, %v4199
      %v4290 = vadd.f32 %v3077, %v4204
      %v4291 = vadd.f32 %v3082, %v4209
      %v4292 = vadd.f32 %v3087, %v4214
      %v4293 = vadd.f32 %v3092, %v4219
      %v4294 = vadd.f32 %v3097, %v4224
      %v4295 = vadd.f32 %v3102, %v4229
      %v4296 = vadd.f32 %v3107, %v4234
      %v4297 = vadd.f32 %v3112, %v4239
      %v4298 = vadd.f32 %v3117, %v4244
      %v4299 = vadd.f32 %v3122, %v4249
      %v4300 = vadd.f32 %v3127, %v4254
      %v4301 = vadd.f32 %v3132, %v4259
      %v4302 = vadd.f32 %v3137, %v4264
      %v4303 = vadd.f32 %v3142, %v4269
      %vm4304 = vcmp.ge.s32.totalorder %v794, 6
      %vm4305 = vcmp.lt.s32.totalorder %v794, 8
      %vm4306 = vmand %vm4304, %vm4305
      %v4307 = vsel %vm4306, 1, 0
      %v4308 = vcvt.s32.f32 %v4307
      %v4309 = vmul.f32 %v493, %v4308
      %v4310 = vmul.f32 %v496, %v4308
      %v4311 = vmul.f32 %v501, %v4308
      %v4312 = vmul.f32 %v504, %v4308
      %v4313 = vmul.f32 %v509, %v4308
      %v4314 = vmul.f32 %v512, %v4308
      %v4315 = vmul.f32 %v517, %v4308
      %v4316 = vmul.f32 %v520, %v4308
      %v4317 = vmul.f32 %v525, %v4308
      %v4318 = vmul.f32 %v528, %v4308
      %v4319 = vmul.f32 %v533, %v4308
      %v4320 = vmul.f32 %v536, %v4308
      %v4321 = vmul.f32 %v541, %v4308
      %v4322 = vmul.f32 %v544, %v4308
      %v4323 = vmul.f32 %v549, %v4308
      %v4324 = vmul.f32 %v552, %v4308
      %v4325 = vmul.f32 %v557, %v4308
      %v4326 = vmul.f32 %v560, %v4308
      %v4327 = vmul.f32 %v565, %v4308
      %v4328 = vmul.f32 %v568, %v4308
      %v4329 = vmul.f32 %v573, %v4308
      %v4330 = vmul.f32 %v576, %v4308
      %v4331 = vmul.f32 %v581, %v4308
      %v4332 = vmul.f32 %v584, %v4308
      %v4333 = vmul.f32 %v589, %v4308
      %v4334 = vmul.f32 %v592, %v4308
      %v4335 = vmul.f32 %v597, %v4308
      %v4336 = vmul.f32 %v600, %v4308
      %v4337 = vmul.f32 %v605, %v4308
      %v4338 = vmul.f32 %v608, %v4308
      %v4339 = vmul.f32 %v613, %v4308
      %v4340 = vmul.f32 %v616, %v4308
      %v4342 = vsel %vm231, %v4309, 0
      %v4345 = vsel %vm231, %v4310, 0
      %v4348 = vsel %vm231, %v4311, 0
      %v4351 = vsel %vm231, %v4312, 0
      %v4354 = vsel %vm231, %v4313, 0
      %v4357 = vsel %vm231, %v4314, 0
      %v4360 = vsel %vm231, %v4315, 0
      %v4363 = vsel %vm231, %v4316, 0
      %v4366 = vsel %vm231, %v4317, 0
      %v4369 = vsel %vm231, %v4318, 0
      %v4372 = vsel %vm231, %v4319, 0
      %v4375 = vsel %vm231, %v4320, 0
      %v4378 = vsel %vm231, %v4321, 0
      %v4381 = vsel %vm231, %v4322, 0
      %v4384 = vsel %vm231, %v4323, 0
      %v4387 = vsel %vm231, %v4324, 0
      %v4390 = vsel %vm231, %v4325, 0
      %v4393 = vsel %vm231, %v4326, 0
      %v4396 = vsel %vm231, %v4327, 0
      %v4399 = vsel %vm231, %v4328, 0
      %v4402 = vsel %vm231, %v4329, 0
      %v4405 = vsel %vm231, %v4330, 0
      %v4408 = vsel %vm231, %v4331, 0
      %v4411 = vsel %vm231, %v4332, 0
      %v4414 = vsel %vm231, %v4333, 0
      %v4417 = vsel %vm231, %v4334, 0
      %v4420 = vsel %vm231, %v4335, 0
      %v4423 = vsel %vm231, %v4336, 0
      %v4426 = vsel %vm231, %v4337, 0
      %v4429 = vsel %vm231, %v4338, 0
      %v4432 = vsel %vm231, %v4339, 0
      %v4435 = vsel %vm231, %v4340, 0
      %4437 = vmatprep.subr.mxu0 0.0
      %4438 = vmatpush1.xpose.msra.mxu0 %v4387
      %4439 = vmatprep.subr.mxu0 0.0
      %4440 = vmatpush1.xpose.msra.mxu0 %v4384
      %4441 = vmatprep.subr.mxu0 0.0
      %4442 = vmatpush1.xpose.msra.mxu0 %v4381
      %4443 = vmatprep.subr.mxu0 0.0
      %4444 = vmatpush1.xpose.msra.mxu0 %v4378
      %4445 = vmatprep.subr.mxu0 0.0
      %4446 = vmatpush1.xpose.msra.mxu0 %v4375
      %4447 = vmatprep.subr.mxu0 0.0
      %4448 = vmatpush1.xpose.msra.mxu0 %v4372
      %4449 = vmatprep.subr.mxu0 0.0
      %4450 = vmatpush1.xpose.msra.mxu0 %v4369
      %4451 = vmatprep.subr.mxu0 0.0
      %4452 = vmatpush1.xpose.msra.mxu0 %v4366
      %4453 = vmatprep.subr.mxu0 0.0
      %4454 = vmatpush1.xpose.msra.mxu0 %v4363
      %4455 = vmatprep.subr.mxu0 0.0
      %4456 = vmatpush1.xpose.msra.mxu0 %v4360
      %4457 = vmatprep.subr.mxu0 0.0
      %4458 = vmatpush1.xpose.msra.mxu0 %v4357
      %4459 = vmatprep.subr.mxu0 0.0
      %4460 = vmatpush1.xpose.msra.mxu0 %v4354
      %4461 = vmatprep.subr.mxu0 0.0
      %4462 = vmatpush1.xpose.msra.mxu0 %v4351
      %4463 = vmatprep.subr.mxu0 0.0
      %4464 = vmatpush1.xpose.msra.mxu0 %v4348
      %4465 = vmatprep.subr.mxu0 0.0
      %4466 = vmatpush1.xpose.msra.mxu0 %v4345
      %4467 = vmatprep.subr.mxu0 0.0
      %4468 = vmatpush1.xpose.msra.mxu0 %v4342
      %4469 = vmatprep.subr.mxu0 0.0
      %4470 = vmatpush2.xpose.msra.mxu0 %v4435
      %4471 = vmatprep.subr.mxu0 0.0
      %4472 = vmatpush2.xpose.msra.mxu0 %v4432
      %4473 = vmatprep.subr.mxu0 0.0
      %4474 = vmatpush2.xpose.msra.mxu0 %v4429
      %4475 = vmatprep.subr.mxu0 0.0
      %4476 = vmatpush2.xpose.msra.mxu0 %v4426
      %4477 = vmatprep.subr.mxu0 0.0
      %4478 = vmatpush2.xpose.msra.mxu0 %v4423
      %4479 = vmatprep.subr.mxu0 0.0
      %4480 = vmatpush2.xpose.msra.mxu0 %v4420
      %4481 = vmatprep.subr.mxu0 0.0
      %4482 = vmatpush2.xpose.msra.mxu0 %v4417
      %4483 = vmatprep.subr.mxu0 0.0
      %4484 = vmatpush2.xpose.msra.mxu0 %v4414
      %4485 = vmatprep.subr.mxu0 0.0
      %4486 = vmatpush2.xpose.msra.mxu0 %v4411
      %4487 = vmatprep.subr.mxu0 0.0
      %4488 = vmatpush2.xpose.msra.mxu0 %v4408
      %4489 = vmatprep.subr.mxu0 0.0
      %4490 = vmatpush2.xpose.msra.mxu0 %v4405
      %4491 = vmatprep.subr.mxu0 0.0
      %4492 = vmatpush2.xpose.msra.mxu0 %v4402
      %4493 = vmatprep.subr.mxu0 0.0
      %4494 = vmatpush2.xpose.msra.mxu0 %v4399
      %4495 = vmatprep.subr.mxu0 0.0
      %4496 = vmatpush2.xpose.msra.mxu0 %v4396
      %4497 = vmatprep.subr.mxu0 0.0
      %4498 = vmatpush2.xpose.msra.mxu0 %v4393
      %4499 = vmatprep.subr.mxu0 0.0
      %4500 = vmatpush2.xpose.msra.mxu0 %v4390
      %4501 = vmatprep.mubr.f32.mxu0 0.0
      %4502 = vmatmul.mubr.f32.gmra.mxu0 %v833
      %v4503 = vpop.f32.mrf.mxu0
      %v4504 = vadd.f32 0.0, %v4503
      %v4505 = vpop.f32.mrf.mxu0
      %v4506 = vadd.f32 0.0, %v4505
      %4507 = vmatprep.mubr.f32.mxu0 0.0
      %4508 = vmatmul.mubr.f32.gmra.mxu0 %v836
      %v4509 = vpop.f32.mrf.mxu0
      %v4510 = vadd.f32 0.0, %v4509
      %v4511 = vpop.f32.mrf.mxu0
      %v4512 = vadd.f32 0.0, %v4511
      %4513 = vmatprep.mubr.f32.mxu0 0.0
      %4514 = vmatmul.mubr.f32.gmra.mxu0 %v839
      %v4515 = vpop.f32.mrf.mxu0
      %v4516 = vadd.f32 0.0, %v4515
      %v4517 = vpop.f32.mrf.mxu0
      %v4518 = vadd.f32 0.0, %v4517
      %4519 = vmatprep.mubr.f32.mxu0 0.0
      %4520 = vmatmul.mubr.f32.gmra.mxu0 %v842
      %v4521 = vpop.f32.mrf.mxu0
      %v4522 = vadd.f32 0.0, %v4521
      %v4523 = vpop.f32.mrf.mxu0
      %v4524 = vadd.f32 0.0, %v4523
      %4525 = vmatprep.mubr.f32.mxu0 0.0
      %4526 = vmatmul.mubr.f32.gmra.mxu0 %v845
      %v4527 = vpop.f32.mrf.mxu0
      %v4528 = vadd.f32 0.0, %v4527
      %v4529 = vpop.f32.mrf.mxu0
      %v4530 = vadd.f32 0.0, %v4529
      %4531 = vmatprep.mubr.f32.mxu0 0.0
      %4532 = vmatmul.mubr.f32.gmra.mxu0 %v848
      %v4533 = vpop.f32.mrf.mxu0
      %v4534 = vadd.f32 0.0, %v4533
      %v4535 = vpop.f32.mrf.mxu0
      %v4536 = vadd.f32 0.0, %v4535
      %4537 = vmatprep.mubr.f32.mxu0 0.0
      %4538 = vmatmul.mubr.f32.gmra.mxu0 %v851
      %v4539 = vpop.f32.mrf.mxu0
      %v4540 = vadd.f32 0.0, %v4539
      %v4541 = vpop.f32.mrf.mxu0
      %v4542 = vadd.f32 0.0, %v4541
      %4543 = vmatprep.mubr.f32.mxu0 0.0
      %4544 = vmatmul.mubr.f32.gmra.mxu0 %v854
      %v4545 = vpop.f32.mrf.mxu0
      %v4546 = vadd.f32 0.0, %v4545
      %v4547 = vpop.f32.mrf.mxu0
      %v4548 = vadd.f32 0.0, %v4547
      %4549 = vmatprep.mubr.f32.mxu0 0.0
      %4550 = vmatmul.mubr.f32.gmra.mxu0 %v857
      %v4551 = vpop.f32.mrf.mxu0
      %v4552 = vadd.f32 0.0, %v4551
      %v4553 = vpop.f32.mrf.mxu0
      %v4554 = vadd.f32 0.0, %v4553
      %4555 = vmatprep.mubr.f32.mxu0 0.0
      %4556 = vmatmul.mubr.f32.gmra.mxu0 %v860
      %v4557 = vpop.f32.mrf.mxu0
      %v4558 = vadd.f32 0.0, %v4557
      %v4559 = vpop.f32.mrf.mxu0
      %v4560 = vadd.f32 0.0, %v4559
      %4561 = vmatprep.mubr.f32.mxu0 0.0
      %4562 = vmatmul.mubr.f32.gmra.mxu0 %v863
      %v4563 = vpop.f32.mrf.mxu0
      %v4564 = vadd.f32 0.0, %v4563
      %v4565 = vpop.f32.mrf.mxu0
      %v4566 = vadd.f32 0.0, %v4565
      %4567 = vmatprep.mubr.f32.mxu0 0.0
      %4568 = vmatmul.mubr.f32.gmra.mxu0 %v866
      %v4569 = vpop.f32.mrf.mxu0
      %v4570 = vadd.f32 0.0, %v4569
      %v4571 = vpop.f32.mrf.mxu0
      %v4572 = vadd.f32 0.0, %v4571
      %4573 = vmatprep.mubr.f32.mxu0 0.0
      %4574 = vmatmul.mubr.f32.gmra.mxu0 %v869
      %v4575 = vpop.f32.mrf.mxu0
      %v4576 = vadd.f32 0.0, %v4575
      %v4577 = vpop.f32.mrf.mxu0
      %v4578 = vadd.f32 0.0, %v4577
      %4579 = vmatprep.mubr.f32.mxu0 0.0
      %4580 = vmatmul.mubr.f32.gmra.mxu0 %v872
      %v4581 = vpop.f32.mrf.mxu0
      %v4582 = vadd.f32 0.0, %v4581
      %v4583 = vpop.f32.mrf.mxu0
      %v4584 = vadd.f32 0.0, %v4583
      %4585 = vmatprep.mubr.f32.mxu0 0.0
      %4586 = vmatmul.mubr.f32.gmra.mxu0 %v875
      %v4587 = vpop.f32.mrf.mxu0
      %v4588 = vadd.f32 0.0, %v4587
      %v4589 = vpop.f32.mrf.mxu0
      %v4590 = vadd.f32 0.0, %v4589
      %4591 = vmatprep.mubr.f32.mxu0 0.0
      %4592 = vmatmul.mubr.f32.gmra.mxu0 %v878
      %v4593 = vpop.f32.mrf.mxu0
      %v4594 = vadd.f32 0.0, %v4593
      %v4595 = vpop.f32.mrf.mxu0
      %v4596 = vadd.f32 0.0, %v4595
      %4597 = vmatprep.mubr.f32.mxu0 0.0
      %4598 = vmatmul.mubr.f32.gmra.mxu0 %v881
      %v4599 = vpop.f32.mrf.mxu0
      %v4600 = vadd.f32 0.0, %v4599
      %v4601 = vpop.f32.mrf.mxu0
      %v4602 = vadd.f32 0.0, %v4601
      %4603 = vmatprep.mubr.f32.mxu0 0.0
      %4604 = vmatmul.mubr.f32.gmra.mxu0 %v884
      %v4605 = vpop.f32.mrf.mxu0
      %v4606 = vadd.f32 0.0, %v4605
      %v4607 = vpop.f32.mrf.mxu0
      %v4608 = vadd.f32 0.0, %v4607
      %4609 = vmatprep.mubr.f32.mxu0 0.0
      %4610 = vmatmul.mubr.f32.gmra.mxu0 %v887
      %v4611 = vpop.f32.mrf.mxu0
      %v4612 = vadd.f32 0.0, %v4611
      %v4613 = vpop.f32.mrf.mxu0
      %v4614 = vadd.f32 0.0, %v4613
      %4615 = vmatprep.mubr.f32.mxu0 0.0
      %4616 = vmatmul.mubr.f32.gmra.mxu0 %v890
      %v4617 = vpop.f32.mrf.mxu0
      %v4618 = vadd.f32 0.0, %v4617
      %v4619 = vpop.f32.mrf.mxu0
      %v4620 = vadd.f32 0.0, %v4619
      %4621 = vmatprep.mubr.f32.mxu0 0.0
      %4622 = vmatmul.mubr.f32.gmra.mxu0 %v893
      %v4623 = vpop.f32.mrf.mxu0
      %v4624 = vadd.f32 0.0, %v4623
      %v4625 = vpop.f32.mrf.mxu0
      %v4626 = vadd.f32 0.0, %v4625
      %4627 = vmatprep.mubr.f32.mxu0 0.0
      %4628 = vmatmul.mubr.f32.gmra.mxu0 %v896
      %v4629 = vpop.f32.mrf.mxu0
      %v4630 = vadd.f32 0.0, %v4629
      %v4631 = vpop.f32.mrf.mxu0
      %v4632 = vadd.f32 0.0, %v4631
      %4633 = vmatprep.mubr.f32.mxu0 0.0
      %4634 = vmatmul.mubr.f32.gmra.mxu0 %v899
      %v4635 = vpop.f32.mrf.mxu0
      %v4636 = vadd.f32 0.0, %v4635
      %v4637 = vpop.f32.mrf.mxu0
      %v4638 = vadd.f32 0.0, %v4637
      %4639 = vmatprep.mubr.f32.mxu0 0.0
      %4640 = vmatmul.mubr.f32.gmra.mxu0 %v902
      %v4641 = vpop.f32.mrf.mxu0
      %v4642 = vadd.f32 0.0, %v4641
      %v4643 = vpop.f32.mrf.mxu0
      %v4644 = vadd.f32 0.0, %v4643
      %4645 = vmatprep.mubr.f32.mxu0 0.0
      %4646 = vmatmul.mubr.f32.gmra.mxu0 %v905
      %v4647 = vpop.f32.mrf.mxu0
      %v4648 = vadd.f32 0.0, %v4647
      %v4649 = vpop.f32.mrf.mxu0
      %v4650 = vadd.f32 0.0, %v4649
      %4651 = vmatprep.mubr.f32.mxu0 0.0
      %4652 = vmatmul.mubr.f32.gmra.mxu0 %v908
      %v4653 = vpop.f32.mrf.mxu0
      %v4654 = vadd.f32 0.0, %v4653
      %v4655 = vpop.f32.mrf.mxu0
      %v4656 = vadd.f32 0.0, %v4655
      %4657 = vmatprep.mubr.f32.mxu0 0.0
      %4658 = vmatmul.mubr.f32.gmra.mxu0 %v911
      %v4659 = vpop.f32.mrf.mxu0
      %v4660 = vadd.f32 0.0, %v4659
      %v4661 = vpop.f32.mrf.mxu0
      %v4662 = vadd.f32 0.0, %v4661
      %4663 = vmatprep.mubr.f32.mxu0 0.0
      %4664 = vmatmul.mubr.f32.gmra.mxu0 %v914
      %v4665 = vpop.f32.mrf.mxu0
      %v4666 = vadd.f32 0.0, %v4665
      %v4667 = vpop.f32.mrf.mxu0
      %v4668 = vadd.f32 0.0, %v4667
      %4669 = vmatprep.mubr.f32.mxu0 0.0
      %4670 = vmatmul.mubr.f32.gmra.mxu0 %v917
      %v4671 = vpop.f32.mrf.mxu0
      %v4672 = vadd.f32 0.0, %v4671
      %v4673 = vpop.f32.mrf.mxu0
      %v4674 = vadd.f32 0.0, %v4673
      %4675 = vmatprep.mubr.f32.mxu0 0.0
      %4676 = vmatmul.mubr.f32.gmra.mxu0 %v920
      %v4677 = vpop.f32.mrf.mxu0
      %v4678 = vadd.f32 0.0, %v4677
      %v4679 = vpop.f32.mrf.mxu0
      %v4680 = vadd.f32 0.0, %v4679
      %4681 = vmatprep.mubr.f32.mxu0 0.0
      %4682 = vmatmul.mubr.f32.gmra.mxu0 %v923
      %v4683 = vpop.f32.mrf.mxu0
      %v4684 = vadd.f32 0.0, %v4683
      %v4685 = vpop.f32.mrf.mxu0
      %v4686 = vadd.f32 0.0, %v4685
      %4687 = vmatprep.mubr.f32.mxu0 0.0
      %4688 = vmatmul.mubr.f32.gmra.mxu0 %v926
      %v4689 = vpop.f32.mrf.mxu0
      %v4690 = vadd.f32 0.0, %v4689
      %v4691 = vpop.f32.mrf.mxu0
      %v4692 = vadd.f32 0.0, %v4691
      %4693 = vdwg.mxu0
      %v4694 = vmax.f32 %v4504, %v4506
      %4695 = vmax.xlane.f32.xlu0 %v4694
      %v4696 = vpop.xlane.xlu0 %4695
      %v4697 = vmax.f32 %v4510, %v4512
      %4698 = vmax.xlane.f32.xlu0 %v4697
      %v4699 = vpop.xlane.xlu0 %4698
      %v4700 = vmax.f32 %v4516, %v4518
      %4701 = vmax.xlane.f32.xlu0 %v4700
      %v4702 = vpop.xlane.xlu0 %4701
      %v4703 = vmax.f32 %v4522, %v4524
      %4704 = vmax.xlane.f32.xlu0 %v4703
      %v4705 = vpop.xlane.xlu0 %4704
      %v4706 = vmax.f32 %v4528, %v4530
      %4707 = vmax.xlane.f32.xlu0 %v4706
      %v4708 = vpop.xlane.xlu0 %4707
      %v4709 = vmax.f32 %v4534, %v4536
      %4710 = vmax.xlane.f32.xlu0 %v4709
      %v4711 = vpop.xlane.xlu0 %4710
      %v4712 = vmax.f32 %v4540, %v4542
      %4713 = vmax.xlane.f32.xlu0 %v4712
      %v4714 = vpop.xlane.xlu0 %4713
      %v4715 = vmax.f32 %v4546, %v4548
      %4716 = vmax.xlane.f32.xlu0 %v4715
      %v4717 = vpop.xlane.xlu0 %4716
      %v4718 = vmax.f32 %v4552, %v4554
      %4719 = vmax.xlane.f32.xlu0 %v4718
      %v4720 = vpop.xlane.xlu0 %4719
      %v4721 = vmax.f32 %v4558, %v4560
      %4722 = vmax.xlane.f32.xlu0 %v4721
      %v4723 = vpop.xlane.xlu0 %4722
      %v4724 = vmax.f32 %v4564, %v4566
      %4725 = vmax.xlane.f32.xlu0 %v4724
      %v4726 = vpop.xlane.xlu0 %4725
      %v4727 = vmax.f32 %v4570, %v4572
      %4728 = vmax.xlane.f32.xlu0 %v4727
      %v4729 = vpop.xlane.xlu0 %4728
      %v4730 = vmax.f32 %v4576, %v4578
      %4731 = vmax.xlane.f32.xlu0 %v4730
      %v4732 = vpop.xlane.xlu0 %4731
      %v4733 = vmax.f32 %v4582, %v4584
      %4734 = vmax.xlane.f32.xlu0 %v4733
      %v4735 = vpop.xlane.xlu0 %4734
      %v4736 = vmax.f32 %v4588, %v4590
      %4737 = vmax.xlane.f32.xlu0 %v4736
      %v4738 = vpop.xlane.xlu0 %4737
      %v4739 = vmax.f32 %v4594, %v4596
      %4740 = vmax.xlane.f32.xlu0 %v4739
      %v4741 = vpop.xlane.xlu0 %4740
      %v4742 = vmax.f32 %v4600, %v4602
      %4743 = vmax.xlane.f32.xlu0 %v4742
      %v4744 = vpop.xlane.xlu0 %4743
      %v4745 = vmax.f32 %v4606, %v4608
      %4746 = vmax.xlane.f32.xlu0 %v4745
      %v4747 = vpop.xlane.xlu0 %4746
      %v4748 = vmax.f32 %v4612, %v4614
      %4749 = vmax.xlane.f32.xlu0 %v4748
      %v4750 = vpop.xlane.xlu0 %4749
      %v4751 = vmax.f32 %v4618, %v4620
      %4752 = vmax.xlane.f32.xlu0 %v4751
      %v4753 = vpop.xlane.xlu0 %4752
      %v4754 = vmax.f32 %v4624, %v4626
      %4755 = vmax.xlane.f32.xlu0 %v4754
      %v4756 = vpop.xlane.xlu0 %4755
      %v4757 = vmax.f32 %v4630, %v4632
      %4758 = vmax.xlane.f32.xlu0 %v4757
      %v4759 = vpop.xlane.xlu0 %4758
      %v4760 = vmax.f32 %v4636, %v4638
      %4761 = vmax.xlane.f32.xlu0 %v4760
      %v4762 = vpop.xlane.xlu0 %4761
      %v4763 = vmax.f32 %v4642, %v4644
      %4764 = vmax.xlane.f32.xlu0 %v4763
      %v4765 = vpop.xlane.xlu0 %4764
      %v4766 = vmax.f32 %v4648, %v4650
      %4767 = vmax.xlane.f32.xlu0 %v4766
      %v4768 = vpop.xlane.xlu0 %4767
      %v4769 = vmax.f32 %v4654, %v4656
      %4770 = vmax.xlane.f32.xlu0 %v4769
      %v4771 = vpop.xlane.xlu0 %4770
      %v4772 = vmax.f32 %v4660, %v4662
      %4773 = vmax.xlane.f32.xlu0 %v4772
      %v4774 = vpop.xlane.xlu0 %4773
      %v4775 = vmax.f32 %v4666, %v4668
      %4776 = vmax.xlane.f32.xlu0 %v4775
      %v4777 = vpop.xlane.xlu0 %4776
      %v4778 = vmax.f32 %v4672, %v4674
      %4779 = vmax.xlane.f32.xlu0 %v4778
      %v4780 = vpop.xlane.xlu0 %4779
      %v4781 = vmax.f32 %v4678, %v4680
      %4782 = vmax.xlane.f32.xlu0 %v4781
      %v4783 = vpop.xlane.xlu0 %4782
      %v4784 = vmax.f32 %v4684, %v4686
      %4785 = vmax.xlane.f32.xlu0 %v4784
      %v4786 = vpop.xlane.xlu0 %4785
      %v4787 = vmax.f32 %v4690, %v4692
      %4788 = vmax.xlane.f32.xlu0 %v4787
      %v4789 = vpop.xlane.xlu0 %4788
      %v4790 = vsub.f32 %v4504, %v4696
      %v4791 = vsub.f32 %v4506, %v4696
      %v4792 = vsub.f32 %v4510, %v4699
      %v4793 = vsub.f32 %v4512, %v4699
      %v4794 = vsub.f32 %v4516, %v4702
      %v4795 = vsub.f32 %v4518, %v4702
      %v4796 = vsub.f32 %v4522, %v4705
      %v4797 = vsub.f32 %v4524, %v4705
      %v4798 = vsub.f32 %v4528, %v4708
      %v4799 = vsub.f32 %v4530, %v4708
      %v4800 = vsub.f32 %v4534, %v4711
      %v4801 = vsub.f32 %v4536, %v4711
      %v4802 = vsub.f32 %v4540, %v4714
      %v4803 = vsub.f32 %v4542, %v4714
      %v4804 = vsub.f32 %v4546, %v4717
      %v4805 = vsub.f32 %v4548, %v4717
      %v4806 = vsub.f32 %v4552, %v4720
      %v4807 = vsub.f32 %v4554, %v4720
      %v4808 = vsub.f32 %v4558, %v4723
      %v4809 = vsub.f32 %v4560, %v4723
      %v4810 = vsub.f32 %v4564, %v4726
      %v4811 = vsub.f32 %v4566, %v4726
      %v4812 = vsub.f32 %v4570, %v4729
      %v4813 = vsub.f32 %v4572, %v4729
      %v4814 = vsub.f32 %v4576, %v4732
      %v4815 = vsub.f32 %v4578, %v4732
      %v4816 = vsub.f32 %v4582, %v4735
      %v4817 = vsub.f32 %v4584, %v4735
      %v4818 = vsub.f32 %v4588, %v4738
      %v4819 = vsub.f32 %v4590, %v4738
      %v4820 = vsub.f32 %v4594, %v4741
      %v4821 = vsub.f32 %v4596, %v4741
      %v4822 = vsub.f32 %v4600, %v4744
      %v4823 = vsub.f32 %v4602, %v4744
      %v4824 = vsub.f32 %v4606, %v4747
      %v4825 = vsub.f32 %v4608, %v4747
      %v4826 = vsub.f32 %v4612, %v4750
      %v4827 = vsub.f32 %v4614, %v4750
      %v4828 = vsub.f32 %v4618, %v4753
      %v4829 = vsub.f32 %v4620, %v4753
      %v4830 = vsub.f32 %v4624, %v4756
      %v4831 = vsub.f32 %v4626, %v4756
      %v4832 = vsub.f32 %v4630, %v4759
      %v4833 = vsub.f32 %v4632, %v4759
      %v4834 = vsub.f32 %v4636, %v4762
      %v4835 = vsub.f32 %v4638, %v4762
      %v4836 = vsub.f32 %v4642, %v4765
      %v4837 = vsub.f32 %v4644, %v4765
      %v4838 = vsub.f32 %v4648, %v4768
      %v4839 = vsub.f32 %v4650, %v4768
      %v4840 = vsub.f32 %v4654, %v4771
      %v4841 = vsub.f32 %v4656, %v4771
      %v4842 = vsub.f32 %v4660, %v4774
      %v4843 = vsub.f32 %v4662, %v4774
      %v4844 = vsub.f32 %v4666, %v4777
      %v4845 = vsub.f32 %v4668, %v4777
      %v4846 = vsub.f32 %v4672, %v4780
      %v4847 = vsub.f32 %v4674, %v4780
      %v4848 = vsub.f32 %v4678, %v4783
      %v4849 = vsub.f32 %v4680, %v4783
      %v4850 = vsub.f32 %v4684, %v4786
      %v4851 = vsub.f32 %v4686, %v4786
      %v4852 = vsub.f32 %v4690, %v4789
      %v4853 = vsub.f32 %v4692, %v4789
      %v4854 = vmul.f32 %v4790, 1.442695
      %v4855 = vpow.pop %v4854
      %v4856 = vmul.f32 %v4791, 1.442695
      %v4857 = vpow.pop %v4856
      %v4858 = vmul.f32 %v4792, 1.442695
      %v4859 = vpow.pop %v4858
      %v4860 = vmul.f32 %v4793, 1.442695
      %v4861 = vpow.pop %v4860
      %v4862 = vmul.f32 %v4794, 1.442695
      %v4863 = vpow.pop %v4862
      %v4864 = vmul.f32 %v4795, 1.442695
      %v4865 = vpow.pop %v4864
      %v4866 = vmul.f32 %v4796, 1.442695
      %v4867 = vpow.pop %v4866
      %v4868 = vmul.f32 %v4797, 1.442695
      %v4869 = vpow.pop %v4868
      %v4870 = vmul.f32 %v4798, 1.442695
      %v4871 = vpow.pop %v4870
      %v4872 = vmul.f32 %v4799, 1.442695
      %v4873 = vpow.pop %v4872
      %v4874 = vmul.f32 %v4800, 1.442695
      %v4875 = vpow.pop %v4874
      %v4876 = vmul.f32 %v4801, 1.442695
      %v4877 = vpow.pop %v4876
      %v4878 = vmul.f32 %v4802, 1.442695
      %v4879 = vpow.pop %v4878
      %v4880 = vmul.f32 %v4803, 1.442695
      %v4881 = vpow.pop %v4880
      %v4882 = vmul.f32 %v4804, 1.442695
      %v4883 = vpow.pop %v4882
      %v4884 = vmul.f32 %v4805, 1.442695
      %v4885 = vpow.pop %v4884
      %v4886 = vmul.f32 %v4806, 1.442695
      %v4887 = vpow.pop %v4886
      %v4888 = vmul.f32 %v4807, 1.442695
      %v4889 = vpow.pop %v4888
      %v4890 = vmul.f32 %v4808, 1.442695
      %v4891 = vpow.pop %v4890
      %v4892 = vmul.f32 %v4809, 1.442695
      %v4893 = vpow.pop %v4892
      %v4894 = vmul.f32 %v4810, 1.442695
      %v4895 = vpow.pop %v4894
      %v4896 = vmul.f32 %v4811, 1.442695
      %v4897 = vpow.pop %v4896
      %v4898 = vmul.f32 %v4812, 1.442695
      %v4899 = vpow.pop %v4898
      %v4900 = vmul.f32 %v4813, 1.442695
      %v4901 = vpow.pop %v4900
      %v4902 = vmul.f32 %v4814, 1.442695
      %v4903 = vpow.pop %v4902
      %v4904 = vmul.f32 %v4815, 1.442695
      %v4905 = vpow.pop %v4904
      %v4906 = vmul.f32 %v4816, 1.442695
      %v4907 = vpow.pop %v4906
      %v4908 = vmul.f32 %v4817, 1.442695
      %v4909 = vpow.pop %v4908
      %v4910 = vmul.f32 %v4818, 1.442695
      %v4911 = vpow.pop %v4910
      %v4912 = vmul.f32 %v4819, 1.442695
      %v4913 = vpow.pop %v4912
      %v4914 = vmul.f32 %v4820, 1.442695
      %v4915 = vpow.pop %v4914
      %v4916 = vmul.f32 %v4821, 1.442695
      %v4917 = vpow.pop %v4916
      %v4918 = vmul.f32 %v4822, 1.442695
      %v4919 = vpow.pop %v4918
      %v4920 = vmul.f32 %v4823, 1.442695
      %v4921 = vpow.pop %v4920
      %v4922 = vmul.f32 %v4824, 1.442695
      %v4923 = vpow.pop %v4922
      %v4924 = vmul.f32 %v4825, 1.442695
      %v4925 = vpow.pop %v4924
      %v4926 = vmul.f32 %v4826, 1.442695
      %v4927 = vpow.pop %v4926
      %v4928 = vmul.f32 %v4827, 1.442695
      %v4929 = vpow.pop %v4928
      %v4930 = vmul.f32 %v4828, 1.442695
      %v4931 = vpow.pop %v4930
      %v4932 = vmul.f32 %v4829, 1.442695
      %v4933 = vpow.pop %v4932
      %v4934 = vmul.f32 %v4830, 1.442695
      %v4935 = vpow.pop %v4934
      %v4936 = vmul.f32 %v4831, 1.442695
      %v4937 = vpow.pop %v4936
      %v4938 = vmul.f32 %v4832, 1.442695
      %v4939 = vpow.pop %v4938
      %v4940 = vmul.f32 %v4833, 1.442695
      %v4941 = vpow.pop %v4940
      %v4942 = vmul.f32 %v4834, 1.442695
      %v4943 = vpow.pop %v4942
      %v4944 = vmul.f32 %v4835, 1.442695
      %v4945 = vpow.pop %v4944
      %v4946 = vmul.f32 %v4836, 1.442695
      %v4947 = vpow.pop %v4946
      %v4948 = vmul.f32 %v4837, 1.442695
      %v4949 = vpow.pop %v4948
      %v4950 = vmul.f32 %v4838, 1.442695
      %v4951 = vpow.pop %v4950
      %v4952 = vmul.f32 %v4839, 1.442695
      %v4953 = vpow.pop %v4952
      %v4954 = vmul.f32 %v4840, 1.442695
      %v4955 = vpow.pop %v4954
      %v4956 = vmul.f32 %v4841, 1.442695
      %v4957 = vpow.pop %v4956
      %v4958 = vmul.f32 %v4842, 1.442695
      %v4959 = vpow.pop %v4958
      %v4960 = vmul.f32 %v4843, 1.442695
      %v4961 = vpow.pop %v4960
      %v4962 = vmul.f32 %v4844, 1.442695
      %v4963 = vpow.pop %v4962
      %v4964 = vmul.f32 %v4845, 1.442695
      %v4965 = vpow.pop %v4964
      %v4966 = vmul.f32 %v4846, 1.442695
      %v4967 = vpow.pop %v4966
      %v4968 = vmul.f32 %v4847, 1.442695
      %v4969 = vpow.pop %v4968
      %v4970 = vmul.f32 %v4848, 1.442695
      %v4971 = vpow.pop %v4970
      %v4972 = vmul.f32 %v4849, 1.442695
      %v4973 = vpow.pop %v4972
      %v4974 = vmul.f32 %v4850, 1.442695
      %v4975 = vpow.pop %v4974
      %v4976 = vmul.f32 %v4851, 1.442695
      %v4977 = vpow.pop %v4976
      %v4978 = vmul.f32 %v4852, 1.442695
      %v4979 = vpow.pop %v4978
      %v4980 = vmul.f32 %v4853, 1.442695
      %v4981 = vpow.pop %v4980
      %v4982 = vadd.f32 %v4855, %v4857
      %4983 = vadd.xlane.f32.xlu0 %v4982
      %v4984 = vpop.xlane.xlu0 %4983
      %v4985 = vadd.f32 %v4859, %v4861
      %4986 = vadd.xlane.f32.xlu0 %v4985
      %v4987 = vpop.xlane.xlu0 %4986
      %v4988 = vadd.f32 %v4863, %v4865
      %4989 = vadd.xlane.f32.xlu0 %v4988
      %v4990 = vpop.xlane.xlu0 %4989
      %v4991 = vadd.f32 %v4867, %v4869
      %4992 = vadd.xlane.f32.xlu0 %v4991
      %v4993 = vpop.xlane.xlu0 %4992
      %v4994 = vadd.f32 %v4871, %v4873
      %4995 = vadd.xlane.f32.xlu0 %v4994
      %v4996 = vpop.xlane.xlu0 %4995
      %v4997 = vadd.f32 %v4875, %v4877
      %4998 = vadd.xlane.f32.xlu0 %v4997
      %v4999 = vpop.xlane.xlu0 %4998
      %v5000 = vadd.f32 %v4879, %v4881
      %5001 = vadd.xlane.f32.xlu0 %v5000
      %v5002 = vpop.xlane.xlu0 %5001
      %v5003 = vadd.f32 %v4883, %v4885
      %5004 = vadd.xlane.f32.xlu0 %v5003
      %v5005 = vpop.xlane.xlu0 %5004
      %v5006 = vadd.f32 %v4887, %v4889
      %5007 = vadd.xlane.f32.xlu0 %v5006
      %v5008 = vpop.xlane.xlu0 %5007
      %v5009 = vadd.f32 %v4891, %v4893
      %5010 = vadd.xlane.f32.xlu0 %v5009
      %v5011 = vpop.xlane.xlu0 %5010
      %v5012 = vadd.f32 %v4895, %v4897
      %5013 = vadd.xlane.f32.xlu0 %v5012
      %v5014 = vpop.xlane.xlu0 %5013
      %v5015 = vadd.f32 %v4899, %v4901
      %5016 = vadd.xlane.f32.xlu0 %v5015
      %v5017 = vpop.xlane.xlu0 %5016
      %v5018 = vadd.f32 %v4903, %v4905
      %5019 = vadd.xlane.f32.xlu0 %v5018
      %v5020 = vpop.xlane.xlu0 %5019
      %v5021 = vadd.f32 %v4907, %v4909
      %5022 = vadd.xlane.f32.xlu0 %v5021
      %v5023 = vpop.xlane.xlu0 %5022
      %v5024 = vadd.f32 %v4911, %v4913
      %5025 = vadd.xlane.f32.xlu0 %v5024
      %v5026 = vpop.xlane.xlu0 %5025
      %v5027 = vadd.f32 %v4915, %v4917
      %5028 = vadd.xlane.f32.xlu0 %v5027
      %v5029 = vpop.xlane.xlu0 %5028
      %v5030 = vadd.f32 %v4919, %v4921
      %5031 = vadd.xlane.f32.xlu0 %v5030
      %v5032 = vpop.xlane.xlu0 %5031
      %v5033 = vadd.f32 %v4923, %v4925
      %5034 = vadd.xlane.f32.xlu0 %v5033
      %v5035 = vpop.xlane.xlu0 %5034
      %v5036 = vadd.f32 %v4927, %v4929
      %5037 = vadd.xlane.f32.xlu0 %v5036
      %v5038 = vpop.xlane.xlu0 %5037
      %v5039 = vadd.f32 %v4931, %v4933
      %5040 = vadd.xlane.f32.xlu0 %v5039
      %v5041 = vpop.xlane.xlu0 %5040
      %v5042 = vadd.f32 %v4935, %v4937
      %5043 = vadd.xlane.f32.xlu0 %v5042
      %v5044 = vpop.xlane.xlu0 %5043
      %v5045 = vadd.f32 %v4939, %v4941
      %5046 = vadd.xlane.f32.xlu0 %v5045
      %v5047 = vpop.xlane.xlu0 %5046
      %v5048 = vadd.f32 %v4943, %v4945
      %5049 = vadd.xlane.f32.xlu0 %v5048
      %v5050 = vpop.xlane.xlu0 %5049
      %v5051 = vadd.f32 %v4947, %v4949
      %5052 = vadd.xlane.f32.xlu0 %v5051
      %v5053 = vpop.xlane.xlu0 %5052
      %v5054 = vadd.f32 %v4951, %v4953
      %5055 = vadd.xlane.f32.xlu0 %v5054
      %v5056 = vpop.xlane.xlu0 %5055
      %v5057 = vadd.f32 %v4955, %v4957
      %5058 = vadd.xlane.f32.xlu0 %v5057
      %v5059 = vpop.xlane.xlu0 %5058
      %v5060 = vadd.f32 %v4959, %v4961
      %5061 = vadd.xlane.f32.xlu0 %v5060
      %v5062 = vpop.xlane.xlu0 %5061
      %v5063 = vadd.f32 %v4963, %v4965
      %5064 = vadd.xlane.f32.xlu0 %v5063
      %v5065 = vpop.xlane.xlu0 %5064
      %v5066 = vadd.f32 %v4967, %v4969
      %5067 = vadd.xlane.f32.xlu0 %v5066
      %v5068 = vpop.xlane.xlu0 %5067
      %v5069 = vadd.f32 %v4971, %v4973
      %5070 = vadd.xlane.f32.xlu0 %v5069
      %v5071 = vpop.xlane.xlu0 %5070
      %v5072 = vadd.f32 %v4975, %v4977
      %5073 = vadd.xlane.f32.xlu0 %v5072
      %v5074 = vpop.xlane.xlu0 %5073
      %v5075 = vadd.f32 %v4979, %v4981
      %5076 = vadd.xlane.f32.xlu0 %v5075
      %v5077 = vpop.xlane.xlu0 %5076
      %v5078 = vrcp.pop %v4984
      %v5079 = vrcp.pop %v4987
      %v5080 = vrcp.pop %v4990
      %v5081 = vrcp.pop %v4993
      %v5082 = vrcp.pop %v4996
      %v5083 = vrcp.pop %v4999
      %v5084 = vrcp.pop %v5002
      %v5085 = vrcp.pop %v5005
      %v5086 = vrcp.pop %v5008
      %v5087 = vrcp.pop %v5011
      %v5088 = vrcp.pop %v5014
      %v5089 = vrcp.pop %v5017
      %v5090 = vrcp.pop %v5020
      %v5091 = vrcp.pop %v5023
      %v5092 = vrcp.pop %v5026
      %v5093 = vrcp.pop %v5029
      %v5094 = vrcp.pop %v5032
      %v5095 = vrcp.pop %v5035
      %v5096 = vrcp.pop %v5038
      %v5097 = vrcp.pop %v5041
      %v5098 = vrcp.pop %v5044
      %v5099 = vrcp.pop %v5047
      %v5100 = vrcp.pop %v5050
      %v5101 = vrcp.pop %v5053
      %v5102 = vrcp.pop %v5056
      %v5103 = vrcp.pop %v5059
      %v5104 = vrcp.pop %v5062
      %v5105 = vrcp.pop %v5065
      %v5106 = vrcp.pop %v5068
      %v5107 = vrcp.pop %v5071
      %v5108 = vrcp.pop %v5074
      %v5109 = vrcp.pop %v5077
      %v5110 = vmul.f32 %v4855, %v5078
      %v5111 = vmul.f32 %v4857, %v5078
      %v5112 = vmul.f32 %v4859, %v5079
      %v5113 = vmul.f32 %v4861, %v5079
      %v5114 = vmul.f32 %v4863, %v5080
      %v5115 = vmul.f32 %v4865, %v5080
      %v5116 = vmul.f32 %v4867, %v5081
      %v5117 = vmul.f32 %v4869, %v5081
      %v5118 = vmul.f32 %v4871, %v5082
      %v5119 = vmul.f32 %v4873, %v5082
      %v5120 = vmul.f32 %v4875, %v5083
      %v5121 = vmul.f32 %v4877, %v5083
      %v5122 = vmul.f32 %v4879, %v5084
      %v5123 = vmul.f32 %v4881, %v5084
      %v5124 = vmul.f32 %v4883, %v5085
      %v5125 = vmul.f32 %v4885, %v5085
      %v5126 = vmul.f32 %v4887, %v5086
      %v5127 = vmul.f32 %v4889, %v5086
      %v5128 = vmul.f32 %v4891, %v5087
      %v5129 = vmul.f32 %v4893, %v5087
      %v5130 = vmul.f32 %v4895, %v5088
      %v5131 = vmul.f32 %v4897, %v5088
      %v5132 = vmul.f32 %v4899, %v5089
      %v5133 = vmul.f32 %v4901, %v5089
      %v5134 = vmul.f32 %v4903, %v5090
      %v5135 = vmul.f32 %v4905, %v5090
      %v5136 = vmul.f32 %v4907, %v5091
      %v5137 = vmul.f32 %v4909, %v5091
      %v5138 = vmul.f32 %v4911, %v5092
      %v5139 = vmul.f32 %v4913, %v5092
      %v5140 = vmul.f32 %v4915, %v5093
      %v5141 = vmul.f32 %v4917, %v5093
      %v5142 = vmul.f32 %v4919, %v5094
      %v5143 = vmul.f32 %v4921, %v5094
      %v5144 = vmul.f32 %v4923, %v5095
      %v5145 = vmul.f32 %v4925, %v5095
      %v5146 = vmul.f32 %v4927, %v5096
      %v5147 = vmul.f32 %v4929, %v5096
      %v5148 = vmul.f32 %v4931, %v5097
      %v5149 = vmul.f32 %v4933, %v5097
      %v5150 = vmul.f32 %v4935, %v5098
      %v5151 = vmul.f32 %v4937, %v5098
      %v5152 = vmul.f32 %v4939, %v5099
      %v5153 = vmul.f32 %v4941, %v5099
      %v5154 = vmul.f32 %v4943, %v5100
      %v5155 = vmul.f32 %v4945, %v5100
      %v5156 = vmul.f32 %v4947, %v5101
      %v5157 = vmul.f32 %v4949, %v5101
      %v5158 = vmul.f32 %v4951, %v5102
      %v5159 = vmul.f32 %v4953, %v5102
      %v5160 = vmul.f32 %v4955, %v5103
      %v5161 = vmul.f32 %v4957, %v5103
      %v5162 = vmul.f32 %v4959, %v5104
      %v5163 = vmul.f32 %v4961, %v5104
      %v5164 = vmul.f32 %v4963, %v5105
      %v5165 = vmul.f32 %v4965, %v5105
      %v5166 = vmul.f32 %v4967, %v5106
      %v5167 = vmul.f32 %v4969, %v5106
      %v5168 = vmul.f32 %v4971, %v5107
      %v5169 = vmul.f32 %v4973, %v5107
      %v5170 = vmul.f32 %v4975, %v5108
      %v5171 = vmul.f32 %v4977, %v5108
      %v5172 = vmul.f32 %v4979, %v5109
      %v5173 = vmul.f32 %v4981, %v5109
      %v5174 = vmul.f32 %v667, %v4308
      %v5175 = vmul.f32 %v670, %v4308
      %v5176 = vmul.f32 %v675, %v4308
      %v5177 = vmul.f32 %v678, %v4308
      %v5178 = vmul.f32 %v683, %v4308
      %v5179 = vmul.f32 %v686, %v4308
      %v5180 = vmul.f32 %v691, %v4308
      %v5181 = vmul.f32 %v694, %v4308
      %v5182 = vmul.f32 %v699, %v4308
      %v5183 = vmul.f32 %v702, %v4308
      %v5184 = vmul.f32 %v707, %v4308
      %v5185 = vmul.f32 %v710, %v4308
      %v5186 = vmul.f32 %v715, %v4308
      %v5187 = vmul.f32 %v718, %v4308
      %v5188 = vmul.f32 %v723, %v4308
      %v5189 = vmul.f32 %v726, %v4308
      %v5190 = vmul.f32 %v731, %v4308
      %v5191 = vmul.f32 %v734, %v4308
      %v5192 = vmul.f32 %v739, %v4308
      %v5193 = vmul.f32 %v742, %v4308
      %v5194 = vmul.f32 %v747, %v4308
      %v5195 = vmul.f32 %v750, %v4308
      %v5196 = vmul.f32 %v755, %v4308
      %v5197 = vmul.f32 %v758, %v4308
      %v5198 = vmul.f32 %v763, %v4308
      %v5199 = vmul.f32 %v766, %v4308
      %v5200 = vmul.f32 %v771, %v4308
      %v5201 = vmul.f32 %v774, %v4308
      %v5202 = vmul.f32 %v779, %v4308
      %v5203 = vmul.f32 %v782, %v4308
      %v5204 = vmul.f32 %v787, %v4308
      %v5205 = vmul.f32 %v790, %v4308
      %5206 = vmatprep.subr.mxu0 0.0
      %5207 = vmatpush1.msra.mxu0 %v5189
      %5208 = vmatprep.subr.mxu0 0.0
      %5209 = vmatpush1.msra.mxu0 %v5188
      %5210 = vmatprep.subr.mxu0 0.0
      %5211 = vmatpush1.msra.mxu0 %v5187
      %5212 = vmatprep.subr.mxu0 0.0
      %5213 = vmatpush1.msra.mxu0 %v5186
      %5214 = vmatprep.subr.mxu0 0.0
      %5215 = vmatpush1.msra.mxu0 %v5185
      %5216 = vmatprep.subr.mxu0 0.0
      %5217 = vmatpush1.msra.mxu0 %v5184
      %5218 = vmatprep.subr.mxu0 0.0
      %5219 = vmatpush1.msra.mxu0 %v5183
      %5220 = vmatprep.subr.mxu0 0.0
      %5221 = vmatpush1.msra.mxu0 %v5182
      %5222 = vmatprep.subr.mxu0 0.0
      %5223 = vmatpush1.msra.mxu0 %v5181
      %5224 = vmatprep.subr.mxu0 0.0
      %5225 = vmatpush1.msra.mxu0 %v5180
      %5226 = vmatprep.subr.mxu0 0.0
      %5227 = vmatpush1.msra.mxu0 %v5179
      %5228 = vmatprep.subr.mxu0 0.0
      %5229 = vmatpush1.msra.mxu0 %v5178
      %5230 = vmatprep.subr.mxu0 0.0
      %5231 = vmatpush1.msra.mxu0 %v5177
      %5232 = vmatprep.subr.mxu0 0.0
      %5233 = vmatpush1.msra.mxu0 %v5176
      %5234 = vmatprep.subr.mxu0 0.0
      %5235 = vmatpush1.msra.mxu0 %v5175
      %5236 = vmatprep.subr.mxu0 0.0
      %5237 = vmatpush1.msra.mxu0 %v5174
      %5238 = vmatprep.subr.mxu0 0.0
      %5239 = vmatpush2.msra.mxu0 %v5205
      %5240 = vmatprep.subr.mxu0 0.0
      %5241 = vmatpush2.msra.mxu0 %v5204
      %5242 = vmatprep.subr.mxu0 0.0
      %5243 = vmatpush2.msra.mxu0 %v5203
      %5244 = vmatprep.subr.mxu0 0.0
      %5245 = vmatpush2.msra.mxu0 %v5202
      %5246 = vmatprep.subr.mxu0 0.0
      %5247 = vmatpush2.msra.mxu0 %v5201
      %5248 = vmatprep.subr.mxu0 0.0
      %5249 = vmatpush2.msra.mxu0 %v5200
      %5250 = vmatprep.subr.mxu0 0.0
      %5251 = vmatpush2.msra.mxu0 %v5199
      %5252 = vmatprep.subr.mxu0 0.0
      %5253 = vmatpush2.msra.mxu0 %v5198
      %5254 = vmatprep.subr.mxu0 0.0
      %5255 = vmatpush2.msra.mxu0 %v5197
      %5256 = vmatprep.subr.mxu0 0.0
      %5257 = vmatpush2.msra.mxu0 %v5196
      %5258 = vmatprep.subr.mxu0 0.0
      %5259 = vmatpush2.msra.mxu0 %v5195
      %5260 = vmatprep.subr.mxu0 0.0
      %5261 = vmatpush2.msra.mxu0 %v5194
      %5262 = vmatprep.subr.mxu0 0.0
      %5263 = vmatpush2.msra.mxu0 %v5193
      %5264 = vmatprep.subr.mxu0 0.0
      %5265 = vmatpush2.msra.mxu0 %v5192
      %5266 = vmatprep.subr.mxu0 0.0
      %5267 = vmatpush2.msra.mxu0 %v5191
      %5268 = vmatprep.subr.mxu0 0.0
      %5269 = vmatpush2.msra.mxu0 %v5190
      %5270 = vmatprep.mubr.f32.mxu0 %v5111
      %5271 = vmatmul.mubr.f32.gmra.mxu0 %v5110
      %v5272 = vpop.f32.mrf.mxu0
      %v5273 = vadd.f32 0.0, %v5272
      %v5274 = vpop.f32.mrf.mxu0
      %5275 = vmatprep.mubr.f32.mxu0 %v5113
      %5276 = vmatmul.mubr.f32.gmra.mxu0 %v5112
      %v5277 = vpop.f32.mrf.mxu0
      %v5278 = vadd.f32 0.0, %v5277
      %v5279 = vpop.f32.mrf.mxu0
      %5280 = vmatprep.mubr.f32.mxu0 %v5115
      %5281 = vmatmul.mubr.f32.gmra.mxu0 %v5114
      %v5282 = vpop.f32.mrf.mxu0
      %v5283 = vadd.f32 0.0, %v5282
      %v5284 = vpop.f32.mrf.mxu0
      %5285 = vmatprep.mubr.f32.mxu0 %v5117
      %5286 = vmatmul.mubr.f32.gmra.mxu0 %v5116
      %v5287 = vpop.f32.mrf.mxu0
      %v5288 = vadd.f32 0.0, %v5287
      %v5289 = vpop.f32.mrf.mxu0
      %5290 = vmatprep.mubr.f32.mxu0 %v5119
      %5291 = vmatmul.mubr.f32.gmra.mxu0 %v5118
      %v5292 = vpop.f32.mrf.mxu0
      %v5293 = vadd.f32 0.0, %v5292
      %v5294 = vpop.f32.mrf.mxu0
      %5295 = vmatprep.mubr.f32.mxu0 %v5121
      %5296 = vmatmul.mubr.f32.gmra.mxu0 %v5120
      %v5297 = vpop.f32.mrf.mxu0
      %v5298 = vadd.f32 0.0, %v5297
      %v5299 = vpop.f32.mrf.mxu0
      %5300 = vmatprep.mubr.f32.mxu0 %v5123
      %5301 = vmatmul.mubr.f32.gmra.mxu0 %v5122
      %v5302 = vpop.f32.mrf.mxu0
      %v5303 = vadd.f32 0.0, %v5302
      %v5304 = vpop.f32.mrf.mxu0
      %5305 = vmatprep.mubr.f32.mxu0 %v5125
      %5306 = vmatmul.mubr.f32.gmra.mxu0 %v5124
      %v5307 = vpop.f32.mrf.mxu0
      %v5308 = vadd.f32 0.0, %v5307
      %v5309 = vpop.f32.mrf.mxu0
      %5310 = vmatprep.mubr.f32.mxu0 %v5127
      %5311 = vmatmul.mubr.f32.gmra.mxu0 %v5126
      %v5312 = vpop.f32.mrf.mxu0
      %v5313 = vadd.f32 0.0, %v5312
      %v5314 = vpop.f32.mrf.mxu0
      %5315 = vmatprep.mubr.f32.mxu0 %v5129
      %5316 = vmatmul.mubr.f32.gmra.mxu0 %v5128
      %v5317 = vpop.f32.mrf.mxu0
      %v5318 = vadd.f32 0.0, %v5317
      %v5319 = vpop.f32.mrf.mxu0
      %5320 = vmatprep.mubr.f32.mxu0 %v5131
      %5321 = vmatmul.mubr.f32.gmra.mxu0 %v5130
      %v5322 = vpop.f32.mrf.mxu0
      %v5323 = vadd.f32 0.0, %v5322
      %v5324 = vpop.f32.mrf.mxu0
      %5325 = vmatprep.mubr.f32.mxu0 %v5133
      %5326 = vmatmul.mubr.f32.gmra.mxu0 %v5132
      %v5327 = vpop.f32.mrf.mxu0
      %v5328 = vadd.f32 0.0, %v5327
      %v5329 = vpop.f32.mrf.mxu0
      %5330 = vmatprep.mubr.f32.mxu0 %v5135
      %5331 = vmatmul.mubr.f32.gmra.mxu0 %v5134
      %v5332 = vpop.f32.mrf.mxu0
      %v5333 = vadd.f32 0.0, %v5332
      %v5334 = vpop.f32.mrf.mxu0
      %5335 = vmatprep.mubr.f32.mxu0 %v5137
      %5336 = vmatmul.mubr.f32.gmra.mxu0 %v5136
      %v5337 = vpop.f32.mrf.mxu0
      %v5338 = vadd.f32 0.0, %v5337
      %v5339 = vpop.f32.mrf.mxu0
      %5340 = vmatprep.mubr.f32.mxu0 %v5139
      %5341 = vmatmul.mubr.f32.gmra.mxu0 %v5138
      %v5342 = vpop.f32.mrf.mxu0
      %v5343 = vadd.f32 0.0, %v5342
      %v5344 = vpop.f32.mrf.mxu0
      %5345 = vmatprep.mubr.f32.mxu0 %v5141
      %5346 = vmatmul.mubr.f32.gmra.mxu0 %v5140
      %v5347 = vpop.f32.mrf.mxu0
      %v5348 = vadd.f32 0.0, %v5347
      %v5349 = vpop.f32.mrf.mxu0
      %5350 = vmatprep.mubr.f32.mxu0 %v5143
      %5351 = vmatmul.mubr.f32.gmra.mxu0 %v5142
      %v5352 = vpop.f32.mrf.mxu0
      %v5353 = vadd.f32 0.0, %v5352
      %v5354 = vpop.f32.mrf.mxu0
      %5355 = vmatprep.mubr.f32.mxu0 %v5145
      %5356 = vmatmul.mubr.f32.gmra.mxu0 %v5144
      %v5357 = vpop.f32.mrf.mxu0
      %v5358 = vadd.f32 0.0, %v5357
      %v5359 = vpop.f32.mrf.mxu0
      %5360 = vmatprep.mubr.f32.mxu0 %v5147
      %5361 = vmatmul.mubr.f32.gmra.mxu0 %v5146
      %v5362 = vpop.f32.mrf.mxu0
      %v5363 = vadd.f32 0.0, %v5362
      %v5364 = vpop.f32.mrf.mxu0
      %5365 = vmatprep.mubr.f32.mxu0 %v5149
      %5366 = vmatmul.mubr.f32.gmra.mxu0 %v5148
      %v5367 = vpop.f32.mrf.mxu0
      %v5368 = vadd.f32 0.0, %v5367
      %v5369 = vpop.f32.mrf.mxu0
      %5370 = vmatprep.mubr.f32.mxu0 %v5151
      %5371 = vmatmul.mubr.f32.gmra.mxu0 %v5150
      %v5372 = vpop.f32.mrf.mxu0
      %v5373 = vadd.f32 0.0, %v5372
      %v5374 = vpop.f32.mrf.mxu0
      %5375 = vmatprep.mubr.f32.mxu0 %v5153
      %5376 = vmatmul.mubr.f32.gmra.mxu0 %v5152
      %v5377 = vpop.f32.mrf.mxu0
      %v5378 = vadd.f32 0.0, %v5377
      %v5379 = vpop.f32.mrf.mxu0
      %5380 = vmatprep.mubr.f32.mxu0 %v5155
      %5381 = vmatmul.mubr.f32.gmra.mxu0 %v5154
      %v5382 = vpop.f32.mrf.mxu0
      %v5383 = vadd.f32 0.0, %v5382
      %v5384 = vpop.f32.mrf.mxu0
      %5385 = vmatprep.mubr.f32.mxu0 %v5157
      %5386 = vmatmul.mubr.f32.gmra.mxu0 %v5156
      %v5387 = vpop.f32.mrf.mxu0
      %v5388 = vadd.f32 0.0, %v5387
      %v5389 = vpop.f32.mrf.mxu0
      %5390 = vmatprep.mubr.f32.mxu0 %v5159
      %5391 = vmatmul.mubr.f32.gmra.mxu0 %v5158
      %v5392 = vpop.f32.mrf.mxu0
      %v5393 = vadd.f32 0.0, %v5392
      %v5394 = vpop.f32.mrf.mxu0
      %5395 = vmatprep.mubr.f32.mxu0 %v5161
      %5396 = vmatmul.mubr.f32.gmra.mxu0 %v5160
      %v5397 = vpop.f32.mrf.mxu0
      %v5398 = vadd.f32 0.0, %v5397
      %v5399 = vpop.f32.mrf.mxu0
      %5400 = vmatprep.mubr.f32.mxu0 %v5163
      %5401 = vmatmul.mubr.f32.gmra.mxu0 %v5162
      %v5402 = vpop.f32.mrf.mxu0
      %v5403 = vadd.f32 0.0, %v5402
      %v5404 = vpop.f32.mrf.mxu0
      %5405 = vmatprep.mubr.f32.mxu0 %v5165
      %5406 = vmatmul.mubr.f32.gmra.mxu0 %v5164
      %v5407 = vpop.f32.mrf.mxu0
      %v5408 = vadd.f32 0.0, %v5407
      %v5409 = vpop.f32.mrf.mxu0
      %5410 = vmatprep.mubr.f32.mxu0 %v5167
      %5411 = vmatmul.mubr.f32.gmra.mxu0 %v5166
      %v5412 = vpop.f32.mrf.mxu0
      %v5413 = vadd.f32 0.0, %v5412
      %v5414 = vpop.f32.mrf.mxu0
      %5415 = vmatprep.mubr.f32.mxu0 %v5169
      %5416 = vmatmul.mubr.f32.gmra.mxu0 %v5168
      %v5417 = vpop.f32.mrf.mxu0
      %v5418 = vadd.f32 0.0, %v5417
      %v5419 = vpop.f32.mrf.mxu0
      %5420 = vmatprep.mubr.f32.mxu0 %v5171
      %5421 = vmatmul.mubr.f32.gmra.mxu0 %v5170
      %v5422 = vpop.f32.mrf.mxu0
      %v5423 = vadd.f32 0.0, %v5422
      %v5424 = vpop.f32.mrf.mxu0
      %5425 = vmatprep.mubr.f32.mxu0 %v5173
      %5426 = vmatmul.mubr.f32.gmra.mxu0 %v5172
      %v5427 = vpop.f32.mrf.mxu0
      %v5428 = vadd.f32 0.0, %v5427
      %v5429 = vpop.f32.mrf.mxu0
      %5430 = vdwg.mxu0
      %v5431 = vadd.f32 %v4272, %v5273
      %v5432 = vadd.f32 %v4273, %v5278
      %v5433 = vadd.f32 %v4274, %v5283
      %v5434 = vadd.f32 %v4275, %v5288
      %v5435 = vadd.f32 %v4276, %v5293
      %v5436 = vadd.f32 %v4277, %v5298
      %v5437 = vadd.f32 %v4278, %v5303
      %v5438 = vadd.f32 %v4279, %v5308
      %v5439 = vadd.f32 %v4280, %v5313
      %v5440 = vadd.f32 %v4281, %v5318
      %v5441 = vadd.f32 %v4282, %v5323
      %v5442 = vadd.f32 %v4283, %v5328
      %v5443 = vadd.f32 %v4284, %v5333
      %v5444 = vadd.f32 %v4285, %v5338
      %v5445 = vadd.f32 %v4286, %v5343
      %v5446 = vadd.f32 %v4287, %v5348
      %v5447 = vadd.f32 %v4288, %v5353
      %v5448 = vadd.f32 %v4289, %v5358
      %v5449 = vadd.f32 %v4290, %v5363
      %v5450 = vadd.f32 %v4291, %v5368
      %v5451 = vadd.f32 %v4292, %v5373
      %v5452 = vadd.f32 %v4293, %v5378
      %v5453 = vadd.f32 %v4294, %v5383
      %v5454 = vadd.f32 %v4295, %v5388
      %v5455 = vadd.f32 %v4296, %v5393
      %v5456 = vadd.f32 %v4297, %v5398
      %v5457 = vadd.f32 %v4298, %v5403
      %v5458 = vadd.f32 %v4299, %v5408
      %v5459 = vadd.f32 %v4300, %v5413
      %v5460 = vadd.f32 %v4301, %v5418
      %v5461 = vadd.f32 %v4302, %v5423
      %v5462 = vadd.f32 %v4303, %v5428
      %5463 = vst.msk [vmem:[%s172] sm:$0xff] %vm231, %v5431
      %5464 = vst.msk [vmem:[%s172 + $0x8] sm:$0xff] %vm231, %v5432
      %5465 = vst.msk [vmem:[%s172 + $0x10] sm:$0xff] %vm231, %v5433
      %5466 = vst.msk [vmem:[%s172 + $0x18] sm:$0xff] %vm231, %v5434
      %5467 = vst.msk [vmem:[%s172 + $0x20] sm:$0xff] %vm231, %v5435
      %5468 = vst.msk [vmem:[%s172 + $0x28] sm:$0xff] %vm231, %v5436
      %5469 = vst.msk [vmem:[%s172 + $0x30] sm:$0xff] %vm231, %v5437
      %5470 = vst.msk [vmem:[%s172 + $0x38] sm:$0xff] %vm231, %v5438
      %5471 = vst.msk [vmem:[%s172 + $0x40] sm:$0xff] %vm231, %v5439
      %5472 = vst.msk [vmem:[%s172 + $0x48] sm:$0xff] %vm231, %v5440
      %5473 = vst.msk [vmem:[%s172 + $0x50] sm:$0xff] %vm231, %v5441
      %5474 = vst.msk [vmem:[%s172 + $0x58] sm:$0xff] %vm231, %v5442
      %5475 = vst.msk [vmem:[%s172 + $0x60] sm:$0xff] %vm231, %v5443
      %5476 = vst.msk [vmem:[%s172 + $0x68] sm:$0xff] %vm231, %v5444
      %5477 = vst.msk [vmem:[%s172 + $0x70] sm:$0xff] %vm231, %v5445
      %5478 = vst.msk [vmem:[%s172 + $0x78] sm:$0xff] %vm231, %v5446
      %5479 = vst.msk [vmem:[%s172 + $0x80] sm:$0xff] %vm231, %v5447
      %5480 = vst.msk [vmem:[%s172 + $0x88] sm:$0xff] %vm231, %v5448
      %5481 = vst.msk [vmem:[%s172 + $0x90] sm:$0xff] %vm231, %v5449
      %5482 = vst.msk [vmem:[%s172 + $0x98] sm:$0xff] %vm231, %v5450
      %5483 = vst.msk [vmem:[%s172 + $0xa0] sm:$0xff] %vm231, %v5451
      %5484 = vst.msk [vmem:[%s172 + $0xa8] sm:$0xff] %vm231, %v5452
      %5485 = vst.msk [vmem:[%s172 + $0xb0] sm:$0xff] %vm231, %v5453
      %5486 = vst.msk [vmem:[%s172 + $0xb8] sm:$0xff] %vm231, %v5454
      %5487 = vst.msk [vmem:[%s172 + $0xc0] sm:$0xff] %vm231, %v5455
      %5488 = vst.msk [vmem:[%s172 + $0xc8] sm:$0xff] %vm231, %v5456
      %5489 = vst.msk [vmem:[%s172 + $0xd0] sm:$0xff] %vm231, %v5457
      %5490 = vst.msk [vmem:[%s172 + $0xd8] sm:$0xff] %vm231, %v5458
      %5491 = vst.msk [vmem:[%s172 + $0xe0] sm:$0xff] %vm231, %v5459
      %5492 = vst.msk [vmem:[%s172 + $0xe8] sm:$0xff] %vm231, %v5460
      %5493 = vst.msk [vmem:[%s172 + $0xf0] sm:$0xff] %vm231, %v5461
      %5494 = vst.msk [vmem:[%s172 + $0xf8] sm:$0xff] %vm231, %v5462
      %s5495 = smul.u32 32, %s14
      %p5496 = scmp.lt.s32.totalorder %s5495, 63
      %s5497 = scalar_select %p5496, %s5495, 63
      %s5498 = smul.addr %s5497, 8
      %s5499 = scalar_lea.vmem %s3, %s5498
      // Predicated region
      $region33: #{c2f_mhsa_forward.8} parent=31 // pred_check
        %p5500 = pneg %p100
      $region34: #{c2f_mhsa_forward.8} parent=31 // pred_check_branch
        %5502 = sbr.rel (%p5500) target = $region36
      $region35: #{c2f_mhsa_forward.8} parent=31 // pred_region
        %s5503 = smul.u32 32, %s14
      $region36: #{c2f_mhsa_forward.8} parent=31 // pred_fallthru
        _
    $region32: #{c2f_mhsa_forward.8} parent=5 // pred_fallthru
      _
    %p5504 = scmp.le.s32.totalorder 2, %s9
    // Predicated region
    $region37: #{c2f_mhsa_forward.8} parent=5 // pred_check
      %p5505 = pneg %p5504
    $region38: #{c2f_mhsa_forward.8} parent=5 // pred_check_branch
      %5507 = sbr.rel (%p5505) target = $region40
    $region39: #{c2f_mhsa_forward.8} parent=5 // pred_region
      %s5508 = ssub.s32 %s9, 2
      // Predicated region
      $region41: #{c2f_mhsa_forward.8} parent=39 // pred_check
        %p5509 = pneg %p106
      $region42: #{c2f_mhsa_forward.8} parent=39 // pred_check_branch
        %5511 = sbr.rel (%p5509) target = $region44
      $region43: #{c2f_mhsa_forward.8} parent=39 // pred_region
        %s5512 = smul.u32 32, %s15
        %p5513 = scmp.lt.s32.totalorder %s5512, 63
        %s5514 = scalar_select %p5513, %s5512, 63
        %s5515 = smul.addr %s5514, 8
        %s5516 = scalar_lea.vmem %s3, %s5515
      $region44: #{c2f_mhsa_forward.8} parent=39 // pred_fallthru
        _
    $region40: #{c2f_mhsa_forward.8} parent=5 // pred_fallthru
      _
  $region6: #{c2f_mhsa_forward.8} parent=0 // loop_footer
    %s13 = sadd.s32 1, %s9
  $region7: #{c2f_mhsa_forward.8} parent=0 // loop_footer_branch
    %8 = sbr.rel target = $region3
  $region8: #{c2f_mhsa_forward.8} parent=0 // loop_exit
    _

</llo_original>
